<compile_context>
chip_gen: v6e
topology: v6e:2x2x1
jax: 0.10.0
libtpu: 0.0.40
codegen_flags: <defaults>
</compile_context>

<pallas_src>
import functools

import jax
import jax.numpy as jnp
from jax.experimental import pallas as pl
from jax.experimental.pallas import tpu as pltpu


def _default_tile_b():
    """Batch-tile rows per grid step: 1024 on v5e, 2048 on v6e/v7x (overhead
    amortization; both comfortably under the scoped-VMEM defaults)."""
    try:
        kind = jax.devices()[0].device_kind.lower()
    except Exception:
        return 1024
    if ("v6" in kind) or ("v7" in kind):
        return 2048
    return 1024


def ngram_kernel(idx_ref, p_ref, b1_ref, w2_ref, b2_ref, o_ref, *,
                 context_size, vocab_size):
    V = vocab_size

    idx = idx_ref[...]                                      # (TILE_B, ctx) int32
    b1 = b1_ref[...]                                        # (1, H)  f32
    b2 = b2_ref[...]                                        # (1, V)  f32
    vocab_iota = jax.lax.broadcasted_iota(jnp.int32, (1, V), 1)

    # Exact 0/1 gather operand, built directly in bf16 (no f32 select pass).
    # Concatenating ctx lane-aligned (TILE_B, V) blocks gives the (TILE_B, ctx*V)
    # operand for a single full-width MXU dot against the precomputed P.
    onehot = jnp.concatenate(
        [(idx[:, i:i + 1] == vocab_iota).astype(p_ref.dtype)
         for i in range(context_size)],
        axis=-1)                                            # (TILE_B, ctx*V) bf16

    # Fused embedding-gather + linear1 + bias + ReLU (one K=ctx*V MXU dot).
    h = jnp.dot(onehot, p_ref[...],
                preferred_element_type=jnp.float32) + b1    # (TILE_B, H) f32
    h = jnp.maximum(h, 0.0)

    # linear2 (bf16 MXU, f32 accumulation).
    logits = jnp.dot(h.astype(w2_ref.dtype), w2_ref[...],
                     preferred_element_type=jnp.float32) + b2  # (TILE_B, V)

    # log_softmax over the vocab axis (max-stabilized).
    m = jnp.max(logits, axis=-1, keepdims=True)
    z = logits - m
    lse = jnp.log(jnp.sum(jnp.exp(z), axis=-1, keepdims=True))
    o_ref[...] = (z - lse).astype(o_ref.dtype)


def ngram_forward_batched(indices, emb, w1t, b1, w2t, b2, *, tile_b=None):
    """indices: (B, context_size) int32. Returns (B, vocab) float32 log-probs."""
    B, context_size = indices.shape
    V, E = emb.shape
    H = w1t.shape[1]
    assert w1t.shape[0] == context_size * E
    # Lane-dense output / iota one-hot rely on these:
    assert V % 128 == 0 and H % 128 == 0, "vocab and hidden must be multiples of 128"

    # Precompute the fused gather+linear1 operand:
    #   P[c*V + v, :] = emb[v, :] @ w1t[c*E:(c+1)*E, :]
    # f32 math, rounded once to bf16 so the in-kernel dot uses the bf16 MXU path.
    emb_f = emb.astype(jnp.float32)
    w1_f = w1t.astype(jnp.float32).reshape(context_size, E, H)
    p_fused = jnp.einsum("ve,ceh->cvh", emb_f, w1_f).reshape(
        context_size * V, H).astype(jnp.bfloat16)

    if tile_b is None:
        tile_b = _default_tile_b()
    # Never pad a small batch up to a huge tile (keeps the single-context path cheap).
    tile_b = max(8, min(int(tile_b), ((B + 7) // 8) * 8))

    num_tiles = pl.cdiv(B, tile_b)
    padded_b = num_tiles * tile_b
    if padded_b != B:
        pad = jnp.zeros((padded_b - B, context_size), dtype=indices.dtype)
        indices = jnp.concatenate([indices, pad], axis=0)

    kernel = functools.partial(
        ngram_kernel, context_size=context_size, vocab_size=V)

    grid_spec = pltpu.PrefetchScalarGridSpec(
        num_scalar_prefetch=0,
        grid=(num_tiles,),
        in_specs=[
            # Batched token indices: tiled along the batch axis.
            pl.BlockSpec((tile_b, context_size), lambda b: (b, 0)),
            # Parameters: constant index_map -> fetched once, resident across steps.
            # (For a realistic vocab on v7x, add pipeline_mode=pl.Buffered(1) here.)
            pl.BlockSpec(p_fused.shape, lambda b: (0, 0)),
            pl.BlockSpec(b1.shape, lambda b: (0, 0)),
            pl.BlockSpec(w2t.shape, lambda b: (0, 0)),
            pl.BlockSpec(b2.shape, lambda b: (0, 0)),
        ],
        # (TILE_B, V) with V a multiple of 128 -> lane-dense, unmasked stores.
        out_specs=pl.BlockSpec((tile_b, V), lambda b: (b, 0)),
    )

    out = pl.pallas_call(
        kernel,
        out_shape=jax.ShapeDtypeStruct((padded_b, V), jnp.float32),
        grid_spec=grid_spec,
        compiler_params=pltpu.CompilerParams(
            # Batch tiles are independent -> shard across v7x's two TensorCores.
            dimension_semantics=("parallel",)),
    )(indices, p_fused, b1, w2t, b2)
    return out[:B]


def ngram_forward(indices, emb, w1t, b1, w2t, b2):
    """Original module API: single context (context_size,) -> (1, vocab)."""
    return ngram_forward_batched(indices[None, :], emb, w1t, b1, w2t, b2)


def reference_forward_batched(indices, emb, w1t, b1, w2t, b2):
    """Pure-JAX reference on the same (bf16) weights, f32 math."""
    emb_f = emb.astype(jnp.float32)
    w1_f = w1t.astype(jnp.float32)
    w2_f = w2t.astype(jnp.float32)
    x = emb_f[indices].reshape(indices.shape[0], -1)          # (B, ctx*E)
    h = jnp.maximum(x @ w1_f + b1, 0.0)                       # (B, 128)
    logits = h @ w2_f + b2                                    # (B, V)
    return jax.nn.log_softmax(logits, axis=-1)


if __name__ == "__main__":
    # Small shapes consistent with the module (hidden=128 is hard-coded in it).
    vocab_size = 128
    embedding_dim = 16
    context_size = 4
    hidden = 128

    tile_b = 1024                      # within the recommended 1024-4096 sweep,
    batch = 2 * tile_b + 5             # safe on every generation's scoped VMEM;
                                       # exercises multi-tile + padding paths.

    key = jax.random.PRNGKey(0)
    k_emb, k_w1, k_b1, k_w2, k_b2, k_idx = jax.random.split(key, 6)

    # Deterministic synthetic parameters; weights in bf16, biases in f32.
    emb = jax.random.normal(k_emb, (vocab_size, embedding_dim),
                            jnp.float32).astype(jnp.bfloat16)
    w1t = jax.random.uniform(k_w1, (context_size * embedding_dim, hidden),
                             jnp.float32, -0.1, 0.1).astype(jnp.bfloat16)
    b1 = jax.random.uniform(k_b1, (1, hidden), jnp.float32, -0.1, 0.1)
    w2t = jax.random.uniform(k_w2, (hidden, vocab_size),
                             jnp.float32, -0.1, 0.1).astype(jnp.bfloat16)
    b2 = jax.random.uniform(k_b2, (1, vocab_size), jnp.float32, -0.1, 0.1)

    indices = jax.random.randint(k_idx, (batch, context_size), 0, vocab_size,
                                 dtype=jnp.int32)

    # Batched forward (the intended high-throughput path).
    log_probs = ngram_forward_batched(indices, emb, w1t, b1, w2t, b2,
                                      tile_b=tile_b)
    log_probs = jax.block_until_ready(log_probs)

    ref = reference_forward_batched(indices, emb, w1t, b1, w2t, b2)
    assert log_probs.shape == (batch, vocab_size)
    # Tolerance accounts for the kernel's bf16 weight/activation MXU path
    # (f32 accumulation) and the one-time bf16 rounding of the fused emb@W1.
    assert jnp.allclose(log_probs, ref, atol=2e-2, rtol=2e-2), (
        "Pallas kernel does not match pure-JAX reference (batched)")

    # Original single-context API (exercises the small-batch / padding path).
    single = jax.block_until_ready(
        ngram_forward(indices[0], emb, w1t, b1, w2t, b2))
    assert single.shape == (1, vocab_size)
    assert jnp.allclose(single, ref[:1], atol=2e-2, rtol=2e-2), (
        "Pallas kernel does not match pure-JAX reference (single context)")

    print("KERNEL_OK")
</pallas_src>

<mosaic_0001>
module attributes {stable_mosaic.version = 11 : i64} {
  func.func @ngram_kernel(%arg0: i32, %arg1: memref<1024x4xi32, #tpu.memory_space<vmem>>, %arg2: memref<512x128xbf16, #tpu.memory_space<vmem>>, %arg3: memref<1x128xf32, #tpu.memory_space<vmem>>, %arg4: memref<128x128xbf16, #tpu.memory_space<vmem>>, %arg5: memref<1x128xf32, #tpu.memory_space<vmem>>, %arg6: memref<1024x128xf32, #tpu.memory_space<vmem>>) attributes {dimension_semantics = [#tpu.dimension_semantics<parallel>], iteration_bounds = array<i64: 3>, scalar_prefetch = 0 : i64, scratch_operands = 0 : i64, tpu.core_type = #tpu.core_type<tc>, window_params = [{transform_indices = @transform_0, window_bounds = array<i64: 1024, 4>}, {pipeline_mode = #tpu.pipeline_mode<synchronous>, transform_indices = @transform_1, window_bounds = array<i64: 512, 128>}, {pipeline_mode = #tpu.pipeline_mode<synchronous>, transform_indices = @transform_2, window_bounds = array<i64: 1, 128>}, {pipeline_mode = #tpu.pipeline_mode<synchronous>, transform_indices = @transform_3, window_bounds = array<i64: 128, 128>}, {pipeline_mode = #tpu.pipeline_mode<synchronous>, transform_indices = @transform_4, window_bounds = array<i64: 1, 128>}, {transform_indices = @transform_5, window_bounds = array<i64: 1024, 128>}]} {
    %c0 = arith.constant 0 : index
    %c0_0 = arith.constant 0 : index
    %0 = vector.load %arg1[%c0, %c0_0] : memref<1024x4xi32, #tpu.memory_space<vmem>>, vector<1024x4xi32>
    %c0_1 = arith.constant 0 : index
    %c0_2 = arith.constant 0 : index
    %1 = vector.load %arg3[%c0_1, %c0_2] : memref<1x128xf32, #tpu.memory_space<vmem>>, vector<1x128xf32>
    %c0_3 = arith.constant 0 : index
    %c0_4 = arith.constant 0 : index
    %2 = vector.load %arg5[%c0_3, %c0_4] : memref<1x128xf32, #tpu.memory_space<vmem>>, vector<1x128xf32>
    %3 = tpu.iota {dimensions = array<i32: 1>} : vector<1x128xi32>
    %4 = vector.extract_strided_slice %0 {offsets = [0, 0], sizes = [1024, 1], strides = [1, 1]} : vector<1024x4xi32> to vector<1024x1xi32>
    %5 = vector.broadcast %4 : vector<1024x1xi32> to vector<1024x128xi32>
    %6 = vector.broadcast %3 : vector<1x128xi32> to vector<1024x128xi32>
    %7 = arith.cmpi eq, %5, %6 : vector<1024x128xi32>
    %8 = arith.extui %7 : vector<1024x128xi1> to vector<1024x128xi32>
    %9 = arith.sitofp %8 : vector<1024x128xi32> to vector<1024x128xf32>
    %10 = arith.truncf %9 : vector<1024x128xf32> to vector<1024x128xbf16>
    %11 = vector.extract_strided_slice %0 {offsets = [0, 1], sizes = [1024, 1], strides = [1, 1]} : vector<1024x4xi32> to vector<1024x1xi32>
    %12 = vector.broadcast %11 : vector<1024x1xi32> to vector<1024x128xi32>
    %13 = vector.broadcast %3 : vector<1x128xi32> to vector<1024x128xi32>
    %14 = arith.cmpi eq, %12, %13 : vector<1024x128xi32>
    %15 = arith.extui %14 : vector<1024x128xi1> to vector<1024x128xi32>
    %16 = arith.sitofp %15 : vector<1024x128xi32> to vector<1024x128xf32>
    %17 = arith.truncf %16 : vector<1024x128xf32> to vector<1024x128xbf16>
    %18 = vector.extract_strided_slice %0 {offsets = [0, 2], sizes = [1024, 1], strides = [1, 1]} : vector<1024x4xi32> to vector<1024x1xi32>
    %19 = vector.broadcast %18 : vector<1024x1xi32> to vector<1024x128xi32>
    %20 = vector.broadcast %3 : vector<1x128xi32> to vector<1024x128xi32>
    %21 = arith.cmpi eq, %19, %20 : vector<1024x128xi32>
    %22 = arith.extui %21 : vector<1024x128xi1> to vector<1024x128xi32>
    %23 = arith.sitofp %22 : vector<1024x128xi32> to vector<1024x128xf32>
    %24 = arith.truncf %23 : vector<1024x128xf32> to vector<1024x128xbf16>
    %25 = vector.extract_strided_slice %0 {offsets = [0, 3], sizes = [1024, 1], strides = [1, 1]} : vector<1024x4xi32> to vector<1024x1xi32>
    %26 = vector.broadcast %25 : vector<1024x1xi32> to vector<1024x128xi32>
    %27 = vector.broadcast %3 : vector<1x128xi32> to vector<1024x128xi32>
    %28 = arith.cmpi eq, %26, %27 : vector<1024x128xi32>
    %29 = arith.extui %28 : vector<1024x128xi1> to vector<1024x128xi32>
    %30 = arith.sitofp %29 : vector<1024x128xi32> to vector<1024x128xf32>
    %31 = arith.truncf %30 : vector<1024x128xf32> to vector<1024x128xbf16>
    %32 = tpu.concatenate %10, %17, %24, %31 in 1 : vector<1024x128xbf16>, vector<1024x128xbf16>, vector<1024x128xbf16>, vector<1024x128xbf16> -> vector<1024x512xbf16>
    %c0_5 = arith.constant 0 : index
    %c0_6 = arith.constant 0 : index
    %33 = vector.load %arg2[%c0_5, %c0_6] : memref<512x128xbf16, #tpu.memory_space<vmem>>, vector<512x128xbf16>
    %cst = arith.constant dense<0.000000e+00> : vector<1024x128xf32>
    %34 = tpu.matmul %32, %33, %cst {dimension_numbers = #tpu.dot_dimension_numbers<[1], [0], [0], [1], [0, 0, 1, 1], [], []>} : vector<1024x512xbf16>, vector<512x128xbf16>, vector<1024x128xf32> -> vector<1024x128xf32>
    %35 = vector.broadcast %1 : vector<1x128xf32> to vector<1024x128xf32>
    %36 = arith.addf %34, %35 : vector<1024x128xf32>
    %cst_7 = arith.constant 0.000000e+00 : f32
    %37 = vector.broadcast %cst_7 : f32 to vector<1024x128xf32>
    %38 = arith.maximumf %36, %37 : vector<1024x128xf32>
    %39 = arith.truncf %38 : vector<1024x128xf32> to vector<1024x128xbf16>
    %c0_8 = arith.constant 0 : index
    %c0_9 = arith.constant 0 : index
    %40 = vector.load %arg4[%c0_8, %c0_9] : memref<128x128xbf16, #tpu.memory_space<vmem>>, vector<128x128xbf16>
    %cst_10 = arith.constant dense<0.000000e+00> : vector<1024x128xf32>
    %41 = tpu.matmul %39, %40, %cst_10 {dimension_numbers = #tpu.dot_dimension_numbers<[1], [0], [0], [1], [0, 0, 1, 1], [], []>} : vector<1024x128xbf16>, vector<128x128xbf16>, vector<1024x128xf32> -> vector<1024x128xf32>
    %42 = vector.broadcast %2 : vector<1x128xf32> to vector<1024x128xf32>
    %43 = arith.addf %41, %42 : vector<1024x128xf32>
    %cst_11 = arith.constant dense<0xFF800000> : vector<1024xf32>
    %44 = vector.multi_reduction <maximumf>, %43, %cst_11 [1] : vector<1024x128xf32> to vector<1024xf32>
    %45 = vector.shape_cast %44 : vector<1024xf32> to vector<1024x1xf32>
    %46 = vector.broadcast %45 : vector<1024x1xf32> to vector<1024x128xf32>
    %47 = arith.subf %43, %46 : vector<1024x128xf32>
    %48 = math.exp %47 : vector<1024x128xf32>
    %cst_12 = arith.constant dense<0.000000e+00> : vector<1024xf32>
    %49 = vector.multi_reduction <add>, %48, %cst_12 [1] : vector<1024x128xf32> to vector<1024xf32>
    %50 = vector.shape_cast %49 : vector<1024xf32> to vector<1024x1xf32>
    %51 = math.log %50 : vector<1024x1xf32>
    %52 = vector.broadcast %51 : vector<1024x1xf32> to vector<1024x128xf32>
    %53 = arith.subf %47, %52 : vector<1024x128xf32>
    %c0_13 = arith.constant 0 : index
    %c0_14 = arith.constant 0 : index
    %54 = vector.load %arg6[%c0_13, %c0_14] : memref<1024x128xf32, #tpu.memory_space<vmem>>, vector<1024x128xf32>
    tpu.vector_store %arg6[%c0_13, %c0_14], %53 {strides = array<i32>} : memref<1024x128xf32, #tpu.memory_space<vmem>>, vector<1024x128xf32>,
    return
  }
  func.func @transform_0(%arg0: i32) -> (i32, i32) {
    %c0_i32 = arith.constant 0 : i32
    %c0_i32_0 = arith.constant 0 : i32
    return %arg0, %c0_i32 : i32, i32
  }
  func.func @transform_1(%arg0: i32) -> (i32, i32) {
    %c0_i32 = arith.constant 0 : i32
    %c0_i32_0 = arith.constant 0 : i32
    %c0_i32_1 = arith.constant 0 : i32
    return %c0_i32, %c0_i32_0 : i32, i32
  }
  func.func @transform_2(%arg0: i32) -> (i32, i32) {
    %c0_i32 = arith.constant 0 : i32
    %c0_i32_0 = arith.constant 0 : i32
    %c0_i32_1 = arith.constant 0 : i32
    return %c0_i32, %c0_i32_0 : i32, i32
  }
  func.func @transform_3(%arg0: i32) -> (i32, i32) {
    %c0_i32 = arith.constant 0 : i32
    %c0_i32_0 = arith.constant 0 : i32
    %c0_i32_1 = arith.constant 0 : i32
    return %c0_i32, %c0_i32_0 : i32, i32
  }
  func.func @transform_4(%arg0: i32) -> (i32, i32) {
    %c0_i32 = arith.constant 0 : i32
    %c0_i32_0 = arith.constant 0 : i32
    %c0_i32_1 = arith.constant 0 : i32
    return %c0_i32, %c0_i32_0 : i32, i32
  }
  func.func @transform_5(%arg0: i32) -> (i32, i32) {
    %c0_i32 = arith.constant 0 : i32
    %c0_i32_0 = arith.constant 0 : i32
    return %arg0, %c0_i32 : i32, i32
  }
}

</mosaic_0001>

<llo_original>
// kernel: tpu_custom_call.1
$region0: #{tpu_custom_call.1}
  #allocation0 [shape = 'u32[]', space=smem, size = 0x4, offset = 0x4, fixed_abs, tag = 'smem constant byte address 0x4 - core index']
  #allocation1 [shape = 'u32[144,128]{1,0:T(1,128)}', space=vmem, size = 0x12000, scoped, tag = 'internal scratch']
  %s0 = inlined_call_operand.vmem [shape: s32[3072,4], index: 0, kind: input, shape index: {}]
  %s1 = inlined_call_operand.vmem [shape: bf16[512,128], index: 1, kind: input, shape index: {}]
  %s2 = inlined_call_operand.vmem [shape: f32[1,128], index: 2, kind: input, shape index: {}]
  %s3 = inlined_call_operand.vmem [shape: bf16[128,128], index: 3, kind: input, shape index: {}]
  %s4 = inlined_call_operand.vmem [shape: f32[1,128], index: 4, kind: input, shape index: {}]
  %s5 = inlined_call_operand.hbm [shape: f32[3072,128], index: 5, kind: output, shape index: {}]
  %s6 = sld [smem:[#allocation0]]
  $region53: #{tpu_custom_call.1} parent=0
    _
  %s8 = ssub.s32 1, %s6
  %s9 = scalar_select 0, %s8, %s6
  $region1: #{tpu_custom_call.1} parent=0
    #allocation2 [shape = 'u8[1048576]{0}', space=vmem, size = 0x100000, scoped, tag = 'output window, operand 0']
    #allocation3 [shape = 's32[2]{0}', space=sflag, size = 0x8, scoped, tag = 'scoped memory for tpu_custom_call.1']
    %10 = vsyncpa [#allocation3], 0
    %s11 = scalar_lea.sflag [#allocation3], 1
    %12 = vsyncpa %s11, 0
    loop: start=0, step=1, limit=5
    $region2: #{tpu_custom_call.1} parent=1 // loop_pre_header
      _
    $region3: #{tpu_custom_call.1} parent=1 // loop_header
      %s14 = sphi 0, %s18
      %p15 = scmp.ge.s32.totalorder %s14, 5
      %s24 = sphi 0, %s26
      %s27 = sphi 0, %s24
      %s28 = sphi 0, %s27
      %s44 = sphi 0, %s28
      %s48 = sphi 0, %s48
      %s50 = sphi 0, %s48
      %s51 = sphi 0, %s50
      %s65 = sphi 0, %s51
      %s69 = sphi 0, %s69
      %s71 = sphi 0, %s69
      %s72 = sphi 0, %s71
      %s86 = sphi 0, %s72
      %s90 = sphi 0, %s90
      %s92 = sphi 0, %s90
      %s93 = sphi 0, %s92
      %s107 = sphi 0, %s93
      %s111 = sphi 0, %s111
      %s113 = sphi 0, %s111
      %s114 = sphi 0, %s113
      %s128 = sphi 0, %s114
      %s134 = sphi 0, %s136
      %s137 = sphi 0, %s134
      %s138 = sphi 0, %s137
      %s154 = sphi 0, %s138
    $region4: #{tpu_custom_call.1} parent=1 // loop_header_branch
      %17 = sbr.rel (%p15) target = $region8
    $region5: #{tpu_custom_call.1} parent=1 // loop_body
      %s19 = ssub.s32 %s14, 1
      %s20 = ssub.s32 %s14, 2
      %s21 = sadd.s32 %s14, 1
      %s22 = ssub.s32 %s14, %s21
      %p23 = scmp.eq.s32.totalorder %s22, 0
      %s25 = sadd.s32 %s24, 1
      %s26 = scalar_select %p23, %s24, %s25
      %p29 = pneg %p23
      %p30 = scmp.eq.s32.totalorder %s14, 2
      %p31 = por %p29, %p30
      %p32 = scmp.ne.s32.totalorder %s24, %s27
      %p33 = scmp.eq.s32.totalorder %s14, 0
      %p34 = por %p32, %p33
      %p35 = scmp.ne.s32.totalorder %s24, %s27
      %p36 = scmp.eq.s32.totalorder %s19, 2
      %p37 = por %p35, %p36
      %p38 = scmp.ne.s32.totalorder %s27, %s28
      %p39 = scmp.eq.s32.totalorder %s19, 0
      %p40 = por %p38, %p39
      %p41 = scmp.ne.s32.totalorder %s27, %s28
      %p42 = scmp.eq.s32.totalorder %s20, 2
      %p43 = por %p41, %p42
      %p45 = scmp.ne.s32.totalorder %s28, %s44
      %p46 = scmp.eq.s32.totalorder %s20, 0
      %p47 = por %p45, %p46
      %s49 = sadd.s32 %s48, 1
      %p52 = scmp.eq.s32.totalorder %s14, 2
      %p53 = scmp.ne.s32.totalorder %s48, %s50
      %p54 = scmp.eq.s32.totalorder %s14, 0
      %p55 = por %p53, %p54
      %p56 = scmp.ne.s32.totalorder %s48, %s50
      %p57 = scmp.eq.s32.totalorder %s19, 2
      %p58 = por %p56, %p57
      %p59 = scmp.ne.s32.totalorder %s50, %s51
      %p60 = scmp.eq.s32.totalorder %s19, 0
      %p61 = por %p59, %p60
      %p62 = scmp.ne.s32.totalorder %s50, %s51
      %p63 = scmp.eq.s32.totalorder %s20, 2
      %p64 = por %p62, %p63
      %p66 = scmp.ne.s32.totalorder %s51, %s65
      %p67 = scmp.eq.s32.totalorder %s20, 0
      %p68 = por %p66, %p67
      %s70 = sadd.s32 %s69, 1
      %p73 = scmp.eq.s32.totalorder %s14, 2
      %p74 = scmp.ne.s32.totalorder %s69, %s71
      %p75 = scmp.eq.s32.totalorder %s14, 0
      %p76 = por %p74, %p75
      %p77 = scmp.ne.s32.totalorder %s69, %s71
      %p78 = scmp.eq.s32.totalorder %s19, 2
      %p79 = por %p77, %p78
      %p80 = scmp.ne.s32.totalorder %s71, %s72
      %p81 = scmp.eq.s32.totalorder %s19, 0
      %p82 = por %p80, %p81
      %p83 = scmp.ne.s32.totalorder %s71, %s72
      %p84 = scmp.eq.s32.totalorder %s20, 2
      %p85 = por %p83, %p84
      %p87 = scmp.ne.s32.totalorder %s72, %s86
      %p88 = scmp.eq.s32.totalorder %s20, 0
      %p89 = por %p87, %p88
      %s91 = sadd.s32 %s90, 1
      %p94 = scmp.eq.s32.totalorder %s14, 2
      %p95 = scmp.ne.s32.totalorder %s90, %s92
      %p96 = scmp.eq.s32.totalorder %s14, 0
      %p97 = por %p95, %p96
      %p98 = scmp.ne.s32.totalorder %s90, %s92
      %p99 = scmp.eq.s32.totalorder %s19, 2
      %p100 = por %p98, %p99
      %p101 = scmp.ne.s32.totalorder %s92, %s93
      %p102 = scmp.eq.s32.totalorder %s19, 0
      %p103 = por %p101, %p102
      %p104 = scmp.ne.s32.totalorder %s92, %s93
      %p105 = scmp.eq.s32.totalorder %s20, 2
      %p106 = por %p104, %p105
      %p108 = scmp.ne.s32.totalorder %s93, %s107
      %p109 = scmp.eq.s32.totalorder %s20, 0
      %p110 = por %p108, %p109
      %s112 = sadd.s32 %s111, 1
      %p115 = scmp.eq.s32.totalorder %s14, 2
      %p116 = scmp.ne.s32.totalorder %s111, %s113
      %p117 = scmp.eq.s32.totalorder %s14, 0
      %p118 = por %p116, %p117
      %p119 = scmp.ne.s32.totalorder %s111, %s113
      %p120 = scmp.eq.s32.totalorder %s19, 2
      %p121 = por %p119, %p120
      %p122 = scmp.ne.s32.totalorder %s113, %s114
      %p123 = scmp.eq.s32.totalorder %s19, 0
      %p124 = por %p122, %p123
      %p125 = scmp.ne.s32.totalorder %s113, %s114
      %p126 = scmp.eq.s32.totalorder %s20, 2
      %p127 = por %p125, %p126
      %p129 = scmp.ne.s32.totalorder %s114, %s128
      %p130 = scmp.eq.s32.totalorder %s20, 0
      %p131 = por %p129, %p130
      %s132 = ssub.s32 %s14, %s21
      %p133 = scmp.eq.s32.totalorder %s132, 0
      %s135 = sadd.s32 %s134, 1
      %s136 = scalar_select %p133, %s134, %s135
      %p139 = pneg %p133
      %p140 = scmp.eq.s32.totalorder %s14, 2
      %p141 = por %p139, %p140
      %p142 = scmp.ne.s32.totalorder %s134, %s137
      %p143 = scmp.eq.s32.totalorder %s14, 0
      %p144 = por %p142, %p143
      %p145 = scmp.ne.s32.totalorder %s134, %s137
      %p146 = scmp.eq.s32.totalorder %s19, 2
      %p147 = por %p145, %p146
      %p148 = scmp.ne.s32.totalorder %s137, %s138
      %p149 = scmp.eq.s32.totalorder %s19, 0
      %p150 = por %p148, %p149
      %p151 = scmp.ne.s32.totalorder %s137, %s138
      %p152 = scmp.eq.s32.totalorder %s20, 2
      %p153 = por %p151, %p152
      %p155 = scmp.ne.s32.totalorder %s138, %s154
      %p156 = scmp.eq.s32.totalorder %s20, 0
      %p157 = por %p155, %p156
      %p158 = scmp.le.s32.totalorder 1, %s14
      %p159 = scmp.lt.s32.totalorder %s14, 4
      %p160 = pnand %p158, %p159
      %p161 = pneg %p160
      // Predicated region
      $region9: #{tpu_custom_call.1} parent=5 // pred_check
        _
      $region10: #{tpu_custom_call.1} parent=5 // pred_check_branch
        %163 = sbr.rel (%p160) target = $region12
      $region11: #{tpu_custom_call.1} parent=5 // pred_region
        %s164 = ssub.s32 %s14, 1
        // Predicated region
        $region13: #{tpu_custom_call.1} parent=11 // pred_check
          %p165 = pneg %p61
        $region14: #{tpu_custom_call.1} parent=11 // pred_check_branch
          %167 = sbr.rel (%p165) target = $region16
        $region15: #{tpu_custom_call.1} parent=11 // pred_region
          _
        $region16: #{tpu_custom_call.1} parent=11 // pred_fallthru
          _
        // Predicated region
        $region17: #{tpu_custom_call.1} parent=11 // pred_check
          %p168 = pneg %p82
        $region18: #{tpu_custom_call.1} parent=11 // pred_check_branch
          %170 = sbr.rel (%p168) target = $region20
        $region19: #{tpu_custom_call.1} parent=11 // pred_region
          _
        $region20: #{tpu_custom_call.1} parent=11 // pred_fallthru
          _
        // Predicated region
        $region21: #{tpu_custom_call.1} parent=11 // pred_check
          %p171 = pneg %p103
        $region22: #{tpu_custom_call.1} parent=11 // pred_check_branch
          %173 = sbr.rel (%p171) target = $region24
        $region23: #{tpu_custom_call.1} parent=11 // pred_region
          _
        $region24: #{tpu_custom_call.1} parent=11 // pred_fallthru
          _
        // Predicated region
        $region25: #{tpu_custom_call.1} parent=11 // pred_check
          %p174 = pneg %p124
        $region26: #{tpu_custom_call.1} parent=11 // pred_check_branch
          %176 = sbr.rel (%p174) target = $region28
        $region27: #{tpu_custom_call.1} parent=11 // pred_region
          _
        $region28: #{tpu_custom_call.1} parent=11 // pred_fallthru
          _
      $region12: #{tpu_custom_call.1} parent=5 // pred_fallthru
        _
      %p177 = scmp.lt.s32.totalorder %s14, 3
      // Predicated region
      $region29: #{tpu_custom_call.1} parent=5 // pred_check
        %p178 = pneg %p177
      $region30: #{tpu_custom_call.1} parent=5 // pred_check_branch
        %180 = sbr.rel (%p178) target = $region32
      $region31: #{tpu_custom_call.1} parent=5 // pred_region
        // Predicated region
        $region33: #{tpu_custom_call.1} parent=31 // pred_check
          %p181 = pneg %p34
        $region34: #{tpu_custom_call.1} parent=31 // pred_check_branch
          %183 = sbr.rel (%p181) target = $region36
        $region35: #{tpu_custom_call.1} parent=31 // pred_region
          %s184 = smul.u32 128, %s14
          %p185 = scmp.lt.s32.totalorder %s184, 383
          %s186 = scalar_select %p185, %s184, 383
          %s187 = smul.addr %s186, 8
          %s188 = scalar_lea.vmem %s0, %s187
          %s189 = smul.u32 128, %s14
        $region36: #{tpu_custom_call.1} parent=31 // pred_fallthru
          _
      $region32: #{tpu_custom_call.1} parent=5 // pred_fallthru
        _
      %p190 = scmp.le.s32.totalorder 1, %s14
      %p191 = scmp.lt.s32.totalorder %s14, 4
      %p192 = pnand %p190, %p191
      %p193 = pneg %p192
      // Predicated region
      $region37: #{tpu_custom_call.1} parent=5 // pred_check
        _
      $region38: #{tpu_custom_call.1} parent=5 // pred_check_branch
        %195 = sbr.rel (%p192) target = $region40
      $region39: #{tpu_custom_call.1} parent=5 // pred_region
        %s196 = ssub.s32 %s14, 1
        %s197 = smul.u32 128, %s19
        %p198 = scmp.lt.s32.totalorder %s197, 383
        %s199 = scalar_select %p198, %s197, 383
        %s200 = smul.addr %s199, 8
        %s201 = scalar_lea.vmem %s0, %s200
        %p202 = pneg %p40
        %p203 = pneg %p37
        %p204 = pneg %p61
        %p205 = pneg %p58
        %p206 = pneg %p82
        %p207 = pneg %p79
        %p208 = pneg %p103
        %p209 = pneg %p100
        %p210 = pneg %p124
        %p211 = pneg %p121
        %p212 = pneg %p150
        %p213 = pneg %p147
        %s214 = sand.u32 %s137, 1
        %s215 = scalar_lea.sflag [#allocation3], %s214
        %s216 = sand.u32 %s137, 1
        %s217 = smul.addr %s216, 1024
        %s218 = scalar_lea.vmem [#allocation2], %s217
        %s219 = smul.u32 128, %s19
        %p220 = scmp.lt.s32.totalorder %s219, 383
        %s221 = scalar_select %p220, %s219, 383
        %s222 = smul.addr %s221, 8
        %s223 = scalar_lea.vmem %s0, %s222
        %s224 = smul.u32 128, %s19
        %s225 = smul.u32 128, %s19
        %v227 = vld [vmem:[%s223] sm:$0xff]
        %v228 = vld [vmem:[%s223 + $0x8] sm:$0xff]
        %v229 = vld [vmem:[%s223 + $0x10] sm:$0xff]
        %v230 = vld [vmem:[%s223 + $0x18] sm:$0xff]
        %v231 = vld [vmem:[%s223 + $0x20] sm:$0xff]
        %v232 = vld [vmem:[%s223 + $0x28] sm:$0xff]
        %v233 = vld [vmem:[%s223 + $0x30] sm:$0xff]
        %v234 = vld [vmem:[%s223 + $0x38] sm:$0xff]
        %v235 = vld [vmem:[%s223 + $0x40] sm:$0xff]
        %v236 = vld [vmem:[%s223 + $0x48] sm:$0xff]
        %v237 = vld [vmem:[%s223 + $0x50] sm:$0xff]
        %v238 = vld [vmem:[%s223 + $0x58] sm:$0xff]
        %v239 = vld [vmem:[%s223 + $0x60] sm:$0xff]
        %v240 = vld [vmem:[%s223 + $0x68] sm:$0xff]
        %v241 = vld [vmem:[%s223 + $0x70] sm:$0xff]
        %v242 = vld [vmem:[%s223 + $0x78] sm:$0xff]
        %v243 = vld [vmem:[%s223 + $0x80] sm:$0xff]
        %v244 = vld [vmem:[%s223 + $0x88] sm:$0xff]
        %v245 = vld [vmem:[%s223 + $0x90] sm:$0xff]
        %v246 = vld [vmem:[%s223 + $0x98] sm:$0xff]
        %v247 = vld [vmem:[%s223 + $0xa0] sm:$0xff]
        %v248 = vld [vmem:[%s223 + $0xa8] sm:$0xff]
        %v249 = vld [vmem:[%s223 + $0xb0] sm:$0xff]
        %v250 = vld [vmem:[%s223 + $0xb8] sm:$0xff]
        %v251 = vld [vmem:[%s223 + $0xc0] sm:$0xff]
        %v252 = vld [vmem:[%s223 + $0xc8] sm:$0xff]
        %v253 = vld [vmem:[%s223 + $0xd0] sm:$0xff]
        %v254 = vld [vmem:[%s223 + $0xd8] sm:$0xff]
        %v255 = vld [vmem:[%s223 + $0xe0] sm:$0xff]
        %v256 = vld [vmem:[%s223 + $0xe8] sm:$0xff]
        %v257 = vld [vmem:[%s223 + $0xf0] sm:$0xff]
        %v258 = vld [vmem:[%s223 + $0xf8] sm:$0xff]
        %v259 = vld [vmem:[%s223 + $0x100] sm:$0xff]
        %v260 = vld [vmem:[%s223 + $0x108] sm:$0xff]
        %v261 = vld [vmem:[%s223 + $0x110] sm:$0xff]
        %v262 = vld [vmem:[%s223 + $0x118] sm:$0xff]
        %v263 = vld [vmem:[%s223 + $0x120] sm:$0xff]
        %v264 = vld [vmem:[%s223 + $0x128] sm:$0xff]
        %v265 = vld [vmem:[%s223 + $0x130] sm:$0xff]
        %v266 = vld [vmem:[%s223 + $0x138] sm:$0xff]
        %v267 = vld [vmem:[%s223 + $0x140] sm:$0xff]
        %v268 = vld [vmem:[%s223 + $0x148] sm:$0xff]
        %v269 = vld [vmem:[%s223 + $0x150] sm:$0xff]
        %v270 = vld [vmem:[%s223 + $0x158] sm:$0xff]
        %v271 = vld [vmem:[%s223 + $0x160] sm:$0xff]
        %v272 = vld [vmem:[%s223 + $0x168] sm:$0xff]
        %v273 = vld [vmem:[%s223 + $0x170] sm:$0xff]
        %v274 = vld [vmem:[%s223 + $0x178] sm:$0xff]
        %v275 = vld [vmem:[%s223 + $0x180] sm:$0xff]
        %v276 = vld [vmem:[%s223 + $0x188] sm:$0xff]
        %v277 = vld [vmem:[%s223 + $0x190] sm:$0xff]
        %v278 = vld [vmem:[%s223 + $0x198] sm:$0xff]
        %v279 = vld [vmem:[%s223 + $0x1a0] sm:$0xff]
        %v280 = vld [vmem:[%s223 + $0x1a8] sm:$0xff]
        %v281 = vld [vmem:[%s223 + $0x1b0] sm:$0xff]
        %v282 = vld [vmem:[%s223 + $0x1b8] sm:$0xff]
        %v283 = vld [vmem:[%s223 + $0x1c0] sm:$0xff]
        %v284 = vld [vmem:[%s223 + $0x1c8] sm:$0xff]
        %v285 = vld [vmem:[%s223 + $0x1d0] sm:$0xff]
        %v286 = vld [vmem:[%s223 + $0x1d8] sm:$0xff]
        %v287 = vld [vmem:[%s223 + $0x1e0] sm:$0xff]
        %v288 = vld [vmem:[%s223 + $0x1e8] sm:$0xff]
        %v289 = vld [vmem:[%s223 + $0x1f0] sm:$0xff]
        %v290 = vld [vmem:[%s223 + $0x1f8] sm:$0xff]
        %v291 = vld [vmem:[%s223 + $0x200] sm:$0xff]
        %v292 = vld [vmem:[%s223 + $0x208] sm:$0xff]
        %v293 = vld [vmem:[%s223 + $0x210] sm:$0xff]
        %v294 = vld [vmem:[%s223 + $0x218] sm:$0xff]
        %v295 = vld [vmem:[%s223 + $0x220] sm:$0xff]
        %v296 = vld [vmem:[%s223 + $0x228] sm:$0xff]
        %v297 = vld [vmem:[%s223 + $0x230] sm:$0xff]
        %v298 = vld [vmem:[%s223 + $0x238] sm:$0xff]
        %v299 = vld [vmem:[%s223 + $0x240] sm:$0xff]
        %v300 = vld [vmem:[%s223 + $0x248] sm:$0xff]
        %v301 = vld [vmem:[%s223 + $0x250] sm:$0xff]
        %v302 = vld [vmem:[%s223 + $0x258] sm:$0xff]
        %v303 = vld [vmem:[%s223 + $0x260] sm:$0xff]
        %v304 = vld [vmem:[%s223 + $0x268] sm:$0xff]
        %v305 = vld [vmem:[%s223 + $0x270] sm:$0xff]
        %v306 = vld [vmem:[%s223 + $0x278] sm:$0xff]
        %v307 = vld [vmem:[%s223 + $0x280] sm:$0xff]
        %v308 = vld [vmem:[%s223 + $0x288] sm:$0xff]
        %v309 = vld [vmem:[%s223 + $0x290] sm:$0xff]
        %v310 = vld [vmem:[%s223 + $0x298] sm:$0xff]
        %v311 = vld [vmem:[%s223 + $0x2a0] sm:$0xff]
        %v312 = vld [vmem:[%s223 + $0x2a8] sm:$0xff]
        %v313 = vld [vmem:[%s223 + $0x2b0] sm:$0xff]
        %v314 = vld [vmem:[%s223 + $0x2b8] sm:$0xff]
        %v315 = vld [vmem:[%s223 + $0x2c0] sm:$0xff]
        %v316 = vld [vmem:[%s223 + $0x2c8] sm:$0xff]
        %v317 = vld [vmem:[%s223 + $0x2d0] sm:$0xff]
        %v318 = vld [vmem:[%s223 + $0x2d8] sm:$0xff]
        %v319 = vld [vmem:[%s223 + $0x2e0] sm:$0xff]
        %v320 = vld [vmem:[%s223 + $0x2e8] sm:$0xff]
        %v321 = vld [vmem:[%s223 + $0x2f0] sm:$0xff]
        %v322 = vld [vmem:[%s223 + $0x2f8] sm:$0xff]
        %v323 = vld [vmem:[%s223 + $0x300] sm:$0xff]
        %v324 = vld [vmem:[%s223 + $0x308] sm:$0xff]
        %v325 = vld [vmem:[%s223 + $0x310] sm:$0xff]
        %v326 = vld [vmem:[%s223 + $0x318] sm:$0xff]
        %v327 = vld [vmem:[%s223 + $0x320] sm:$0xff]
        %v328 = vld [vmem:[%s223 + $0x328] sm:$0xff]
        %v329 = vld [vmem:[%s223 + $0x330] sm:$0xff]
        %v330 = vld [vmem:[%s223 + $0x338] sm:$0xff]
        %v331 = vld [vmem:[%s223 + $0x340] sm:$0xff]
        %v332 = vld [vmem:[%s223 + $0x348] sm:$0xff]
        %v333 = vld [vmem:[%s223 + $0x350] sm:$0xff]
        %v334 = vld [vmem:[%s223 + $0x358] sm:$0xff]
        %v335 = vld [vmem:[%s223 + $0x360] sm:$0xff]
        %v336 = vld [vmem:[%s223 + $0x368] sm:$0xff]
        %v337 = vld [vmem:[%s223 + $0x370] sm:$0xff]
        %v338 = vld [vmem:[%s223 + $0x378] sm:$0xff]
        %v339 = vld [vmem:[%s223 + $0x380] sm:$0xff]
        %v340 = vld [vmem:[%s223 + $0x388] sm:$0xff]
        %v341 = vld [vmem:[%s223 + $0x390] sm:$0xff]
        %v342 = vld [vmem:[%s223 + $0x398] sm:$0xff]
        %v343 = vld [vmem:[%s223 + $0x3a0] sm:$0xff]
        %v344 = vld [vmem:[%s223 + $0x3a8] sm:$0xff]
        %v345 = vld [vmem:[%s223 + $0x3b0] sm:$0xff]
        %v346 = vld [vmem:[%s223 + $0x3b8] sm:$0xff]
        %v347 = vld [vmem:[%s223 + $0x3c0] sm:$0xff]
        %v348 = vld [vmem:[%s223 + $0x3c8] sm:$0xff]
        %v349 = vld [vmem:[%s223 + $0x3d0] sm:$0xff]
        %v350 = vld [vmem:[%s223 + $0x3d8] sm:$0xff]
        %v351 = vld [vmem:[%s223 + $0x3e0] sm:$0xff]
        %v352 = vld [vmem:[%s223 + $0x3e8] sm:$0xff]
        %v353 = vld [vmem:[%s223 + $0x3f0] sm:$0xff]
        %v354 = vld [vmem:[%s223 + $0x3f8] sm:$0xff]
        %v355 = vld [vmem:[%s2] sm:$0x1]
        %v356 = vld [vmem:[%s4] sm:$0x1]
        %v357 = vlaneseq
        %v358 = vand.u32 %v357, 127
        %359 = vset.pattern.permute.xlu0 0
        %360 = vperm.xlu0 %359, %v227
        %v361 = vpop.permute.xlu0 %360
        %362 = vset.pattern.permute.xlu0 0
        %363 = vperm.xlu0 %362, %v228
        %v364 = vpop.permute.xlu0 %363
        %365 = vset.pattern.permute.xlu0 0
        %366 = vperm.xlu0 %365, %v229
        %v367 = vpop.permute.xlu0 %366
        %368 = vset.pattern.permute.xlu0 0
        %369 = vperm.xlu0 %368, %v230
        %v370 = vpop.permute.xlu0 %369
        %371 = vset.pattern.permute.xlu0 0
        %372 = vperm.xlu0 %371, %v231
        %v373 = vpop.permute.xlu0 %372
        %374 = vset.pattern.permute.xlu0 0
        %375 = vperm.xlu0 %374, %v232
        %v376 = vpop.permute.xlu0 %375
        %377 = vset.pattern.permute.xlu0 0
        %378 = vperm.xlu0 %377, %v233
        %v379 = vpop.permute.xlu0 %378
        %380 = vset.pattern.permute.xlu0 0
        %381 = vperm.xlu0 %380, %v234
        %v382 = vpop.permute.xlu0 %381
        %383 = vset.pattern.permute.xlu0 0
        %384 = vperm.xlu0 %383, %v235
        %v385 = vpop.permute.xlu0 %384
        %386 = vset.pattern.permute.xlu0 0
        %387 = vperm.xlu0 %386, %v236
        %v388 = vpop.permute.xlu0 %387
        %389 = vset.pattern.permute.xlu0 0
        %390 = vperm.xlu0 %389, %v237
        %v391 = vpop.permute.xlu0 %390
        %392 = vset.pattern.permute.xlu0 0
        %393 = vperm.xlu0 %392, %v238
        %v394 = vpop.permute.xlu0 %393
        %395 = vset.pattern.permute.xlu0 0
        %396 = vperm.xlu0 %395, %v239
        %v397 = vpop.permute.xlu0 %396
        %398 = vset.pattern.permute.xlu0 0
        %399 = vperm.xlu0 %398, %v240
        %v400 = vpop.permute.xlu0 %399
        %401 = vset.pattern.permute.xlu0 0
        %402 = vperm.xlu0 %401, %v241
        %v403 = vpop.permute.xlu0 %402
        %404 = vset.pattern.permute.xlu0 0
        %405 = vperm.xlu0 %404, %v242
        %v406 = vpop.permute.xlu0 %405
        %407 = vset.pattern.permute.xlu0 0
        %408 = vperm.xlu0 %407, %v243
        %v409 = vpop.permute.xlu0 %408
        %410 = vset.pattern.permute.xlu0 0
        %411 = vperm.xlu0 %410, %v244
        %v412 = vpop.permute.xlu0 %411
        %413 = vset.pattern.permute.xlu0 0
        %414 = vperm.xlu0 %413, %v245
        %v415 = vpop.permute.xlu0 %414
        %416 = vset.pattern.permute.xlu0 0
        %417 = vperm.xlu0 %416, %v246
        %v418 = vpop.permute.xlu0 %417
        %419 = vset.pattern.permute.xlu0 0
        %420 = vperm.xlu0 %419, %v247
        %v421 = vpop.permute.xlu0 %420
        %422 = vset.pattern.permute.xlu0 0
        %423 = vperm.xlu0 %422, %v248
        %v424 = vpop.permute.xlu0 %423
        %425 = vset.pattern.permute.xlu0 0
        %426 = vperm.xlu0 %425, %v249
        %v427 = vpop.permute.xlu0 %426
        %428 = vset.pattern.permute.xlu0 0
        %429 = vperm.xlu0 %428, %v250
        %v430 = vpop.permute.xlu0 %429
        %431 = vset.pattern.permute.xlu0 0
        %432 = vperm.xlu0 %431, %v251
        %v433 = vpop.permute.xlu0 %432
        %434 = vset.pattern.permute.xlu0 0
        %435 = vperm.xlu0 %434, %v252
        %v436 = vpop.permute.xlu0 %435
        %437 = vset.pattern.permute.xlu0 0
        %438 = vperm.xlu0 %437, %v253
        %v439 = vpop.permute.xlu0 %438
        %440 = vset.pattern.permute.xlu0 0
        %441 = vperm.xlu0 %440, %v254
        %v442 = vpop.permute.xlu0 %441
        %443 = vset.pattern.permute.xlu0 0
        %444 = vperm.xlu0 %443, %v255
        %v445 = vpop.permute.xlu0 %444
        %446 = vset.pattern.permute.xlu0 0
        %447 = vperm.xlu0 %446, %v256
        %v448 = vpop.permute.xlu0 %447
        %449 = vset.pattern.permute.xlu0 0
        %450 = vperm.xlu0 %449, %v257
        %v451 = vpop.permute.xlu0 %450
        %452 = vset.pattern.permute.xlu0 0
        %453 = vperm.xlu0 %452, %v258
        %v454 = vpop.permute.xlu0 %453
        %455 = vset.pattern.permute.xlu0 0
        %456 = vperm.xlu0 %455, %v259
        %v457 = vpop.permute.xlu0 %456
        %458 = vset.pattern.permute.xlu0 0
        %459 = vperm.xlu0 %458, %v260
        %v460 = vpop.permute.xlu0 %459
        %461 = vset.pattern.permute.xlu0 0
        %462 = vperm.xlu0 %461, %v261
        %v463 = vpop.permute.xlu0 %462
        %464 = vset.pattern.permute.xlu0 0
        %465 = vperm.xlu0 %464, %v262
        %v466 = vpop.permute.xlu0 %465
        %467 = vset.pattern.permute.xlu0 0
        %468 = vperm.xlu0 %467, %v263
        %v469 = vpop.permute.xlu0 %468
        %470 = vset.pattern.permute.xlu0 0
        %471 = vperm.xlu0 %470, %v264
        %v472 = vpop.permute.xlu0 %471
        %473 = vset.pattern.permute.xlu0 0
        %474 = vperm.xlu0 %473, %v265
        %v475 = vpop.permute.xlu0 %474
        %476 = vset.pattern.permute.xlu0 0
        %477 = vperm.xlu0 %476, %v266
        %v478 = vpop.permute.xlu0 %477
        %479 = vset.pattern.permute.xlu0 0
        %480 = vperm.xlu0 %479, %v267
        %v481 = vpop.permute.xlu0 %480
        %482 = vset.pattern.permute.xlu0 0
        %483 = vperm.xlu0 %482, %v268
        %v484 = vpop.permute.xlu0 %483
        %485 = vset.pattern.permute.xlu0 0
        %486 = vperm.xlu0 %485, %v269
        %v487 = vpop.permute.xlu0 %486
        %488 = vset.pattern.permute.xlu0 0
        %489 = vperm.xlu0 %488, %v270
        %v490 = vpop.permute.xlu0 %489
        %491 = vset.pattern.permute.xlu0 0
        %492 = vperm.xlu0 %491, %v271
        %v493 = vpop.permute.xlu0 %492
        %494 = vset.pattern.permute.xlu0 0
        %495 = vperm.xlu0 %494, %v272
        %v496 = vpop.permute.xlu0 %495
        %497 = vset.pattern.permute.xlu0 0
        %498 = vperm.xlu0 %497, %v273
        %v499 = vpop.permute.xlu0 %498
        %500 = vset.pattern.permute.xlu0 0
        %501 = vperm.xlu0 %500, %v274
        %v502 = vpop.permute.xlu0 %501
        %503 = vset.pattern.permute.xlu0 0
        %504 = vperm.xlu0 %503, %v275
        %v505 = vpop.permute.xlu0 %504
        %506 = vset.pattern.permute.xlu0 0
        %507 = vperm.xlu0 %506, %v276
        %v508 = vpop.permute.xlu0 %507
        %509 = vset.pattern.permute.xlu0 0
        %510 = vperm.xlu0 %509, %v277
        %v511 = vpop.permute.xlu0 %510
        %512 = vset.pattern.permute.xlu0 0
        %513 = vperm.xlu0 %512, %v278
        %v514 = vpop.permute.xlu0 %513
        %515 = vset.pattern.permute.xlu0 0
        %516 = vperm.xlu0 %515, %v279
        %v517 = vpop.permute.xlu0 %516
        %518 = vset.pattern.permute.xlu0 0
        %519 = vperm.xlu0 %518, %v280
        %v520 = vpop.permute.xlu0 %519
        %521 = vset.pattern.permute.xlu0 0
        %522 = vperm.xlu0 %521, %v281
        %v523 = vpop.permute.xlu0 %522
        %524 = vset.pattern.permute.xlu0 0
        %525 = vperm.xlu0 %524, %v282
        %v526 = vpop.permute.xlu0 %525
        %527 = vset.pattern.permute.xlu0 0
        %528 = vperm.xlu0 %527, %v283
        %v529 = vpop.permute.xlu0 %528
        %530 = vset.pattern.permute.xlu0 0
        %531 = vperm.xlu0 %530, %v284
        %v532 = vpop.permute.xlu0 %531
        %533 = vset.pattern.permute.xlu0 0
        %534 = vperm.xlu0 %533, %v285
        %v535 = vpop.permute.xlu0 %534
        %536 = vset.pattern.permute.xlu0 0
        %537 = vperm.xlu0 %536, %v286
        %v538 = vpop.permute.xlu0 %537
        %539 = vset.pattern.permute.xlu0 0
        %540 = vperm.xlu0 %539, %v287
        %v541 = vpop.permute.xlu0 %540
        %542 = vset.pattern.permute.xlu0 0
        %543 = vperm.xlu0 %542, %v288
        %v544 = vpop.permute.xlu0 %543
        %545 = vset.pattern.permute.xlu0 0
        %546 = vperm.xlu0 %545, %v289
        %v547 = vpop.permute.xlu0 %546
        %548 = vset.pattern.permute.xlu0 0
        %549 = vperm.xlu0 %548, %v290
        %v550 = vpop.permute.xlu0 %549
        %551 = vset.pattern.permute.xlu0 0
        %552 = vperm.xlu0 %551, %v291
        %v553 = vpop.permute.xlu0 %552
        %554 = vset.pattern.permute.xlu0 0
        %555 = vperm.xlu0 %554, %v292
        %v556 = vpop.permute.xlu0 %555
        %557 = vset.pattern.permute.xlu0 0
        %558 = vperm.xlu0 %557, %v293
        %v559 = vpop.permute.xlu0 %558
        %560 = vset.pattern.permute.xlu0 0
        %561 = vperm.xlu0 %560, %v294
        %v562 = vpop.permute.xlu0 %561
        %563 = vset.pattern.permute.xlu0 0
        %564 = vperm.xlu0 %563, %v295
        %v565 = vpop.permute.xlu0 %564
        %566 = vset.pattern.permute.xlu0 0
        %567 = vperm.xlu0 %566, %v296
        %v568 = vpop.permute.xlu0 %567
        %569 = vset.pattern.permute.xlu0 0
        %570 = vperm.xlu0 %569, %v297
        %v571 = vpop.permute.xlu0 %570
        %572 = vset.pattern.permute.xlu0 0
        %573 = vperm.xlu0 %572, %v298
        %v574 = vpop.permute.xlu0 %573
        %575 = vset.pattern.permute.xlu0 0
        %576 = vperm.xlu0 %575, %v299
        %v577 = vpop.permute.xlu0 %576
        %578 = vset.pattern.permute.xlu0 0
        %579 = vperm.xlu0 %578, %v300
        %v580 = vpop.permute.xlu0 %579
        %581 = vset.pattern.permute.xlu0 0
        %582 = vperm.xlu0 %581, %v301
        %v583 = vpop.permute.xlu0 %582
        %584 = vset.pattern.permute.xlu0 0
        %585 = vperm.xlu0 %584, %v302
        %v586 = vpop.permute.xlu0 %585
        %587 = vset.pattern.permute.xlu0 0
        %588 = vperm.xlu0 %587, %v303
        %v589 = vpop.permute.xlu0 %588
        %590 = vset.pattern.permute.xlu0 0
        %591 = vperm.xlu0 %590, %v304
        %v592 = vpop.permute.xlu0 %591
        %593 = vset.pattern.permute.xlu0 0
        %594 = vperm.xlu0 %593, %v305
        %v595 = vpop.permute.xlu0 %594
        %596 = vset.pattern.permute.xlu0 0
        %597 = vperm.xlu0 %596, %v306
        %v598 = vpop.permute.xlu0 %597
        %599 = vset.pattern.permute.xlu0 0
        %600 = vperm.xlu0 %599, %v307
        %v601 = vpop.permute.xlu0 %600
        %602 = vset.pattern.permute.xlu0 0
        %603 = vperm.xlu0 %602, %v308
        %v604 = vpop.permute.xlu0 %603
        %605 = vset.pattern.permute.xlu0 0
        %606 = vperm.xlu0 %605, %v309
        %v607 = vpop.permute.xlu0 %606
        %608 = vset.pattern.permute.xlu0 0
        %609 = vperm.xlu0 %608, %v310
        %v610 = vpop.permute.xlu0 %609
        %611 = vset.pattern.permute.xlu0 0
        %612 = vperm.xlu0 %611, %v311
        %v613 = vpop.permute.xlu0 %612
        %614 = vset.pattern.permute.xlu0 0
        %615 = vperm.xlu0 %614, %v312
        %v616 = vpop.permute.xlu0 %615
        %617 = vset.pattern.permute.xlu0 0
        %618 = vperm.xlu0 %617, %v313
        %v619 = vpop.permute.xlu0 %618
        %620 = vset.pattern.permute.xlu0 0
        %621 = vperm.xlu0 %620, %v314
        %v622 = vpop.permute.xlu0 %621
        %623 = vset.pattern.permute.xlu0 0
        %624 = vperm.xlu0 %623, %v315
        %v625 = vpop.permute.xlu0 %624
        %626 = vset.pattern.permute.xlu0 0
        %627 = vperm.xlu0 %626, %v316
        %v628 = vpop.permute.xlu0 %627
        %629 = vset.pattern.permute.xlu0 0
        %630 = vperm.xlu0 %629, %v317
        %v631 = vpop.permute.xlu0 %630
        %632 = vset.pattern.permute.xlu0 0
        %633 = vperm.xlu0 %632, %v318
        %v634 = vpop.permute.xlu0 %633
        %635 = vset.pattern.permute.xlu0 0
        %636 = vperm.xlu0 %635, %v319
        %v637 = vpop.permute.xlu0 %636
        %638 = vset.pattern.permute.xlu0 0
        %639 = vperm.xlu0 %638, %v320
        %v640 = vpop.permute.xlu0 %639
        %641 = vset.pattern.permute.xlu0 0
        %642 = vperm.xlu0 %641, %v321
        %v643 = vpop.permute.xlu0 %642
        %644 = vset.pattern.permute.xlu0 0
        %645 = vperm.xlu0 %644, %v322
        %v646 = vpop.permute.xlu0 %645
        %647 = vset.pattern.permute.xlu0 0
        %648 = vperm.xlu0 %647, %v323
        %v649 = vpop.permute.xlu0 %648
        %650 = vset.pattern.permute.xlu0 0
        %651 = vperm.xlu0 %650, %v324
        %v652 = vpop.permute.xlu0 %651
        %653 = vset.pattern.permute.xlu0 0
        %654 = vperm.xlu0 %653, %v325
        %v655 = vpop.permute.xlu0 %654
        %656 = vset.pattern.permute.xlu0 0
        %657 = vperm.xlu0 %656, %v326
        %v658 = vpop.permute.xlu0 %657
        %659 = vset.pattern.permute.xlu0 0
        %660 = vperm.xlu0 %659, %v327
        %v661 = vpop.permute.xlu0 %660
        %662 = vset.pattern.permute.xlu0 0
        %663 = vperm.xlu0 %662, %v328
        %v664 = vpop.permute.xlu0 %663
        %665 = vset.pattern.permute.xlu0 0
        %666 = vperm.xlu0 %665, %v329
        %v667 = vpop.permute.xlu0 %666
        %668 = vset.pattern.permute.xlu0 0
        %669 = vperm.xlu0 %668, %v330
        %v670 = vpop.permute.xlu0 %669
        %671 = vset.pattern.permute.xlu0 0
        %672 = vperm.xlu0 %671, %v331
        %v673 = vpop.permute.xlu0 %672
        %674 = vset.pattern.permute.xlu0 0
        %675 = vperm.xlu0 %674, %v332
        %v676 = vpop.permute.xlu0 %675
        %677 = vset.pattern.permute.xlu0 0
        %678 = vperm.xlu0 %677, %v333
        %v679 = vpop.permute.xlu0 %678
        %680 = vset.pattern.permute.xlu0 0
        %681 = vperm.xlu0 %680, %v334
        %v682 = vpop.permute.xlu0 %681
        %683 = vset.pattern.permute.xlu0 0
        %684 = vperm.xlu0 %683, %v335
        %v685 = vpop.permute.xlu0 %684
        %686 = vset.pattern.permute.xlu0 0
        %687 = vperm.xlu0 %686, %v336
        %v688 = vpop.permute.xlu0 %687
        %689 = vset.pattern.permute.xlu0 0
        %690 = vperm.xlu0 %689, %v337
        %v691 = vpop.permute.xlu0 %690
        %692 = vset.pattern.permute.xlu0 0
        %693 = vperm.xlu0 %692, %v338
        %v694 = vpop.permute.xlu0 %693
        %695 = vset.pattern.permute.xlu0 0
        %696 = vperm.xlu0 %695, %v339
        %v697 = vpop.permute.xlu0 %696
        %698 = vset.pattern.permute.xlu0 0
        %699 = vperm.xlu0 %698, %v340
        %v700 = vpop.permute.xlu0 %699
        %701 = vset.pattern.permute.xlu0 0
        %702 = vperm.xlu0 %701, %v341
        %v703 = vpop.permute.xlu0 %702
        %704 = vset.pattern.permute.xlu0 0
        %705 = vperm.xlu0 %704, %v342
        %v706 = vpop.permute.xlu0 %705
        %707 = vset.pattern.permute.xlu0 0
        %708 = vperm.xlu0 %707, %v343
        %v709 = vpop.permute.xlu0 %708
        %710 = vset.pattern.permute.xlu0 0
        %711 = vperm.xlu0 %710, %v344
        %v712 = vpop.permute.xlu0 %711
        %713 = vset.pattern.permute.xlu0 0
        %714 = vperm.xlu0 %713, %v345
        %v715 = vpop.permute.xlu0 %714
        %716 = vset.pattern.permute.xlu0 0
        %717 = vperm.xlu0 %716, %v346
        %v718 = vpop.permute.xlu0 %717
        %719 = vset.pattern.permute.xlu0 0
        %720 = vperm.xlu0 %719, %v347
        %v721 = vpop.permute.xlu0 %720
        %722 = vset.pattern.permute.xlu0 0
        %723 = vperm.xlu0 %722, %v348
        %v724 = vpop.permute.xlu0 %723
        %725 = vset.pattern.permute.xlu0 0
        %726 = vperm.xlu0 %725, %v349
        %v727 = vpop.permute.xlu0 %726
        %728 = vset.pattern.permute.xlu0 0
        %729 = vperm.xlu0 %728, %v350
        %v730 = vpop.permute.xlu0 %729
        %731 = vset.pattern.permute.xlu0 0
        %732 = vperm.xlu0 %731, %v351
        %v733 = vpop.permute.xlu0 %732
        %734 = vset.pattern.permute.xlu0 0
        %735 = vperm.xlu0 %734, %v352
        %v736 = vpop.permute.xlu0 %735
        %737 = vset.pattern.permute.xlu0 0
        %738 = vperm.xlu0 %737, %v353
        %v739 = vpop.permute.xlu0 %738
        %740 = vset.pattern.permute.xlu0 0
        %741 = vperm.xlu0 %740, %v354
        %v742 = vpop.permute.xlu0 %741
        %vm743 = vcmp.eq.s32.totalorder %v361, %v358
        %vm744 = vcmp.eq.s32.totalorder %v364, %v358
        %vm745 = vcmp.eq.s32.totalorder %v367, %v358
        %vm746 = vcmp.eq.s32.totalorder %v370, %v358
        %vm747 = vcmp.eq.s32.totalorder %v373, %v358
        %vm748 = vcmp.eq.s32.totalorder %v376, %v358
        %vm749 = vcmp.eq.s32.totalorder %v379, %v358
        %vm750 = vcmp.eq.s32.totalorder %v382, %v358
        %vm751 = vcmp.eq.s32.totalorder %v385, %v358
        %vm752 = vcmp.eq.s32.totalorder %v388, %v358
        %vm753 = vcmp.eq.s32.totalorder %v391, %v358
        %vm754 = vcmp.eq.s32.totalorder %v394, %v358
        %vm755 = vcmp.eq.s32.totalorder %v397, %v358
        %vm756 = vcmp.eq.s32.totalorder %v400, %v358
        %vm757 = vcmp.eq.s32.totalorder %v403, %v358
        %vm758 = vcmp.eq.s32.totalorder %v406, %v358
        %vm759 = vcmp.eq.s32.totalorder %v409, %v358
        %vm760 = vcmp.eq.s32.totalorder %v412, %v358
        %vm761 = vcmp.eq.s32.totalorder %v415, %v358
        %vm762 = vcmp.eq.s32.totalorder %v418, %v358
        %vm763 = vcmp.eq.s32.totalorder %v421, %v358
        %vm764 = vcmp.eq.s32.totalorder %v424, %v358
        %vm765 = vcmp.eq.s32.totalorder %v427, %v358
        %vm766 = vcmp.eq.s32.totalorder %v430, %v358
        %vm767 = vcmp.eq.s32.totalorder %v433, %v358
        %vm768 = vcmp.eq.s32.totalorder %v436, %v358
        %vm769 = vcmp.eq.s32.totalorder %v439, %v358
        %vm770 = vcmp.eq.s32.totalorder %v442, %v358
        %vm771 = vcmp.eq.s32.totalorder %v445, %v358
        %vm772 = vcmp.eq.s32.totalorder %v448, %v358
        %vm773 = vcmp.eq.s32.totalorder %v451, %v358
        %vm774 = vcmp.eq.s32.totalorder %v454, %v358
        %vm775 = vcmp.eq.s32.totalorder %v457, %v358
        %vm776 = vcmp.eq.s32.totalorder %v460, %v358
        %vm777 = vcmp.eq.s32.totalorder %v463, %v358
        %vm778 = vcmp.eq.s32.totalorder %v466, %v358
        %vm779 = vcmp.eq.s32.totalorder %v469, %v358
        %vm780 = vcmp.eq.s32.totalorder %v472, %v358
        %vm781 = vcmp.eq.s32.totalorder %v475, %v358
        %vm782 = vcmp.eq.s32.totalorder %v478, %v358
        %vm783 = vcmp.eq.s32.totalorder %v481, %v358
        %vm784 = vcmp.eq.s32.totalorder %v484, %v358
        %vm785 = vcmp.eq.s32.totalorder %v487, %v358
        %vm786 = vcmp.eq.s32.totalorder %v490, %v358
        %vm787 = vcmp.eq.s32.totalorder %v493, %v358
        %vm788 = vcmp.eq.s32.totalorder %v496, %v358
        %vm789 = vcmp.eq.s32.totalorder %v499, %v358
        %vm790 = vcmp.eq.s32.totalorder %v502, %v358
        %vm791 = vcmp.eq.s32.totalorder %v505, %v358
        %vm792 = vcmp.eq.s32.totalorder %v508, %v358
        %vm793 = vcmp.eq.s32.totalorder %v511, %v358
        %vm794 = vcmp.eq.s32.totalorder %v514, %v358
        %vm795 = vcmp.eq.s32.totalorder %v517, %v358
        %vm796 = vcmp.eq.s32.totalorder %v520, %v358
        %vm797 = vcmp.eq.s32.totalorder %v523, %v358
        %vm798 = vcmp.eq.s32.totalorder %v526, %v358
        %vm799 = vcmp.eq.s32.totalorder %v529, %v358
        %vm800 = vcmp.eq.s32.totalorder %v532, %v358
        %vm801 = vcmp.eq.s32.totalorder %v535, %v358
        %vm802 = vcmp.eq.s32.totalorder %v538, %v358
        %vm803 = vcmp.eq.s32.totalorder %v541, %v358
        %vm804 = vcmp.eq.s32.totalorder %v544, %v358
        %vm805 = vcmp.eq.s32.totalorder %v547, %v358
        %vm806 = vcmp.eq.s32.totalorder %v550, %v358
        %vm807 = vcmp.eq.s32.totalorder %v553, %v358
        %vm808 = vcmp.eq.s32.totalorder %v556, %v358
        %vm809 = vcmp.eq.s32.totalorder %v559, %v358
        %vm810 = vcmp.eq.s32.totalorder %v562, %v358
        %vm811 = vcmp.eq.s32.totalorder %v565, %v358
        %vm812 = vcmp.eq.s32.totalorder %v568, %v358
        %vm813 = vcmp.eq.s32.totalorder %v571, %v358
        %vm814 = vcmp.eq.s32.totalorder %v574, %v358
        %vm815 = vcmp.eq.s32.totalorder %v577, %v358
        %vm816 = vcmp.eq.s32.totalorder %v580, %v358
        %vm817 = vcmp.eq.s32.totalorder %v583, %v358
        %vm818 = vcmp.eq.s32.totalorder %v586, %v358
        %vm819 = vcmp.eq.s32.totalorder %v589, %v358
        %vm820 = vcmp.eq.s32.totalorder %v592, %v358
        %vm821 = vcmp.eq.s32.totalorder %v595, %v358
        %vm822 = vcmp.eq.s32.totalorder %v598, %v358
        %vm823 = vcmp.eq.s32.totalorder %v601, %v358
        %vm824 = vcmp.eq.s32.totalorder %v604, %v358
        %vm825 = vcmp.eq.s32.totalorder %v607, %v358
        %vm826 = vcmp.eq.s32.totalorder %v610, %v358
        %vm827 = vcmp.eq.s32.totalorder %v613, %v358
        %vm828 = vcmp.eq.s32.totalorder %v616, %v358
        %vm829 = vcmp.eq.s32.totalorder %v619, %v358
        %vm830 = vcmp.eq.s32.totalorder %v622, %v358
        %vm831 = vcmp.eq.s32.totalorder %v625, %v358
        %vm832 = vcmp.eq.s32.totalorder %v628, %v358
        %vm833 = vcmp.eq.s32.totalorder %v631, %v358
        %vm834 = vcmp.eq.s32.totalorder %v634, %v358
        %vm835 = vcmp.eq.s32.totalorder %v637, %v358
        %vm836 = vcmp.eq.s32.totalorder %v640, %v358
        %vm837 = vcmp.eq.s32.totalorder %v643, %v358
        %vm838 = vcmp.eq.s32.totalorder %v646, %v358
        %vm839 = vcmp.eq.s32.totalorder %v649, %v358
        %vm840 = vcmp.eq.s32.totalorder %v652, %v358
        %vm841 = vcmp.eq.s32.totalorder %v655, %v358
        %vm842 = vcmp.eq.s32.totalorder %v658, %v358
        %vm843 = vcmp.eq.s32.totalorder %v661, %v358
        %vm844 = vcmp.eq.s32.totalorder %v664, %v358
        %vm845 = vcmp.eq.s32.totalorder %v667, %v358
        %vm846 = vcmp.eq.s32.totalorder %v670, %v358
        %vm847 = vcmp.eq.s32.totalorder %v673, %v358
        %vm848 = vcmp.eq.s32.totalorder %v676, %v358
        %vm849 = vcmp.eq.s32.totalorder %v679, %v358
        %vm850 = vcmp.eq.s32.totalorder %v682, %v358
        %vm851 = vcmp.eq.s32.totalorder %v685, %v358
        %vm852 = vcmp.eq.s32.totalorder %v688, %v358
        %vm853 = vcmp.eq.s32.totalorder %v691, %v358
        %vm854 = vcmp.eq.s32.totalorder %v694, %v358
        %vm855 = vcmp.eq.s32.totalorder %v697, %v358
        %vm856 = vcmp.eq.s32.totalorder %v700, %v358
        %vm857 = vcmp.eq.s32.totalorder %v703, %v358
        %vm858 = vcmp.eq.s32.totalorder %v706, %v358
        %vm859 = vcmp.eq.s32.totalorder %v709, %v358
        %vm860 = vcmp.eq.s32.totalorder %v712, %v358
        %vm861 = vcmp.eq.s32.totalorder %v715, %v358
        %vm862 = vcmp.eq.s32.totalorder %v718, %v358
        %vm863 = vcmp.eq.s32.totalorder %v721, %v358
        %vm864 = vcmp.eq.s32.totalorder %v724, %v358
        %vm865 = vcmp.eq.s32.totalorder %v727, %v358
        %vm866 = vcmp.eq.s32.totalorder %v730, %v358
        %vm867 = vcmp.eq.s32.totalorder %v733, %v358
        %vm868 = vcmp.eq.s32.totalorder %v736, %v358
        %vm869 = vcmp.eq.s32.totalorder %v739, %v358
        %vm870 = vcmp.eq.s32.totalorder %v742, %v358
        %v871 = vsel %vm743, 1, 0
        %v872 = vsel %vm744, 1, 0
        %v873 = vsel %vm745, 1, 0
        %v874 = vsel %vm746, 1, 0
        %v875 = vsel %vm747, 1, 0
        %v876 = vsel %vm748, 1, 0
        %v877 = vsel %vm749, 1, 0
        %v878 = vsel %vm750, 1, 0
        %v879 = vsel %vm751, 1, 0
        %v880 = vsel %vm752, 1, 0
        %v881 = vsel %vm753, 1, 0
        %v882 = vsel %vm754, 1, 0
        %v883 = vsel %vm755, 1, 0
        %v884 = vsel %vm756, 1, 0
        %v885 = vsel %vm757, 1, 0
        %v886 = vsel %vm758, 1, 0
        %v887 = vsel %vm759, 1, 0
        %v888 = vsel %vm760, 1, 0
        %v889 = vsel %vm761, 1, 0
        %v890 = vsel %vm762, 1, 0
        %v891 = vsel %vm763, 1, 0
        %v892 = vsel %vm764, 1, 0
        %v893 = vsel %vm765, 1, 0
        %v894 = vsel %vm766, 1, 0
        %v895 = vsel %vm767, 1, 0
        %v896 = vsel %vm768, 1, 0
        %v897 = vsel %vm769, 1, 0
        %v898 = vsel %vm770, 1, 0
        %v899 = vsel %vm771, 1, 0
        %v900 = vsel %vm772, 1, 0
        %v901 = vsel %vm773, 1, 0
        %v902 = vsel %vm774, 1, 0
        %v903 = vsel %vm775, 1, 0
        %v904 = vsel %vm776, 1, 0
        %v905 = vsel %vm777, 1, 0
        %v906 = vsel %vm778, 1, 0
        %v907 = vsel %vm779, 1, 0
        %v908 = vsel %vm780, 1, 0
        %v909 = vsel %vm781, 1, 0
        %v910 = vsel %vm782, 1, 0
        %v911 = vsel %vm783, 1, 0
        %v912 = vsel %vm784, 1, 0
        %v913 = vsel %vm785, 1, 0
        %v914 = vsel %vm786, 1, 0
        %v915 = vsel %vm787, 1, 0
        %v916 = vsel %vm788, 1, 0
        %v917 = vsel %vm789, 1, 0
        %v918 = vsel %vm790, 1, 0
        %v919 = vsel %vm791, 1, 0
        %v920 = vsel %vm792, 1, 0
        %v921 = vsel %vm793, 1, 0
        %v922 = vsel %vm794, 1, 0
        %v923 = vsel %vm795, 1, 0
        %v924 = vsel %vm796, 1, 0
        %v925 = vsel %vm797, 1, 0
        %v926 = vsel %vm798, 1, 0
        %v927 = vsel %vm799, 1, 0
        %v928 = vsel %vm800, 1, 0
        %v929 = vsel %vm801, 1, 0
        %v930 = vsel %vm802, 1, 0
        %v931 = vsel %vm803, 1, 0
        %v932 = vsel %vm804, 1, 0
        %v933 = vsel %vm805, 1, 0
        %v934 = vsel %vm806, 1, 0
        %v935 = vsel %vm807, 1, 0
        %v936 = vsel %vm808, 1, 0
        %v937 = vsel %vm809, 1, 0
        %v938 = vsel %vm810, 1, 0
        %v939 = vsel %vm811, 1, 0
        %v940 = vsel %vm812, 1, 0
        %v941 = vsel %vm813, 1, 0
        %v942 = vsel %vm814, 1, 0
        %v943 = vsel %vm815, 1, 0
        %v944 = vsel %vm816, 1, 0
        %v945 = vsel %vm817, 1, 0
        %v946 = vsel %vm818, 1, 0
        %v947 = vsel %vm819, 1, 0
        %v948 = vsel %vm820, 1, 0
        %v949 = vsel %vm821, 1, 0
        %v950 = vsel %vm822, 1, 0
        %v951 = vsel %vm823, 1, 0
        %v952 = vsel %vm824, 1, 0
        %v953 = vsel %vm825, 1, 0
        %v954 = vsel %vm826, 1, 0
        %v955 = vsel %vm827, 1, 0
        %v956 = vsel %vm828, 1, 0
        %v957 = vsel %vm829, 1, 0
        %v958 = vsel %vm830, 1, 0
        %v959 = vsel %vm831, 1, 0
        %v960 = vsel %vm832, 1, 0
        %v961 = vsel %vm833, 1, 0
        %v962 = vsel %vm834, 1, 0
        %v963 = vsel %vm835, 1, 0
        %v964 = vsel %vm836, 1, 0
        %v965 = vsel %vm837, 1, 0
        %v966 = vsel %vm838, 1, 0
        %v967 = vsel %vm839, 1, 0
        %v968 = vsel %vm840, 1, 0
        %v969 = vsel %vm841, 1, 0
        %v970 = vsel %vm842, 1, 0
        %v971 = vsel %vm843, 1, 0
        %v972 = vsel %vm844, 1, 0
        %v973 = vsel %vm845, 1, 0
        %v974 = vsel %vm846, 1, 0
        %v975 = vsel %vm847, 1, 0
        %v976 = vsel %vm848, 1, 0
        %v977 = vsel %vm849, 1, 0
        %v978 = vsel %vm850, 1, 0
        %v979 = vsel %vm851, 1, 0
        %v980 = vsel %vm852, 1, 0
        %v981 = vsel %vm853, 1, 0
        %v982 = vsel %vm854, 1, 0
        %v983 = vsel %vm855, 1, 0
        %v984 = vsel %vm856, 1, 0
        %v985 = vsel %vm857, 1, 0
        %v986 = vsel %vm858, 1, 0
        %v987 = vsel %vm859, 1, 0
        %v988 = vsel %vm860, 1, 0
        %v989 = vsel %vm861, 1, 0
        %v990 = vsel %vm862, 1, 0
        %v991 = vsel %vm863, 1, 0
        %v992 = vsel %vm864, 1, 0
        %v993 = vsel %vm865, 1, 0
        %v994 = vsel %vm866, 1, 0
        %v995 = vsel %vm867, 1, 0
        %v996 = vsel %vm868, 1, 0
        %v997 = vsel %vm869, 1, 0
        %v998 = vsel %vm870, 1, 0
        %v999 = vcvt.s32.f32 %v871
        %v1000 = vcvt.s32.f32 %v872
        %v1001 = vcvt.s32.f32 %v873
        %v1002 = vcvt.s32.f32 %v874
        %v1003 = vcvt.s32.f32 %v875
        %v1004 = vcvt.s32.f32 %v876
        %v1005 = vcvt.s32.f32 %v877
        %v1006 = vcvt.s32.f32 %v878
        %v1007 = vcvt.s32.f32 %v879
        %v1008 = vcvt.s32.f32 %v880
        %v1009 = vcvt.s32.f32 %v881
        %v1010 = vcvt.s32.f32 %v882
        %v1011 = vcvt.s32.f32 %v883
        %v1012 = vcvt.s32.f32 %v884
        %v1013 = vcvt.s32.f32 %v885
        %v1014 = vcvt.s32.f32 %v886
        %v1015 = vcvt.s32.f32 %v887
        %v1016 = vcvt.s32.f32 %v888
        %v1017 = vcvt.s32.f32 %v889
        %v1018 = vcvt.s32.f32 %v890
        %v1019 = vcvt.s32.f32 %v891
        %v1020 = vcvt.s32.f32 %v892
        %v1021 = vcvt.s32.f32 %v893
        %v1022 = vcvt.s32.f32 %v894
        %v1023 = vcvt.s32.f32 %v895
        %v1024 = vcvt.s32.f32 %v896
        %v1025 = vcvt.s32.f32 %v897
        %v1026 = vcvt.s32.f32 %v898
        %v1027 = vcvt.s32.f32 %v899
        %v1028 = vcvt.s32.f32 %v900
        %v1029 = vcvt.s32.f32 %v901
        %v1030 = vcvt.s32.f32 %v902
        %v1031 = vcvt.s32.f32 %v903
        %v1032 = vcvt.s32.f32 %v904
        %v1033 = vcvt.s32.f32 %v905
        %v1034 = vcvt.s32.f32 %v906
        %v1035 = vcvt.s32.f32 %v907
        %v1036 = vcvt.s32.f32 %v908
        %v1037 = vcvt.s32.f32 %v909
        %v1038 = vcvt.s32.f32 %v910
        %v1039 = vcvt.s32.f32 %v911
        %v1040 = vcvt.s32.f32 %v912
        %v1041 = vcvt.s32.f32 %v913
        %v1042 = vcvt.s32.f32 %v914
        %v1043 = vcvt.s32.f32 %v915
        %v1044 = vcvt.s32.f32 %v916
        %v1045 = vcvt.s32.f32 %v917
        %v1046 = vcvt.s32.f32 %v918
        %v1047 = vcvt.s32.f32 %v919
        %v1048 = vcvt.s32.f32 %v920
        %v1049 = vcvt.s32.f32 %v921
        %v1050 = vcvt.s32.f32 %v922
        %v1051 = vcvt.s32.f32 %v923
        %v1052 = vcvt.s32.f32 %v924
        %v1053 = vcvt.s32.f32 %v925
        %v1054 = vcvt.s32.f32 %v926
        %v1055 = vcvt.s32.f32 %v927
        %v1056 = vcvt.s32.f32 %v928
        %v1057 = vcvt.s32.f32 %v929
        %v1058 = vcvt.s32.f32 %v930
        %v1059 = vcvt.s32.f32 %v931
        %v1060 = vcvt.s32.f32 %v932
        %v1061 = vcvt.s32.f32 %v933
        %v1062 = vcvt.s32.f32 %v934
        %v1063 = vcvt.s32.f32 %v935
        %v1064 = vcvt.s32.f32 %v936
        %v1065 = vcvt.s32.f32 %v937
        %v1066 = vcvt.s32.f32 %v938
        %v1067 = vcvt.s32.f32 %v939
        %v1068 = vcvt.s32.f32 %v940
        %v1069 = vcvt.s32.f32 %v941
        %v1070 = vcvt.s32.f32 %v942
        %v1071 = vcvt.s32.f32 %v943
        %v1072 = vcvt.s32.f32 %v944
        %v1073 = vcvt.s32.f32 %v945
        %v1074 = vcvt.s32.f32 %v946
        %v1075 = vcvt.s32.f32 %v947
        %v1076 = vcvt.s32.f32 %v948
        %v1077 = vcvt.s32.f32 %v949
        %v1078 = vcvt.s32.f32 %v950
        %v1079 = vcvt.s32.f32 %v951
        %v1080 = vcvt.s32.f32 %v952
        %v1081 = vcvt.s32.f32 %v953
        %v1082 = vcvt.s32.f32 %v954
        %v1083 = vcvt.s32.f32 %v955
        %v1084 = vcvt.s32.f32 %v956
        %v1085 = vcvt.s32.f32 %v957
        %v1086 = vcvt.s32.f32 %v958
        %v1087 = vcvt.s32.f32 %v959
        %v1088 = vcvt.s32.f32 %v960
        %v1089 = vcvt.s32.f32 %v961
        %v1090 = vcvt.s32.f32 %v962
        %v1091 = vcvt.s32.f32 %v963
        %v1092 = vcvt.s32.f32 %v964
        %v1093 = vcvt.s32.f32 %v965
        %v1094 = vcvt.s32.f32 %v966
        %v1095 = vcvt.s32.f32 %v967
        %v1096 = vcvt.s32.f32 %v968
        %v1097 = vcvt.s32.f32 %v969
        %v1098 = vcvt.s32.f32 %v970
        %v1099 = vcvt.s32.f32 %v971
        %v1100 = vcvt.s32.f32 %v972
        %v1101 = vcvt.s32.f32 %v973
        %v1102 = vcvt.s32.f32 %v974
        %v1103 = vcvt.s32.f32 %v975
        %v1104 = vcvt.s32.f32 %v976
        %v1105 = vcvt.s32.f32 %v977
        %v1106 = vcvt.s32.f32 %v978
        %v1107 = vcvt.s32.f32 %v979
        %v1108 = vcvt.s32.f32 %v980
        %v1109 = vcvt.s32.f32 %v981
        %v1110 = vcvt.s32.f32 %v982
        %v1111 = vcvt.s32.f32 %v983
        %v1112 = vcvt.s32.f32 %v984
        %v1113 = vcvt.s32.f32 %v985
        %v1114 = vcvt.s32.f32 %v986
        %v1115 = vcvt.s32.f32 %v987
        %v1116 = vcvt.s32.f32 %v988
        %v1117 = vcvt.s32.f32 %v989
        %v1118 = vcvt.s32.f32 %v990
        %v1119 = vcvt.s32.f32 %v991
        %v1120 = vcvt.s32.f32 %v992
        %v1121 = vcvt.s32.f32 %v993
        %v1122 = vcvt.s32.f32 %v994
        %v1123 = vcvt.s32.f32 %v995
        %v1124 = vcvt.s32.f32 %v996
        %v1125 = vcvt.s32.f32 %v997
        %v1126 = vcvt.s32.f32 %v998
        %v1127 = vpack.c.bf16 %v1000, %v999
        %v1128 = vpack.c.bf16 %v1002, %v1001
        %v1129 = vpack.c.bf16 %v1004, %v1003
        %v1130 = vpack.c.bf16 %v1006, %v1005
        %v1131 = vpack.c.bf16 %v1008, %v1007
        %v1132 = vpack.c.bf16 %v1010, %v1009
        %v1133 = vpack.c.bf16 %v1012, %v1011
        %v1134 = vpack.c.bf16 %v1014, %v1013
        %v1135 = vpack.c.bf16 %v1016, %v1015
        %v1136 = vpack.c.bf16 %v1018, %v1017
        %v1137 = vpack.c.bf16 %v1020, %v1019
        %v1138 = vpack.c.bf16 %v1022, %v1021
        %v1139 = vpack.c.bf16 %v1024, %v1023
        %v1140 = vpack.c.bf16 %v1026, %v1025
        %v1141 = vpack.c.bf16 %v1028, %v1027
        %v1142 = vpack.c.bf16 %v1030, %v1029
        %v1143 = vpack.c.bf16 %v1032, %v1031
        %v1144 = vpack.c.bf16 %v1034, %v1033
        %v1145 = vpack.c.bf16 %v1036, %v1035
        %v1146 = vpack.c.bf16 %v1038, %v1037
        %v1147 = vpack.c.bf16 %v1040, %v1039
        %v1148 = vpack.c.bf16 %v1042, %v1041
        %v1149 = vpack.c.bf16 %v1044, %v1043
        %v1150 = vpack.c.bf16 %v1046, %v1045
        %v1151 = vpack.c.bf16 %v1048, %v1047
        %v1152 = vpack.c.bf16 %v1050, %v1049
        %v1153 = vpack.c.bf16 %v1052, %v1051
        %v1154 = vpack.c.bf16 %v1054, %v1053
        %v1155 = vpack.c.bf16 %v1056, %v1055
        %v1156 = vpack.c.bf16 %v1058, %v1057
        %v1157 = vpack.c.bf16 %v1060, %v1059
        %v1158 = vpack.c.bf16 %v1062, %v1061
        %v1159 = vpack.c.bf16 %v1064, %v1063
        %v1160 = vpack.c.bf16 %v1066, %v1065
        %v1161 = vpack.c.bf16 %v1068, %v1067
        %v1162 = vpack.c.bf16 %v1070, %v1069
        %v1163 = vpack.c.bf16 %v1072, %v1071
        %v1164 = vpack.c.bf16 %v1074, %v1073
        %v1165 = vpack.c.bf16 %v1076, %v1075
        %v1166 = vpack.c.bf16 %v1078, %v1077
        %v1167 = vpack.c.bf16 %v1080, %v1079
        %v1168 = vpack.c.bf16 %v1082, %v1081
        %v1169 = vpack.c.bf16 %v1084, %v1083
        %v1170 = vpack.c.bf16 %v1086, %v1085
        %v1171 = vpack.c.bf16 %v1088, %v1087
        %v1172 = vpack.c.bf16 %v1090, %v1089
        %v1173 = vpack.c.bf16 %v1092, %v1091
        %v1174 = vpack.c.bf16 %v1094, %v1093
        %v1175 = vpack.c.bf16 %v1096, %v1095
        %v1176 = vpack.c.bf16 %v1098, %v1097
        %v1177 = vpack.c.bf16 %v1100, %v1099
        %v1178 = vpack.c.bf16 %v1102, %v1101
        %v1179 = vpack.c.bf16 %v1104, %v1103
        %v1180 = vpack.c.bf16 %v1106, %v1105
        %v1181 = vpack.c.bf16 %v1108, %v1107
        %v1182 = vpack.c.bf16 %v1110, %v1109
        %v1183 = vpack.c.bf16 %v1112, %v1111
        %v1184 = vpack.c.bf16 %v1114, %v1113
        %v1185 = vpack.c.bf16 %v1116, %v1115
        %v1186 = vpack.c.bf16 %v1118, %v1117
        %v1187 = vpack.c.bf16 %v1120, %v1119
        %v1188 = vpack.c.bf16 %v1122, %v1121
        %v1189 = vpack.c.bf16 %v1124, %v1123
        %v1190 = vpack.c.bf16 %v1126, %v1125
        %1191 = vset.pattern.permute.xlu0 1
        %1192 = vperm.xlu0 %1191, %v227
        %v1193 = vpop.permute.xlu0 %1192
        %1194 = vset.pattern.permute.xlu0 1
        %1195 = vperm.xlu0 %1194, %v228
        %v1196 = vpop.permute.xlu0 %1195
        %1197 = vset.pattern.permute.xlu0 1
        %1198 = vperm.xlu0 %1197, %v229
        %v1199 = vpop.permute.xlu0 %1198
        %1200 = vset.pattern.permute.xlu0 1
        %1201 = vperm.xlu0 %1200, %v230
        %v1202 = vpop.permute.xlu0 %1201
        %1203 = vset.pattern.permute.xlu0 1
        %1204 = vperm.xlu0 %1203, %v231
        %v1205 = vpop.permute.xlu0 %1204
        %1206 = vset.pattern.permute.xlu0 1
        %1207 = vperm.xlu0 %1206, %v232
        %v1208 = vpop.permute.xlu0 %1207
        %1209 = vset.pattern.permute.xlu0 1
        %1210 = vperm.xlu0 %1209, %v233
        %v1211 = vpop.permute.xlu0 %1210
        %1212 = vset.pattern.permute.xlu0 1
        %1213 = vperm.xlu0 %1212, %v234
        %v1214 = vpop.permute.xlu0 %1213
        %1215 = vset.pattern.permute.xlu0 1
        %1216 = vperm.xlu0 %1215, %v235
        %v1217 = vpop.permute.xlu0 %1216
        %1218 = vset.pattern.permute.xlu0 1
        %1219 = vperm.xlu0 %1218, %v236
        %v1220 = vpop.permute.xlu0 %1219
        %1221 = vset.pattern.permute.xlu0 1
        %1222 = vperm.xlu0 %1221, %v237
        %v1223 = vpop.permute.xlu0 %1222
        %1224 = vset.pattern.permute.xlu0 1
        %1225 = vperm.xlu0 %1224, %v238
        %v1226 = vpop.permute.xlu0 %1225
        %1227 = vset.pattern.permute.xlu0 1
        %1228 = vperm.xlu0 %1227, %v239
        %v1229 = vpop.permute.xlu0 %1228
        %1230 = vset.pattern.permute.xlu0 1
        %1231 = vperm.xlu0 %1230, %v240
        %v1232 = vpop.permute.xlu0 %1231
        %1233 = vset.pattern.permute.xlu0 1
        %1234 = vperm.xlu0 %1233, %v241
        %v1235 = vpop.permute.xlu0 %1234
        %1236 = vset.pattern.permute.xlu0 1
        %1237 = vperm.xlu0 %1236, %v242
        %v1238 = vpop.permute.xlu0 %1237
        %1239 = vset.pattern.permute.xlu0 1
        %1240 = vperm.xlu0 %1239, %v243
        %v1241 = vpop.permute.xlu0 %1240
        %1242 = vset.pattern.permute.xlu0 1
        %1243 = vperm.xlu0 %1242, %v244
        %v1244 = vpop.permute.xlu0 %1243
        %1245 = vset.pattern.permute.xlu0 1
        %1246 = vperm.xlu0 %1245, %v245
        %v1247 = vpop.permute.xlu0 %1246
        %1248 = vset.pattern.permute.xlu0 1
        %1249 = vperm.xlu0 %1248, %v246
        %v1250 = vpop.permute.xlu0 %1249
        %1251 = vset.pattern.permute.xlu0 1
        %1252 = vperm.xlu0 %1251, %v247
        %v1253 = vpop.permute.xlu0 %1252
        %1254 = vset.pattern.permute.xlu0 1
        %1255 = vperm.xlu0 %1254, %v248
        %v1256 = vpop.permute.xlu0 %1255
        %1257 = vset.pattern.permute.xlu0 1
        %1258 = vperm.xlu0 %1257, %v249
        %v1259 = vpop.permute.xlu0 %1258
        %1260 = vset.pattern.permute.xlu0 1
        %1261 = vperm.xlu0 %1260, %v250
        %v1262 = vpop.permute.xlu0 %1261
        %1263 = vset.pattern.permute.xlu0 1
        %1264 = vperm.xlu0 %1263, %v251
        %v1265 = vpop.permute.xlu0 %1264
        %1266 = vset.pattern.permute.xlu0 1
        %1267 = vperm.xlu0 %1266, %v252
        %v1268 = vpop.permute.xlu0 %1267
        %1269 = vset.pattern.permute.xlu0 1
        %1270 = vperm.xlu0 %1269, %v253
        %v1271 = vpop.permute.xlu0 %1270
        %1272 = vset.pattern.permute.xlu0 1
        %1273 = vperm.xlu0 %1272, %v254
        %v1274 = vpop.permute.xlu0 %1273
        %1275 = vset.pattern.permute.xlu0 1
        %1276 = vperm.xlu0 %1275, %v255
        %v1277 = vpop.permute.xlu0 %1276
        %1278 = vset.pattern.permute.xlu0 1
        %1279 = vperm.xlu0 %1278, %v256
        %v1280 = vpop.permute.xlu0 %1279
        %1281 = vset.pattern.permute.xlu0 1
        %1282 = vperm.xlu0 %1281, %v257
        %v1283 = vpop.permute.xlu0 %1282
        %1284 = vset.pattern.permute.xlu0 1
        %1285 = vperm.xlu0 %1284, %v258
        %v1286 = vpop.permute.xlu0 %1285
        %1287 = vset.pattern.permute.xlu0 1
        %1288 = vperm.xlu0 %1287, %v259
        %v1289 = vpop.permute.xlu0 %1288
        %1290 = vset.pattern.permute.xlu0 1
        %1291 = vperm.xlu0 %1290, %v260
        %v1292 = vpop.permute.xlu0 %1291
        %1293 = vset.pattern.permute.xlu0 1
        %1294 = vperm.xlu0 %1293, %v261
        %v1295 = vpop.permute.xlu0 %1294
        %1296 = vset.pattern.permute.xlu0 1
        %1297 = vperm.xlu0 %1296, %v262
        %v1298 = vpop.permute.xlu0 %1297
        %1299 = vset.pattern.permute.xlu0 1
        %1300 = vperm.xlu0 %1299, %v263
        %v1301 = vpop.permute.xlu0 %1300
        %1302 = vset.pattern.permute.xlu0 1
        %1303 = vperm.xlu0 %1302, %v264
        %v1304 = vpop.permute.xlu0 %1303
        %1305 = vset.pattern.permute.xlu0 1
        %1306 = vperm.xlu0 %1305, %v265
        %v1307 = vpop.permute.xlu0 %1306
        %1308 = vset.pattern.permute.xlu0 1
        %1309 = vperm.xlu0 %1308, %v266
        %v1310 = vpop.permute.xlu0 %1309
        %1311 = vset.pattern.permute.xlu0 1
        %1312 = vperm.xlu0 %1311, %v267
        %v1313 = vpop.permute.xlu0 %1312
        %1314 = vset.pattern.permute.xlu0 1
        %1315 = vperm.xlu0 %1314, %v268
        %v1316 = vpop.permute.xlu0 %1315
        %1317 = vset.pattern.permute.xlu0 1
        %1318 = vperm.xlu0 %1317, %v269
        %v1319 = vpop.permute.xlu0 %1318
        %1320 = vset.pattern.permute.xlu0 1
        %1321 = vperm.xlu0 %1320, %v270
        %v1322 = vpop.permute.xlu0 %1321
        %1323 = vset.pattern.permute.xlu0 1
        %1324 = vperm.xlu0 %1323, %v271
        %v1325 = vpop.permute.xlu0 %1324
        %1326 = vset.pattern.permute.xlu0 1
        %1327 = vperm.xlu0 %1326, %v272
        %v1328 = vpop.permute.xlu0 %1327
        %1329 = vset.pattern.permute.xlu0 1
        %1330 = vperm.xlu0 %1329, %v273
        %v1331 = vpop.permute.xlu0 %1330
        %1332 = vset.pattern.permute.xlu0 1
        %1333 = vperm.xlu0 %1332, %v274
        %v1334 = vpop.permute.xlu0 %1333
        %1335 = vset.pattern.permute.xlu0 1
        %1336 = vperm.xlu0 %1335, %v275
        %v1337 = vpop.permute.xlu0 %1336
        %1338 = vset.pattern.permute.xlu0 1
        %1339 = vperm.xlu0 %1338, %v276
        %v1340 = vpop.permute.xlu0 %1339
        %1341 = vset.pattern.permute.xlu0 1
        %1342 = vperm.xlu0 %1341, %v277
        %v1343 = vpop.permute.xlu0 %1342
        %1344 = vset.pattern.permute.xlu0 1
        %1345 = vperm.xlu0 %1344, %v278
        %v1346 = vpop.permute.xlu0 %1345
        %1347 = vset.pattern.permute.xlu0 1
        %1348 = vperm.xlu0 %1347, %v279
        %v1349 = vpop.permute.xlu0 %1348
        %1350 = vset.pattern.permute.xlu0 1
        %1351 = vperm.xlu0 %1350, %v280
        %v1352 = vpop.permute.xlu0 %1351
        %1353 = vset.pattern.permute.xlu0 1
        %1354 = vperm.xlu0 %1353, %v281
        %v1355 = vpop.permute.xlu0 %1354
        %1356 = vset.pattern.permute.xlu0 1
        %1357 = vperm.xlu0 %1356, %v282
        %v1358 = vpop.permute.xlu0 %1357
        %1359 = vset.pattern.permute.xlu0 1
        %1360 = vperm.xlu0 %1359, %v283
        %v1361 = vpop.permute.xlu0 %1360
        %1362 = vset.pattern.permute.xlu0 1
        %1363 = vperm.xlu0 %1362, %v284
        %v1364 = vpop.permute.xlu0 %1363
        %1365 = vset.pattern.permute.xlu0 1
        %1366 = vperm.xlu0 %1365, %v285
        %v1367 = vpop.permute.xlu0 %1366
        %1368 = vset.pattern.permute.xlu0 1
        %1369 = vperm.xlu0 %1368, %v286
        %v1370 = vpop.permute.xlu0 %1369
        %1371 = vset.pattern.permute.xlu0 1
        %1372 = vperm.xlu0 %1371, %v287
        %v1373 = vpop.permute.xlu0 %1372
        %1374 = vset.pattern.permute.xlu0 1
        %1375 = vperm.xlu0 %1374, %v288
        %v1376 = vpop.permute.xlu0 %1375
        %1377 = vset.pattern.permute.xlu0 1
        %1378 = vperm.xlu0 %1377, %v289
        %v1379 = vpop.permute.xlu0 %1378
        %1380 = vset.pattern.permute.xlu0 1
        %1381 = vperm.xlu0 %1380, %v290
        %v1382 = vpop.permute.xlu0 %1381
        %1383 = vset.pattern.permute.xlu0 1
        %1384 = vperm.xlu0 %1383, %v291
        %v1385 = vpop.permute.xlu0 %1384
        %1386 = vset.pattern.permute.xlu0 1
        %1387 = vperm.xlu0 %1386, %v292
        %v1388 = vpop.permute.xlu0 %1387
        %1389 = vset.pattern.permute.xlu0 1
        %1390 = vperm.xlu0 %1389, %v293
        %v1391 = vpop.permute.xlu0 %1390
        %1392 = vset.pattern.permute.xlu0 1
        %1393 = vperm.xlu0 %1392, %v294
        %v1394 = vpop.permute.xlu0 %1393
        %1395 = vset.pattern.permute.xlu0 1
        %1396 = vperm.xlu0 %1395, %v295
        %v1397 = vpop.permute.xlu0 %1396
        %1398 = vset.pattern.permute.xlu0 1
        %1399 = vperm.xlu0 %1398, %v296
        %v1400 = vpop.permute.xlu0 %1399
        %1401 = vset.pattern.permute.xlu0 1
        %1402 = vperm.xlu0 %1401, %v297
        %v1403 = vpop.permute.xlu0 %1402
        %1404 = vset.pattern.permute.xlu0 1
        %1405 = vperm.xlu0 %1404, %v298
        %v1406 = vpop.permute.xlu0 %1405
        %1407 = vset.pattern.permute.xlu0 1
        %1408 = vperm.xlu0 %1407, %v299
        %v1409 = vpop.permute.xlu0 %1408
        %1410 = vset.pattern.permute.xlu0 1
        %1411 = vperm.xlu0 %1410, %v300
        %v1412 = vpop.permute.xlu0 %1411
        %1413 = vset.pattern.permute.xlu0 1
        %1414 = vperm.xlu0 %1413, %v301
        %v1415 = vpop.permute.xlu0 %1414
        %1416 = vset.pattern.permute.xlu0 1
        %1417 = vperm.xlu0 %1416, %v302
        %v1418 = vpop.permute.xlu0 %1417
        %1419 = vset.pattern.permute.xlu0 1
        %1420 = vperm.xlu0 %1419, %v303
        %v1421 = vpop.permute.xlu0 %1420
        %1422 = vset.pattern.permute.xlu0 1
        %1423 = vperm.xlu0 %1422, %v304
        %v1424 = vpop.permute.xlu0 %1423
        %1425 = vset.pattern.permute.xlu0 1
        %1426 = vperm.xlu0 %1425, %v305
        %v1427 = vpop.permute.xlu0 %1426
        %1428 = vset.pattern.permute.xlu0 1
        %1429 = vperm.xlu0 %1428, %v306
        %v1430 = vpop.permute.xlu0 %1429
        %1431 = vset.pattern.permute.xlu0 1
        %1432 = vperm.xlu0 %1431, %v307
        %v1433 = vpop.permute.xlu0 %1432
        %1434 = vset.pattern.permute.xlu0 1
        %1435 = vperm.xlu0 %1434, %v308
        %v1436 = vpop.permute.xlu0 %1435
        %1437 = vset.pattern.permute.xlu0 1
        %1438 = vperm.xlu0 %1437, %v309
        %v1439 = vpop.permute.xlu0 %1438
        %1440 = vset.pattern.permute.xlu0 1
        %1441 = vperm.xlu0 %1440, %v310
        %v1442 = vpop.permute.xlu0 %1441
        %1443 = vset.pattern.permute.xlu0 1
        %1444 = vperm.xlu0 %1443, %v311
        %v1445 = vpop.permute.xlu0 %1444
        %1446 = vset.pattern.permute.xlu0 1
        %1447 = vperm.xlu0 %1446, %v312
        %v1448 = vpop.permute.xlu0 %1447
        %1449 = vset.pattern.permute.xlu0 1
        %1450 = vperm.xlu0 %1449, %v313
        %v1451 = vpop.permute.xlu0 %1450
        %1452 = vset.pattern.permute.xlu0 1
        %1453 = vperm.xlu0 %1452, %v314
        %v1454 = vpop.permute.xlu0 %1453
        %1455 = vset.pattern.permute.xlu0 1
        %1456 = vperm.xlu0 %1455, %v315
        %v1457 = vpop.permute.xlu0 %1456
        %1458 = vset.pattern.permute.xlu0 1
        %1459 = vperm.xlu0 %1458, %v316
        %v1460 = vpop.permute.xlu0 %1459
        %1461 = vset.pattern.permute.xlu0 1
        %1462 = vperm.xlu0 %1461, %v317
        %v1463 = vpop.permute.xlu0 %1462
        %1464 = vset.pattern.permute.xlu0 1
        %1465 = vperm.xlu0 %1464, %v318
        %v1466 = vpop.permute.xlu0 %1465
        %1467 = vset.pattern.permute.xlu0 1
        %1468 = vperm.xlu0 %1467, %v319
        %v1469 = vpop.permute.xlu0 %1468
        %1470 = vset.pattern.permute.xlu0 1
        %1471 = vperm.xlu0 %1470, %v320
        %v1472 = vpop.permute.xlu0 %1471
        %1473 = vset.pattern.permute.xlu0 1
        %1474 = vperm.xlu0 %1473, %v321
        %v1475 = vpop.permute.xlu0 %1474
        %1476 = vset.pattern.permute.xlu0 1
        %1477 = vperm.xlu0 %1476, %v322
        %v1478 = vpop.permute.xlu0 %1477
        %1479 = vset.pattern.permute.xlu0 1
        %1480 = vperm.xlu0 %1479, %v323
        %v1481 = vpop.permute.xlu0 %1480
        %1482 = vset.pattern.permute.xlu0 1
        %1483 = vperm.xlu0 %1482, %v324
        %v1484 = vpop.permute.xlu0 %1483
        %1485 = vset.pattern.permute.xlu0 1
        %1486 = vperm.xlu0 %1485, %v325
        %v1487 = vpop.permute.xlu0 %1486
        %1488 = vset.pattern.permute.xlu0 1
        %1489 = vperm.xlu0 %1488, %v326
        %v1490 = vpop.permute.xlu0 %1489
        %1491 = vset.pattern.permute.xlu0 1
        %1492 = vperm.xlu0 %1491, %v327
        %v1493 = vpop.permute.xlu0 %1492
        %1494 = vset.pattern.permute.xlu0 1
        %1495 = vperm.xlu0 %1494, %v328
        %v1496 = vpop.permute.xlu0 %1495
        %1497 = vset.pattern.permute.xlu0 1
        %1498 = vperm.xlu0 %1497, %v329
        %v1499 = vpop.permute.xlu0 %1498
        %1500 = vset.pattern.permute.xlu0 1
        %1501 = vperm.xlu0 %1500, %v330
        %v1502 = vpop.permute.xlu0 %1501
        %1503 = vset.pattern.permute.xlu0 1
        %1504 = vperm.xlu0 %1503, %v331
        %v1505 = vpop.permute.xlu0 %1504
        %1506 = vset.pattern.permute.xlu0 1
        %1507 = vperm.xlu0 %1506, %v332
        %v1508 = vpop.permute.xlu0 %1507
        %1509 = vset.pattern.permute.xlu0 1
        %1510 = vperm.xlu0 %1509, %v333
        %v1511 = vpop.permute.xlu0 %1510
        %1512 = vset.pattern.permute.xlu0 1
        %1513 = vperm.xlu0 %1512, %v334
        %v1514 = vpop.permute.xlu0 %1513
        %1515 = vset.pattern.permute.xlu0 1
        %1516 = vperm.xlu0 %1515, %v335
        %v1517 = vpop.permute.xlu0 %1516
        %1518 = vset.pattern.permute.xlu0 1
        %1519 = vperm.xlu0 %1518, %v336
        %v1520 = vpop.permute.xlu0 %1519
        %1521 = vset.pattern.permute.xlu0 1
        %1522 = vperm.xlu0 %1521, %v337
        %v1523 = vpop.permute.xlu0 %1522
        %1524 = vset.pattern.permute.xlu0 1
        %1525 = vperm.xlu0 %1524, %v338
        %v1526 = vpop.permute.xlu0 %1525
        %1527 = vset.pattern.permute.xlu0 1
        %1528 = vperm.xlu0 %1527, %v339
        %v1529 = vpop.permute.xlu0 %1528
        %1530 = vset.pattern.permute.xlu0 1
        %1531 = vperm.xlu0 %1530, %v340
        %v1532 = vpop.permute.xlu0 %1531
        %1533 = vset.pattern.permute.xlu0 1
        %1534 = vperm.xlu0 %1533, %v341
        %v1535 = vpop.permute.xlu0 %1534
        %1536 = vset.pattern.permute.xlu0 1
        %1537 = vperm.xlu0 %1536, %v342
        %v1538 = vpop.permute.xlu0 %1537
        %1539 = vset.pattern.permute.xlu0 1
        %1540 = vperm.xlu0 %1539, %v343
        %v1541 = vpop.permute.xlu0 %1540
        %1542 = vset.pattern.permute.xlu0 1
        %1543 = vperm.xlu0 %1542, %v344
        %v1544 = vpop.permute.xlu0 %1543
        %1545 = vset.pattern.permute.xlu0 1
        %1546 = vperm.xlu0 %1545, %v345
        %v1547 = vpop.permute.xlu0 %1546
        %1548 = vset.pattern.permute.xlu0 1
        %1549 = vperm.xlu0 %1548, %v346
        %v1550 = vpop.permute.xlu0 %1549
        %1551 = vset.pattern.permute.xlu0 1
        %1552 = vperm.xlu0 %1551, %v347
        %v1553 = vpop.permute.xlu0 %1552
        %1554 = vset.pattern.permute.xlu0 1
        %1555 = vperm.xlu0 %1554, %v348
        %v1556 = vpop.permute.xlu0 %1555
        %1557 = vset.pattern.permute.xlu0 1
        %1558 = vperm.xlu0 %1557, %v349
        %v1559 = vpop.permute.xlu0 %1558
        %1560 = vset.pattern.permute.xlu0 1
        %1561 = vperm.xlu0 %1560, %v350
        %v1562 = vpop.permute.xlu0 %1561
        %1563 = vset.pattern.permute.xlu0 1
        %1564 = vperm.xlu0 %1563, %v351
        %v1565 = vpop.permute.xlu0 %1564
        %1566 = vset.pattern.permute.xlu0 1
        %1567 = vperm.xlu0 %1566, %v352
        %v1568 = vpop.permute.xlu0 %1567
        %1569 = vset.pattern.permute.xlu0 1
        %1570 = vperm.xlu0 %1569, %v353
        %v1571 = vpop.permute.xlu0 %1570
        %1572 = vset.pattern.permute.xlu0 1
        %1573 = vperm.xlu0 %1572, %v354
        %v1574 = vpop.permute.xlu0 %1573
        %vm1575 = vcmp.eq.s32.totalorder %v1193, %v358
        %vm1576 = vcmp.eq.s32.totalorder %v1196, %v358
        %vm1577 = vcmp.eq.s32.totalorder %v1199, %v358
        %vm1578 = vcmp.eq.s32.totalorder %v1202, %v358
        %vm1579 = vcmp.eq.s32.totalorder %v1205, %v358
        %vm1580 = vcmp.eq.s32.totalorder %v1208, %v358
        %vm1581 = vcmp.eq.s32.totalorder %v1211, %v358
        %vm1582 = vcmp.eq.s32.totalorder %v1214, %v358
        %vm1583 = vcmp.eq.s32.totalorder %v1217, %v358
        %vm1584 = vcmp.eq.s32.totalorder %v1220, %v358
        %vm1585 = vcmp.eq.s32.totalorder %v1223, %v358
        %vm1586 = vcmp.eq.s32.totalorder %v1226, %v358
        %vm1587 = vcmp.eq.s32.totalorder %v1229, %v358
        %vm1588 = vcmp.eq.s32.totalorder %v1232, %v358
        %vm1589 = vcmp.eq.s32.totalorder %v1235, %v358
        %vm1590 = vcmp.eq.s32.totalorder %v1238, %v358
        %vm1591 = vcmp.eq.s32.totalorder %v1241, %v358
        %vm1592 = vcmp.eq.s32.totalorder %v1244, %v358
        %vm1593 = vcmp.eq.s32.totalorder %v1247, %v358
        %vm1594 = vcmp.eq.s32.totalorder %v1250, %v358
        %vm1595 = vcmp.eq.s32.totalorder %v1253, %v358
        %vm1596 = vcmp.eq.s32.totalorder %v1256, %v358
        %vm1597 = vcmp.eq.s32.totalorder %v1259, %v358
        %vm1598 = vcmp.eq.s32.totalorder %v1262, %v358
        %vm1599 = vcmp.eq.s32.totalorder %v1265, %v358
        %vm1600 = vcmp.eq.s32.totalorder %v1268, %v358
        %vm1601 = vcmp.eq.s32.totalorder %v1271, %v358
        %vm1602 = vcmp.eq.s32.totalorder %v1274, %v358
        %vm1603 = vcmp.eq.s32.totalorder %v1277, %v358
        %vm1604 = vcmp.eq.s32.totalorder %v1280, %v358
        %vm1605 = vcmp.eq.s32.totalorder %v1283, %v358
        %vm1606 = vcmp.eq.s32.totalorder %v1286, %v358
        %vm1607 = vcmp.eq.s32.totalorder %v1289, %v358
        %vm1608 = vcmp.eq.s32.totalorder %v1292, %v358
        %vm1609 = vcmp.eq.s32.totalorder %v1295, %v358
        %vm1610 = vcmp.eq.s32.totalorder %v1298, %v358
        %vm1611 = vcmp.eq.s32.totalorder %v1301, %v358
        %vm1612 = vcmp.eq.s32.totalorder %v1304, %v358
        %vm1613 = vcmp.eq.s32.totalorder %v1307, %v358
        %vm1614 = vcmp.eq.s32.totalorder %v1310, %v358
        %vm1615 = vcmp.eq.s32.totalorder %v1313, %v358
        %vm1616 = vcmp.eq.s32.totalorder %v1316, %v358
        %vm1617 = vcmp.eq.s32.totalorder %v1319, %v358
        %vm1618 = vcmp.eq.s32.totalorder %v1322, %v358
        %vm1619 = vcmp.eq.s32.totalorder %v1325, %v358
        %vm1620 = vcmp.eq.s32.totalorder %v1328, %v358
        %vm1621 = vcmp.eq.s32.totalorder %v1331, %v358
        %vm1622 = vcmp.eq.s32.totalorder %v1334, %v358
        %vm1623 = vcmp.eq.s32.totalorder %v1337, %v358
        %vm1624 = vcmp.eq.s32.totalorder %v1340, %v358
        %vm1625 = vcmp.eq.s32.totalorder %v1343, %v358
        %vm1626 = vcmp.eq.s32.totalorder %v1346, %v358
        %vm1627 = vcmp.eq.s32.totalorder %v1349, %v358
        %vm1628 = vcmp.eq.s32.totalorder %v1352, %v358
        %vm1629 = vcmp.eq.s32.totalorder %v1355, %v358
        %vm1630 = vcmp.eq.s32.totalorder %v1358, %v358
        %vm1631 = vcmp.eq.s32.totalorder %v1361, %v358
        %vm1632 = vcmp.eq.s32.totalorder %v1364, %v358
        %vm1633 = vcmp.eq.s32.totalorder %v1367, %v358
        %vm1634 = vcmp.eq.s32.totalorder %v1370, %v358
        %vm1635 = vcmp.eq.s32.totalorder %v1373, %v358
        %vm1636 = vcmp.eq.s32.totalorder %v1376, %v358
        %vm1637 = vcmp.eq.s32.totalorder %v1379, %v358
        %vm1638 = vcmp.eq.s32.totalorder %v1382, %v358
        %vm1639 = vcmp.eq.s32.totalorder %v1385, %v358
        %vm1640 = vcmp.eq.s32.totalorder %v1388, %v358
        %vm1641 = vcmp.eq.s32.totalorder %v1391, %v358
        %vm1642 = vcmp.eq.s32.totalorder %v1394, %v358
        %vm1643 = vcmp.eq.s32.totalorder %v1397, %v358
        %vm1644 = vcmp.eq.s32.totalorder %v1400, %v358
        %vm1645 = vcmp.eq.s32.totalorder %v1403, %v358
        %vm1646 = vcmp.eq.s32.totalorder %v1406, %v358
        %vm1647 = vcmp.eq.s32.totalorder %v1409, %v358
        %vm1648 = vcmp.eq.s32.totalorder %v1412, %v358
        %vm1649 = vcmp.eq.s32.totalorder %v1415, %v358
        %vm1650 = vcmp.eq.s32.totalorder %v1418, %v358
        %vm1651 = vcmp.eq.s32.totalorder %v1421, %v358
        %vm1652 = vcmp.eq.s32.totalorder %v1424, %v358
        %vm1653 = vcmp.eq.s32.totalorder %v1427, %v358
        %vm1654 = vcmp.eq.s32.totalorder %v1430, %v358
        %vm1655 = vcmp.eq.s32.totalorder %v1433, %v358
        %vm1656 = vcmp.eq.s32.totalorder %v1436, %v358
        %vm1657 = vcmp.eq.s32.totalorder %v1439, %v358
        %vm1658 = vcmp.eq.s32.totalorder %v1442, %v358
        %vm1659 = vcmp.eq.s32.totalorder %v1445, %v358
        %vm1660 = vcmp.eq.s32.totalorder %v1448, %v358
        %vm1661 = vcmp.eq.s32.totalorder %v1451, %v358
        %vm1662 = vcmp.eq.s32.totalorder %v1454, %v358
        %vm1663 = vcmp.eq.s32.totalorder %v1457, %v358
        %vm1664 = vcmp.eq.s32.totalorder %v1460, %v358
        %vm1665 = vcmp.eq.s32.totalorder %v1463, %v358
        %vm1666 = vcmp.eq.s32.totalorder %v1466, %v358
        %vm1667 = vcmp.eq.s32.totalorder %v1469, %v358
        %vm1668 = vcmp.eq.s32.totalorder %v1472, %v358
        %vm1669 = vcmp.eq.s32.totalorder %v1475, %v358
        %vm1670 = vcmp.eq.s32.totalorder %v1478, %v358
        %vm1671 = vcmp.eq.s32.totalorder %v1481, %v358
        %vm1672 = vcmp.eq.s32.totalorder %v1484, %v358
        %vm1673 = vcmp.eq.s32.totalorder %v1487, %v358
        %vm1674 = vcmp.eq.s32.totalorder %v1490, %v358
        %vm1675 = vcmp.eq.s32.totalorder %v1493, %v358
        %vm1676 = vcmp.eq.s32.totalorder %v1496, %v358
        %vm1677 = vcmp.eq.s32.totalorder %v1499, %v358
        %vm1678 = vcmp.eq.s32.totalorder %v1502, %v358
        %vm1679 = vcmp.eq.s32.totalorder %v1505, %v358
        %vm1680 = vcmp.eq.s32.totalorder %v1508, %v358
        %vm1681 = vcmp.eq.s32.totalorder %v1511, %v358
        %vm1682 = vcmp.eq.s32.totalorder %v1514, %v358
        %vm1683 = vcmp.eq.s32.totalorder %v1517, %v358
        %vm1684 = vcmp.eq.s32.totalorder %v1520, %v358
        %vm1685 = vcmp.eq.s32.totalorder %v1523, %v358
        %vm1686 = vcmp.eq.s32.totalorder %v1526, %v358
        %vm1687 = vcmp.eq.s32.totalorder %v1529, %v358
        %vm1688 = vcmp.eq.s32.totalorder %v1532, %v358
        %vm1689 = vcmp.eq.s32.totalorder %v1535, %v358
        %vm1690 = vcmp.eq.s32.totalorder %v1538, %v358
        %vm1691 = vcmp.eq.s32.totalorder %v1541, %v358
        %vm1692 = vcmp.eq.s32.totalorder %v1544, %v358
        %vm1693 = vcmp.eq.s32.totalorder %v1547, %v358
        %vm1694 = vcmp.eq.s32.totalorder %v1550, %v358
        %vm1695 = vcmp.eq.s32.totalorder %v1553, %v358
        %vm1696 = vcmp.eq.s32.totalorder %v1556, %v358
        %vm1697 = vcmp.eq.s32.totalorder %v1559, %v358
        %vm1698 = vcmp.eq.s32.totalorder %v1562, %v358
        %vm1699 = vcmp.eq.s32.totalorder %v1565, %v358
        %vm1700 = vcmp.eq.s32.totalorder %v1568, %v358
        %vm1701 = vcmp.eq.s32.totalorder %v1571, %v358
        %vm1702 = vcmp.eq.s32.totalorder %v1574, %v358
        %v1703 = vsel %vm1575, 1, 0
        %v1704 = vsel %vm1576, 1, 0
        %v1705 = vsel %vm1577, 1, 0
        %v1706 = vsel %vm1578, 1, 0
        %v1707 = vsel %vm1579, 1, 0
        %v1708 = vsel %vm1580, 1, 0
        %v1709 = vsel %vm1581, 1, 0
        %v1710 = vsel %vm1582, 1, 0
        %v1711 = vsel %vm1583, 1, 0
        %v1712 = vsel %vm1584, 1, 0
        %v1713 = vsel %vm1585, 1, 0
        %v1714 = vsel %vm1586, 1, 0
        %v1715 = vsel %vm1587, 1, 0
        %v1716 = vsel %vm1588, 1, 0
        %v1717 = vsel %vm1589, 1, 0
        %v1718 = vsel %vm1590, 1, 0
        %v1719 = vsel %vm1591, 1, 0
        %v1720 = vsel %vm1592, 1, 0
        %v1721 = vsel %vm1593, 1, 0
        %v1722 = vsel %vm1594, 1, 0
        %v1723 = vsel %vm1595, 1, 0
        %v1724 = vsel %vm1596, 1, 0
        %v1725 = vsel %vm1597, 1, 0
        %v1726 = vsel %vm1598, 1, 0
        %v1727 = vsel %vm1599, 1, 0
        %v1728 = vsel %vm1600, 1, 0
        %v1729 = vsel %vm1601, 1, 0
        %v1730 = vsel %vm1602, 1, 0
        %v1731 = vsel %vm1603, 1, 0
        %v1732 = vsel %vm1604, 1, 0
        %v1733 = vsel %vm1605, 1, 0
        %v1734 = vsel %vm1606, 1, 0
        %v1735 = vsel %vm1607, 1, 0
        %v1736 = vsel %vm1608, 1, 0
        %v1737 = vsel %vm1609, 1, 0
        %v1738 = vsel %vm1610, 1, 0
        %v1739 = vsel %vm1611, 1, 0
        %v1740 = vsel %vm1612, 1, 0
        %v1741 = vsel %vm1613, 1, 0
        %v1742 = vsel %vm1614, 1, 0
        %v1743 = vsel %vm1615, 1, 0
        %v1744 = vsel %vm1616, 1, 0
        %v1745 = vsel %vm1617, 1, 0
        %v1746 = vsel %vm1618, 1, 0
        %v1747 = vsel %vm1619, 1, 0
        %v1748 = vsel %vm1620, 1, 0
        %v1749 = vsel %vm1621, 1, 0
        %v1750 = vsel %vm1622, 1, 0
        %v1751 = vsel %vm1623, 1, 0
        %v1752 = vsel %vm1624, 1, 0
        %v1753 = vsel %vm1625, 1, 0
        %v1754 = vsel %vm1626, 1, 0
        %v1755 = vsel %vm1627, 1, 0
        %v1756 = vsel %vm1628, 1, 0
        %v1757 = vsel %vm1629, 1, 0
        %v1758 = vsel %vm1630, 1, 0
        %v1759 = vsel %vm1631, 1, 0
        %v1760 = vsel %vm1632, 1, 0
        %v1761 = vsel %vm1633, 1, 0
        %v1762 = vsel %vm1634, 1, 0
        %v1763 = vsel %vm1635, 1, 0
        %v1764 = vsel %vm1636, 1, 0
        %v1765 = vsel %vm1637, 1, 0
        %v1766 = vsel %vm1638, 1, 0
        %v1767 = vsel %vm1639, 1, 0
        %v1768 = vsel %vm1640, 1, 0
        %v1769 = vsel %vm1641, 1, 0
        %v1770 = vsel %vm1642, 1, 0
        %v1771 = vsel %vm1643, 1, 0
        %v1772 = vsel %vm1644, 1, 0
        %v1773 = vsel %vm1645, 1, 0
        %v1774 = vsel %vm1646, 1, 0
        %v1775 = vsel %vm1647, 1, 0
        %v1776 = vsel %vm1648, 1, 0
        %v1777 = vsel %vm1649, 1, 0
        %v1778 = vsel %vm1650, 1, 0
        %v1779 = vsel %vm1651, 1, 0
        %v1780 = vsel %vm1652, 1, 0
        %v1781 = vsel %vm1653, 1, 0
        %v1782 = vsel %vm1654, 1, 0
        %v1783 = vsel %vm1655, 1, 0
        %v1784 = vsel %vm1656, 1, 0
        %v1785 = vsel %vm1657, 1, 0
        %v1786 = vsel %vm1658, 1, 0
        %v1787 = vsel %vm1659, 1, 0
        %v1788 = vsel %vm1660, 1, 0
        %v1789 = vsel %vm1661, 1, 0
        %v1790 = vsel %vm1662, 1, 0
        %v1791 = vsel %vm1663, 1, 0
        %v1792 = vsel %vm1664, 1, 0
        %v1793 = vsel %vm1665, 1, 0
        %v1794 = vsel %vm1666, 1, 0
        %v1795 = vsel %vm1667, 1, 0
        %v1796 = vsel %vm1668, 1, 0
        %v1797 = vsel %vm1669, 1, 0
        %v1798 = vsel %vm1670, 1, 0
        %v1799 = vsel %vm1671, 1, 0
        %v1800 = vsel %vm1672, 1, 0
        %v1801 = vsel %vm1673, 1, 0
        %v1802 = vsel %vm1674, 1, 0
        %v1803 = vsel %vm1675, 1, 0
        %v1804 = vsel %vm1676, 1, 0
        %v1805 = vsel %vm1677, 1, 0
        %v1806 = vsel %vm1678, 1, 0
        %v1807 = vsel %vm1679, 1, 0
        %v1808 = vsel %vm1680, 1, 0
        %v1809 = vsel %vm1681, 1, 0
        %v1810 = vsel %vm1682, 1, 0
        %v1811 = vsel %vm1683, 1, 0
        %v1812 = vsel %vm1684, 1, 0
        %v1813 = vsel %vm1685, 1, 0
        %v1814 = vsel %vm1686, 1, 0
        %v1815 = vsel %vm1687, 1, 0
        %v1816 = vsel %vm1688, 1, 0
        %v1817 = vsel %vm1689, 1, 0
        %v1818 = vsel %vm1690, 1, 0
        %v1819 = vsel %vm1691, 1, 0
        %v1820 = vsel %vm1692, 1, 0
        %v1821 = vsel %vm1693, 1, 0
        %v1822 = vsel %vm1694, 1, 0
        %v1823 = vsel %vm1695, 1, 0
        %v1824 = vsel %vm1696, 1, 0
        %v1825 = vsel %vm1697, 1, 0
        %v1826 = vsel %vm1698, 1, 0
        %v1827 = vsel %vm1699, 1, 0
        %v1828 = vsel %vm1700, 1, 0
        %v1829 = vsel %vm1701, 1, 0
        %v1830 = vsel %vm1702, 1, 0
        %v1831 = vcvt.s32.f32 %v1703
        %v1832 = vcvt.s32.f32 %v1704
        %v1833 = vcvt.s32.f32 %v1705
        %v1834 = vcvt.s32.f32 %v1706
        %v1835 = vcvt.s32.f32 %v1707
        %v1836 = vcvt.s32.f32 %v1708
        %v1837 = vcvt.s32.f32 %v1709
        %v1838 = vcvt.s32.f32 %v1710
        %v1839 = vcvt.s32.f32 %v1711
        %v1840 = vcvt.s32.f32 %v1712
        %v1841 = vcvt.s32.f32 %v1713
        %v1842 = vcvt.s32.f32 %v1714
        %v1843 = vcvt.s32.f32 %v1715
        %v1844 = vcvt.s32.f32 %v1716
        %v1845 = vcvt.s32.f32 %v1717
        %v1846 = vcvt.s32.f32 %v1718
        %v1847 = vcvt.s32.f32 %v1719
        %v1848 = vcvt.s32.f32 %v1720
        %v1849 = vcvt.s32.f32 %v1721
        %v1850 = vcvt.s32.f32 %v1722
        %v1851 = vcvt.s32.f32 %v1723
        %v1852 = vcvt.s32.f32 %v1724
        %v1853 = vcvt.s32.f32 %v1725
        %v1854 = vcvt.s32.f32 %v1726
        %v1855 = vcvt.s32.f32 %v1727
        %v1856 = vcvt.s32.f32 %v1728
        %v1857 = vcvt.s32.f32 %v1729
        %v1858 = vcvt.s32.f32 %v1730
        %v1859 = vcvt.s32.f32 %v1731
        %v1860 = vcvt.s32.f32 %v1732
        %v1861 = vcvt.s32.f32 %v1733
        %v1862 = vcvt.s32.f32 %v1734
        %v1863 = vcvt.s32.f32 %v1735
        %v1864 = vcvt.s32.f32 %v1736
        %v1865 = vcvt.s32.f32 %v1737
        %v1866 = vcvt.s32.f32 %v1738
        %v1867 = vcvt.s32.f32 %v1739
        %v1868 = vcvt.s32.f32 %v1740
        %v1869 = vcvt.s32.f32 %v1741
        %v1870 = vcvt.s32.f32 %v1742
        %v1871 = vcvt.s32.f32 %v1743
        %v1872 = vcvt.s32.f32 %v1744
        %v1873 = vcvt.s32.f32 %v1745
        %v1874 = vcvt.s32.f32 %v1746
        %v1875 = vcvt.s32.f32 %v1747
        %v1876 = vcvt.s32.f32 %v1748
        %v1877 = vcvt.s32.f32 %v1749
        %v1878 = vcvt.s32.f32 %v1750
        %v1879 = vcvt.s32.f32 %v1751
        %v1880 = vcvt.s32.f32 %v1752
        %v1881 = vcvt.s32.f32 %v1753
        %v1882 = vcvt.s32.f32 %v1754
        %v1883 = vcvt.s32.f32 %v1755
        %v1884 = vcvt.s32.f32 %v1756
        %v1885 = vcvt.s32.f32 %v1757
        %v1886 = vcvt.s32.f32 %v1758
        %v1887 = vcvt.s32.f32 %v1759
        %v1888 = vcvt.s32.f32 %v1760
        %v1889 = vcvt.s32.f32 %v1761
        %v1890 = vcvt.s32.f32 %v1762
        %v1891 = vcvt.s32.f32 %v1763
        %v1892 = vcvt.s32.f32 %v1764
        %v1893 = vcvt.s32.f32 %v1765
        %v1894 = vcvt.s32.f32 %v1766
        %v1895 = vcvt.s32.f32 %v1767
        %v1896 = vcvt.s32.f32 %v1768
        %v1897 = vcvt.s32.f32 %v1769
        %v1898 = vcvt.s32.f32 %v1770
        %v1899 = vcvt.s32.f32 %v1771
        %v1900 = vcvt.s32.f32 %v1772
        %v1901 = vcvt.s32.f32 %v1773
        %v1902 = vcvt.s32.f32 %v1774
        %v1903 = vcvt.s32.f32 %v1775
        %v1904 = vcvt.s32.f32 %v1776
        %v1905 = vcvt.s32.f32 %v1777
        %v1906 = vcvt.s32.f32 %v1778
        %v1907 = vcvt.s32.f32 %v1779
        %v1908 = vcvt.s32.f32 %v1780
        %v1909 = vcvt.s32.f32 %v1781
        %v1910 = vcvt.s32.f32 %v1782
        %v1911 = vcvt.s32.f32 %v1783
        %v1912 = vcvt.s32.f32 %v1784
        %v1913 = vcvt.s32.f32 %v1785
        %v1914 = vcvt.s32.f32 %v1786
        %v1915 = vcvt.s32.f32 %v1787
        %v1916 = vcvt.s32.f32 %v1788
        %v1917 = vcvt.s32.f32 %v1789
        %v1918 = vcvt.s32.f32 %v1790
        %v1919 = vcvt.s32.f32 %v1791
        %v1920 = vcvt.s32.f32 %v1792
        %v1921 = vcvt.s32.f32 %v1793
        %v1922 = vcvt.s32.f32 %v1794
        %v1923 = vcvt.s32.f32 %v1795
        %v1924 = vcvt.s32.f32 %v1796
        %v1925 = vcvt.s32.f32 %v1797
        %v1926 = vcvt.s32.f32 %v1798
        %v1927 = vcvt.s32.f32 %v1799
        %v1928 = vcvt.s32.f32 %v1800
        %v1929 = vcvt.s32.f32 %v1801
        %v1930 = vcvt.s32.f32 %v1802
        %v1931 = vcvt.s32.f32 %v1803
        %v1932 = vcvt.s32.f32 %v1804
        %v1933 = vcvt.s32.f32 %v1805
        %v1934 = vcvt.s32.f32 %v1806
        %v1935 = vcvt.s32.f32 %v1807
        %v1936 = vcvt.s32.f32 %v1808
        %v1937 = vcvt.s32.f32 %v1809
        %v1938 = vcvt.s32.f32 %v1810
        %v1939 = vcvt.s32.f32 %v1811
        %v1940 = vcvt.s32.f32 %v1812
        %v1941 = vcvt.s32.f32 %v1813
        %v1942 = vcvt.s32.f32 %v1814
        %v1943 = vcvt.s32.f32 %v1815
        %v1944 = vcvt.s32.f32 %v1816
        %v1945 = vcvt.s32.f32 %v1817
        %v1946 = vcvt.s32.f32 %v1818
        %v1947 = vcvt.s32.f32 %v1819
        %v1948 = vcvt.s32.f32 %v1820
        %v1949 = vcvt.s32.f32 %v1821
        %v1950 = vcvt.s32.f32 %v1822
        %v1951 = vcvt.s32.f32 %v1823
        %v1952 = vcvt.s32.f32 %v1824
        %v1953 = vcvt.s32.f32 %v1825
        %v1954 = vcvt.s32.f32 %v1826
        %v1955 = vcvt.s32.f32 %v1827
        %v1956 = vcvt.s32.f32 %v1828
        %v1957 = vcvt.s32.f32 %v1829
        %v1958 = vcvt.s32.f32 %v1830
        %v1959 = vpack.c.bf16 %v1832, %v1831
        %v1960 = vpack.c.bf16 %v1834, %v1833
        %v1961 = vpack.c.bf16 %v1836, %v1835
        %v1962 = vpack.c.bf16 %v1838, %v1837
        %v1963 = vpack.c.bf16 %v1840, %v1839
        %v1964 = vpack.c.bf16 %v1842, %v1841
        %v1965 = vpack.c.bf16 %v1844, %v1843
        %v1966 = vpack.c.bf16 %v1846, %v1845
        %v1967 = vpack.c.bf16 %v1848, %v1847
        %v1968 = vpack.c.bf16 %v1850, %v1849
        %v1969 = vpack.c.bf16 %v1852, %v1851
        %v1970 = vpack.c.bf16 %v1854, %v1853
        %v1971 = vpack.c.bf16 %v1856, %v1855
        %v1972 = vpack.c.bf16 %v1858, %v1857
        %v1973 = vpack.c.bf16 %v1860, %v1859
        %v1974 = vpack.c.bf16 %v1862, %v1861
        %v1975 = vpack.c.bf16 %v1864, %v1863
        %v1976 = vpack.c.bf16 %v1866, %v1865
        %v1977 = vpack.c.bf16 %v1868, %v1867
        %v1978 = vpack.c.bf16 %v1870, %v1869
        %v1979 = vpack.c.bf16 %v1872, %v1871
        %v1980 = vpack.c.bf16 %v1874, %v1873
        %v1981 = vpack.c.bf16 %v1876, %v1875
        %v1982 = vpack.c.bf16 %v1878, %v1877
        %v1983 = vpack.c.bf16 %v1880, %v1879
        %v1984 = vpack.c.bf16 %v1882, %v1881
        %v1985 = vpack.c.bf16 %v1884, %v1883
        %v1986 = vpack.c.bf16 %v1886, %v1885
        %v1987 = vpack.c.bf16 %v1888, %v1887
        %v1988 = vpack.c.bf16 %v1890, %v1889
        %v1989 = vpack.c.bf16 %v1892, %v1891
        %v1990 = vpack.c.bf16 %v1894, %v1893
        %v1991 = vpack.c.bf16 %v1896, %v1895
        %v1992 = vpack.c.bf16 %v1898, %v1897
        %v1993 = vpack.c.bf16 %v1900, %v1899
        %v1994 = vpack.c.bf16 %v1902, %v1901
        %v1995 = vpack.c.bf16 %v1904, %v1903
        %v1996 = vpack.c.bf16 %v1906, %v1905
        %v1997 = vpack.c.bf16 %v1908, %v1907
        %v1998 = vpack.c.bf16 %v1910, %v1909
        %v1999 = vpack.c.bf16 %v1912, %v1911
        %v2000 = vpack.c.bf16 %v1914, %v1913
        %v2001 = vpack.c.bf16 %v1916, %v1915
        %v2002 = vpack.c.bf16 %v1918, %v1917
        %v2003 = vpack.c.bf16 %v1920, %v1919
        %v2004 = vpack.c.bf16 %v1922, %v1921
        %v2005 = vpack.c.bf16 %v1924, %v1923
        %v2006 = vpack.c.bf16 %v1926, %v1925
        %v2007 = vpack.c.bf16 %v1928, %v1927
        %v2008 = vpack.c.bf16 %v1930, %v1929
        %v2009 = vpack.c.bf16 %v1932, %v1931
        %v2010 = vpack.c.bf16 %v1934, %v1933
        %v2011 = vpack.c.bf16 %v1936, %v1935
        %v2012 = vpack.c.bf16 %v1938, %v1937
        %v2013 = vpack.c.bf16 %v1940, %v1939
        %v2014 = vpack.c.bf16 %v1942, %v1941
        %v2015 = vpack.c.bf16 %v1944, %v1943
        %v2016 = vpack.c.bf16 %v1946, %v1945
        %v2017 = vpack.c.bf16 %v1948, %v1947
        %v2018 = vpack.c.bf16 %v1950, %v1949
        %v2019 = vpack.c.bf16 %v1952, %v1951
        %v2020 = vpack.c.bf16 %v1954, %v1953
        %v2021 = vpack.c.bf16 %v1956, %v1955
        %v2022 = vpack.c.bf16 %v1958, %v1957
        %2023 = vset.pattern.permute.xlu0 2
        %2024 = vperm.xlu0 %2023, %v227
        %v2025 = vpop.permute.xlu0 %2024
        %2026 = vset.pattern.permute.xlu0 2
        %2027 = vperm.xlu0 %2026, %v228
        %v2028 = vpop.permute.xlu0 %2027
        %2029 = vset.pattern.permute.xlu0 2
        %2030 = vperm.xlu0 %2029, %v229
        %v2031 = vpop.permute.xlu0 %2030
        %2032 = vset.pattern.permute.xlu0 2
        %2033 = vperm.xlu0 %2032, %v230
        %v2034 = vpop.permute.xlu0 %2033
        %2035 = vset.pattern.permute.xlu0 2
        %2036 = vperm.xlu0 %2035, %v231
        %v2037 = vpop.permute.xlu0 %2036
        %2038 = vset.pattern.permute.xlu0 2
        %2039 = vperm.xlu0 %2038, %v232
        %v2040 = vpop.permute.xlu0 %2039
        %2041 = vset.pattern.permute.xlu0 2
        %2042 = vperm.xlu0 %2041, %v233
        %v2043 = vpop.permute.xlu0 %2042
        %2044 = vset.pattern.permute.xlu0 2
        %2045 = vperm.xlu0 %2044, %v234
        %v2046 = vpop.permute.xlu0 %2045
        %2047 = vset.pattern.permute.xlu0 2
        %2048 = vperm.xlu0 %2047, %v235
        %v2049 = vpop.permute.xlu0 %2048
        %2050 = vset.pattern.permute.xlu0 2
        %2051 = vperm.xlu0 %2050, %v236
        %v2052 = vpop.permute.xlu0 %2051
        %2053 = vset.pattern.permute.xlu0 2
        %2054 = vperm.xlu0 %2053, %v237
        %v2055 = vpop.permute.xlu0 %2054
        %2056 = vset.pattern.permute.xlu0 2
        %2057 = vperm.xlu0 %2056, %v238
        %v2058 = vpop.permute.xlu0 %2057
        %2059 = vset.pattern.permute.xlu0 2
        %2060 = vperm.xlu0 %2059, %v239
        %v2061 = vpop.permute.xlu0 %2060
        %2062 = vset.pattern.permute.xlu0 2
        %2063 = vperm.xlu0 %2062, %v240
        %v2064 = vpop.permute.xlu0 %2063
        %2065 = vset.pattern.permute.xlu0 2
        %2066 = vperm.xlu0 %2065, %v241
        %v2067 = vpop.permute.xlu0 %2066
        %2068 = vset.pattern.permute.xlu0 2
        %2069 = vperm.xlu0 %2068, %v242
        %v2070 = vpop.permute.xlu0 %2069
        %2071 = vset.pattern.permute.xlu0 2
        %2072 = vperm.xlu0 %2071, %v243
        %v2073 = vpop.permute.xlu0 %2072
        %2074 = vset.pattern.permute.xlu0 2
        %2075 = vperm.xlu0 %2074, %v244
        %v2076 = vpop.permute.xlu0 %2075
        %2077 = vset.pattern.permute.xlu0 2
        %2078 = vperm.xlu0 %2077, %v245
        %v2079 = vpop.permute.xlu0 %2078
        %2080 = vset.pattern.permute.xlu0 2
        %2081 = vperm.xlu0 %2080, %v246
        %v2082 = vpop.permute.xlu0 %2081
        %2083 = vset.pattern.permute.xlu0 2
        %2084 = vperm.xlu0 %2083, %v247
        %v2085 = vpop.permute.xlu0 %2084
        %2086 = vset.pattern.permute.xlu0 2
        %2087 = vperm.xlu0 %2086, %v248
        %v2088 = vpop.permute.xlu0 %2087
        %2089 = vset.pattern.permute.xlu0 2
        %2090 = vperm.xlu0 %2089, %v249
        %v2091 = vpop.permute.xlu0 %2090
        %2092 = vset.pattern.permute.xlu0 2
        %2093 = vperm.xlu0 %2092, %v250
        %v2094 = vpop.permute.xlu0 %2093
        %2095 = vset.pattern.permute.xlu0 2
        %2096 = vperm.xlu0 %2095, %v251
        %v2097 = vpop.permute.xlu0 %2096
        %2098 = vset.pattern.permute.xlu0 2
        %2099 = vperm.xlu0 %2098, %v252
        %v2100 = vpop.permute.xlu0 %2099
        %2101 = vset.pattern.permute.xlu0 2
        %2102 = vperm.xlu0 %2101, %v253
        %v2103 = vpop.permute.xlu0 %2102
        %2104 = vset.pattern.permute.xlu0 2
        %2105 = vperm.xlu0 %2104, %v254
        %v2106 = vpop.permute.xlu0 %2105
        %2107 = vset.pattern.permute.xlu0 2
        %2108 = vperm.xlu0 %2107, %v255
        %v2109 = vpop.permute.xlu0 %2108
        %2110 = vset.pattern.permute.xlu0 2
        %2111 = vperm.xlu0 %2110, %v256
        %v2112 = vpop.permute.xlu0 %2111
        %2113 = vset.pattern.permute.xlu0 2
        %2114 = vperm.xlu0 %2113, %v257
        %v2115 = vpop.permute.xlu0 %2114
        %2116 = vset.pattern.permute.xlu0 2
        %2117 = vperm.xlu0 %2116, %v258
        %v2118 = vpop.permute.xlu0 %2117
        %2119 = vset.pattern.permute.xlu0 2
        %2120 = vperm.xlu0 %2119, %v259
        %v2121 = vpop.permute.xlu0 %2120
        %2122 = vset.pattern.permute.xlu0 2
        %2123 = vperm.xlu0 %2122, %v260
        %v2124 = vpop.permute.xlu0 %2123
        %2125 = vset.pattern.permute.xlu0 2
        %2126 = vperm.xlu0 %2125, %v261
        %v2127 = vpop.permute.xlu0 %2126
        %2128 = vset.pattern.permute.xlu0 2
        %2129 = vperm.xlu0 %2128, %v262
        %v2130 = vpop.permute.xlu0 %2129
        %2131 = vset.pattern.permute.xlu0 2
        %2132 = vperm.xlu0 %2131, %v263
        %v2133 = vpop.permute.xlu0 %2132
        %2134 = vset.pattern.permute.xlu0 2
        %2135 = vperm.xlu0 %2134, %v264
        %v2136 = vpop.permute.xlu0 %2135
        %2137 = vset.pattern.permute.xlu0 2
        %2138 = vperm.xlu0 %2137, %v265
        %v2139 = vpop.permute.xlu0 %2138
        %2140 = vset.pattern.permute.xlu0 2
        %2141 = vperm.xlu0 %2140, %v266
        %v2142 = vpop.permute.xlu0 %2141
        %2143 = vset.pattern.permute.xlu0 2
        %2144 = vperm.xlu0 %2143, %v267
        %v2145 = vpop.permute.xlu0 %2144
        %2146 = vset.pattern.permute.xlu0 2
        %2147 = vperm.xlu0 %2146, %v268
        %v2148 = vpop.permute.xlu0 %2147
        %2149 = vset.pattern.permute.xlu0 2
        %2150 = vperm.xlu0 %2149, %v269
        %v2151 = vpop.permute.xlu0 %2150
        %2152 = vset.pattern.permute.xlu0 2
        %2153 = vperm.xlu0 %2152, %v270
        %v2154 = vpop.permute.xlu0 %2153
        %2155 = vset.pattern.permute.xlu0 2
        %2156 = vperm.xlu0 %2155, %v271
        %v2157 = vpop.permute.xlu0 %2156
        %2158 = vset.pattern.permute.xlu0 2
        %2159 = vperm.xlu0 %2158, %v272
        %v2160 = vpop.permute.xlu0 %2159
        %2161 = vset.pattern.permute.xlu0 2
        %2162 = vperm.xlu0 %2161, %v273
        %v2163 = vpop.permute.xlu0 %2162
        %2164 = vset.pattern.permute.xlu0 2
        %2165 = vperm.xlu0 %2164, %v274
        %v2166 = vpop.permute.xlu0 %2165
        %2167 = vset.pattern.permute.xlu0 2
        %2168 = vperm.xlu0 %2167, %v275
        %v2169 = vpop.permute.xlu0 %2168
        %2170 = vset.pattern.permute.xlu0 2
        %2171 = vperm.xlu0 %2170, %v276
        %v2172 = vpop.permute.xlu0 %2171
        %2173 = vset.pattern.permute.xlu0 2
        %2174 = vperm.xlu0 %2173, %v277
        %v2175 = vpop.permute.xlu0 %2174
        %2176 = vset.pattern.permute.xlu0 2
        %2177 = vperm.xlu0 %2176, %v278
        %v2178 = vpop.permute.xlu0 %2177
        %2179 = vset.pattern.permute.xlu0 2
        %2180 = vperm.xlu0 %2179, %v279
        %v2181 = vpop.permute.xlu0 %2180
        %2182 = vset.pattern.permute.xlu0 2
        %2183 = vperm.xlu0 %2182, %v280
        %v2184 = vpop.permute.xlu0 %2183
        %2185 = vset.pattern.permute.xlu0 2
        %2186 = vperm.xlu0 %2185, %v281
        %v2187 = vpop.permute.xlu0 %2186
        %2188 = vset.pattern.permute.xlu0 2
        %2189 = vperm.xlu0 %2188, %v282
        %v2190 = vpop.permute.xlu0 %2189
        %2191 = vset.pattern.permute.xlu0 2
        %2192 = vperm.xlu0 %2191, %v283
        %v2193 = vpop.permute.xlu0 %2192
        %2194 = vset.pattern.permute.xlu0 2
        %2195 = vperm.xlu0 %2194, %v284
        %v2196 = vpop.permute.xlu0 %2195
        %2197 = vset.pattern.permute.xlu0 2
        %2198 = vperm.xlu0 %2197, %v285
        %v2199 = vpop.permute.xlu0 %2198
        %2200 = vset.pattern.permute.xlu0 2
        %2201 = vperm.xlu0 %2200, %v286
        %v2202 = vpop.permute.xlu0 %2201
        %2203 = vset.pattern.permute.xlu0 2
        %2204 = vperm.xlu0 %2203, %v287
        %v2205 = vpop.permute.xlu0 %2204
        %2206 = vset.pattern.permute.xlu0 2
        %2207 = vperm.xlu0 %2206, %v288
        %v2208 = vpop.permute.xlu0 %2207
        %2209 = vset.pattern.permute.xlu0 2
        %2210 = vperm.xlu0 %2209, %v289
        %v2211 = vpop.permute.xlu0 %2210
        %2212 = vset.pattern.permute.xlu0 2
        %2213 = vperm.xlu0 %2212, %v290
        %v2214 = vpop.permute.xlu0 %2213
        %2215 = vset.pattern.permute.xlu0 2
        %2216 = vperm.xlu0 %2215, %v291
        %v2217 = vpop.permute.xlu0 %2216
        %2218 = vset.pattern.permute.xlu0 2
        %2219 = vperm.xlu0 %2218, %v292
        %v2220 = vpop.permute.xlu0 %2219
        %2221 = vset.pattern.permute.xlu0 2
        %2222 = vperm.xlu0 %2221, %v293
        %v2223 = vpop.permute.xlu0 %2222
        %2224 = vset.pattern.permute.xlu0 2
        %2225 = vperm.xlu0 %2224, %v294
        %v2226 = vpop.permute.xlu0 %2225
        %2227 = vset.pattern.permute.xlu0 2
        %2228 = vperm.xlu0 %2227, %v295
        %v2229 = vpop.permute.xlu0 %2228
        %2230 = vset.pattern.permute.xlu0 2
        %2231 = vperm.xlu0 %2230, %v296
        %v2232 = vpop.permute.xlu0 %2231
        %2233 = vset.pattern.permute.xlu0 2
        %2234 = vperm.xlu0 %2233, %v297
        %v2235 = vpop.permute.xlu0 %2234
        %2236 = vset.pattern.permute.xlu0 2
        %2237 = vperm.xlu0 %2236, %v298
        %v2238 = vpop.permute.xlu0 %2237
        %2239 = vset.pattern.permute.xlu0 2
        %2240 = vperm.xlu0 %2239, %v299
        %v2241 = vpop.permute.xlu0 %2240
        %2242 = vset.pattern.permute.xlu0 2
        %2243 = vperm.xlu0 %2242, %v300
        %v2244 = vpop.permute.xlu0 %2243
        %2245 = vset.pattern.permute.xlu0 2
        %2246 = vperm.xlu0 %2245, %v301
        %v2247 = vpop.permute.xlu0 %2246
        %2248 = vset.pattern.permute.xlu0 2
        %2249 = vperm.xlu0 %2248, %v302
        %v2250 = vpop.permute.xlu0 %2249
        %2251 = vset.pattern.permute.xlu0 2
        %2252 = vperm.xlu0 %2251, %v303
        %v2253 = vpop.permute.xlu0 %2252
        %2254 = vset.pattern.permute.xlu0 2
        %2255 = vperm.xlu0 %2254, %v304
        %v2256 = vpop.permute.xlu0 %2255
        %2257 = vset.pattern.permute.xlu0 2
        %2258 = vperm.xlu0 %2257, %v305
        %v2259 = vpop.permute.xlu0 %2258
        %2260 = vset.pattern.permute.xlu0 2
        %2261 = vperm.xlu0 %2260, %v306
        %v2262 = vpop.permute.xlu0 %2261
        %2263 = vset.pattern.permute.xlu0 2
        %2264 = vperm.xlu0 %2263, %v307
        %v2265 = vpop.permute.xlu0 %2264
        %2266 = vset.pattern.permute.xlu0 2
        %2267 = vperm.xlu0 %2266, %v308
        %v2268 = vpop.permute.xlu0 %2267
        %2269 = vset.pattern.permute.xlu0 2
        %2270 = vperm.xlu0 %2269, %v309
        %v2271 = vpop.permute.xlu0 %2270
        %2272 = vset.pattern.permute.xlu0 2
        %2273 = vperm.xlu0 %2272, %v310
        %v2274 = vpop.permute.xlu0 %2273
        %2275 = vset.pattern.permute.xlu0 2
        %2276 = vperm.xlu0 %2275, %v311
        %v2277 = vpop.permute.xlu0 %2276
        %2278 = vset.pattern.permute.xlu0 2
        %2279 = vperm.xlu0 %2278, %v312
        %v2280 = vpop.permute.xlu0 %2279
        %2281 = vset.pattern.permute.xlu0 2
        %2282 = vperm.xlu0 %2281, %v313
        %v2283 = vpop.permute.xlu0 %2282
        %2284 = vset.pattern.permute.xlu0 2
        %2285 = vperm.xlu0 %2284, %v314
        %v2286 = vpop.permute.xlu0 %2285
        %2287 = vset.pattern.permute.xlu0 2
        %2288 = vperm.xlu0 %2287, %v315
        %v2289 = vpop.permute.xlu0 %2288
        %2290 = vset.pattern.permute.xlu0 2
        %2291 = vperm.xlu0 %2290, %v316
        %v2292 = vpop.permute.xlu0 %2291
        %2293 = vset.pattern.permute.xlu0 2
        %2294 = vperm.xlu0 %2293, %v317
        %v2295 = vpop.permute.xlu0 %2294
        %2296 = vset.pattern.permute.xlu0 2
        %2297 = vperm.xlu0 %2296, %v318
        %v2298 = vpop.permute.xlu0 %2297
        %2299 = vset.pattern.permute.xlu0 2
        %2300 = vperm.xlu0 %2299, %v319
        %v2301 = vpop.permute.xlu0 %2300
        %2302 = vset.pattern.permute.xlu0 2
        %2303 = vperm.xlu0 %2302, %v320
        %v2304 = vpop.permute.xlu0 %2303
        %2305 = vset.pattern.permute.xlu0 2
        %2306 = vperm.xlu0 %2305, %v321
        %v2307 = vpop.permute.xlu0 %2306
        %2308 = vset.pattern.permute.xlu0 2
        %2309 = vperm.xlu0 %2308, %v322
        %v2310 = vpop.permute.xlu0 %2309
        %2311 = vset.pattern.permute.xlu0 2
        %2312 = vperm.xlu0 %2311, %v323
        %v2313 = vpop.permute.xlu0 %2312
        %2314 = vset.pattern.permute.xlu0 2
        %2315 = vperm.xlu0 %2314, %v324
        %v2316 = vpop.permute.xlu0 %2315
        %2317 = vset.pattern.permute.xlu0 2
        %2318 = vperm.xlu0 %2317, %v325
        %v2319 = vpop.permute.xlu0 %2318
        %2320 = vset.pattern.permute.xlu0 2
        %2321 = vperm.xlu0 %2320, %v326
        %v2322 = vpop.permute.xlu0 %2321
        %2323 = vset.pattern.permute.xlu0 2
        %2324 = vperm.xlu0 %2323, %v327
        %v2325 = vpop.permute.xlu0 %2324
        %2326 = vset.pattern.permute.xlu0 2
        %2327 = vperm.xlu0 %2326, %v328
        %v2328 = vpop.permute.xlu0 %2327
        %2329 = vset.pattern.permute.xlu0 2
        %2330 = vperm.xlu0 %2329, %v329
        %v2331 = vpop.permute.xlu0 %2330
        %2332 = vset.pattern.permute.xlu0 2
        %2333 = vperm.xlu0 %2332, %v330
        %v2334 = vpop.permute.xlu0 %2333
        %2335 = vset.pattern.permute.xlu0 2
        %2336 = vperm.xlu0 %2335, %v331
        %v2337 = vpop.permute.xlu0 %2336
        %2338 = vset.pattern.permute.xlu0 2
        %2339 = vperm.xlu0 %2338, %v332
        %v2340 = vpop.permute.xlu0 %2339
        %2341 = vset.pattern.permute.xlu0 2
        %2342 = vperm.xlu0 %2341, %v333
        %v2343 = vpop.permute.xlu0 %2342
        %2344 = vset.pattern.permute.xlu0 2
        %2345 = vperm.xlu0 %2344, %v334
        %v2346 = vpop.permute.xlu0 %2345
        %2347 = vset.pattern.permute.xlu0 2
        %2348 = vperm.xlu0 %2347, %v335
        %v2349 = vpop.permute.xlu0 %2348
        %2350 = vset.pattern.permute.xlu0 2
        %2351 = vperm.xlu0 %2350, %v336
        %v2352 = vpop.permute.xlu0 %2351
        %2353 = vset.pattern.permute.xlu0 2
        %2354 = vperm.xlu0 %2353, %v337
        %v2355 = vpop.permute.xlu0 %2354
        %2356 = vset.pattern.permute.xlu0 2
        %2357 = vperm.xlu0 %2356, %v338
        %v2358 = vpop.permute.xlu0 %2357
        %2359 = vset.pattern.permute.xlu0 2
        %2360 = vperm.xlu0 %2359, %v339
        %v2361 = vpop.permute.xlu0 %2360
        %2362 = vset.pattern.permute.xlu0 2
        %2363 = vperm.xlu0 %2362, %v340
        %v2364 = vpop.permute.xlu0 %2363
        %2365 = vset.pattern.permute.xlu0 2
        %2366 = vperm.xlu0 %2365, %v341
        %v2367 = vpop.permute.xlu0 %2366
        %2368 = vset.pattern.permute.xlu0 2
        %2369 = vperm.xlu0 %2368, %v342
        %v2370 = vpop.permute.xlu0 %2369
        %2371 = vset.pattern.permute.xlu0 2
        %2372 = vperm.xlu0 %2371, %v343
        %v2373 = vpop.permute.xlu0 %2372
        %2374 = vset.pattern.permute.xlu0 2
        %2375 = vperm.xlu0 %2374, %v344
        %v2376 = vpop.permute.xlu0 %2375
        %2377 = vset.pattern.permute.xlu0 2
        %2378 = vperm.xlu0 %2377, %v345
        %v2379 = vpop.permute.xlu0 %2378
        %2380 = vset.pattern.permute.xlu0 2
        %2381 = vperm.xlu0 %2380, %v346
        %v2382 = vpop.permute.xlu0 %2381
        %2383 = vset.pattern.permute.xlu0 2
        %2384 = vperm.xlu0 %2383, %v347
        %v2385 = vpop.permute.xlu0 %2384
        %2386 = vset.pattern.permute.xlu0 2
        %2387 = vperm.xlu0 %2386, %v348
        %v2388 = vpop.permute.xlu0 %2387
        %2389 = vset.pattern.permute.xlu0 2
        %2390 = vperm.xlu0 %2389, %v349
        %v2391 = vpop.permute.xlu0 %2390
        %2392 = vset.pattern.permute.xlu0 2
        %2393 = vperm.xlu0 %2392, %v350
        %v2394 = vpop.permute.xlu0 %2393
        %2395 = vset.pattern.permute.xlu0 2
        %2396 = vperm.xlu0 %2395, %v351
        %v2397 = vpop.permute.xlu0 %2396
        %2398 = vset.pattern.permute.xlu0 2
        %2399 = vperm.xlu0 %2398, %v352
        %v2400 = vpop.permute.xlu0 %2399
        %2401 = vset.pattern.permute.xlu0 2
        %2402 = vperm.xlu0 %2401, %v353
        %v2403 = vpop.permute.xlu0 %2402
        %2404 = vset.pattern.permute.xlu0 2
        %2405 = vperm.xlu0 %2404, %v354
        %v2406 = vpop.permute.xlu0 %2405
        %vm2407 = vcmp.eq.s32.totalorder %v2025, %v358
        %vm2408 = vcmp.eq.s32.totalorder %v2028, %v358
        %vm2409 = vcmp.eq.s32.totalorder %v2031, %v358
        %vm2410 = vcmp.eq.s32.totalorder %v2034, %v358
        %vm2411 = vcmp.eq.s32.totalorder %v2037, %v358
        %vm2412 = vcmp.eq.s32.totalorder %v2040, %v358
        %vm2413 = vcmp.eq.s32.totalorder %v2043, %v358
        %vm2414 = vcmp.eq.s32.totalorder %v2046, %v358
        %vm2415 = vcmp.eq.s32.totalorder %v2049, %v358
        %vm2416 = vcmp.eq.s32.totalorder %v2052, %v358
        %vm2417 = vcmp.eq.s32.totalorder %v2055, %v358
        %vm2418 = vcmp.eq.s32.totalorder %v2058, %v358
        %vm2419 = vcmp.eq.s32.totalorder %v2061, %v358
        %vm2420 = vcmp.eq.s32.totalorder %v2064, %v358
        %vm2421 = vcmp.eq.s32.totalorder %v2067, %v358
        %vm2422 = vcmp.eq.s32.totalorder %v2070, %v358
        %vm2423 = vcmp.eq.s32.totalorder %v2073, %v358
        %vm2424 = vcmp.eq.s32.totalorder %v2076, %v358
        %vm2425 = vcmp.eq.s32.totalorder %v2079, %v358
        %vm2426 = vcmp.eq.s32.totalorder %v2082, %v358
        %vm2427 = vcmp.eq.s32.totalorder %v2085, %v358
        %vm2428 = vcmp.eq.s32.totalorder %v2088, %v358
        %vm2429 = vcmp.eq.s32.totalorder %v2091, %v358
        %vm2430 = vcmp.eq.s32.totalorder %v2094, %v358
        %vm2431 = vcmp.eq.s32.totalorder %v2097, %v358
        %vm2432 = vcmp.eq.s32.totalorder %v2100, %v358
        %vm2433 = vcmp.eq.s32.totalorder %v2103, %v358
        %vm2434 = vcmp.eq.s32.totalorder %v2106, %v358
        %vm2435 = vcmp.eq.s32.totalorder %v2109, %v358
        %vm2436 = vcmp.eq.s32.totalorder %v2112, %v358
        %vm2437 = vcmp.eq.s32.totalorder %v2115, %v358
        %vm2438 = vcmp.eq.s32.totalorder %v2118, %v358
        %vm2439 = vcmp.eq.s32.totalorder %v2121, %v358
        %vm2440 = vcmp.eq.s32.totalorder %v2124, %v358
        %vm2441 = vcmp.eq.s32.totalorder %v2127, %v358
        %vm2442 = vcmp.eq.s32.totalorder %v2130, %v358
        %vm2443 = vcmp.eq.s32.totalorder %v2133, %v358
        %vm2444 = vcmp.eq.s32.totalorder %v2136, %v358
        %vm2445 = vcmp.eq.s32.totalorder %v2139, %v358
        %vm2446 = vcmp.eq.s32.totalorder %v2142, %v358
        %vm2447 = vcmp.eq.s32.totalorder %v2145, %v358
        %vm2448 = vcmp.eq.s32.totalorder %v2148, %v358
        %vm2449 = vcmp.eq.s32.totalorder %v2151, %v358
        %vm2450 = vcmp.eq.s32.totalorder %v2154, %v358
        %vm2451 = vcmp.eq.s32.totalorder %v2157, %v358
        %vm2452 = vcmp.eq.s32.totalorder %v2160, %v358
        %vm2453 = vcmp.eq.s32.totalorder %v2163, %v358
        %vm2454 = vcmp.eq.s32.totalorder %v2166, %v358
        %vm2455 = vcmp.eq.s32.totalorder %v2169, %v358
        %vm2456 = vcmp.eq.s32.totalorder %v2172, %v358
        %vm2457 = vcmp.eq.s32.totalorder %v2175, %v358
        %vm2458 = vcmp.eq.s32.totalorder %v2178, %v358
        %vm2459 = vcmp.eq.s32.totalorder %v2181, %v358
        %vm2460 = vcmp.eq.s32.totalorder %v2184, %v358
        %vm2461 = vcmp.eq.s32.totalorder %v2187, %v358
        %vm2462 = vcmp.eq.s32.totalorder %v2190, %v358
        %vm2463 = vcmp.eq.s32.totalorder %v2193, %v358
        %vm2464 = vcmp.eq.s32.totalorder %v2196, %v358
        %vm2465 = vcmp.eq.s32.totalorder %v2199, %v358
        %vm2466 = vcmp.eq.s32.totalorder %v2202, %v358
        %vm2467 = vcmp.eq.s32.totalorder %v2205, %v358
        %vm2468 = vcmp.eq.s32.totalorder %v2208, %v358
        %vm2469 = vcmp.eq.s32.totalorder %v2211, %v358
        %vm2470 = vcmp.eq.s32.totalorder %v2214, %v358
        %vm2471 = vcmp.eq.s32.totalorder %v2217, %v358
        %vm2472 = vcmp.eq.s32.totalorder %v2220, %v358
        %vm2473 = vcmp.eq.s32.totalorder %v2223, %v358
        %vm2474 = vcmp.eq.s32.totalorder %v2226, %v358
        %vm2475 = vcmp.eq.s32.totalorder %v2229, %v358
        %vm2476 = vcmp.eq.s32.totalorder %v2232, %v358
        %vm2477 = vcmp.eq.s32.totalorder %v2235, %v358
        %vm2478 = vcmp.eq.s32.totalorder %v2238, %v358
        %vm2479 = vcmp.eq.s32.totalorder %v2241, %v358
        %vm2480 = vcmp.eq.s32.totalorder %v2244, %v358
        %vm2481 = vcmp.eq.s32.totalorder %v2247, %v358
        %vm2482 = vcmp.eq.s32.totalorder %v2250, %v358
        %vm2483 = vcmp.eq.s32.totalorder %v2253, %v358
        %vm2484 = vcmp.eq.s32.totalorder %v2256, %v358
        %vm2485 = vcmp.eq.s32.totalorder %v2259, %v358
        %vm2486 = vcmp.eq.s32.totalorder %v2262, %v358
        %vm2487 = vcmp.eq.s32.totalorder %v2265, %v358
        %vm2488 = vcmp.eq.s32.totalorder %v2268, %v358
        %vm2489 = vcmp.eq.s32.totalorder %v2271, %v358
        %vm2490 = vcmp.eq.s32.totalorder %v2274, %v358
        %vm2491 = vcmp.eq.s32.totalorder %v2277, %v358
        %vm2492 = vcmp.eq.s32.totalorder %v2280, %v358
        %vm2493 = vcmp.eq.s32.totalorder %v2283, %v358
        %vm2494 = vcmp.eq.s32.totalorder %v2286, %v358
        %vm2495 = vcmp.eq.s32.totalorder %v2289, %v358
        %vm2496 = vcmp.eq.s32.totalorder %v2292, %v358
        %vm2497 = vcmp.eq.s32.totalorder %v2295, %v358
        %vm2498 = vcmp.eq.s32.totalorder %v2298, %v358
        %vm2499 = vcmp.eq.s32.totalorder %v2301, %v358
        %vm2500 = vcmp.eq.s32.totalorder %v2304, %v358
        %vm2501 = vcmp.eq.s32.totalorder %v2307, %v358
        %vm2502 = vcmp.eq.s32.totalorder %v2310, %v358
        %vm2503 = vcmp.eq.s32.totalorder %v2313, %v358
        %vm2504 = vcmp.eq.s32.totalorder %v2316, %v358
        %vm2505 = vcmp.eq.s32.totalorder %v2319, %v358
        %vm2506 = vcmp.eq.s32.totalorder %v2322, %v358
        %vm2507 = vcmp.eq.s32.totalorder %v2325, %v358
        %vm2508 = vcmp.eq.s32.totalorder %v2328, %v358
        %vm2509 = vcmp.eq.s32.totalorder %v2331, %v358
        %vm2510 = vcmp.eq.s32.totalorder %v2334, %v358
        %vm2511 = vcmp.eq.s32.totalorder %v2337, %v358
        %vm2512 = vcmp.eq.s32.totalorder %v2340, %v358
        %vm2513 = vcmp.eq.s32.totalorder %v2343, %v358
        %vm2514 = vcmp.eq.s32.totalorder %v2346, %v358
        %vm2515 = vcmp.eq.s32.totalorder %v2349, %v358
        %vm2516 = vcmp.eq.s32.totalorder %v2352, %v358
        %vm2517 = vcmp.eq.s32.totalorder %v2355, %v358
        %vm2518 = vcmp.eq.s32.totalorder %v2358, %v358
        %vm2519 = vcmp.eq.s32.totalorder %v2361, %v358
        %vm2520 = vcmp.eq.s32.totalorder %v2364, %v358
        %vm2521 = vcmp.eq.s32.totalorder %v2367, %v358
        %vm2522 = vcmp.eq.s32.totalorder %v2370, %v358
        %vm2523 = vcmp.eq.s32.totalorder %v2373, %v358
        %vm2524 = vcmp.eq.s32.totalorder %v2376, %v358
        %vm2525 = vcmp.eq.s32.totalorder %v2379, %v358
        %vm2526 = vcmp.eq.s32.totalorder %v2382, %v358
        %vm2527 = vcmp.eq.s32.totalorder %v2385, %v358
        %vm2528 = vcmp.eq.s32.totalorder %v2388, %v358
        %vm2529 = vcmp.eq.s32.totalorder %v2391, %v358
        %vm2530 = vcmp.eq.s32.totalorder %v2394, %v358
        %vm2531 = vcmp.eq.s32.totalorder %v2397, %v358
        %vm2532 = vcmp.eq.s32.totalorder %v2400, %v358
        %vm2533 = vcmp.eq.s32.totalorder %v2403, %v358
        %vm2534 = vcmp.eq.s32.totalorder %v2406, %v358
        %v2535 = vsel %vm2407, 1, 0
        %v2536 = vsel %vm2408, 1, 0
        %v2537 = vsel %vm2409, 1, 0
        %v2538 = vsel %vm2410, 1, 0
        %v2539 = vsel %vm2411, 1, 0
        %v2540 = vsel %vm2412, 1, 0
        %v2541 = vsel %vm2413, 1, 0
        %v2542 = vsel %vm2414, 1, 0
        %v2543 = vsel %vm2415, 1, 0
        %v2544 = vsel %vm2416, 1, 0
        %v2545 = vsel %vm2417, 1, 0
        %v2546 = vsel %vm2418, 1, 0
        %v2547 = vsel %vm2419, 1, 0
        %v2548 = vsel %vm2420, 1, 0
        %v2549 = vsel %vm2421, 1, 0
        %v2550 = vsel %vm2422, 1, 0
        %v2551 = vsel %vm2423, 1, 0
        %v2552 = vsel %vm2424, 1, 0
        %v2553 = vsel %vm2425, 1, 0
        %v2554 = vsel %vm2426, 1, 0
        %v2555 = vsel %vm2427, 1, 0
        %v2556 = vsel %vm2428, 1, 0
        %v2557 = vsel %vm2429, 1, 0
        %v2558 = vsel %vm2430, 1, 0
        %v2559 = vsel %vm2431, 1, 0
        %v2560 = vsel %vm2432, 1, 0
        %v2561 = vsel %vm2433, 1, 0
        %v2562 = vsel %vm2434, 1, 0
        %v2563 = vsel %vm2435, 1, 0
        %v2564 = vsel %vm2436, 1, 0
        %v2565 = vsel %vm2437, 1, 0
        %v2566 = vsel %vm2438, 1, 0
        %v2567 = vsel %vm2439, 1, 0
        %v2568 = vsel %vm2440, 1, 0
        %v2569 = vsel %vm2441, 1, 0
        %v2570 = vsel %vm2442, 1, 0
        %v2571 = vsel %vm2443, 1, 0
        %v2572 = vsel %vm2444, 1, 0
        %v2573 = vsel %vm2445, 1, 0
        %v2574 = vsel %vm2446, 1, 0
        %v2575 = vsel %vm2447, 1, 0
        %v2576 = vsel %vm2448, 1, 0
        %v2577 = vsel %vm2449, 1, 0
        %v2578 = vsel %vm2450, 1, 0
        %v2579 = vsel %vm2451, 1, 0
        %v2580 = vsel %vm2452, 1, 0
        %v2581 = vsel %vm2453, 1, 0
        %v2582 = vsel %vm2454, 1, 0
        %v2583 = vsel %vm2455, 1, 0
        %v2584 = vsel %vm2456, 1, 0
        %v2585 = vsel %vm2457, 1, 0
        %v2586 = vsel %vm2458, 1, 0
        %v2587 = vsel %vm2459, 1, 0
        %v2588 = vsel %vm2460, 1, 0
        %v2589 = vsel %vm2461, 1, 0
        %v2590 = vsel %vm2462, 1, 0
        %v2591 = vsel %vm2463, 1, 0
        %v2592 = vsel %vm2464, 1, 0
        %v2593 = vsel %vm2465, 1, 0
        %v2594 = vsel %vm2466, 1, 0
        %v2595 = vsel %vm2467, 1, 0
        %v2596 = vsel %vm2468, 1, 0
        %v2597 = vsel %vm2469, 1, 0
        %v2598 = vsel %vm2470, 1, 0
        %v2599 = vsel %vm2471, 1, 0
        %v2600 = vsel %vm2472, 1, 0
        %v2601 = vsel %vm2473, 1, 0
        %v2602 = vsel %vm2474, 1, 0
        %v2603 = vsel %vm2475, 1, 0
        %v2604 = vsel %vm2476, 1, 0
        %v2605 = vsel %vm2477, 1, 0
        %v2606 = vsel %vm2478, 1, 0
        %v2607 = vsel %vm2479, 1, 0
        %v2608 = vsel %vm2480, 1, 0
        %v2609 = vsel %vm2481, 1, 0
        %v2610 = vsel %vm2482, 1, 0
        %v2611 = vsel %vm2483, 1, 0
        %v2612 = vsel %vm2484, 1, 0
        %v2613 = vsel %vm2485, 1, 0
        %v2614 = vsel %vm2486, 1, 0
        %v2615 = vsel %vm2487, 1, 0
        %v2616 = vsel %vm2488, 1, 0
        %v2617 = vsel %vm2489, 1, 0
        %v2618 = vsel %vm2490, 1, 0
        %v2619 = vsel %vm2491, 1, 0
        %v2620 = vsel %vm2492, 1, 0
        %v2621 = vsel %vm2493, 1, 0
        %v2622 = vsel %vm2494, 1, 0
        %v2623 = vsel %vm2495, 1, 0
        %v2624 = vsel %vm2496, 1, 0
        %v2625 = vsel %vm2497, 1, 0
        %v2626 = vsel %vm2498, 1, 0
        %v2627 = vsel %vm2499, 1, 0
        %v2628 = vsel %vm2500, 1, 0
        %v2629 = vsel %vm2501, 1, 0
        %v2630 = vsel %vm2502, 1, 0
        %v2631 = vsel %vm2503, 1, 0
        %v2632 = vsel %vm2504, 1, 0
        %v2633 = vsel %vm2505, 1, 0
        %v2634 = vsel %vm2506, 1, 0
        %v2635 = vsel %vm2507, 1, 0
        %v2636 = vsel %vm2508, 1, 0
        %v2637 = vsel %vm2509, 1, 0
        %v2638 = vsel %vm2510, 1, 0
        %v2639 = vsel %vm2511, 1, 0
        %v2640 = vsel %vm2512, 1, 0
        %v2641 = vsel %vm2513, 1, 0
        %v2642 = vsel %vm2514, 1, 0
        %v2643 = vsel %vm2515, 1, 0
        %v2644 = vsel %vm2516, 1, 0
        %v2645 = vsel %vm2517, 1, 0
        %v2646 = vsel %vm2518, 1, 0
        %v2647 = vsel %vm2519, 1, 0
        %v2648 = vsel %vm2520, 1, 0
        %v2649 = vsel %vm2521, 1, 0
        %v2650 = vsel %vm2522, 1, 0
        %v2651 = vsel %vm2523, 1, 0
        %v2652 = vsel %vm2524, 1, 0
        %v2653 = vsel %vm2525, 1, 0
        %v2654 = vsel %vm2526, 1, 0
        %v2655 = vsel %vm2527, 1, 0
        %v2656 = vsel %vm2528, 1, 0
        %v2657 = vsel %vm2529, 1, 0
        %v2658 = vsel %vm2530, 1, 0
        %v2659 = vsel %vm2531, 1, 0
        %v2660 = vsel %vm2532, 1, 0
        %v2661 = vsel %vm2533, 1, 0
        %v2662 = vsel %vm2534, 1, 0
        %v2663 = vcvt.s32.f32 %v2535
        %v2664 = vcvt.s32.f32 %v2536
        %v2665 = vcvt.s32.f32 %v2537
        %v2666 = vcvt.s32.f32 %v2538
        %v2667 = vcvt.s32.f32 %v2539
        %v2668 = vcvt.s32.f32 %v2540
        %v2669 = vcvt.s32.f32 %v2541
        %v2670 = vcvt.s32.f32 %v2542
        %v2671 = vcvt.s32.f32 %v2543
        %v2672 = vcvt.s32.f32 %v2544
        %v2673 = vcvt.s32.f32 %v2545
        %v2674 = vcvt.s32.f32 %v2546
        %v2675 = vcvt.s32.f32 %v2547
        %v2676 = vcvt.s32.f32 %v2548
        %v2677 = vcvt.s32.f32 %v2549
        %v2678 = vcvt.s32.f32 %v2550
        %v2679 = vcvt.s32.f32 %v2551
        %v2680 = vcvt.s32.f32 %v2552
        %v2681 = vcvt.s32.f32 %v2553
        %v2682 = vcvt.s32.f32 %v2554
        %v2683 = vcvt.s32.f32 %v2555
        %v2684 = vcvt.s32.f32 %v2556
        %v2685 = vcvt.s32.f32 %v2557
        %v2686 = vcvt.s32.f32 %v2558
        %v2687 = vcvt.s32.f32 %v2559
        %v2688 = vcvt.s32.f32 %v2560
        %v2689 = vcvt.s32.f32 %v2561
        %v2690 = vcvt.s32.f32 %v2562
        %v2691 = vcvt.s32.f32 %v2563
        %v2692 = vcvt.s32.f32 %v2564
        %v2693 = vcvt.s32.f32 %v2565
        %v2694 = vcvt.s32.f32 %v2566
        %v2695 = vcvt.s32.f32 %v2567
        %v2696 = vcvt.s32.f32 %v2568
        %v2697 = vcvt.s32.f32 %v2569
        %v2698 = vcvt.s32.f32 %v2570
        %v2699 = vcvt.s32.f32 %v2571
        %v2700 = vcvt.s32.f32 %v2572
        %v2701 = vcvt.s32.f32 %v2573
        %v2702 = vcvt.s32.f32 %v2574
        %v2703 = vcvt.s32.f32 %v2575
        %v2704 = vcvt.s32.f32 %v2576
        %v2705 = vcvt.s32.f32 %v2577
        %v2706 = vcvt.s32.f32 %v2578
        %v2707 = vcvt.s32.f32 %v2579
        %v2708 = vcvt.s32.f32 %v2580
        %v2709 = vcvt.s32.f32 %v2581
        %v2710 = vcvt.s32.f32 %v2582
        %v2711 = vcvt.s32.f32 %v2583
        %v2712 = vcvt.s32.f32 %v2584
        %v2713 = vcvt.s32.f32 %v2585
        %v2714 = vcvt.s32.f32 %v2586
        %v2715 = vcvt.s32.f32 %v2587
        %v2716 = vcvt.s32.f32 %v2588
        %v2717 = vcvt.s32.f32 %v2589
        %v2718 = vcvt.s32.f32 %v2590
        %v2719 = vcvt.s32.f32 %v2591
        %v2720 = vcvt.s32.f32 %v2592
        %v2721 = vcvt.s32.f32 %v2593
        %v2722 = vcvt.s32.f32 %v2594
        %v2723 = vcvt.s32.f32 %v2595
        %v2724 = vcvt.s32.f32 %v2596
        %v2725 = vcvt.s32.f32 %v2597
        %v2726 = vcvt.s32.f32 %v2598
        %v2727 = vcvt.s32.f32 %v2599
        %v2728 = vcvt.s32.f32 %v2600
        %v2729 = vcvt.s32.f32 %v2601
        %v2730 = vcvt.s32.f32 %v2602
        %v2731 = vcvt.s32.f32 %v2603
        %v2732 = vcvt.s32.f32 %v2604
        %v2733 = vcvt.s32.f32 %v2605
        %v2734 = vcvt.s32.f32 %v2606
        %v2735 = vcvt.s32.f32 %v2607
        %v2736 = vcvt.s32.f32 %v2608
        %v2737 = vcvt.s32.f32 %v2609
        %v2738 = vcvt.s32.f32 %v2610
        %v2739 = vcvt.s32.f32 %v2611
        %v2740 = vcvt.s32.f32 %v2612
        %v2741 = vcvt.s32.f32 %v2613
        %v2742 = vcvt.s32.f32 %v2614
        %v2743 = vcvt.s32.f32 %v2615
        %v2744 = vcvt.s32.f32 %v2616
        %v2745 = vcvt.s32.f32 %v2617
        %v2746 = vcvt.s32.f32 %v2618
        %v2747 = vcvt.s32.f32 %v2619
        %v2748 = vcvt.s32.f32 %v2620
        %v2749 = vcvt.s32.f32 %v2621
        %v2750 = vcvt.s32.f32 %v2622
        %v2751 = vcvt.s32.f32 %v2623
        %v2752 = vcvt.s32.f32 %v2624
        %v2753 = vcvt.s32.f32 %v2625
        %v2754 = vcvt.s32.f32 %v2626
        %v2755 = vcvt.s32.f32 %v2627
        %v2756 = vcvt.s32.f32 %v2628
        %v2757 = vcvt.s32.f32 %v2629
        %v2758 = vcvt.s32.f32 %v2630
        %v2759 = vcvt.s32.f32 %v2631
        %v2760 = vcvt.s32.f32 %v2632
        %v2761 = vcvt.s32.f32 %v2633
        %v2762 = vcvt.s32.f32 %v2634
        %v2763 = vcvt.s32.f32 %v2635
        %v2764 = vcvt.s32.f32 %v2636
        %v2765 = vcvt.s32.f32 %v2637
        %v2766 = vcvt.s32.f32 %v2638
        %v2767 = vcvt.s32.f32 %v2639
        %v2768 = vcvt.s32.f32 %v2640
        %v2769 = vcvt.s32.f32 %v2641
        %v2770 = vcvt.s32.f32 %v2642
        %v2771 = vcvt.s32.f32 %v2643
        %v2772 = vcvt.s32.f32 %v2644
        %v2773 = vcvt.s32.f32 %v2645
        %v2774 = vcvt.s32.f32 %v2646
        %v2775 = vcvt.s32.f32 %v2647
        %v2776 = vcvt.s32.f32 %v2648
        %v2777 = vcvt.s32.f32 %v2649
        %v2778 = vcvt.s32.f32 %v2650
        %v2779 = vcvt.s32.f32 %v2651
        %v2780 = vcvt.s32.f32 %v2652
        %v2781 = vcvt.s32.f32 %v2653
        %v2782 = vcvt.s32.f32 %v2654
        %v2783 = vcvt.s32.f32 %v2655
        %v2784 = vcvt.s32.f32 %v2656
        %v2785 = vcvt.s32.f32 %v2657
        %v2786 = vcvt.s32.f32 %v2658
        %v2787 = vcvt.s32.f32 %v2659
        %v2788 = vcvt.s32.f32 %v2660
        %v2789 = vcvt.s32.f32 %v2661
        %v2790 = vcvt.s32.f32 %v2662
        %v2791 = vpack.c.bf16 %v2664, %v2663
        %v2792 = vpack.c.bf16 %v2666, %v2665
        %v2793 = vpack.c.bf16 %v2668, %v2667
        %v2794 = vpack.c.bf16 %v2670, %v2669
        %v2795 = vpack.c.bf16 %v2672, %v2671
        %v2796 = vpack.c.bf16 %v2674, %v2673
        %v2797 = vpack.c.bf16 %v2676, %v2675
        %v2798 = vpack.c.bf16 %v2678, %v2677
        %v2799 = vpack.c.bf16 %v2680, %v2679
        %v2800 = vpack.c.bf16 %v2682, %v2681
        %v2801 = vpack.c.bf16 %v2684, %v2683
        %v2802 = vpack.c.bf16 %v2686, %v2685
        %v2803 = vpack.c.bf16 %v2688, %v2687
        %v2804 = vpack.c.bf16 %v2690, %v2689
        %v2805 = vpack.c.bf16 %v2692, %v2691
        %v2806 = vpack.c.bf16 %v2694, %v2693
        %v2807 = vpack.c.bf16 %v2696, %v2695
        %v2808 = vpack.c.bf16 %v2698, %v2697
        %v2809 = vpack.c.bf16 %v2700, %v2699
        %v2810 = vpack.c.bf16 %v2702, %v2701
        %v2811 = vpack.c.bf16 %v2704, %v2703
        %v2812 = vpack.c.bf16 %v2706, %v2705
        %v2813 = vpack.c.bf16 %v2708, %v2707
        %v2814 = vpack.c.bf16 %v2710, %v2709
        %v2815 = vpack.c.bf16 %v2712, %v2711
        %v2816 = vpack.c.bf16 %v2714, %v2713
        %v2817 = vpack.c.bf16 %v2716, %v2715
        %v2818 = vpack.c.bf16 %v2718, %v2717
        %v2819 = vpack.c.bf16 %v2720, %v2719
        %v2820 = vpack.c.bf16 %v2722, %v2721
        %v2821 = vpack.c.bf16 %v2724, %v2723
        %v2822 = vpack.c.bf16 %v2726, %v2725
        %v2823 = vpack.c.bf16 %v2728, %v2727
        %v2824 = vpack.c.bf16 %v2730, %v2729
        %v2825 = vpack.c.bf16 %v2732, %v2731
        %v2826 = vpack.c.bf16 %v2734, %v2733
        %v2827 = vpack.c.bf16 %v2736, %v2735
        %v2828 = vpack.c.bf16 %v2738, %v2737
        %v2829 = vpack.c.bf16 %v2740, %v2739
        %v2830 = vpack.c.bf16 %v2742, %v2741
        %v2831 = vpack.c.bf16 %v2744, %v2743
        %v2832 = vpack.c.bf16 %v2746, %v2745
        %v2833 = vpack.c.bf16 %v2748, %v2747
        %v2834 = vpack.c.bf16 %v2750, %v2749
        %v2835 = vpack.c.bf16 %v2752, %v2751
        %v2836 = vpack.c.bf16 %v2754, %v2753
        %v2837 = vpack.c.bf16 %v2756, %v2755
        %v2838 = vpack.c.bf16 %v2758, %v2757
        %v2839 = vpack.c.bf16 %v2760, %v2759
        %v2840 = vpack.c.bf16 %v2762, %v2761
        %v2841 = vpack.c.bf16 %v2764, %v2763
        %v2842 = vpack.c.bf16 %v2766, %v2765
        %v2843 = vpack.c.bf16 %v2768, %v2767
        %v2844 = vpack.c.bf16 %v2770, %v2769
        %v2845 = vpack.c.bf16 %v2772, %v2771
        %v2846 = vpack.c.bf16 %v2774, %v2773
        %v2847 = vpack.c.bf16 %v2776, %v2775
        %v2848 = vpack.c.bf16 %v2778, %v2777
        %v2849 = vpack.c.bf16 %v2780, %v2779
        %v2850 = vpack.c.bf16 %v2782, %v2781
        %v2851 = vpack.c.bf16 %v2784, %v2783
        %v2852 = vpack.c.bf16 %v2786, %v2785
        %v2853 = vpack.c.bf16 %v2788, %v2787
        %v2854 = vpack.c.bf16 %v2790, %v2789
        %2855 = vset.pattern.permute.xlu0 3
        %2856 = vperm.xlu0 %2855, %v227
        %v2857 = vpop.permute.xlu0 %2856
        %2858 = vset.pattern.permute.xlu0 3
        %2859 = vperm.xlu0 %2858, %v228
        %v2860 = vpop.permute.xlu0 %2859
        %2861 = vset.pattern.permute.xlu0 3
        %2862 = vperm.xlu0 %2861, %v229
        %v2863 = vpop.permute.xlu0 %2862
        %2864 = vset.pattern.permute.xlu0 3
        %2865 = vperm.xlu0 %2864, %v230
        %v2866 = vpop.permute.xlu0 %2865
        %2867 = vset.pattern.permute.xlu0 3
        %2868 = vperm.xlu0 %2867, %v231
        %v2869 = vpop.permute.xlu0 %2868
        %2870 = vset.pattern.permute.xlu0 3
        %2871 = vperm.xlu0 %2870, %v232
        %v2872 = vpop.permute.xlu0 %2871
        %2873 = vset.pattern.permute.xlu0 3
        %2874 = vperm.xlu0 %2873, %v233
        %v2875 = vpop.permute.xlu0 %2874
        %2876 = vset.pattern.permute.xlu0 3
        %2877 = vperm.xlu0 %2876, %v234
        %v2878 = vpop.permute.xlu0 %2877
        %2879 = vset.pattern.permute.xlu0 3
        %2880 = vperm.xlu0 %2879, %v235
        %v2881 = vpop.permute.xlu0 %2880
        %2882 = vset.pattern.permute.xlu0 3
        %2883 = vperm.xlu0 %2882, %v236
        %v2884 = vpop.permute.xlu0 %2883
        %2885 = vset.pattern.permute.xlu0 3
        %2886 = vperm.xlu0 %2885, %v237
        %v2887 = vpop.permute.xlu0 %2886
        %2888 = vset.pattern.permute.xlu0 3
        %2889 = vperm.xlu0 %2888, %v238
        %v2890 = vpop.permute.xlu0 %2889
        %2891 = vset.pattern.permute.xlu0 3
        %2892 = vperm.xlu0 %2891, %v239
        %v2893 = vpop.permute.xlu0 %2892
        %2894 = vset.pattern.permute.xlu0 3
        %2895 = vperm.xlu0 %2894, %v240
        %v2896 = vpop.permute.xlu0 %2895
        %2897 = vset.pattern.permute.xlu0 3
        %2898 = vperm.xlu0 %2897, %v241
        %v2899 = vpop.permute.xlu0 %2898
        %2900 = vset.pattern.permute.xlu0 3
        %2901 = vperm.xlu0 %2900, %v242
        %v2902 = vpop.permute.xlu0 %2901
        %2903 = vset.pattern.permute.xlu0 3
        %2904 = vperm.xlu0 %2903, %v243
        %v2905 = vpop.permute.xlu0 %2904
        %2906 = vset.pattern.permute.xlu0 3
        %2907 = vperm.xlu0 %2906, %v244
        %v2908 = vpop.permute.xlu0 %2907
        %2909 = vset.pattern.permute.xlu0 3
        %2910 = vperm.xlu0 %2909, %v245
        %v2911 = vpop.permute.xlu0 %2910
        %2912 = vset.pattern.permute.xlu0 3
        %2913 = vperm.xlu0 %2912, %v246
        %v2914 = vpop.permute.xlu0 %2913
        %2915 = vset.pattern.permute.xlu0 3
        %2916 = vperm.xlu0 %2915, %v247
        %v2917 = vpop.permute.xlu0 %2916
        %2918 = vset.pattern.permute.xlu0 3
        %2919 = vperm.xlu0 %2918, %v248
        %v2920 = vpop.permute.xlu0 %2919
        %2921 = vset.pattern.permute.xlu0 3
        %2922 = vperm.xlu0 %2921, %v249
        %v2923 = vpop.permute.xlu0 %2922
        %2924 = vset.pattern.permute.xlu0 3
        %2925 = vperm.xlu0 %2924, %v250
        %v2926 = vpop.permute.xlu0 %2925
        %2927 = vset.pattern.permute.xlu0 3
        %2928 = vperm.xlu0 %2927, %v251
        %v2929 = vpop.permute.xlu0 %2928
        %2930 = vset.pattern.permute.xlu0 3
        %2931 = vperm.xlu0 %2930, %v252
        %v2932 = vpop.permute.xlu0 %2931
        %2933 = vset.pattern.permute.xlu0 3
        %2934 = vperm.xlu0 %2933, %v253
        %v2935 = vpop.permute.xlu0 %2934
        %2936 = vset.pattern.permute.xlu0 3
        %2937 = vperm.xlu0 %2936, %v254
        %v2938 = vpop.permute.xlu0 %2937
        %2939 = vset.pattern.permute.xlu0 3
        %2940 = vperm.xlu0 %2939, %v255
        %v2941 = vpop.permute.xlu0 %2940
        %2942 = vset.pattern.permute.xlu0 3
        %2943 = vperm.xlu0 %2942, %v256
        %v2944 = vpop.permute.xlu0 %2943
        %2945 = vset.pattern.permute.xlu0 3
        %2946 = vperm.xlu0 %2945, %v257
        %v2947 = vpop.permute.xlu0 %2946
        %2948 = vset.pattern.permute.xlu0 3
        %2949 = vperm.xlu0 %2948, %v258
        %v2950 = vpop.permute.xlu0 %2949
        %2951 = vset.pattern.permute.xlu0 3
        %2952 = vperm.xlu0 %2951, %v259
        %v2953 = vpop.permute.xlu0 %2952
        %2954 = vset.pattern.permute.xlu0 3
        %2955 = vperm.xlu0 %2954, %v260
        %v2956 = vpop.permute.xlu0 %2955
        %2957 = vset.pattern.permute.xlu0 3
        %2958 = vperm.xlu0 %2957, %v261
        %v2959 = vpop.permute.xlu0 %2958
        %2960 = vset.pattern.permute.xlu0 3
        %2961 = vperm.xlu0 %2960, %v262
        %v2962 = vpop.permute.xlu0 %2961
        %2963 = vset.pattern.permute.xlu0 3
        %2964 = vperm.xlu0 %2963, %v263
        %v2965 = vpop.permute.xlu0 %2964
        %2966 = vset.pattern.permute.xlu0 3
        %2967 = vperm.xlu0 %2966, %v264
        %v2968 = vpop.permute.xlu0 %2967
        %2969 = vset.pattern.permute.xlu0 3
        %2970 = vperm.xlu0 %2969, %v265
        %v2971 = vpop.permute.xlu0 %2970
        %2972 = vset.pattern.permute.xlu0 3
        %2973 = vperm.xlu0 %2972, %v266
        %v2974 = vpop.permute.xlu0 %2973
        %2975 = vset.pattern.permute.xlu0 3
        %2976 = vperm.xlu0 %2975, %v267
        %v2977 = vpop.permute.xlu0 %2976
        %2978 = vset.pattern.permute.xlu0 3
        %2979 = vperm.xlu0 %2978, %v268
        %v2980 = vpop.permute.xlu0 %2979
        %2981 = vset.pattern.permute.xlu0 3
        %2982 = vperm.xlu0 %2981, %v269
        %v2983 = vpop.permute.xlu0 %2982
        %2984 = vset.pattern.permute.xlu0 3
        %2985 = vperm.xlu0 %2984, %v270
        %v2986 = vpop.permute.xlu0 %2985
        %2987 = vset.pattern.permute.xlu0 3
        %2988 = vperm.xlu0 %2987, %v271
        %v2989 = vpop.permute.xlu0 %2988
        %2990 = vset.pattern.permute.xlu0 3
        %2991 = vperm.xlu0 %2990, %v272
        %v2992 = vpop.permute.xlu0 %2991
        %2993 = vset.pattern.permute.xlu0 3
        %2994 = vperm.xlu0 %2993, %v273
        %v2995 = vpop.permute.xlu0 %2994
        %2996 = vset.pattern.permute.xlu0 3
        %2997 = vperm.xlu0 %2996, %v274
        %v2998 = vpop.permute.xlu0 %2997
        %2999 = vset.pattern.permute.xlu0 3
        %3000 = vperm.xlu0 %2999, %v275
        %v3001 = vpop.permute.xlu0 %3000
        %3002 = vset.pattern.permute.xlu0 3
        %3003 = vperm.xlu0 %3002, %v276
        %v3004 = vpop.permute.xlu0 %3003
        %3005 = vset.pattern.permute.xlu0 3
        %3006 = vperm.xlu0 %3005, %v277
        %v3007 = vpop.permute.xlu0 %3006
        %3008 = vset.pattern.permute.xlu0 3
        %3009 = vperm.xlu0 %3008, %v278
        %v3010 = vpop.permute.xlu0 %3009
        %3011 = vset.pattern.permute.xlu0 3
        %3012 = vperm.xlu0 %3011, %v279
        %v3013 = vpop.permute.xlu0 %3012
        %3014 = vset.pattern.permute.xlu0 3
        %3015 = vperm.xlu0 %3014, %v280
        %v3016 = vpop.permute.xlu0 %3015
        %3017 = vset.pattern.permute.xlu0 3
        %3018 = vperm.xlu0 %3017, %v281
        %v3019 = vpop.permute.xlu0 %3018
        %3020 = vset.pattern.permute.xlu0 3
        %3021 = vperm.xlu0 %3020, %v282
        %v3022 = vpop.permute.xlu0 %3021
        %3023 = vset.pattern.permute.xlu0 3
        %3024 = vperm.xlu0 %3023, %v283
        %v3025 = vpop.permute.xlu0 %3024
        %3026 = vset.pattern.permute.xlu0 3
        %3027 = vperm.xlu0 %3026, %v284
        %v3028 = vpop.permute.xlu0 %3027
        %3029 = vset.pattern.permute.xlu0 3
        %3030 = vperm.xlu0 %3029, %v285
        %v3031 = vpop.permute.xlu0 %3030
        %3032 = vset.pattern.permute.xlu0 3
        %3033 = vperm.xlu0 %3032, %v286
        %v3034 = vpop.permute.xlu0 %3033
        %3035 = vset.pattern.permute.xlu0 3
        %3036 = vperm.xlu0 %3035, %v287
        %v3037 = vpop.permute.xlu0 %3036
        %3038 = vset.pattern.permute.xlu0 3
        %3039 = vperm.xlu0 %3038, %v288
        %v3040 = vpop.permute.xlu0 %3039
        %3041 = vset.pattern.permute.xlu0 3
        %3042 = vperm.xlu0 %3041, %v289
        %v3043 = vpop.permute.xlu0 %3042
        %3044 = vset.pattern.permute.xlu0 3
        %3045 = vperm.xlu0 %3044, %v290
        %v3046 = vpop.permute.xlu0 %3045
        %3047 = vset.pattern.permute.xlu0 3
        %3048 = vperm.xlu0 %3047, %v291
        %v3049 = vpop.permute.xlu0 %3048
        %3050 = vset.pattern.permute.xlu0 3
        %3051 = vperm.xlu0 %3050, %v292
        %v3052 = vpop.permute.xlu0 %3051
        %3053 = vset.pattern.permute.xlu0 3
        %3054 = vperm.xlu0 %3053, %v293
        %v3055 = vpop.permute.xlu0 %3054
        %3056 = vset.pattern.permute.xlu0 3
        %3057 = vperm.xlu0 %3056, %v294
        %v3058 = vpop.permute.xlu0 %3057
        %3059 = vset.pattern.permute.xlu0 3
        %3060 = vperm.xlu0 %3059, %v295
        %v3061 = vpop.permute.xlu0 %3060
        %3062 = vset.pattern.permute.xlu0 3
        %3063 = vperm.xlu0 %3062, %v296
        %v3064 = vpop.permute.xlu0 %3063
        %3065 = vset.pattern.permute.xlu0 3
        %3066 = vperm.xlu0 %3065, %v297
        %v3067 = vpop.permute.xlu0 %3066
        %3068 = vset.pattern.permute.xlu0 3
        %3069 = vperm.xlu0 %3068, %v298
        %v3070 = vpop.permute.xlu0 %3069
        %3071 = vset.pattern.permute.xlu0 3
        %3072 = vperm.xlu0 %3071, %v299
        %v3073 = vpop.permute.xlu0 %3072
        %3074 = vset.pattern.permute.xlu0 3
        %3075 = vperm.xlu0 %3074, %v300
        %v3076 = vpop.permute.xlu0 %3075
        %3077 = vset.pattern.permute.xlu0 3
        %3078 = vperm.xlu0 %3077, %v301
        %v3079 = vpop.permute.xlu0 %3078
        %3080 = vset.pattern.permute.xlu0 3
        %3081 = vperm.xlu0 %3080, %v302
        %v3082 = vpop.permute.xlu0 %3081
        %3083 = vset.pattern.permute.xlu0 3
        %3084 = vperm.xlu0 %3083, %v303
        %v3085 = vpop.permute.xlu0 %3084
        %3086 = vset.pattern.permute.xlu0 3
        %3087 = vperm.xlu0 %3086, %v304
        %v3088 = vpop.permute.xlu0 %3087
        %3089 = vset.pattern.permute.xlu0 3
        %3090 = vperm.xlu0 %3089, %v305
        %v3091 = vpop.permute.xlu0 %3090
        %3092 = vset.pattern.permute.xlu0 3
        %3093 = vperm.xlu0 %3092, %v306
        %v3094 = vpop.permute.xlu0 %3093
        %3095 = vset.pattern.permute.xlu0 3
        %3096 = vperm.xlu0 %3095, %v307
        %v3097 = vpop.permute.xlu0 %3096
        %3098 = vset.pattern.permute.xlu0 3
        %3099 = vperm.xlu0 %3098, %v308
        %v3100 = vpop.permute.xlu0 %3099
        %3101 = vset.pattern.permute.xlu0 3
        %3102 = vperm.xlu0 %3101, %v309
        %v3103 = vpop.permute.xlu0 %3102
        %3104 = vset.pattern.permute.xlu0 3
        %3105 = vperm.xlu0 %3104, %v310
        %v3106 = vpop.permute.xlu0 %3105
        %3107 = vset.pattern.permute.xlu0 3
        %3108 = vperm.xlu0 %3107, %v311
        %v3109 = vpop.permute.xlu0 %3108
        %3110 = vset.pattern.permute.xlu0 3
        %3111 = vperm.xlu0 %3110, %v312
        %v3112 = vpop.permute.xlu0 %3111
        %3113 = vset.pattern.permute.xlu0 3
        %3114 = vperm.xlu0 %3113, %v313
        %v3115 = vpop.permute.xlu0 %3114
        %3116 = vset.pattern.permute.xlu0 3
        %3117 = vperm.xlu0 %3116, %v314
        %v3118 = vpop.permute.xlu0 %3117
        %3119 = vset.pattern.permute.xlu0 3
        %3120 = vperm.xlu0 %3119, %v315
        %v3121 = vpop.permute.xlu0 %3120
        %3122 = vset.pattern.permute.xlu0 3
        %3123 = vperm.xlu0 %3122, %v316
        %v3124 = vpop.permute.xlu0 %3123
        %3125 = vset.pattern.permute.xlu0 3
        %3126 = vperm.xlu0 %3125, %v317
        %v3127 = vpop.permute.xlu0 %3126
        %3128 = vset.pattern.permute.xlu0 3
        %3129 = vperm.xlu0 %3128, %v318
        %v3130 = vpop.permute.xlu0 %3129
        %3131 = vset.pattern.permute.xlu0 3
        %3132 = vperm.xlu0 %3131, %v319
        %v3133 = vpop.permute.xlu0 %3132
        %3134 = vset.pattern.permute.xlu0 3
        %3135 = vperm.xlu0 %3134, %v320
        %v3136 = vpop.permute.xlu0 %3135
        %3137 = vset.pattern.permute.xlu0 3
        %3138 = vperm.xlu0 %3137, %v321
        %v3139 = vpop.permute.xlu0 %3138
        %3140 = vset.pattern.permute.xlu0 3
        %3141 = vperm.xlu0 %3140, %v322
        %v3142 = vpop.permute.xlu0 %3141
        %3143 = vset.pattern.permute.xlu0 3
        %3144 = vperm.xlu0 %3143, %v323
        %v3145 = vpop.permute.xlu0 %3144
        %3146 = vset.pattern.permute.xlu0 3
        %3147 = vperm.xlu0 %3146, %v324
        %v3148 = vpop.permute.xlu0 %3147
        %3149 = vset.pattern.permute.xlu0 3
        %3150 = vperm.xlu0 %3149, %v325
        %v3151 = vpop.permute.xlu0 %3150
        %3152 = vset.pattern.permute.xlu0 3
        %3153 = vperm.xlu0 %3152, %v326
        %v3154 = vpop.permute.xlu0 %3153
        %3155 = vset.pattern.permute.xlu0 3
        %3156 = vperm.xlu0 %3155, %v327
        %v3157 = vpop.permute.xlu0 %3156
        %3158 = vset.pattern.permute.xlu0 3
        %3159 = vperm.xlu0 %3158, %v328
        %v3160 = vpop.permute.xlu0 %3159
        %3161 = vset.pattern.permute.xlu0 3
        %3162 = vperm.xlu0 %3161, %v329
        %v3163 = vpop.permute.xlu0 %3162
        %3164 = vset.pattern.permute.xlu0 3
        %3165 = vperm.xlu0 %3164, %v330
        %v3166 = vpop.permute.xlu0 %3165
        %3167 = vset.pattern.permute.xlu0 3
        %3168 = vperm.xlu0 %3167, %v331
        %v3169 = vpop.permute.xlu0 %3168
        %3170 = vset.pattern.permute.xlu0 3
        %3171 = vperm.xlu0 %3170, %v332
        %v3172 = vpop.permute.xlu0 %3171
        %3173 = vset.pattern.permute.xlu0 3
        %3174 = vperm.xlu0 %3173, %v333
        %v3175 = vpop.permute.xlu0 %3174
        %3176 = vset.pattern.permute.xlu0 3
        %3177 = vperm.xlu0 %3176, %v334
        %v3178 = vpop.permute.xlu0 %3177
        %3179 = vset.pattern.permute.xlu0 3
        %3180 = vperm.xlu0 %3179, %v335
        %v3181 = vpop.permute.xlu0 %3180
        %3182 = vset.pattern.permute.xlu0 3
        %3183 = vperm.xlu0 %3182, %v336
        %v3184 = vpop.permute.xlu0 %3183
        %3185 = vset.pattern.permute.xlu0 3
        %3186 = vperm.xlu0 %3185, %v337
        %v3187 = vpop.permute.xlu0 %3186
        %3188 = vset.pattern.permute.xlu0 3
        %3189 = vperm.xlu0 %3188, %v338
        %v3190 = vpop.permute.xlu0 %3189
        %3191 = vset.pattern.permute.xlu0 3
        %3192 = vperm.xlu0 %3191, %v339
        %v3193 = vpop.permute.xlu0 %3192
        %3194 = vset.pattern.permute.xlu0 3
        %3195 = vperm.xlu0 %3194, %v340
        %v3196 = vpop.permute.xlu0 %3195
        %3197 = vset.pattern.permute.xlu0 3
        %3198 = vperm.xlu0 %3197, %v341
        %v3199 = vpop.permute.xlu0 %3198
        %3200 = vset.pattern.permute.xlu0 3
        %3201 = vperm.xlu0 %3200, %v342
        %v3202 = vpop.permute.xlu0 %3201
        %3203 = vset.pattern.permute.xlu0 3
        %3204 = vperm.xlu0 %3203, %v343
        %v3205 = vpop.permute.xlu0 %3204
        %3206 = vset.pattern.permute.xlu0 3
        %3207 = vperm.xlu0 %3206, %v344
        %v3208 = vpop.permute.xlu0 %3207
        %3209 = vset.pattern.permute.xlu0 3
        %3210 = vperm.xlu0 %3209, %v345
        %v3211 = vpop.permute.xlu0 %3210
        %3212 = vset.pattern.permute.xlu0 3
        %3213 = vperm.xlu0 %3212, %v346
        %v3214 = vpop.permute.xlu0 %3213
        %3215 = vset.pattern.permute.xlu0 3
        %3216 = vperm.xlu0 %3215, %v347
        %v3217 = vpop.permute.xlu0 %3216
        %3218 = vset.pattern.permute.xlu0 3
        %3219 = vperm.xlu0 %3218, %v348
        %v3220 = vpop.permute.xlu0 %3219
        %3221 = vset.pattern.permute.xlu0 3
        %3222 = vperm.xlu0 %3221, %v349
        %v3223 = vpop.permute.xlu0 %3222
        %3224 = vset.pattern.permute.xlu0 3
        %3225 = vperm.xlu0 %3224, %v350
        %v3226 = vpop.permute.xlu0 %3225
        %3227 = vset.pattern.permute.xlu0 3
        %3228 = vperm.xlu0 %3227, %v351
        %v3229 = vpop.permute.xlu0 %3228
        %3230 = vset.pattern.permute.xlu0 3
        %3231 = vperm.xlu0 %3230, %v352
        %v3232 = vpop.permute.xlu0 %3231
        %3233 = vset.pattern.permute.xlu0 3
        %3234 = vperm.xlu0 %3233, %v353
        %v3235 = vpop.permute.xlu0 %3234
        %3236 = vset.pattern.permute.xlu0 3
        %3237 = vperm.xlu0 %3236, %v354
        %v3238 = vpop.permute.xlu0 %3237
        %vm3239 = vcmp.eq.s32.totalorder %v2857, %v358
        %vm3240 = vcmp.eq.s32.totalorder %v2860, %v358
        %vm3241 = vcmp.eq.s32.totalorder %v2863, %v358
        %vm3242 = vcmp.eq.s32.totalorder %v2866, %v358
        %vm3243 = vcmp.eq.s32.totalorder %v2869, %v358
        %vm3244 = vcmp.eq.s32.totalorder %v2872, %v358
        %vm3245 = vcmp.eq.s32.totalorder %v2875, %v358
        %vm3246 = vcmp.eq.s32.totalorder %v2878, %v358
        %vm3247 = vcmp.eq.s32.totalorder %v2881, %v358
        %vm3248 = vcmp.eq.s32.totalorder %v2884, %v358
        %vm3249 = vcmp.eq.s32.totalorder %v2887, %v358
        %vm3250 = vcmp.eq.s32.totalorder %v2890, %v358
        %vm3251 = vcmp.eq.s32.totalorder %v2893, %v358
        %vm3252 = vcmp.eq.s32.totalorder %v2896, %v358
        %vm3253 = vcmp.eq.s32.totalorder %v2899, %v358
        %vm3254 = vcmp.eq.s32.totalorder %v2902, %v358
        %vm3255 = vcmp.eq.s32.totalorder %v2905, %v358
        %vm3256 = vcmp.eq.s32.totalorder %v2908, %v358
        %vm3257 = vcmp.eq.s32.totalorder %v2911, %v358
        %vm3258 = vcmp.eq.s32.totalorder %v2914, %v358
        %vm3259 = vcmp.eq.s32.totalorder %v2917, %v358
        %vm3260 = vcmp.eq.s32.totalorder %v2920, %v358
        %vm3261 = vcmp.eq.s32.totalorder %v2923, %v358
        %vm3262 = vcmp.eq.s32.totalorder %v2926, %v358
        %vm3263 = vcmp.eq.s32.totalorder %v2929, %v358
        %vm3264 = vcmp.eq.s32.totalorder %v2932, %v358
        %vm3265 = vcmp.eq.s32.totalorder %v2935, %v358
        %vm3266 = vcmp.eq.s32.totalorder %v2938, %v358
        %vm3267 = vcmp.eq.s32.totalorder %v2941, %v358
        %vm3268 = vcmp.eq.s32.totalorder %v2944, %v358
        %vm3269 = vcmp.eq.s32.totalorder %v2947, %v358
        %vm3270 = vcmp.eq.s32.totalorder %v2950, %v358
        %vm3271 = vcmp.eq.s32.totalorder %v2953, %v358
        %vm3272 = vcmp.eq.s32.totalorder %v2956, %v358
        %vm3273 = vcmp.eq.s32.totalorder %v2959, %v358
        %vm3274 = vcmp.eq.s32.totalorder %v2962, %v358
        %vm3275 = vcmp.eq.s32.totalorder %v2965, %v358
        %vm3276 = vcmp.eq.s32.totalorder %v2968, %v358
        %vm3277 = vcmp.eq.s32.totalorder %v2971, %v358
        %vm3278 = vcmp.eq.s32.totalorder %v2974, %v358
        %vm3279 = vcmp.eq.s32.totalorder %v2977, %v358
        %vm3280 = vcmp.eq.s32.totalorder %v2980, %v358
        %vm3281 = vcmp.eq.s32.totalorder %v2983, %v358
        %vm3282 = vcmp.eq.s32.totalorder %v2986, %v358
        %vm3283 = vcmp.eq.s32.totalorder %v2989, %v358
        %vm3284 = vcmp.eq.s32.totalorder %v2992, %v358
        %vm3285 = vcmp.eq.s32.totalorder %v2995, %v358
        %vm3286 = vcmp.eq.s32.totalorder %v2998, %v358
        %vm3287 = vcmp.eq.s32.totalorder %v3001, %v358
        %vm3288 = vcmp.eq.s32.totalorder %v3004, %v358
        %vm3289 = vcmp.eq.s32.totalorder %v3007, %v358
        %vm3290 = vcmp.eq.s32.totalorder %v3010, %v358
        %vm3291 = vcmp.eq.s32.totalorder %v3013, %v358
        %vm3292 = vcmp.eq.s32.totalorder %v3016, %v358
        %vm3293 = vcmp.eq.s32.totalorder %v3019, %v358
        %vm3294 = vcmp.eq.s32.totalorder %v3022, %v358
        %vm3295 = vcmp.eq.s32.totalorder %v3025, %v358
        %vm3296 = vcmp.eq.s32.totalorder %v3028, %v358
        %vm3297 = vcmp.eq.s32.totalorder %v3031, %v358
        %vm3298 = vcmp.eq.s32.totalorder %v3034, %v358
        %vm3299 = vcmp.eq.s32.totalorder %v3037, %v358
        %vm3300 = vcmp.eq.s32.totalorder %v3040, %v358
        %vm3301 = vcmp.eq.s32.totalorder %v3043, %v358
        %vm3302 = vcmp.eq.s32.totalorder %v3046, %v358
        %vm3303 = vcmp.eq.s32.totalorder %v3049, %v358
        %vm3304 = vcmp.eq.s32.totalorder %v3052, %v358
        %vm3305 = vcmp.eq.s32.totalorder %v3055, %v358
        %vm3306 = vcmp.eq.s32.totalorder %v3058, %v358
        %vm3307 = vcmp.eq.s32.totalorder %v3061, %v358
        %vm3308 = vcmp.eq.s32.totalorder %v3064, %v358
        %vm3309 = vcmp.eq.s32.totalorder %v3067, %v358
        %vm3310 = vcmp.eq.s32.totalorder %v3070, %v358
        %vm3311 = vcmp.eq.s32.totalorder %v3073, %v358
        %vm3312 = vcmp.eq.s32.totalorder %v3076, %v358
        %vm3313 = vcmp.eq.s32.totalorder %v3079, %v358
        %vm3314 = vcmp.eq.s32.totalorder %v3082, %v358
        %vm3315 = vcmp.eq.s32.totalorder %v3085, %v358
        %vm3316 = vcmp.eq.s32.totalorder %v3088, %v358
        %vm3317 = vcmp.eq.s32.totalorder %v3091, %v358
        %vm3318 = vcmp.eq.s32.totalorder %v3094, %v358
        %vm3319 = vcmp.eq.s32.totalorder %v3097, %v358
        %vm3320 = vcmp.eq.s32.totalorder %v3100, %v358
        %vm3321 = vcmp.eq.s32.totalorder %v3103, %v358
        %vm3322 = vcmp.eq.s32.totalorder %v3106, %v358
        %vm3323 = vcmp.eq.s32.totalorder %v3109, %v358
        %vm3324 = vcmp.eq.s32.totalorder %v3112, %v358
        %vm3325 = vcmp.eq.s32.totalorder %v3115, %v358
        %vm3326 = vcmp.eq.s32.totalorder %v3118, %v358
        %vm3327 = vcmp.eq.s32.totalorder %v3121, %v358
        %vm3328 = vcmp.eq.s32.totalorder %v3124, %v358
        %vm3329 = vcmp.eq.s32.totalorder %v3127, %v358
        %vm3330 = vcmp.eq.s32.totalorder %v3130, %v358
        %vm3331 = vcmp.eq.s32.totalorder %v3133, %v358
        %vm3332 = vcmp.eq.s32.totalorder %v3136, %v358
        %vm3333 = vcmp.eq.s32.totalorder %v3139, %v358
        %vm3334 = vcmp.eq.s32.totalorder %v3142, %v358
        %vm3335 = vcmp.eq.s32.totalorder %v3145, %v358
        %vm3336 = vcmp.eq.s32.totalorder %v3148, %v358
        %vm3337 = vcmp.eq.s32.totalorder %v3151, %v358
        %vm3338 = vcmp.eq.s32.totalorder %v3154, %v358
        %vm3339 = vcmp.eq.s32.totalorder %v3157, %v358
        %vm3340 = vcmp.eq.s32.totalorder %v3160, %v358
        %vm3341 = vcmp.eq.s32.totalorder %v3163, %v358
        %vm3342 = vcmp.eq.s32.totalorder %v3166, %v358
        %vm3343 = vcmp.eq.s32.totalorder %v3169, %v358
        %vm3344 = vcmp.eq.s32.totalorder %v3172, %v358
        %vm3345 = vcmp.eq.s32.totalorder %v3175, %v358
        %vm3346 = vcmp.eq.s32.totalorder %v3178, %v358
        %vm3347 = vcmp.eq.s32.totalorder %v3181, %v358
        %vm3348 = vcmp.eq.s32.totalorder %v3184, %v358
        %vm3349 = vcmp.eq.s32.totalorder %v3187, %v358
        %vm3350 = vcmp.eq.s32.totalorder %v3190, %v358
        %vm3351 = vcmp.eq.s32.totalorder %v3193, %v358
        %vm3352 = vcmp.eq.s32.totalorder %v3196, %v358
        %vm3353 = vcmp.eq.s32.totalorder %v3199, %v358
        %vm3354 = vcmp.eq.s32.totalorder %v3202, %v358
        %vm3355 = vcmp.eq.s32.totalorder %v3205, %v358
        %vm3356 = vcmp.eq.s32.totalorder %v3208, %v358
        %vm3357 = vcmp.eq.s32.totalorder %v3211, %v358
        %vm3358 = vcmp.eq.s32.totalorder %v3214, %v358
        %vm3359 = vcmp.eq.s32.totalorder %v3217, %v358
        %vm3360 = vcmp.eq.s32.totalorder %v3220, %v358
        %vm3361 = vcmp.eq.s32.totalorder %v3223, %v358
        %vm3362 = vcmp.eq.s32.totalorder %v3226, %v358
        %vm3363 = vcmp.eq.s32.totalorder %v3229, %v358
        %vm3364 = vcmp.eq.s32.totalorder %v3232, %v358
        %vm3365 = vcmp.eq.s32.totalorder %v3235, %v358
        %vm3366 = vcmp.eq.s32.totalorder %v3238, %v358
        %v3367 = vsel %vm3239, 1, 0
        %v3368 = vsel %vm3240, 1, 0
        %v3369 = vsel %vm3241, 1, 0
        %v3370 = vsel %vm3242, 1, 0
        %v3371 = vsel %vm3243, 1, 0
        %v3372 = vsel %vm3244, 1, 0
        %v3373 = vsel %vm3245, 1, 0
        %v3374 = vsel %vm3246, 1, 0
        %v3375 = vsel %vm3247, 1, 0
        %v3376 = vsel %vm3248, 1, 0
        %v3377 = vsel %vm3249, 1, 0
        %v3378 = vsel %vm3250, 1, 0
        %v3379 = vsel %vm3251, 1, 0
        %v3380 = vsel %vm3252, 1, 0
        %v3381 = vsel %vm3253, 1, 0
        %v3382 = vsel %vm3254, 1, 0
        %v3383 = vsel %vm3255, 1, 0
        %v3384 = vsel %vm3256, 1, 0
        %v3385 = vsel %vm3257, 1, 0
        %v3386 = vsel %vm3258, 1, 0
        %v3387 = vsel %vm3259, 1, 0
        %v3388 = vsel %vm3260, 1, 0
        %v3389 = vsel %vm3261, 1, 0
        %v3390 = vsel %vm3262, 1, 0
        %v3391 = vsel %vm3263, 1, 0
        %v3392 = vsel %vm3264, 1, 0
        %v3393 = vsel %vm3265, 1, 0
        %v3394 = vsel %vm3266, 1, 0
        %v3395 = vsel %vm3267, 1, 0
        %v3396 = vsel %vm3268, 1, 0
        %v3397 = vsel %vm3269, 1, 0
        %v3398 = vsel %vm3270, 1, 0
        %v3399 = vsel %vm3271, 1, 0
        %v3400 = vsel %vm3272, 1, 0
        %v3401 = vsel %vm3273, 1, 0
        %v3402 = vsel %vm3274, 1, 0
        %v3403 = vsel %vm3275, 1, 0
        %v3404 = vsel %vm3276, 1, 0
        %v3405 = vsel %vm3277, 1, 0
        %v3406 = vsel %vm3278, 1, 0
        %v3407 = vsel %vm3279, 1, 0
        %v3408 = vsel %vm3280, 1, 0
        %v3409 = vsel %vm3281, 1, 0
        %v3410 = vsel %vm3282, 1, 0
        %v3411 = vsel %vm3283, 1, 0
        %v3412 = vsel %vm3284, 1, 0
        %v3413 = vsel %vm3285, 1, 0
        %v3414 = vsel %vm3286, 1, 0
        %v3415 = vsel %vm3287, 1, 0
        %v3416 = vsel %vm3288, 1, 0
        %v3417 = vsel %vm3289, 1, 0
        %v3418 = vsel %vm3290, 1, 0
        %v3419 = vsel %vm3291, 1, 0
        %v3420 = vsel %vm3292, 1, 0
        %v3421 = vsel %vm3293, 1, 0
        %v3422 = vsel %vm3294, 1, 0
        %v3423 = vsel %vm3295, 1, 0
        %v3424 = vsel %vm3296, 1, 0
        %v3425 = vsel %vm3297, 1, 0
        %v3426 = vsel %vm3298, 1, 0
        %v3427 = vsel %vm3299, 1, 0
        %v3428 = vsel %vm3300, 1, 0
        %v3429 = vsel %vm3301, 1, 0
        %v3430 = vsel %vm3302, 1, 0
        %v3431 = vsel %vm3303, 1, 0
        %v3432 = vsel %vm3304, 1, 0
        %v3433 = vsel %vm3305, 1, 0
        %v3434 = vsel %vm3306, 1, 0
        %v3435 = vsel %vm3307, 1, 0
        %v3436 = vsel %vm3308, 1, 0
        %v3437 = vsel %vm3309, 1, 0
        %v3438 = vsel %vm3310, 1, 0
        %v3439 = vsel %vm3311, 1, 0
        %v3440 = vsel %vm3312, 1, 0
        %v3441 = vsel %vm3313, 1, 0
        %v3442 = vsel %vm3314, 1, 0
        %v3443 = vsel %vm3315, 1, 0
        %v3444 = vsel %vm3316, 1, 0
        %v3445 = vsel %vm3317, 1, 0
        %v3446 = vsel %vm3318, 1, 0
        %v3447 = vsel %vm3319, 1, 0
        %v3448 = vsel %vm3320, 1, 0
        %v3449 = vsel %vm3321, 1, 0
        %v3450 = vsel %vm3322, 1, 0
        %v3451 = vsel %vm3323, 1, 0
        %v3452 = vsel %vm3324, 1, 0
        %v3453 = vsel %vm3325, 1, 0
        %v3454 = vsel %vm3326, 1, 0
        %v3455 = vsel %vm3327, 1, 0
        %v3456 = vsel %vm3328, 1, 0
        %v3457 = vsel %vm3329, 1, 0
        %v3458 = vsel %vm3330, 1, 0
        %v3459 = vsel %vm3331, 1, 0
        %v3460 = vsel %vm3332, 1, 0
        %v3461 = vsel %vm3333, 1, 0
        %v3462 = vsel %vm3334, 1, 0
        %v3463 = vsel %vm3335, 1, 0
        %v3464 = vsel %vm3336, 1, 0
        %v3465 = vsel %vm3337, 1, 0
        %v3466 = vsel %vm3338, 1, 0
        %v3467 = vsel %vm3339, 1, 0
        %v3468 = vsel %vm3340, 1, 0
        %v3469 = vsel %vm3341, 1, 0
        %v3470 = vsel %vm3342, 1, 0
        %v3471 = vsel %vm3343, 1, 0
        %v3472 = vsel %vm3344, 1, 0
        %v3473 = vsel %vm3345, 1, 0
        %v3474 = vsel %vm3346, 1, 0
        %v3475 = vsel %vm3347, 1, 0
        %v3476 = vsel %vm3348, 1, 0
        %v3477 = vsel %vm3349, 1, 0
        %v3478 = vsel %vm3350, 1, 0
        %v3479 = vsel %vm3351, 1, 0
        %v3480 = vsel %vm3352, 1, 0
        %v3481 = vsel %vm3353, 1, 0
        %v3482 = vsel %vm3354, 1, 0
        %v3483 = vsel %vm3355, 1, 0
        %v3484 = vsel %vm3356, 1, 0
        %v3485 = vsel %vm3357, 1, 0
        %v3486 = vsel %vm3358, 1, 0
        %v3487 = vsel %vm3359, 1, 0
        %v3488 = vsel %vm3360, 1, 0
        %v3489 = vsel %vm3361, 1, 0
        %v3490 = vsel %vm3362, 1, 0
        %v3491 = vsel %vm3363, 1, 0
        %v3492 = vsel %vm3364, 1, 0
        %v3493 = vsel %vm3365, 1, 0
        %v3494 = vsel %vm3366, 1, 0
        %v3495 = vcvt.s32.f32 %v3367
        %v3496 = vcvt.s32.f32 %v3368
        %v3497 = vcvt.s32.f32 %v3369
        %v3498 = vcvt.s32.f32 %v3370
        %v3499 = vcvt.s32.f32 %v3371
        %v3500 = vcvt.s32.f32 %v3372
        %v3501 = vcvt.s32.f32 %v3373
        %v3502 = vcvt.s32.f32 %v3374
        %v3503 = vcvt.s32.f32 %v3375
        %v3504 = vcvt.s32.f32 %v3376
        %v3505 = vcvt.s32.f32 %v3377
        %v3506 = vcvt.s32.f32 %v3378
        %v3507 = vcvt.s32.f32 %v3379
        %v3508 = vcvt.s32.f32 %v3380
        %v3509 = vcvt.s32.f32 %v3381
        %v3510 = vcvt.s32.f32 %v3382
        %v3511 = vcvt.s32.f32 %v3383
        %v3512 = vcvt.s32.f32 %v3384
        %v3513 = vcvt.s32.f32 %v3385
        %v3514 = vcvt.s32.f32 %v3386
        %v3515 = vcvt.s32.f32 %v3387
        %v3516 = vcvt.s32.f32 %v3388
        %v3517 = vcvt.s32.f32 %v3389
        %v3518 = vcvt.s32.f32 %v3390
        %v3519 = vcvt.s32.f32 %v3391
        %v3520 = vcvt.s32.f32 %v3392
        %v3521 = vcvt.s32.f32 %v3393
        %v3522 = vcvt.s32.f32 %v3394
        %v3523 = vcvt.s32.f32 %v3395
        %v3524 = vcvt.s32.f32 %v3396
        %v3525 = vcvt.s32.f32 %v3397
        %v3526 = vcvt.s32.f32 %v3398
        %v3527 = vcvt.s32.f32 %v3399
        %v3528 = vcvt.s32.f32 %v3400
        %v3529 = vcvt.s32.f32 %v3401
        %v3530 = vcvt.s32.f32 %v3402
        %v3531 = vcvt.s32.f32 %v3403
        %v3532 = vcvt.s32.f32 %v3404
        %v3533 = vcvt.s32.f32 %v3405
        %v3534 = vcvt.s32.f32 %v3406
        %v3535 = vcvt.s32.f32 %v3407
        %v3536 = vcvt.s32.f32 %v3408
        %v3537 = vcvt.s32.f32 %v3409
        %v3538 = vcvt.s32.f32 %v3410
        %v3539 = vcvt.s32.f32 %v3411
        %v3540 = vcvt.s32.f32 %v3412
        %v3541 = vcvt.s32.f32 %v3413
        %v3542 = vcvt.s32.f32 %v3414
        %v3543 = vcvt.s32.f32 %v3415
        %v3544 = vcvt.s32.f32 %v3416
        %v3545 = vcvt.s32.f32 %v3417
        %v3546 = vcvt.s32.f32 %v3418
        %v3547 = vcvt.s32.f32 %v3419
        %v3548 = vcvt.s32.f32 %v3420
        %v3549 = vcvt.s32.f32 %v3421
        %v3550 = vcvt.s32.f32 %v3422
        %v3551 = vcvt.s32.f32 %v3423
        %v3552 = vcvt.s32.f32 %v3424
        %v3553 = vcvt.s32.f32 %v3425
        %v3554 = vcvt.s32.f32 %v3426
        %v3555 = vcvt.s32.f32 %v3427
        %v3556 = vcvt.s32.f32 %v3428
        %v3557 = vcvt.s32.f32 %v3429
        %v3558 = vcvt.s32.f32 %v3430
        %v3559 = vcvt.s32.f32 %v3431
        %v3560 = vcvt.s32.f32 %v3432
        %v3561 = vcvt.s32.f32 %v3433
        %v3562 = vcvt.s32.f32 %v3434
        %v3563 = vcvt.s32.f32 %v3435
        %v3564 = vcvt.s32.f32 %v3436
        %v3565 = vcvt.s32.f32 %v3437
        %v3566 = vcvt.s32.f32 %v3438
        %v3567 = vcvt.s32.f32 %v3439
        %v3568 = vcvt.s32.f32 %v3440
        %v3569 = vcvt.s32.f32 %v3441
        %v3570 = vcvt.s32.f32 %v3442
        %v3571 = vcvt.s32.f32 %v3443
        %v3572 = vcvt.s32.f32 %v3444
        %v3573 = vcvt.s32.f32 %v3445
        %v3574 = vcvt.s32.f32 %v3446
        %v3575 = vcvt.s32.f32 %v3447
        %v3576 = vcvt.s32.f32 %v3448
        %v3577 = vcvt.s32.f32 %v3449
        %v3578 = vcvt.s32.f32 %v3450
        %v3579 = vcvt.s32.f32 %v3451
        %v3580 = vcvt.s32.f32 %v3452
        %v3581 = vcvt.s32.f32 %v3453
        %v3582 = vcvt.s32.f32 %v3454
        %v3583 = vcvt.s32.f32 %v3455
        %v3584 = vcvt.s32.f32 %v3456
        %v3585 = vcvt.s32.f32 %v3457
        %v3586 = vcvt.s32.f32 %v3458
        %v3587 = vcvt.s32.f32 %v3459
        %v3588 = vcvt.s32.f32 %v3460
        %v3589 = vcvt.s32.f32 %v3461
        %v3590 = vcvt.s32.f32 %v3462
        %v3591 = vcvt.s32.f32 %v3463
        %v3592 = vcvt.s32.f32 %v3464
        %v3593 = vcvt.s32.f32 %v3465
        %v3594 = vcvt.s32.f32 %v3466
        %v3595 = vcvt.s32.f32 %v3467
        %v3596 = vcvt.s32.f32 %v3468
        %v3597 = vcvt.s32.f32 %v3469
        %v3598 = vcvt.s32.f32 %v3470
        %v3599 = vcvt.s32.f32 %v3471
        %v3600 = vcvt.s32.f32 %v3472
        %v3601 = vcvt.s32.f32 %v3473
        %v3602 = vcvt.s32.f32 %v3474
        %v3603 = vcvt.s32.f32 %v3475
        %v3604 = vcvt.s32.f32 %v3476
        %v3605 = vcvt.s32.f32 %v3477
        %v3606 = vcvt.s32.f32 %v3478
        %v3607 = vcvt.s32.f32 %v3479
        %v3608 = vcvt.s32.f32 %v3480
        %v3609 = vcvt.s32.f32 %v3481
        %v3610 = vcvt.s32.f32 %v3482
        %v3611 = vcvt.s32.f32 %v3483
        %v3612 = vcvt.s32.f32 %v3484
        %v3613 = vcvt.s32.f32 %v3485
        %v3614 = vcvt.s32.f32 %v3486
        %v3615 = vcvt.s32.f32 %v3487
        %v3616 = vcvt.s32.f32 %v3488
        %v3617 = vcvt.s32.f32 %v3489
        %v3618 = vcvt.s32.f32 %v3490
        %v3619 = vcvt.s32.f32 %v3491
        %v3620 = vcvt.s32.f32 %v3492
        %v3621 = vcvt.s32.f32 %v3493
        %v3622 = vcvt.s32.f32 %v3494
        %v3623 = vpack.c.bf16 %v3496, %v3495
        %v3624 = vpack.c.bf16 %v3498, %v3497
        %v3625 = vpack.c.bf16 %v3500, %v3499
        %v3626 = vpack.c.bf16 %v3502, %v3501
        %v3627 = vpack.c.bf16 %v3504, %v3503
        %v3628 = vpack.c.bf16 %v3506, %v3505
        %v3629 = vpack.c.bf16 %v3508, %v3507
        %v3630 = vpack.c.bf16 %v3510, %v3509
        %v3631 = vpack.c.bf16 %v3512, %v3511
        %v3632 = vpack.c.bf16 %v3514, %v3513
        %v3633 = vpack.c.bf16 %v3516, %v3515
        %v3634 = vpack.c.bf16 %v3518, %v3517
        %v3635 = vpack.c.bf16 %v3520, %v3519
        %v3636 = vpack.c.bf16 %v3522, %v3521
        %v3637 = vpack.c.bf16 %v3524, %v3523
        %v3638 = vpack.c.bf16 %v3526, %v3525
        %v3639 = vpack.c.bf16 %v3528, %v3527
        %v3640 = vpack.c.bf16 %v3530, %v3529
        %v3641 = vpack.c.bf16 %v3532, %v3531
        %v3642 = vpack.c.bf16 %v3534, %v3533
        %v3643 = vpack.c.bf16 %v3536, %v3535
        %v3644 = vpack.c.bf16 %v3538, %v3537
        %v3645 = vpack.c.bf16 %v3540, %v3539
        %v3646 = vpack.c.bf16 %v3542, %v3541
        %v3647 = vpack.c.bf16 %v3544, %v3543
        %v3648 = vpack.c.bf16 %v3546, %v3545
        %v3649 = vpack.c.bf16 %v3548, %v3547
        %v3650 = vpack.c.bf16 %v3550, %v3549
        %v3651 = vpack.c.bf16 %v3552, %v3551
        %v3652 = vpack.c.bf16 %v3554, %v3553
        %v3653 = vpack.c.bf16 %v3556, %v3555
        %v3654 = vpack.c.bf16 %v3558, %v3557
        %v3655 = vpack.c.bf16 %v3560, %v3559
        %v3656 = vpack.c.bf16 %v3562, %v3561
        %v3657 = vpack.c.bf16 %v3564, %v3563
        %v3658 = vpack.c.bf16 %v3566, %v3565
        %v3659 = vpack.c.bf16 %v3568, %v3567
        %v3660 = vpack.c.bf16 %v3570, %v3569
        %v3661 = vpack.c.bf16 %v3572, %v3571
        %v3662 = vpack.c.bf16 %v3574, %v3573
        %v3663 = vpack.c.bf16 %v3576, %v3575
        %v3664 = vpack.c.bf16 %v3578, %v3577
        %v3665 = vpack.c.bf16 %v3580, %v3579
        %v3666 = vpack.c.bf16 %v3582, %v3581
        %v3667 = vpack.c.bf16 %v3584, %v3583
        %v3668 = vpack.c.bf16 %v3586, %v3585
        %v3669 = vpack.c.bf16 %v3588, %v3587
        %v3670 = vpack.c.bf16 %v3590, %v3589
        %v3671 = vpack.c.bf16 %v3592, %v3591
        %v3672 = vpack.c.bf16 %v3594, %v3593
        %v3673 = vpack.c.bf16 %v3596, %v3595
        %v3674 = vpack.c.bf16 %v3598, %v3597
        %v3675 = vpack.c.bf16 %v3600, %v3599
        %v3676 = vpack.c.bf16 %v3602, %v3601
        %v3677 = vpack.c.bf16 %v3604, %v3603
        %v3678 = vpack.c.bf16 %v3606, %v3605
        %v3679 = vpack.c.bf16 %v3608, %v3607
        %v3680 = vpack.c.bf16 %v3610, %v3609
        %v3681 = vpack.c.bf16 %v3612, %v3611
        %v3682 = vpack.c.bf16 %v3614, %v3613
        %v3683 = vpack.c.bf16 %v3616, %v3615
        %v3684 = vpack.c.bf16 %v3618, %v3617
        %v3685 = vpack.c.bf16 %v3620, %v3619
        %v3686 = vpack.c.bf16 %v3622, %v3621
        %v3687 = vld [vmem:[%s1] sm:$0xf]
        %v3688 = vld [vmem:[%s1 + $0x4] sm:$0xf]
        %v3689 = vld [vmem:[%s1 + $0x8] sm:$0xf]
        %v3690 = vld [vmem:[%s1 + $0xc] sm:$0xf]
        %v3691 = vld [vmem:[%s1 + $0x10] sm:$0xf]
        %v3692 = vld [vmem:[%s1 + $0x14] sm:$0xf]
        %v3693 = vld [vmem:[%s1 + $0x18] sm:$0xf]
        %v3694 = vld [vmem:[%s1 + $0x1c] sm:$0xf]
        %v3695 = vld [vmem:[%s1 + $0x20] sm:$0xf]
        %v3696 = vld [vmem:[%s1 + $0x24] sm:$0xf]
        %v3697 = vld [vmem:[%s1 + $0x28] sm:$0xf]
        %v3698 = vld [vmem:[%s1 + $0x2c] sm:$0xf]
        %v3699 = vld [vmem:[%s1 + $0x30] sm:$0xf]
        %v3700 = vld [vmem:[%s1 + $0x34] sm:$0xf]
        %v3701 = vld [vmem:[%s1 + $0x38] sm:$0xf]
        %v3702 = vld [vmem:[%s1 + $0x3c] sm:$0xf]
        %v3703 = vld [vmem:[%s1 + $0x40] sm:$0xf]
        %v3704 = vld [vmem:[%s1 + $0x44] sm:$0xf]
        %v3705 = vld [vmem:[%s1 + $0x48] sm:$0xf]
        %v3706 = vld [vmem:[%s1 + $0x4c] sm:$0xf]
        %v3707 = vld [vmem:[%s1 + $0x50] sm:$0xf]
        %v3708 = vld [vmem:[%s1 + $0x54] sm:$0xf]
        %v3709 = vld [vmem:[%s1 + $0x58] sm:$0xf]
        %v3710 = vld [vmem:[%s1 + $0x5c] sm:$0xf]
        %v3711 = vld [vmem:[%s1 + $0x60] sm:$0xf]
        %v3712 = vld [vmem:[%s1 + $0x64] sm:$0xf]
        %v3713 = vld [vmem:[%s1 + $0x68] sm:$0xf]
        %v3714 = vld [vmem:[%s1 + $0x6c] sm:$0xf]
        %v3715 = vld [vmem:[%s1 + $0x70] sm:$0xf]
        %v3716 = vld [vmem:[%s1 + $0x74] sm:$0xf]
        %v3717 = vld [vmem:[%s1 + $0x78] sm:$0xf]
        %v3718 = vld [vmem:[%s1 + $0x7c] sm:$0xf]
        %v3719 = vld [vmem:[%s1 + $0x80] sm:$0xf]
        %v3720 = vld [vmem:[%s1 + $0x84] sm:$0xf]
        %v3721 = vld [vmem:[%s1 + $0x88] sm:$0xf]
        %v3722 = vld [vmem:[%s1 + $0x8c] sm:$0xf]
        %v3723 = vld [vmem:[%s1 + $0x90] sm:$0xf]
        %v3724 = vld [vmem:[%s1 + $0x94] sm:$0xf]
        %v3725 = vld [vmem:[%s1 + $0x98] sm:$0xf]
        %v3726 = vld [vmem:[%s1 + $0x9c] sm:$0xf]
        %v3727 = vld [vmem:[%s1 + $0xa0] sm:$0xf]
        %v3728 = vld [vmem:[%s1 + $0xa4] sm:$0xf]
        %v3729 = vld [vmem:[%s1 + $0xa8] sm:$0xf]
        %v3730 = vld [vmem:[%s1 + $0xac] sm:$0xf]
        %v3731 = vld [vmem:[%s1 + $0xb0] sm:$0xf]
        %v3732 = vld [vmem:[%s1 + $0xb4] sm:$0xf]
        %v3733 = vld [vmem:[%s1 + $0xb8] sm:$0xf]
        %v3734 = vld [vmem:[%s1 + $0xbc] sm:$0xf]
        %v3735 = vld [vmem:[%s1 + $0xc0] sm:$0xf]
        %v3736 = vld [vmem:[%s1 + $0xc4] sm:$0xf]
        %v3737 = vld [vmem:[%s1 + $0xc8] sm:$0xf]
        %v3738 = vld [vmem:[%s1 + $0xcc] sm:$0xf]
        %v3739 = vld [vmem:[%s1 + $0xd0] sm:$0xf]
        %v3740 = vld [vmem:[%s1 + $0xd4] sm:$0xf]
        %v3741 = vld [vmem:[%s1 + $0xd8] sm:$0xf]
        %v3742 = vld [vmem:[%s1 + $0xdc] sm:$0xf]
        %v3743 = vld [vmem:[%s1 + $0xe0] sm:$0xf]
        %v3744 = vld [vmem:[%s1 + $0xe4] sm:$0xf]
        %v3745 = vld [vmem:[%s1 + $0xe8] sm:$0xf]
        %v3746 = vld [vmem:[%s1 + $0xec] sm:$0xf]
        %v3747 = vld [vmem:[%s1 + $0xf0] sm:$0xf]
        %v3748 = vld [vmem:[%s1 + $0xf4] sm:$0xf]
        %v3749 = vld [vmem:[%s1 + $0xf8] sm:$0xf]
        %v3750 = vld [vmem:[%s1 + $0xfc] sm:$0xf]
        %v3752 = vlaneseq
        %v3753 = vshrl.u32 %v3752, 7
        %v3754 = vsub.s32 0, %v3753
        %v3755 = vrot.slane %v355, %v3754
        %v3821 = vunpack.c.l.b16 %v3687
        %v3822 = vunpack.c.l.b16 %v3688
        %v3823 = vunpack.c.l.b16 %v3689
        %v3824 = vunpack.c.l.b16 %v3690
        %v3825 = vunpack.c.l.b16 %v3691
        %v3826 = vunpack.c.l.b16 %v3692
        %v3827 = vunpack.c.l.b16 %v3693
        %v3828 = vunpack.c.l.b16 %v3694
        %v3829 = vunpack.c.l.b16 %v3695
        %v3830 = vunpack.c.l.b16 %v3696
        %v3831 = vunpack.c.l.b16 %v3697
        %v3832 = vunpack.c.l.b16 %v3698
        %v3833 = vunpack.c.l.b16 %v3699
        %v3834 = vunpack.c.l.b16 %v3700
        %v3835 = vunpack.c.l.b16 %v3701
        %v3836 = vunpack.c.l.b16 %v3702
        %v3837 = vunpack.c.l.b16 %v3703
        %v3838 = vunpack.c.l.b16 %v3704
        %v3839 = vunpack.c.l.b16 %v3705
        %v3840 = vunpack.c.l.b16 %v3706
        %v3841 = vunpack.c.l.b16 %v3707
        %v3842 = vunpack.c.l.b16 %v3708
        %v3843 = vunpack.c.l.b16 %v3709
        %v3844 = vunpack.c.l.b16 %v3710
        %v3845 = vunpack.c.l.b16 %v3711
        %v3846 = vunpack.c.l.b16 %v3712
        %v3847 = vunpack.c.l.b16 %v3713
        %v3848 = vunpack.c.l.b16 %v3714
        %v3849 = vunpack.c.l.b16 %v3715
        %v3850 = vunpack.c.l.b16 %v3716
        %v3851 = vunpack.c.l.b16 %v3717
        %v3852 = vunpack.c.l.b16 %v3718
        %v3853 = vunpack.c.l.b16 %v3719
        %v3854 = vunpack.c.l.b16 %v3720
        %v3855 = vunpack.c.l.b16 %v3721
        %v3856 = vunpack.c.l.b16 %v3722
        %v3857 = vunpack.c.l.b16 %v3723
        %v3858 = vunpack.c.l.b16 %v3724
        %v3859 = vunpack.c.l.b16 %v3725
        %v3860 = vunpack.c.l.b16 %v3726
        %v3861 = vunpack.c.l.b16 %v3727
        %v3862 = vunpack.c.l.b16 %v3728
        %v3863 = vunpack.c.l.b16 %v3729
        %v3864 = vunpack.c.l.b16 %v3730
        %v3865 = vunpack.c.l.b16 %v3731
        %v3866 = vunpack.c.l.b16 %v3732
        %v3867 = vunpack.c.l.b16 %v3733
        %v3868 = vunpack.c.l.b16 %v3734
        %v3869 = vunpack.c.l.b16 %v3735
        %v3870 = vunpack.c.l.b16 %v3736
        %v3871 = vunpack.c.l.b16 %v3737
        %v3872 = vunpack.c.l.b16 %v3738
        %v3873 = vunpack.c.l.b16 %v3739
        %v3874 = vunpack.c.l.b16 %v3740
        %v3875 = vunpack.c.l.b16 %v3741
        %v3876 = vunpack.c.l.b16 %v3742
        %v3877 = vunpack.c.l.b16 %v3743
        %v3878 = vunpack.c.l.b16 %v3744
        %v3879 = vunpack.c.l.b16 %v3745
        %v3880 = vunpack.c.l.b16 %v3746
        %v3881 = vunpack.c.l.b16 %v3747
        %v3882 = vunpack.c.l.b16 %v3748
        %v3883 = vunpack.c.l.b16 %v3749
        %v3884 = vunpack.c.l.b16 %v3750
        %v3885 = vpack.c.b16 %v3822, %v3821
        %v3886 = vpack.c.b16 %v3824, %v3823
        %v3887 = vpack.c.b16 %v3826, %v3825
        %v3888 = vpack.c.b16 %v3828, %v3827
        %v3889 = vpack.c.b16 %v3830, %v3829
        %v3890 = vpack.c.b16 %v3832, %v3831
        %v3891 = vpack.c.b16 %v3834, %v3833
        %v3892 = vpack.c.b16 %v3836, %v3835
        %v3893 = vpack.c.b16 %v3838, %v3837
        %v3894 = vpack.c.b16 %v3840, %v3839
        %v3895 = vpack.c.b16 %v3842, %v3841
        %v3896 = vpack.c.b16 %v3844, %v3843
        %v3897 = vpack.c.b16 %v3846, %v3845
        %v3898 = vpack.c.b16 %v3848, %v3847
        %v3899 = vpack.c.b16 %v3850, %v3849
        %v3900 = vpack.c.b16 %v3852, %v3851
        %v3901 = vpack.c.b16 %v3854, %v3853
        %v3902 = vpack.c.b16 %v3856, %v3855
        %v3903 = vpack.c.b16 %v3858, %v3857
        %v3904 = vpack.c.b16 %v3860, %v3859
        %v3905 = vpack.c.b16 %v3862, %v3861
        %v3906 = vpack.c.b16 %v3864, %v3863
        %v3907 = vpack.c.b16 %v3866, %v3865
        %v3908 = vpack.c.b16 %v3868, %v3867
        %v3909 = vpack.c.b16 %v3870, %v3869
        %v3910 = vpack.c.b16 %v3872, %v3871
        %v3911 = vpack.c.b16 %v3874, %v3873
        %v3912 = vpack.c.b16 %v3876, %v3875
        %v3913 = vpack.c.b16 %v3878, %v3877
        %v3914 = vpack.c.b16 %v3880, %v3879
        %v3915 = vpack.c.b16 %v3882, %v3881
        %v3916 = vpack.c.b16 %v3884, %v3883
        %3949 = vmatprep.subr.bf16.mxu0 0
        %3950 = vmatpush1.bf16.msra.mxu0 %v3892
        %3951 = vmatprep.subr.bf16.mxu0 0
        %3952 = vmatpush1.bf16.msra.mxu0 %v3891
        %3953 = vmatprep.subr.bf16.mxu0 0
        %3954 = vmatpush1.bf16.msra.mxu0 %v3890
        %3955 = vmatprep.subr.bf16.mxu0 0
        %3956 = vmatpush1.bf16.msra.mxu0 %v3889
        %3957 = vmatprep.subr.bf16.mxu0 0
        %3958 = vmatpush1.bf16.msra.mxu0 %v3888
        %3959 = vmatprep.subr.bf16.mxu0 0
        %3960 = vmatpush1.bf16.msra.mxu0 %v3887
        %3961 = vmatprep.subr.bf16.mxu0 0
        %3962 = vmatpush1.bf16.msra.mxu0 %v3886
        %3963 = vmatprep.subr.bf16.mxu0 0
        %3964 = vmatpush1.bf16.msra.mxu0 %v3885
        %3965 = vmatprep.subr.bf16.mxu0 0
        %3966 = vmatpush2.bf16.msra.mxu0 %v3900
        %3967 = vmatprep.subr.bf16.mxu0 0
        %3968 = vmatpush2.bf16.msra.mxu0 %v3899
        %3969 = vmatprep.subr.bf16.mxu0 0
        %3970 = vmatpush2.bf16.msra.mxu0 %v3898
        %3971 = vmatprep.subr.bf16.mxu0 0
        %3972 = vmatpush2.bf16.msra.mxu0 %v3897
        %3973 = vmatprep.subr.bf16.mxu0 0
        %3974 = vmatpush2.bf16.msra.mxu0 %v3896
        %3975 = vmatprep.subr.bf16.mxu0 0
        %3976 = vmatpush2.bf16.msra.mxu0 %v3895
        %3977 = vmatprep.subr.bf16.mxu0 0
        %3978 = vmatpush2.bf16.msra.mxu0 %v3894
        %3979 = vmatprep.subr.bf16.mxu0 0
        %3980 = vmatpush2.bf16.msra.mxu0 %v3893
        %3981 = vmatprep.mubr.bf16.mxu0 %v1959
        %3982 = vmatmul.mubr.bf16.gmra.mxu0 %v1127
        %v3983 = vpop.f32.mrf.mxu0
        %v3984 = vadd.f32 %v3755, %v3983
        %v3985 = vpop.f32.mrf.mxu0
        %v3986 = vpop.f32.mrf.mxu0
        %v3987 = vadd.f32 %v3755, %v3986
        %v3988 = vpop.f32.mrf.mxu0
        %3989 = vmatprep.mubr.bf16.mxu0 %v1960
        %3990 = vmatmul.mubr.bf16.gmra.mxu0 %v1128
        %v3991 = vpop.f32.mrf.mxu0
        %v3992 = vadd.f32 %v3755, %v3991
        %v3993 = vpop.f32.mrf.mxu0
        %v3994 = vpop.f32.mrf.mxu0
        %v3995 = vadd.f32 %v3755, %v3994
        %v3996 = vpop.f32.mrf.mxu0
        %3997 = vmatprep.mubr.bf16.mxu0 %v1961
        %3998 = vmatmul.mubr.bf16.gmra.mxu0 %v1129
        %v3999 = vpop.f32.mrf.mxu0
        %v4000 = vadd.f32 %v3755, %v3999
        %v4001 = vpop.f32.mrf.mxu0
        %v4002 = vpop.f32.mrf.mxu0
        %v4003 = vadd.f32 %v3755, %v4002
        %v4004 = vpop.f32.mrf.mxu0
        %4005 = vmatprep.mubr.bf16.mxu0 %v1962
        %4006 = vmatmul.mubr.bf16.gmra.mxu0 %v1130
        %v4007 = vpop.f32.mrf.mxu0
        %v4008 = vadd.f32 %v3755, %v4007
        %v4009 = vpop.f32.mrf.mxu0
        %v4010 = vpop.f32.mrf.mxu0
        %v4011 = vadd.f32 %v3755, %v4010
        %v4012 = vpop.f32.mrf.mxu0
        %4013 = vmatprep.mubr.bf16.mxu0 %v1963
        %4014 = vmatmul.mubr.bf16.gmra.mxu0 %v1131
        %v4015 = vpop.f32.mrf.mxu0
        %v4016 = vadd.f32 %v3755, %v4015
        %v4017 = vpop.f32.mrf.mxu0
        %v4018 = vpop.f32.mrf.mxu0
        %v4019 = vadd.f32 %v3755, %v4018
        %v4020 = vpop.f32.mrf.mxu0
        %4021 = vmatprep.mubr.bf16.mxu0 %v1964
        %4022 = vmatmul.mubr.bf16.gmra.mxu0 %v1132
        %v4023 = vpop.f32.mrf.mxu0
        %v4024 = vadd.f32 %v3755, %v4023
        %v4025 = vpop.f32.mrf.mxu0
        %v4026 = vpop.f32.mrf.mxu0
        %v4027 = vadd.f32 %v3755, %v4026
        %v4028 = vpop.f32.mrf.mxu0
        %4029 = vmatprep.mubr.bf16.mxu0 %v1965
        %4030 = vmatmul.mubr.bf16.gmra.mxu0 %v1133
        %v4031 = vpop.f32.mrf.mxu0
        %v4032 = vadd.f32 %v3755, %v4031
        %v4033 = vpop.f32.mrf.mxu0
        %v4034 = vpop.f32.mrf.mxu0
        %v4035 = vadd.f32 %v3755, %v4034
        %v4036 = vpop.f32.mrf.mxu0
        %4037 = vmatprep.mubr.bf16.mxu0 %v1966
        %4038 = vmatmul.mubr.bf16.gmra.mxu0 %v1134
        %v4039 = vpop.f32.mrf.mxu0
        %v4040 = vadd.f32 %v3755, %v4039
        %v4041 = vpop.f32.mrf.mxu0
        %v4042 = vpop.f32.mrf.mxu0
        %v4043 = vadd.f32 %v3755, %v4042
        %v4044 = vpop.f32.mrf.mxu0
        %4045 = vmatprep.mubr.bf16.mxu0 %v1967
        %4046 = vmatmul.mubr.bf16.gmra.mxu0 %v1135
        %v4047 = vpop.f32.mrf.mxu0
        %v4048 = vadd.f32 %v3755, %v4047
        %v4049 = vpop.f32.mrf.mxu0
        %v4050 = vpop.f32.mrf.mxu0
        %v4051 = vadd.f32 %v3755, %v4050
        %v4052 = vpop.f32.mrf.mxu0
        %4053 = vmatprep.mubr.bf16.mxu0 %v1968
        %4054 = vmatmul.mubr.bf16.gmra.mxu0 %v1136
        %v4055 = vpop.f32.mrf.mxu0
        %v4056 = vadd.f32 %v3755, %v4055
        %v4057 = vpop.f32.mrf.mxu0
        %v4058 = vpop.f32.mrf.mxu0
        %v4059 = vadd.f32 %v3755, %v4058
        %v4060 = vpop.f32.mrf.mxu0
        %4061 = vmatprep.mubr.bf16.mxu0 %v1969
        %4062 = vmatmul.mubr.bf16.gmra.mxu0 %v1137
        %v4063 = vpop.f32.mrf.mxu0
        %v4064 = vadd.f32 %v3755, %v4063
        %v4065 = vpop.f32.mrf.mxu0
        %v4066 = vpop.f32.mrf.mxu0
        %v4067 = vadd.f32 %v3755, %v4066
        %v4068 = vpop.f32.mrf.mxu0
        %4069 = vmatprep.mubr.bf16.mxu0 %v1970
        %4070 = vmatmul.mubr.bf16.gmra.mxu0 %v1138
        %v4071 = vpop.f32.mrf.mxu0
        %v4072 = vadd.f32 %v3755, %v4071
        %v4073 = vpop.f32.mrf.mxu0
        %v4074 = vpop.f32.mrf.mxu0
        %v4075 = vadd.f32 %v3755, %v4074
        %v4076 = vpop.f32.mrf.mxu0
        %4077 = vmatprep.mubr.bf16.mxu0 %v1971
        %4078 = vmatmul.mubr.bf16.gmra.mxu0 %v1139
        %v4079 = vpop.f32.mrf.mxu0
        %v4080 = vadd.f32 %v3755, %v4079
        %v4081 = vpop.f32.mrf.mxu0
        %v4082 = vpop.f32.mrf.mxu0
        %v4083 = vadd.f32 %v3755, %v4082
        %v4084 = vpop.f32.mrf.mxu0
        %4085 = vmatprep.mubr.bf16.mxu0 %v1972
        %4086 = vmatmul.mubr.bf16.gmra.mxu0 %v1140
        %v4087 = vpop.f32.mrf.mxu0
        %v4088 = vadd.f32 %v3755, %v4087
        %v4089 = vpop.f32.mrf.mxu0
        %v4090 = vpop.f32.mrf.mxu0
        %v4091 = vadd.f32 %v3755, %v4090
        %v4092 = vpop.f32.mrf.mxu0
        %4093 = vmatprep.mubr.bf16.mxu0 %v1973
        %4094 = vmatmul.mubr.bf16.gmra.mxu0 %v1141
        %v4095 = vpop.f32.mrf.mxu0
        %v4096 = vadd.f32 %v3755, %v4095
        %v4097 = vpop.f32.mrf.mxu0
        %v4098 = vpop.f32.mrf.mxu0
        %v4099 = vadd.f32 %v3755, %v4098
        %v4100 = vpop.f32.mrf.mxu0
        %4101 = vmatprep.mubr.bf16.mxu0 %v1974
        %4102 = vmatmul.mubr.bf16.gmra.mxu0 %v1142
        %v4103 = vpop.f32.mrf.mxu0
        %v4104 = vadd.f32 %v3755, %v4103
        %v4105 = vpop.f32.mrf.mxu0
        %v4106 = vpop.f32.mrf.mxu0
        %v4107 = vadd.f32 %v3755, %v4106
        %v4108 = vpop.f32.mrf.mxu0
        %4109 = vmatprep.mubr.bf16.mxu0 %v1975
        %4110 = vmatmul.mubr.bf16.gmra.mxu0 %v1143
        %v4111 = vpop.f32.mrf.mxu0
        %v4112 = vadd.f32 %v3755, %v4111
        %v4113 = vpop.f32.mrf.mxu0
        %v4114 = vpop.f32.mrf.mxu0
        %v4115 = vadd.f32 %v3755, %v4114
        %v4116 = vpop.f32.mrf.mxu0
        %4117 = vmatprep.mubr.bf16.mxu0 %v1976
        %4118 = vmatmul.mubr.bf16.gmra.mxu0 %v1144
        %v4119 = vpop.f32.mrf.mxu0
        %v4120 = vadd.f32 %v3755, %v4119
        %v4121 = vpop.f32.mrf.mxu0
        %v4122 = vpop.f32.mrf.mxu0
        %v4123 = vadd.f32 %v3755, %v4122
        %v4124 = vpop.f32.mrf.mxu0
        %4125 = vmatprep.mubr.bf16.mxu0 %v1977
        %4126 = vmatmul.mubr.bf16.gmra.mxu0 %v1145
        %v4127 = vpop.f32.mrf.mxu0
        %v4128 = vadd.f32 %v3755, %v4127
        %v4129 = vpop.f32.mrf.mxu0
        %v4130 = vpop.f32.mrf.mxu0
        %v4131 = vadd.f32 %v3755, %v4130
        %v4132 = vpop.f32.mrf.mxu0
        %4133 = vmatprep.mubr.bf16.mxu0 %v1978
        %4134 = vmatmul.mubr.bf16.gmra.mxu0 %v1146
        %v4135 = vpop.f32.mrf.mxu0
        %v4136 = vadd.f32 %v3755, %v4135
        %v4137 = vpop.f32.mrf.mxu0
        %v4138 = vpop.f32.mrf.mxu0
        %v4139 = vadd.f32 %v3755, %v4138
        %v4140 = vpop.f32.mrf.mxu0
        %4141 = vmatprep.mubr.bf16.mxu0 %v1979
        %4142 = vmatmul.mubr.bf16.gmra.mxu0 %v1147
        %v4143 = vpop.f32.mrf.mxu0
        %v4144 = vadd.f32 %v3755, %v4143
        %v4145 = vpop.f32.mrf.mxu0
        %v4146 = vpop.f32.mrf.mxu0
        %v4147 = vadd.f32 %v3755, %v4146
        %v4148 = vpop.f32.mrf.mxu0
        %4149 = vmatprep.mubr.bf16.mxu0 %v1980
        %4150 = vmatmul.mubr.bf16.gmra.mxu0 %v1148
        %v4151 = vpop.f32.mrf.mxu0
        %v4152 = vadd.f32 %v3755, %v4151
        %v4153 = vpop.f32.mrf.mxu0
        %v4154 = vpop.f32.mrf.mxu0
        %v4155 = vadd.f32 %v3755, %v4154
        %v4156 = vpop.f32.mrf.mxu0
        %4157 = vmatprep.mubr.bf16.mxu0 %v1981
        %4158 = vmatmul.mubr.bf16.gmra.mxu0 %v1149
        %v4159 = vpop.f32.mrf.mxu0
        %v4160 = vadd.f32 %v3755, %v4159
        %v4161 = vpop.f32.mrf.mxu0
        %v4162 = vpop.f32.mrf.mxu0
        %v4163 = vadd.f32 %v3755, %v4162
        %v4164 = vpop.f32.mrf.mxu0
        %4165 = vmatprep.mubr.bf16.mxu0 %v1982
        %4166 = vmatmul.mubr.bf16.gmra.mxu0 %v1150
        %v4167 = vpop.f32.mrf.mxu0
        %v4168 = vadd.f32 %v3755, %v4167
        %v4169 = vpop.f32.mrf.mxu0
        %v4170 = vpop.f32.mrf.mxu0
        %v4171 = vadd.f32 %v3755, %v4170
        %v4172 = vpop.f32.mrf.mxu0
        %4173 = vmatprep.mubr.bf16.mxu0 %v1983
        %4174 = vmatmul.mubr.bf16.gmra.mxu0 %v1151
        %v4175 = vpop.f32.mrf.mxu0
        %v4176 = vadd.f32 %v3755, %v4175
        %v4177 = vpop.f32.mrf.mxu0
        %v4178 = vpop.f32.mrf.mxu0
        %v4179 = vadd.f32 %v3755, %v4178
        %v4180 = vpop.f32.mrf.mxu0
        %4181 = vmatprep.mubr.bf16.mxu0 %v1984
        %4182 = vmatmul.mubr.bf16.gmra.mxu0 %v1152
        %v4183 = vpop.f32.mrf.mxu0
        %v4184 = vadd.f32 %v3755, %v4183
        %v4185 = vpop.f32.mrf.mxu0
        %v4186 = vpop.f32.mrf.mxu0
        %v4187 = vadd.f32 %v3755, %v4186
        %v4188 = vpop.f32.mrf.mxu0
        %4189 = vmatprep.mubr.bf16.mxu0 %v1985
        %4190 = vmatmul.mubr.bf16.gmra.mxu0 %v1153
        %v4191 = vpop.f32.mrf.mxu0
        %v4192 = vadd.f32 %v3755, %v4191
        %v4193 = vpop.f32.mrf.mxu0
        %v4194 = vpop.f32.mrf.mxu0
        %v4195 = vadd.f32 %v3755, %v4194
        %v4196 = vpop.f32.mrf.mxu0
        %4197 = vmatprep.mubr.bf16.mxu0 %v1986
        %4198 = vmatmul.mubr.bf16.gmra.mxu0 %v1154
        %v4199 = vpop.f32.mrf.mxu0
        %v4200 = vadd.f32 %v3755, %v4199
        %v4201 = vpop.f32.mrf.mxu0
        %v4202 = vpop.f32.mrf.mxu0
        %v4203 = vadd.f32 %v3755, %v4202
        %v4204 = vpop.f32.mrf.mxu0
        %4205 = vmatprep.mubr.bf16.mxu0 %v1987
        %4206 = vmatmul.mubr.bf16.gmra.mxu0 %v1155
        %v4207 = vpop.f32.mrf.mxu0
        %v4208 = vadd.f32 %v3755, %v4207
        %v4209 = vpop.f32.mrf.mxu0
        %v4210 = vpop.f32.mrf.mxu0
        %v4211 = vadd.f32 %v3755, %v4210
        %v4212 = vpop.f32.mrf.mxu0
        %4213 = vmatprep.mubr.bf16.mxu0 %v1988
        %4214 = vmatmul.mubr.bf16.gmra.mxu0 %v1156
        %v4215 = vpop.f32.mrf.mxu0
        %v4216 = vadd.f32 %v3755, %v4215
        %v4217 = vpop.f32.mrf.mxu0
        %v4218 = vpop.f32.mrf.mxu0
        %v4219 = vadd.f32 %v3755, %v4218
        %v4220 = vpop.f32.mrf.mxu0
        %4221 = vmatprep.mubr.bf16.mxu0 %v1989
        %4222 = vmatmul.mubr.bf16.gmra.mxu0 %v1157
        %v4223 = vpop.f32.mrf.mxu0
        %v4224 = vadd.f32 %v3755, %v4223
        %v4225 = vpop.f32.mrf.mxu0
        %v4226 = vpop.f32.mrf.mxu0
        %v4227 = vadd.f32 %v3755, %v4226
        %v4228 = vpop.f32.mrf.mxu0
        %4229 = vmatprep.mubr.bf16.mxu0 %v1990
        %4230 = vmatmul.mubr.bf16.gmra.mxu0 %v1158
        %v4231 = vpop.f32.mrf.mxu0
        %v4232 = vadd.f32 %v3755, %v4231
        %v4233 = vpop.f32.mrf.mxu0
        %v4234 = vpop.f32.mrf.mxu0
        %v4235 = vadd.f32 %v3755, %v4234
        %v4236 = vpop.f32.mrf.mxu0
        %4237 = vmatprep.mubr.bf16.mxu0 %v1991
        %4238 = vmatmul.mubr.bf16.gmra.mxu0 %v1159
        %v4239 = vpop.f32.mrf.mxu0
        %v4240 = vadd.f32 %v3755, %v4239
        %v4241 = vpop.f32.mrf.mxu0
        %v4242 = vpop.f32.mrf.mxu0
        %v4243 = vadd.f32 %v3755, %v4242
        %v4244 = vpop.f32.mrf.mxu0
        %4245 = vmatprep.mubr.bf16.mxu0 %v1992
        %4246 = vmatmul.mubr.bf16.gmra.mxu0 %v1160
        %v4247 = vpop.f32.mrf.mxu0
        %v4248 = vadd.f32 %v3755, %v4247
        %v4249 = vpop.f32.mrf.mxu0
        %v4250 = vpop.f32.mrf.mxu0
        %v4251 = vadd.f32 %v3755, %v4250
        %v4252 = vpop.f32.mrf.mxu0
        %4253 = vmatprep.mubr.bf16.mxu0 %v1993
        %4254 = vmatmul.mubr.bf16.gmra.mxu0 %v1161
        %v4255 = vpop.f32.mrf.mxu0
        %v4256 = vadd.f32 %v3755, %v4255
        %v4257 = vpop.f32.mrf.mxu0
        %v4258 = vpop.f32.mrf.mxu0
        %v4259 = vadd.f32 %v3755, %v4258
        %v4260 = vpop.f32.mrf.mxu0
        %4261 = vmatprep.mubr.bf16.mxu0 %v1994
        %4262 = vmatmul.mubr.bf16.gmra.mxu0 %v1162
        %v4263 = vpop.f32.mrf.mxu0
        %v4264 = vadd.f32 %v3755, %v4263
        %v4265 = vpop.f32.mrf.mxu0
        %v4266 = vpop.f32.mrf.mxu0
        %v4267 = vadd.f32 %v3755, %v4266
        %v4268 = vpop.f32.mrf.mxu0
        %4269 = vmatprep.mubr.bf16.mxu0 %v1995
        %4270 = vmatmul.mubr.bf16.gmra.mxu0 %v1163
        %v4271 = vpop.f32.mrf.mxu0
        %v4272 = vadd.f32 %v3755, %v4271
        %v4273 = vpop.f32.mrf.mxu0
        %v4274 = vpop.f32.mrf.mxu0
        %v4275 = vadd.f32 %v3755, %v4274
        %v4276 = vpop.f32.mrf.mxu0
        %4277 = vmatprep.mubr.bf16.mxu0 %v1996
        %4278 = vmatmul.mubr.bf16.gmra.mxu0 %v1164
        %v4279 = vpop.f32.mrf.mxu0
        %v4280 = vadd.f32 %v3755, %v4279
        %v4281 = vpop.f32.mrf.mxu0
        %v4282 = vpop.f32.mrf.mxu0
        %v4283 = vadd.f32 %v3755, %v4282
        %v4284 = vpop.f32.mrf.mxu0
        %4285 = vmatprep.mubr.bf16.mxu0 %v1997
        %4286 = vmatmul.mubr.bf16.gmra.mxu0 %v1165
        %v4287 = vpop.f32.mrf.mxu0
        %v4288 = vadd.f32 %v3755, %v4287
        %v4289 = vpop.f32.mrf.mxu0
        %v4290 = vpop.f32.mrf.mxu0
        %v4291 = vadd.f32 %v3755, %v4290
        %v4292 = vpop.f32.mrf.mxu0
        %4293 = vmatprep.mubr.bf16.mxu0 %v1998
        %4294 = vmatmul.mubr.bf16.gmra.mxu0 %v1166
        %v4295 = vpop.f32.mrf.mxu0
        %v4296 = vadd.f32 %v3755, %v4295
        %v4297 = vpop.f32.mrf.mxu0
        %v4298 = vpop.f32.mrf.mxu0
        %v4299 = vadd.f32 %v3755, %v4298
        %v4300 = vpop.f32.mrf.mxu0
        %4301 = vmatprep.mubr.bf16.mxu0 %v1999
        %4302 = vmatmul.mubr.bf16.gmra.mxu0 %v1167
        %v4303 = vpop.f32.mrf.mxu0
        %v4304 = vadd.f32 %v3755, %v4303
        %v4305 = vpop.f32.mrf.mxu0
        %v4306 = vpop.f32.mrf.mxu0
        %v4307 = vadd.f32 %v3755, %v4306
        %v4308 = vpop.f32.mrf.mxu0
        %4309 = vmatprep.mubr.bf16.mxu0 %v2000
        %4310 = vmatmul.mubr.bf16.gmra.mxu0 %v1168
        %v4311 = vpop.f32.mrf.mxu0
        %v4312 = vadd.f32 %v3755, %v4311
        %v4313 = vpop.f32.mrf.mxu0
        %v4314 = vpop.f32.mrf.mxu0
        %v4315 = vadd.f32 %v3755, %v4314
        %v4316 = vpop.f32.mrf.mxu0
        %4317 = vmatprep.mubr.bf16.mxu0 %v2001
        %4318 = vmatmul.mubr.bf16.gmra.mxu0 %v1169
        %v4319 = vpop.f32.mrf.mxu0
        %v4320 = vadd.f32 %v3755, %v4319
        %v4321 = vpop.f32.mrf.mxu0
        %v4322 = vpop.f32.mrf.mxu0
        %v4323 = vadd.f32 %v3755, %v4322
        %v4324 = vpop.f32.mrf.mxu0
        %4325 = vmatprep.mubr.bf16.mxu0 %v2002
        %4326 = vmatmul.mubr.bf16.gmra.mxu0 %v1170
        %v4327 = vpop.f32.mrf.mxu0
        %v4328 = vadd.f32 %v3755, %v4327
        %v4329 = vpop.f32.mrf.mxu0
        %v4330 = vpop.f32.mrf.mxu0
        %v4331 = vadd.f32 %v3755, %v4330
        %v4332 = vpop.f32.mrf.mxu0
        %4333 = vmatprep.mubr.bf16.mxu0 %v2003
        %4334 = vmatmul.mubr.bf16.gmra.mxu0 %v1171
        %v4335 = vpop.f32.mrf.mxu0
        %v4336 = vadd.f32 %v3755, %v4335
        %v4337 = vpop.f32.mrf.mxu0
        %v4338 = vpop.f32.mrf.mxu0
        %v4339 = vadd.f32 %v3755, %v4338
        %v4340 = vpop.f32.mrf.mxu0
        %4341 = vmatprep.mubr.bf16.mxu0 %v2004
        %4342 = vmatmul.mubr.bf16.gmra.mxu0 %v1172
        %v4343 = vpop.f32.mrf.mxu0
        %v4344 = vadd.f32 %v3755, %v4343
        %v4345 = vpop.f32.mrf.mxu0
        %v4346 = vpop.f32.mrf.mxu0
        %v4347 = vadd.f32 %v3755, %v4346
        %v4348 = vpop.f32.mrf.mxu0
        %4349 = vmatprep.mubr.bf16.mxu0 %v2005
        %4350 = vmatmul.mubr.bf16.gmra.mxu0 %v1173
        %v4351 = vpop.f32.mrf.mxu0
        %v4352 = vadd.f32 %v3755, %v4351
        %v4353 = vpop.f32.mrf.mxu0
        %v4354 = vpop.f32.mrf.mxu0
        %v4355 = vadd.f32 %v3755, %v4354
        %v4356 = vpop.f32.mrf.mxu0
        %4357 = vmatprep.mubr.bf16.mxu0 %v2006
        %4358 = vmatmul.mubr.bf16.gmra.mxu0 %v1174
        %v4359 = vpop.f32.mrf.mxu0
        %v4360 = vadd.f32 %v3755, %v4359
        %v4361 = vpop.f32.mrf.mxu0
        %v4362 = vpop.f32.mrf.mxu0
        %v4363 = vadd.f32 %v3755, %v4362
        %v4364 = vpop.f32.mrf.mxu0
        %4365 = vmatprep.mubr.bf16.mxu0 %v2007
        %4366 = vmatmul.mubr.bf16.gmra.mxu0 %v1175
        %v4367 = vpop.f32.mrf.mxu0
        %v4368 = vadd.f32 %v3755, %v4367
        %v4369 = vpop.f32.mrf.mxu0
        %v4370 = vpop.f32.mrf.mxu0
        %v4371 = vadd.f32 %v3755, %v4370
        %v4372 = vpop.f32.mrf.mxu0
        %4373 = vmatprep.mubr.bf16.mxu0 %v2008
        %4374 = vmatmul.mubr.bf16.gmra.mxu0 %v1176
        %v4375 = vpop.f32.mrf.mxu0
        %v4376 = vadd.f32 %v3755, %v4375
        %v4377 = vpop.f32.mrf.mxu0
        %v4378 = vpop.f32.mrf.mxu0
        %v4379 = vadd.f32 %v3755, %v4378
        %v4380 = vpop.f32.mrf.mxu0
        %4381 = vmatprep.mubr.bf16.mxu0 %v2009
        %4382 = vmatmul.mubr.bf16.gmra.mxu0 %v1177
        %v4383 = vpop.f32.mrf.mxu0
        %v4384 = vadd.f32 %v3755, %v4383
        %v4385 = vpop.f32.mrf.mxu0
        %v4386 = vpop.f32.mrf.mxu0
        %v4387 = vadd.f32 %v3755, %v4386
        %v4388 = vpop.f32.mrf.mxu0
        %4389 = vmatprep.mubr.bf16.mxu0 %v2010
        %4390 = vmatmul.mubr.bf16.gmra.mxu0 %v1178
        %v4391 = vpop.f32.mrf.mxu0
        %v4392 = vadd.f32 %v3755, %v4391
        %v4393 = vpop.f32.mrf.mxu0
        %v4394 = vpop.f32.mrf.mxu0
        %v4395 = vadd.f32 %v3755, %v4394
        %v4396 = vpop.f32.mrf.mxu0
        %4397 = vmatprep.mubr.bf16.mxu0 %v2011
        %4398 = vmatmul.mubr.bf16.gmra.mxu0 %v1179
        %v4399 = vpop.f32.mrf.mxu0
        %v4400 = vadd.f32 %v3755, %v4399
        %v4401 = vpop.f32.mrf.mxu0
        %v4402 = vpop.f32.mrf.mxu0
        %v4403 = vadd.f32 %v3755, %v4402
        %v4404 = vpop.f32.mrf.mxu0
        %4405 = vmatprep.mubr.bf16.mxu0 %v2012
        %4406 = vmatmul.mubr.bf16.gmra.mxu0 %v1180
        %v4407 = vpop.f32.mrf.mxu0
        %v4408 = vadd.f32 %v3755, %v4407
        %v4409 = vpop.f32.mrf.mxu0
        %v4410 = vpop.f32.mrf.mxu0
        %v4411 = vadd.f32 %v3755, %v4410
        %v4412 = vpop.f32.mrf.mxu0
        %4413 = vmatprep.mubr.bf16.mxu0 %v2013
        %4414 = vmatmul.mubr.bf16.gmra.mxu0 %v1181
        %v4415 = vpop.f32.mrf.mxu0
        %v4416 = vadd.f32 %v3755, %v4415
        %v4417 = vpop.f32.mrf.mxu0
        %v4418 = vpop.f32.mrf.mxu0
        %v4419 = vadd.f32 %v3755, %v4418
        %v4420 = vpop.f32.mrf.mxu0
        %4421 = vmatprep.mubr.bf16.mxu0 %v2014
        %4422 = vmatmul.mubr.bf16.gmra.mxu0 %v1182
        %v4423 = vpop.f32.mrf.mxu0
        %v4424 = vadd.f32 %v3755, %v4423
        %v4425 = vpop.f32.mrf.mxu0
        %v4426 = vpop.f32.mrf.mxu0
        %v4427 = vadd.f32 %v3755, %v4426
        %v4428 = vpop.f32.mrf.mxu0
        %4429 = vmatprep.mubr.bf16.mxu0 %v2015
        %4430 = vmatmul.mubr.bf16.gmra.mxu0 %v1183
        %v4431 = vpop.f32.mrf.mxu0
        %v4432 = vadd.f32 %v3755, %v4431
        %v4433 = vpop.f32.mrf.mxu0
        %v4434 = vpop.f32.mrf.mxu0
        %v4435 = vadd.f32 %v3755, %v4434
        %v4436 = vpop.f32.mrf.mxu0
        %4437 = vmatprep.mubr.bf16.mxu0 %v2016
        %4438 = vmatmul.mubr.bf16.gmra.mxu0 %v1184
        %v4439 = vpop.f32.mrf.mxu0
        %v4440 = vadd.f32 %v3755, %v4439
        %v4441 = vpop.f32.mrf.mxu0
        %v4442 = vpop.f32.mrf.mxu0
        %v4443 = vadd.f32 %v3755, %v4442
        %v4444 = vpop.f32.mrf.mxu0
        %4445 = vmatprep.mubr.bf16.mxu0 %v2017
        %4446 = vmatmul.mubr.bf16.gmra.mxu0 %v1185
        %v4447 = vpop.f32.mrf.mxu0
        %v4448 = vadd.f32 %v3755, %v4447
        %v4449 = vpop.f32.mrf.mxu0
        %v4450 = vpop.f32.mrf.mxu0
        %v4451 = vadd.f32 %v3755, %v4450
        %v4452 = vpop.f32.mrf.mxu0
        %4453 = vmatprep.mubr.bf16.mxu0 %v2018
        %4454 = vmatmul.mubr.bf16.gmra.mxu0 %v1186
        %v4455 = vpop.f32.mrf.mxu0
        %v4456 = vadd.f32 %v3755, %v4455
        %v4457 = vpop.f32.mrf.mxu0
        %v4458 = vpop.f32.mrf.mxu0
        %v4459 = vadd.f32 %v3755, %v4458
        %v4460 = vpop.f32.mrf.mxu0
        %4461 = vmatprep.mubr.bf16.mxu0 %v2019
        %4462 = vmatmul.mubr.bf16.gmra.mxu0 %v1187
        %v4463 = vpop.f32.mrf.mxu0
        %v4464 = vadd.f32 %v3755, %v4463
        %v4465 = vpop.f32.mrf.mxu0
        %v4466 = vpop.f32.mrf.mxu0
        %v4467 = vadd.f32 %v3755, %v4466
        %v4468 = vpop.f32.mrf.mxu0
        %4469 = vmatprep.mubr.bf16.mxu0 %v2020
        %4470 = vmatmul.mubr.bf16.gmra.mxu0 %v1188
        %v4471 = vpop.f32.mrf.mxu0
        %v4472 = vadd.f32 %v3755, %v4471
        %v4473 = vpop.f32.mrf.mxu0
        %v4474 = vpop.f32.mrf.mxu0
        %v4475 = vadd.f32 %v3755, %v4474
        %v4476 = vpop.f32.mrf.mxu0
        %4477 = vmatprep.mubr.bf16.mxu0 %v2021
        %4478 = vmatmul.mubr.bf16.gmra.mxu0 %v1189
        %v4479 = vpop.f32.mrf.mxu0
        %v4480 = vadd.f32 %v3755, %v4479
        %v4481 = vpop.f32.mrf.mxu0
        %v4482 = vpop.f32.mrf.mxu0
        %v4483 = vadd.f32 %v3755, %v4482
        %v4484 = vpop.f32.mrf.mxu0
        %4485 = vmatprep.mubr.bf16.mxu0 %v2022
        %4486 = vmatmul.mubr.bf16.gmra.mxu0 %v1190
        %v4487 = vpop.f32.mrf.mxu0
        %v4488 = vadd.f32 %v3755, %v4487
        %v4489 = vpop.f32.mrf.mxu0
        %v4490 = vpop.f32.mrf.mxu0
        %v4491 = vadd.f32 %v3755, %v4490
        %v4492 = vpop.f32.mrf.mxu0
        %4493 = vdwg.mxu0
        %4494 = vmatprep.subr.bf16.mxu0 0
        %4495 = vmatpush1.bf16.msra.mxu0 %v3908
        %4496 = vmatprep.subr.bf16.mxu0 0
        %4497 = vmatpush1.bf16.msra.mxu0 %v3907
        %4498 = vmatprep.subr.bf16.mxu0 0
        %4499 = vmatpush1.bf16.msra.mxu0 %v3906
        %4500 = vmatprep.subr.bf16.mxu0 0
        %4501 = vmatpush1.bf16.msra.mxu0 %v3905
        %4502 = vmatprep.subr.bf16.mxu0 0
        %4503 = vmatpush1.bf16.msra.mxu0 %v3904
        %4504 = vmatprep.subr.bf16.mxu0 0
        %4505 = vmatpush1.bf16.msra.mxu0 %v3903
        %4506 = vmatprep.subr.bf16.mxu0 0
        %4507 = vmatpush1.bf16.msra.mxu0 %v3902
        %4508 = vmatprep.subr.bf16.mxu0 0
        %4509 = vmatpush1.bf16.msra.mxu0 %v3901
        %4510 = vmatprep.subr.bf16.mxu0 0
        %4511 = vmatpush2.bf16.msra.mxu0 %v3916
        %4512 = vmatprep.subr.bf16.mxu0 0
        %4513 = vmatpush2.bf16.msra.mxu0 %v3915
        %4514 = vmatprep.subr.bf16.mxu0 0
        %4515 = vmatpush2.bf16.msra.mxu0 %v3914
        %4516 = vmatprep.subr.bf16.mxu0 0
        %4517 = vmatpush2.bf16.msra.mxu0 %v3913
        %4518 = vmatprep.subr.bf16.mxu0 0
        %4519 = vmatpush2.bf16.msra.mxu0 %v3912
        %4520 = vmatprep.subr.bf16.mxu0 0
        %4521 = vmatpush2.bf16.msra.mxu0 %v3911
        %4522 = vmatprep.subr.bf16.mxu0 0
        %4523 = vmatpush2.bf16.msra.mxu0 %v3910
        %4524 = vmatprep.subr.bf16.mxu0 0
        %4525 = vmatpush2.bf16.msra.mxu0 %v3909
        %4526 = vmatprep.mubr.bf16.mxu0 %v3623
        %4527 = vmatmul.mubr.bf16.gmra.mxu0 %v2791
        %v4528 = vpop.f32.mrf.mxu0
        %v4529 = vadd.f32 %v3984, %v4528
        %v4530 = vpop.f32.mrf.mxu0
        %v4531 = vpop.f32.mrf.mxu0
        %v4532 = vadd.f32 %v3987, %v4531
        %v4533 = vpop.f32.mrf.mxu0
        %4534 = vmatprep.mubr.bf16.mxu0 %v3624
        %4535 = vmatmul.mubr.bf16.gmra.mxu0 %v2792
        %v4536 = vpop.f32.mrf.mxu0
        %v4537 = vadd.f32 %v3992, %v4536
        %v4538 = vpop.f32.mrf.mxu0
        %v4539 = vpop.f32.mrf.mxu0
        %v4540 = vadd.f32 %v3995, %v4539
        %v4541 = vpop.f32.mrf.mxu0
        %4542 = vmatprep.mubr.bf16.mxu0 %v3625
        %4543 = vmatmul.mubr.bf16.gmra.mxu0 %v2793
        %v4544 = vpop.f32.mrf.mxu0
        %v4545 = vadd.f32 %v4000, %v4544
        %v4546 = vpop.f32.mrf.mxu0
        %v4547 = vpop.f32.mrf.mxu0
        %v4548 = vadd.f32 %v4003, %v4547
        %v4549 = vpop.f32.mrf.mxu0
        %4550 = vmatprep.mubr.bf16.mxu0 %v3626
        %4551 = vmatmul.mubr.bf16.gmra.mxu0 %v2794
        %v4552 = vpop.f32.mrf.mxu0
        %v4553 = vadd.f32 %v4008, %v4552
        %v4554 = vpop.f32.mrf.mxu0
        %v4555 = vpop.f32.mrf.mxu0
        %v4556 = vadd.f32 %v4011, %v4555
        %v4557 = vpop.f32.mrf.mxu0
        %4558 = vmatprep.mubr.bf16.mxu0 %v3627
        %4559 = vmatmul.mubr.bf16.gmra.mxu0 %v2795
        %v4560 = vpop.f32.mrf.mxu0
        %v4561 = vadd.f32 %v4016, %v4560
        %v4562 = vpop.f32.mrf.mxu0
        %v4563 = vpop.f32.mrf.mxu0
        %v4564 = vadd.f32 %v4019, %v4563
        %v4565 = vpop.f32.mrf.mxu0
        %4566 = vmatprep.mubr.bf16.mxu0 %v3628
        %4567 = vmatmul.mubr.bf16.gmra.mxu0 %v2796
        %v4568 = vpop.f32.mrf.mxu0
        %v4569 = vadd.f32 %v4024, %v4568
        %v4570 = vpop.f32.mrf.mxu0
        %v4571 = vpop.f32.mrf.mxu0
        %v4572 = vadd.f32 %v4027, %v4571
        %v4573 = vpop.f32.mrf.mxu0
        %4574 = vmatprep.mubr.bf16.mxu0 %v3629
        %4575 = vmatmul.mubr.bf16.gmra.mxu0 %v2797
        %v4576 = vpop.f32.mrf.mxu0
        %v4577 = vadd.f32 %v4032, %v4576
        %v4578 = vpop.f32.mrf.mxu0
        %v4579 = vpop.f32.mrf.mxu0
        %v4580 = vadd.f32 %v4035, %v4579
        %v4581 = vpop.f32.mrf.mxu0
        %4582 = vmatprep.mubr.bf16.mxu0 %v3630
        %4583 = vmatmul.mubr.bf16.gmra.mxu0 %v2798
        %v4584 = vpop.f32.mrf.mxu0
        %v4585 = vadd.f32 %v4040, %v4584
        %v4586 = vpop.f32.mrf.mxu0
        %v4587 = vpop.f32.mrf.mxu0
        %v4588 = vadd.f32 %v4043, %v4587
        %v4589 = vpop.f32.mrf.mxu0
        %4590 = vmatprep.mubr.bf16.mxu0 %v3631
        %4591 = vmatmul.mubr.bf16.gmra.mxu0 %v2799
        %v4592 = vpop.f32.mrf.mxu0
        %v4593 = vadd.f32 %v4048, %v4592
        %v4594 = vpop.f32.mrf.mxu0
        %v4595 = vpop.f32.mrf.mxu0
        %v4596 = vadd.f32 %v4051, %v4595
        %v4597 = vpop.f32.mrf.mxu0
        %4598 = vmatprep.mubr.bf16.mxu0 %v3632
        %4599 = vmatmul.mubr.bf16.gmra.mxu0 %v2800
        %v4600 = vpop.f32.mrf.mxu0
        %v4601 = vadd.f32 %v4056, %v4600
        %v4602 = vpop.f32.mrf.mxu0
        %v4603 = vpop.f32.mrf.mxu0
        %v4604 = vadd.f32 %v4059, %v4603
        %v4605 = vpop.f32.mrf.mxu0
        %4606 = vmatprep.mubr.bf16.mxu0 %v3633
        %4607 = vmatmul.mubr.bf16.gmra.mxu0 %v2801
        %v4608 = vpop.f32.mrf.mxu0
        %v4609 = vadd.f32 %v4064, %v4608
        %v4610 = vpop.f32.mrf.mxu0
        %v4611 = vpop.f32.mrf.mxu0
        %v4612 = vadd.f32 %v4067, %v4611
        %v4613 = vpop.f32.mrf.mxu0
        %4614 = vmatprep.mubr.bf16.mxu0 %v3634
        %4615 = vmatmul.mubr.bf16.gmra.mxu0 %v2802
        %v4616 = vpop.f32.mrf.mxu0
        %v4617 = vadd.f32 %v4072, %v4616
        %v4618 = vpop.f32.mrf.mxu0
        %v4619 = vpop.f32.mrf.mxu0
        %v4620 = vadd.f32 %v4075, %v4619
        %v4621 = vpop.f32.mrf.mxu0
        %4622 = vmatprep.mubr.bf16.mxu0 %v3635
        %4623 = vmatmul.mubr.bf16.gmra.mxu0 %v2803
        %v4624 = vpop.f32.mrf.mxu0
        %v4625 = vadd.f32 %v4080, %v4624
        %v4626 = vpop.f32.mrf.mxu0
        %v4627 = vpop.f32.mrf.mxu0
        %v4628 = vadd.f32 %v4083, %v4627
        %v4629 = vpop.f32.mrf.mxu0
        %4630 = vmatprep.mubr.bf16.mxu0 %v3636
        %4631 = vmatmul.mubr.bf16.gmra.mxu0 %v2804
        %v4632 = vpop.f32.mrf.mxu0
        %v4633 = vadd.f32 %v4088, %v4632
        %v4634 = vpop.f32.mrf.mxu0
        %v4635 = vpop.f32.mrf.mxu0
        %v4636 = vadd.f32 %v4091, %v4635
        %v4637 = vpop.f32.mrf.mxu0
        %4638 = vmatprep.mubr.bf16.mxu0 %v3637
        %4639 = vmatmul.mubr.bf16.gmra.mxu0 %v2805
        %v4640 = vpop.f32.mrf.mxu0
        %v4641 = vadd.f32 %v4096, %v4640
        %v4642 = vpop.f32.mrf.mxu0
        %v4643 = vpop.f32.mrf.mxu0
        %v4644 = vadd.f32 %v4099, %v4643
        %v4645 = vpop.f32.mrf.mxu0
        %4646 = vmatprep.mubr.bf16.mxu0 %v3638
        %4647 = vmatmul.mubr.bf16.gmra.mxu0 %v2806
        %v4648 = vpop.f32.mrf.mxu0
        %v4649 = vadd.f32 %v4104, %v4648
        %v4650 = vpop.f32.mrf.mxu0
        %v4651 = vpop.f32.mrf.mxu0
        %v4652 = vadd.f32 %v4107, %v4651
        %v4653 = vpop.f32.mrf.mxu0
        %4654 = vmatprep.mubr.bf16.mxu0 %v3639
        %4655 = vmatmul.mubr.bf16.gmra.mxu0 %v2807
        %v4656 = vpop.f32.mrf.mxu0
        %v4657 = vadd.f32 %v4112, %v4656
        %v4658 = vpop.f32.mrf.mxu0
        %v4659 = vpop.f32.mrf.mxu0
        %v4660 = vadd.f32 %v4115, %v4659
        %v4661 = vpop.f32.mrf.mxu0
        %4662 = vmatprep.mubr.bf16.mxu0 %v3640
        %4663 = vmatmul.mubr.bf16.gmra.mxu0 %v2808
        %v4664 = vpop.f32.mrf.mxu0
        %v4665 = vadd.f32 %v4120, %v4664
        %v4666 = vpop.f32.mrf.mxu0
        %v4667 = vpop.f32.mrf.mxu0
        %v4668 = vadd.f32 %v4123, %v4667
        %v4669 = vpop.f32.mrf.mxu0
        %4670 = vmatprep.mubr.bf16.mxu0 %v3641
        %4671 = vmatmul.mubr.bf16.gmra.mxu0 %v2809
        %v4672 = vpop.f32.mrf.mxu0
        %v4673 = vadd.f32 %v4128, %v4672
        %v4674 = vpop.f32.mrf.mxu0
        %v4675 = vpop.f32.mrf.mxu0
        %v4676 = vadd.f32 %v4131, %v4675
        %v4677 = vpop.f32.mrf.mxu0
        %4678 = vmatprep.mubr.bf16.mxu0 %v3642
        %4679 = vmatmul.mubr.bf16.gmra.mxu0 %v2810
        %v4680 = vpop.f32.mrf.mxu0
        %v4681 = vadd.f32 %v4136, %v4680
        %v4682 = vpop.f32.mrf.mxu0
        %v4683 = vpop.f32.mrf.mxu0
        %v4684 = vadd.f32 %v4139, %v4683
        %v4685 = vpop.f32.mrf.mxu0
        %4686 = vmatprep.mubr.bf16.mxu0 %v3643
        %4687 = vmatmul.mubr.bf16.gmra.mxu0 %v2811
        %v4688 = vpop.f32.mrf.mxu0
        %v4689 = vadd.f32 %v4144, %v4688
        %v4690 = vpop.f32.mrf.mxu0
        %v4691 = vpop.f32.mrf.mxu0
        %v4692 = vadd.f32 %v4147, %v4691
        %v4693 = vpop.f32.mrf.mxu0
        %4694 = vmatprep.mubr.bf16.mxu0 %v3644
        %4695 = vmatmul.mubr.bf16.gmra.mxu0 %v2812
        %v4696 = vpop.f32.mrf.mxu0
        %v4697 = vadd.f32 %v4152, %v4696
        %v4698 = vpop.f32.mrf.mxu0
        %v4699 = vpop.f32.mrf.mxu0
        %v4700 = vadd.f32 %v4155, %v4699
        %v4701 = vpop.f32.mrf.mxu0
        %4702 = vmatprep.mubr.bf16.mxu0 %v3645
        %4703 = vmatmul.mubr.bf16.gmra.mxu0 %v2813
        %v4704 = vpop.f32.mrf.mxu0
        %v4705 = vadd.f32 %v4160, %v4704
        %v4706 = vpop.f32.mrf.mxu0
        %v4707 = vpop.f32.mrf.mxu0
        %v4708 = vadd.f32 %v4163, %v4707
        %v4709 = vpop.f32.mrf.mxu0
        %4710 = vmatprep.mubr.bf16.mxu0 %v3646
        %4711 = vmatmul.mubr.bf16.gmra.mxu0 %v2814
        %v4712 = vpop.f32.mrf.mxu0
        %v4713 = vadd.f32 %v4168, %v4712
        %v4714 = vpop.f32.mrf.mxu0
        %v4715 = vpop.f32.mrf.mxu0
        %v4716 = vadd.f32 %v4171, %v4715
        %v4717 = vpop.f32.mrf.mxu0
        %4718 = vmatprep.mubr.bf16.mxu0 %v3647
        %4719 = vmatmul.mubr.bf16.gmra.mxu0 %v2815
        %v4720 = vpop.f32.mrf.mxu0
        %v4721 = vadd.f32 %v4176, %v4720
        %v4722 = vpop.f32.mrf.mxu0
        %v4723 = vpop.f32.mrf.mxu0
        %v4724 = vadd.f32 %v4179, %v4723
        %v4725 = vpop.f32.mrf.mxu0
        %4726 = vmatprep.mubr.bf16.mxu0 %v3648
        %4727 = vmatmul.mubr.bf16.gmra.mxu0 %v2816
        %v4728 = vpop.f32.mrf.mxu0
        %v4729 = vadd.f32 %v4184, %v4728
        %v4730 = vpop.f32.mrf.mxu0
        %v4731 = vpop.f32.mrf.mxu0
        %v4732 = vadd.f32 %v4187, %v4731
        %v4733 = vpop.f32.mrf.mxu0
        %4734 = vmatprep.mubr.bf16.mxu0 %v3649
        %4735 = vmatmul.mubr.bf16.gmra.mxu0 %v2817
        %v4736 = vpop.f32.mrf.mxu0
        %v4737 = vadd.f32 %v4192, %v4736
        %v4738 = vpop.f32.mrf.mxu0
        %v4739 = vpop.f32.mrf.mxu0
        %v4740 = vadd.f32 %v4195, %v4739
        %v4741 = vpop.f32.mrf.mxu0
        %4742 = vmatprep.mubr.bf16.mxu0 %v3650
        %4743 = vmatmul.mubr.bf16.gmra.mxu0 %v2818
        %v4744 = vpop.f32.mrf.mxu0
        %v4745 = vadd.f32 %v4200, %v4744
        %v4746 = vpop.f32.mrf.mxu0
        %v4747 = vpop.f32.mrf.mxu0
        %v4748 = vadd.f32 %v4203, %v4747
        %v4749 = vpop.f32.mrf.mxu0
        %4750 = vmatprep.mubr.bf16.mxu0 %v3651
        %4751 = vmatmul.mubr.bf16.gmra.mxu0 %v2819
        %v4752 = vpop.f32.mrf.mxu0
        %v4753 = vadd.f32 %v4208, %v4752
        %v4754 = vpop.f32.mrf.mxu0
        %v4755 = vpop.f32.mrf.mxu0
        %v4756 = vadd.f32 %v4211, %v4755
        %v4757 = vpop.f32.mrf.mxu0
        %4758 = vmatprep.mubr.bf16.mxu0 %v3652
        %4759 = vmatmul.mubr.bf16.gmra.mxu0 %v2820
        %v4760 = vpop.f32.mrf.mxu0
        %v4761 = vadd.f32 %v4216, %v4760
        %v4762 = vpop.f32.mrf.mxu0
        %v4763 = vpop.f32.mrf.mxu0
        %v4764 = vadd.f32 %v4219, %v4763
        %v4765 = vpop.f32.mrf.mxu0
        %4766 = vmatprep.mubr.bf16.mxu0 %v3653
        %4767 = vmatmul.mubr.bf16.gmra.mxu0 %v2821
        %v4768 = vpop.f32.mrf.mxu0
        %v4769 = vadd.f32 %v4224, %v4768
        %v4770 = vpop.f32.mrf.mxu0
        %v4771 = vpop.f32.mrf.mxu0
        %v4772 = vadd.f32 %v4227, %v4771
        %v4773 = vpop.f32.mrf.mxu0
        %4774 = vmatprep.mubr.bf16.mxu0 %v3654
        %4775 = vmatmul.mubr.bf16.gmra.mxu0 %v2822
        %v4776 = vpop.f32.mrf.mxu0
        %v4777 = vadd.f32 %v4232, %v4776
        %v4778 = vpop.f32.mrf.mxu0
        %v4779 = vpop.f32.mrf.mxu0
        %v4780 = vadd.f32 %v4235, %v4779
        %v4781 = vpop.f32.mrf.mxu0
        %4782 = vmatprep.mubr.bf16.mxu0 %v3655
        %4783 = vmatmul.mubr.bf16.gmra.mxu0 %v2823
        %v4784 = vpop.f32.mrf.mxu0
        %v4785 = vadd.f32 %v4240, %v4784
        %v4786 = vpop.f32.mrf.mxu0
        %v4787 = vpop.f32.mrf.mxu0
        %v4788 = vadd.f32 %v4243, %v4787
        %v4789 = vpop.f32.mrf.mxu0
        %4790 = vmatprep.mubr.bf16.mxu0 %v3656
        %4791 = vmatmul.mubr.bf16.gmra.mxu0 %v2824
        %v4792 = vpop.f32.mrf.mxu0
        %v4793 = vadd.f32 %v4248, %v4792
        %v4794 = vpop.f32.mrf.mxu0
        %v4795 = vpop.f32.mrf.mxu0
        %v4796 = vadd.f32 %v4251, %v4795
        %v4797 = vpop.f32.mrf.mxu0
        %4798 = vmatprep.mubr.bf16.mxu0 %v3657
        %4799 = vmatmul.mubr.bf16.gmra.mxu0 %v2825
        %v4800 = vpop.f32.mrf.mxu0
        %v4801 = vadd.f32 %v4256, %v4800
        %v4802 = vpop.f32.mrf.mxu0
        %v4803 = vpop.f32.mrf.mxu0
        %v4804 = vadd.f32 %v4259, %v4803
        %v4805 = vpop.f32.mrf.mxu0
        %4806 = vmatprep.mubr.bf16.mxu0 %v3658
        %4807 = vmatmul.mubr.bf16.gmra.mxu0 %v2826
        %v4808 = vpop.f32.mrf.mxu0
        %v4809 = vadd.f32 %v4264, %v4808
        %v4810 = vpop.f32.mrf.mxu0
        %v4811 = vpop.f32.mrf.mxu0
        %v4812 = vadd.f32 %v4267, %v4811
        %v4813 = vpop.f32.mrf.mxu0
        %4814 = vmatprep.mubr.bf16.mxu0 %v3659
        %4815 = vmatmul.mubr.bf16.gmra.mxu0 %v2827
        %v4816 = vpop.f32.mrf.mxu0
        %v4817 = vadd.f32 %v4272, %v4816
        %v4818 = vpop.f32.mrf.mxu0
        %v4819 = vpop.f32.mrf.mxu0
        %v4820 = vadd.f32 %v4275, %v4819
        %v4821 = vpop.f32.mrf.mxu0
        %4822 = vmatprep.mubr.bf16.mxu0 %v3660
        %4823 = vmatmul.mubr.bf16.gmra.mxu0 %v2828
        %v4824 = vpop.f32.mrf.mxu0
        %v4825 = vadd.f32 %v4280, %v4824
        %v4826 = vpop.f32.mrf.mxu0
        %v4827 = vpop.f32.mrf.mxu0
        %v4828 = vadd.f32 %v4283, %v4827
        %v4829 = vpop.f32.mrf.mxu0
        %4830 = vmatprep.mubr.bf16.mxu0 %v3661
        %4831 = vmatmul.mubr.bf16.gmra.mxu0 %v2829
        %v4832 = vpop.f32.mrf.mxu0
        %v4833 = vadd.f32 %v4288, %v4832
        %v4834 = vpop.f32.mrf.mxu0
        %v4835 = vpop.f32.mrf.mxu0
        %v4836 = vadd.f32 %v4291, %v4835
        %v4837 = vpop.f32.mrf.mxu0
        %4838 = vmatprep.mubr.bf16.mxu0 %v3662
        %4839 = vmatmul.mubr.bf16.gmra.mxu0 %v2830
        %v4840 = vpop.f32.mrf.mxu0
        %v4841 = vadd.f32 %v4296, %v4840
        %v4842 = vpop.f32.mrf.mxu0
        %v4843 = vpop.f32.mrf.mxu0
        %v4844 = vadd.f32 %v4299, %v4843
        %v4845 = vpop.f32.mrf.mxu0
        %4846 = vmatprep.mubr.bf16.mxu0 %v3663
        %4847 = vmatmul.mubr.bf16.gmra.mxu0 %v2831
        %v4848 = vpop.f32.mrf.mxu0
        %v4849 = vadd.f32 %v4304, %v4848
        %v4850 = vpop.f32.mrf.mxu0
        %v4851 = vpop.f32.mrf.mxu0
        %v4852 = vadd.f32 %v4307, %v4851
        %v4853 = vpop.f32.mrf.mxu0
        %4854 = vmatprep.mubr.bf16.mxu0 %v3664
        %4855 = vmatmul.mubr.bf16.gmra.mxu0 %v2832
        %v4856 = vpop.f32.mrf.mxu0
        %v4857 = vadd.f32 %v4312, %v4856
        %v4858 = vpop.f32.mrf.mxu0
        %v4859 = vpop.f32.mrf.mxu0
        %v4860 = vadd.f32 %v4315, %v4859
        %v4861 = vpop.f32.mrf.mxu0
        %4862 = vmatprep.mubr.bf16.mxu0 %v3665
        %4863 = vmatmul.mubr.bf16.gmra.mxu0 %v2833
        %v4864 = vpop.f32.mrf.mxu0
        %v4865 = vadd.f32 %v4320, %v4864
        %v4866 = vpop.f32.mrf.mxu0
        %v4867 = vpop.f32.mrf.mxu0
        %v4868 = vadd.f32 %v4323, %v4867
        %v4869 = vpop.f32.mrf.mxu0
        %4870 = vmatprep.mubr.bf16.mxu0 %v3666
        %4871 = vmatmul.mubr.bf16.gmra.mxu0 %v2834
        %v4872 = vpop.f32.mrf.mxu0
        %v4873 = vadd.f32 %v4328, %v4872
        %v4874 = vpop.f32.mrf.mxu0
        %v4875 = vpop.f32.mrf.mxu0
        %v4876 = vadd.f32 %v4331, %v4875
        %v4877 = vpop.f32.mrf.mxu0
        %4878 = vmatprep.mubr.bf16.mxu0 %v3667
        %4879 = vmatmul.mubr.bf16.gmra.mxu0 %v2835
        %v4880 = vpop.f32.mrf.mxu0
        %v4881 = vadd.f32 %v4336, %v4880
        %v4882 = vpop.f32.mrf.mxu0
        %v4883 = vpop.f32.mrf.mxu0
        %v4884 = vadd.f32 %v4339, %v4883
        %v4885 = vpop.f32.mrf.mxu0
        %4886 = vmatprep.mubr.bf16.mxu0 %v3668
        %4887 = vmatmul.mubr.bf16.gmra.mxu0 %v2836
        %v4888 = vpop.f32.mrf.mxu0
        %v4889 = vadd.f32 %v4344, %v4888
        %v4890 = vpop.f32.mrf.mxu0
        %v4891 = vpop.f32.mrf.mxu0
        %v4892 = vadd.f32 %v4347, %v4891
        %v4893 = vpop.f32.mrf.mxu0
        %4894 = vmatprep.mubr.bf16.mxu0 %v3669
        %4895 = vmatmul.mubr.bf16.gmra.mxu0 %v2837
        %v4896 = vpop.f32.mrf.mxu0
        %v4897 = vadd.f32 %v4352, %v4896
        %v4898 = vpop.f32.mrf.mxu0
        %v4899 = vpop.f32.mrf.mxu0
        %v4900 = vadd.f32 %v4355, %v4899
        %v4901 = vpop.f32.mrf.mxu0
        %4902 = vmatprep.mubr.bf16.mxu0 %v3670
        %4903 = vmatmul.mubr.bf16.gmra.mxu0 %v2838
        %v4904 = vpop.f32.mrf.mxu0
        %v4905 = vadd.f32 %v4360, %v4904
        %v4906 = vpop.f32.mrf.mxu0
        %v4907 = vpop.f32.mrf.mxu0
        %v4908 = vadd.f32 %v4363, %v4907
        %v4909 = vpop.f32.mrf.mxu0
        %4910 = vmatprep.mubr.bf16.mxu0 %v3671
        %4911 = vmatmul.mubr.bf16.gmra.mxu0 %v2839
        %v4912 = vpop.f32.mrf.mxu0
        %v4913 = vadd.f32 %v4368, %v4912
        %v4914 = vpop.f32.mrf.mxu0
        %v4915 = vpop.f32.mrf.mxu0
        %v4916 = vadd.f32 %v4371, %v4915
        %v4917 = vpop.f32.mrf.mxu0
        %4918 = vmatprep.mubr.bf16.mxu0 %v3672
        %4919 = vmatmul.mubr.bf16.gmra.mxu0 %v2840
        %v4920 = vpop.f32.mrf.mxu0
        %v4921 = vadd.f32 %v4376, %v4920
        %v4922 = vpop.f32.mrf.mxu0
        %v4923 = vpop.f32.mrf.mxu0
        %v4924 = vadd.f32 %v4379, %v4923
        %v4925 = vpop.f32.mrf.mxu0
        %4926 = vmatprep.mubr.bf16.mxu0 %v3673
        %4927 = vmatmul.mubr.bf16.gmra.mxu0 %v2841
        %v4928 = vpop.f32.mrf.mxu0
        %v4929 = vadd.f32 %v4384, %v4928
        %v4930 = vpop.f32.mrf.mxu0
        %v4931 = vpop.f32.mrf.mxu0
        %v4932 = vadd.f32 %v4387, %v4931
        %v4933 = vpop.f32.mrf.mxu0
        %4934 = vmatprep.mubr.bf16.mxu0 %v3674
        %4935 = vmatmul.mubr.bf16.gmra.mxu0 %v2842
        %v4936 = vpop.f32.mrf.mxu0
        %v4937 = vadd.f32 %v4392, %v4936
        %v4938 = vpop.f32.mrf.mxu0
        %v4939 = vpop.f32.mrf.mxu0
        %v4940 = vadd.f32 %v4395, %v4939
        %v4941 = vpop.f32.mrf.mxu0
        %4942 = vmatprep.mubr.bf16.mxu0 %v3675
        %4943 = vmatmul.mubr.bf16.gmra.mxu0 %v2843
        %v4944 = vpop.f32.mrf.mxu0
        %v4945 = vadd.f32 %v4400, %v4944
        %v4946 = vpop.f32.mrf.mxu0
        %v4947 = vpop.f32.mrf.mxu0
        %v4948 = vadd.f32 %v4403, %v4947
        %v4949 = vpop.f32.mrf.mxu0
        %4950 = vmatprep.mubr.bf16.mxu0 %v3676
        %4951 = vmatmul.mubr.bf16.gmra.mxu0 %v2844
        %v4952 = vpop.f32.mrf.mxu0
        %v4953 = vadd.f32 %v4408, %v4952
        %v4954 = vpop.f32.mrf.mxu0
        %v4955 = vpop.f32.mrf.mxu0
        %v4956 = vadd.f32 %v4411, %v4955
        %v4957 = vpop.f32.mrf.mxu0
        %4958 = vmatprep.mubr.bf16.mxu0 %v3677
        %4959 = vmatmul.mubr.bf16.gmra.mxu0 %v2845
        %v4960 = vpop.f32.mrf.mxu0
        %v4961 = vadd.f32 %v4416, %v4960
        %v4962 = vpop.f32.mrf.mxu0
        %v4963 = vpop.f32.mrf.mxu0
        %v4964 = vadd.f32 %v4419, %v4963
        %v4965 = vpop.f32.mrf.mxu0
        %4966 = vmatprep.mubr.bf16.mxu0 %v3678
        %4967 = vmatmul.mubr.bf16.gmra.mxu0 %v2846
        %v4968 = vpop.f32.mrf.mxu0
        %v4969 = vadd.f32 %v4424, %v4968
        %v4970 = vpop.f32.mrf.mxu0
        %v4971 = vpop.f32.mrf.mxu0
        %v4972 = vadd.f32 %v4427, %v4971
        %v4973 = vpop.f32.mrf.mxu0
        %4974 = vmatprep.mubr.bf16.mxu0 %v3679
        %4975 = vmatmul.mubr.bf16.gmra.mxu0 %v2847
        %v4976 = vpop.f32.mrf.mxu0
        %v4977 = vadd.f32 %v4432, %v4976
        %v4978 = vpop.f32.mrf.mxu0
        %v4979 = vpop.f32.mrf.mxu0
        %v4980 = vadd.f32 %v4435, %v4979
        %v4981 = vpop.f32.mrf.mxu0
        %4982 = vmatprep.mubr.bf16.mxu0 %v3680
        %4983 = vmatmul.mubr.bf16.gmra.mxu0 %v2848
        %v4984 = vpop.f32.mrf.mxu0
        %v4985 = vadd.f32 %v4440, %v4984
        %v4986 = vpop.f32.mrf.mxu0
        %v4987 = vpop.f32.mrf.mxu0
        %v4988 = vadd.f32 %v4443, %v4987
        %v4989 = vpop.f32.mrf.mxu0
        %4990 = vmatprep.mubr.bf16.mxu0 %v3681
        %4991 = vmatmul.mubr.bf16.gmra.mxu0 %v2849
        %v4992 = vpop.f32.mrf.mxu0
        %v4993 = vadd.f32 %v4448, %v4992
        %v4994 = vpop.f32.mrf.mxu0
        %v4995 = vpop.f32.mrf.mxu0
        %v4996 = vadd.f32 %v4451, %v4995
        %v4997 = vpop.f32.mrf.mxu0
        %4998 = vmatprep.mubr.bf16.mxu0 %v3682
        %4999 = vmatmul.mubr.bf16.gmra.mxu0 %v2850
        %v5000 = vpop.f32.mrf.mxu0
        %v5001 = vadd.f32 %v4456, %v5000
        %v5002 = vpop.f32.mrf.mxu0
        %v5003 = vpop.f32.mrf.mxu0
        %v5004 = vadd.f32 %v4459, %v5003
        %v5005 = vpop.f32.mrf.mxu0
        %5006 = vmatprep.mubr.bf16.mxu0 %v3683
        %5007 = vmatmul.mubr.bf16.gmra.mxu0 %v2851
        %v5008 = vpop.f32.mrf.mxu0
        %v5009 = vadd.f32 %v4464, %v5008
        %v5010 = vpop.f32.mrf.mxu0
        %v5011 = vpop.f32.mrf.mxu0
        %v5012 = vadd.f32 %v4467, %v5011
        %v5013 = vpop.f32.mrf.mxu0
        %5014 = vmatprep.mubr.bf16.mxu0 %v3684
        %5015 = vmatmul.mubr.bf16.gmra.mxu0 %v2852
        %v5016 = vpop.f32.mrf.mxu0
        %v5017 = vadd.f32 %v4472, %v5016
        %v5018 = vpop.f32.mrf.mxu0
        %v5019 = vpop.f32.mrf.mxu0
        %v5020 = vadd.f32 %v4475, %v5019
        %v5021 = vpop.f32.mrf.mxu0
        %5022 = vmatprep.mubr.bf16.mxu0 %v3685
        %5023 = vmatmul.mubr.bf16.gmra.mxu0 %v2853
        %v5024 = vpop.f32.mrf.mxu0
        %v5025 = vadd.f32 %v4480, %v5024
        %v5026 = vpop.f32.mrf.mxu0
        %v5027 = vpop.f32.mrf.mxu0
        %v5028 = vadd.f32 %v4483, %v5027
        %v5029 = vpop.f32.mrf.mxu0
        %5030 = vmatprep.mubr.bf16.mxu0 %v3686
        %5031 = vmatmul.mubr.bf16.gmra.mxu0 %v2854
        %v5032 = vpop.f32.mrf.mxu0
        %v5033 = vadd.f32 %v4488, %v5032
        %v5034 = vpop.f32.mrf.mxu0
        %v5035 = vpop.f32.mrf.mxu0
        %v5036 = vadd.f32 %v4491, %v5035
        %v5037 = vpop.f32.mrf.mxu0
        %5038 = vdwg.mxu0
        %v5039 = vmax.f32 %v4529, 0.0
        %v5040 = vmax.f32 %v4532, 0.0
        %v5041 = vmax.f32 %v4537, 0.0
        %v5042 = vmax.f32 %v4540, 0.0
        %v5043 = vmax.f32 %v4545, 0.0
        %v5044 = vmax.f32 %v4548, 0.0
        %v5045 = vmax.f32 %v4553, 0.0
        %v5046 = vmax.f32 %v4556, 0.0
        %v5047 = vmax.f32 %v4561, 0.0
        %v5048 = vmax.f32 %v4564, 0.0
        %v5049 = vmax.f32 %v4569, 0.0
        %v5050 = vmax.f32 %v4572, 0.0
        %v5051 = vmax.f32 %v4577, 0.0
        %v5052 = vmax.f32 %v4580, 0.0
        %v5053 = vmax.f32 %v4585, 0.0
        %v5054 = vmax.f32 %v4588, 0.0
        %v5055 = vmax.f32 %v4593, 0.0
        %v5056 = vmax.f32 %v4596, 0.0
        %v5057 = vmax.f32 %v4601, 0.0
        %v5058 = vmax.f32 %v4604, 0.0
        %v5059 = vmax.f32 %v4609, 0.0
        %v5060 = vmax.f32 %v4612, 0.0
        %v5061 = vmax.f32 %v4617, 0.0
        %v5062 = vmax.f32 %v4620, 0.0
        %v5063 = vmax.f32 %v4625, 0.0
        %v5064 = vmax.f32 %v4628, 0.0
        %v5065 = vmax.f32 %v4633, 0.0
        %v5066 = vmax.f32 %v4636, 0.0
        %v5067 = vmax.f32 %v4641, 0.0
        %v5068 = vmax.f32 %v4644, 0.0
        %v5069 = vmax.f32 %v4649, 0.0
        %v5070 = vmax.f32 %v4652, 0.0
        %v5071 = vmax.f32 %v4657, 0.0
        %v5072 = vmax.f32 %v4660, 0.0
        %v5073 = vmax.f32 %v4665, 0.0
        %v5074 = vmax.f32 %v4668, 0.0
        %v5075 = vmax.f32 %v4673, 0.0
        %v5076 = vmax.f32 %v4676, 0.0
        %v5077 = vmax.f32 %v4681, 0.0
        %v5078 = vmax.f32 %v4684, 0.0
        %v5079 = vmax.f32 %v4689, 0.0
        %v5080 = vmax.f32 %v4692, 0.0
        %v5081 = vmax.f32 %v4697, 0.0
        %v5082 = vmax.f32 %v4700, 0.0
        %v5083 = vmax.f32 %v4705, 0.0
        %v5084 = vmax.f32 %v4708, 0.0
        %v5085 = vmax.f32 %v4713, 0.0
        %v5086 = vmax.f32 %v4716, 0.0
        %v5087 = vmax.f32 %v4721, 0.0
        %v5088 = vmax.f32 %v4724, 0.0
        %v5089 = vmax.f32 %v4729, 0.0
        %v5090 = vmax.f32 %v4732, 0.0
        %v5091 = vmax.f32 %v4737, 0.0
        %v5092 = vmax.f32 %v4740, 0.0
        %v5093 = vmax.f32 %v4745, 0.0
        %v5094 = vmax.f32 %v4748, 0.0
        %v5095 = vmax.f32 %v4753, 0.0
        %v5096 = vmax.f32 %v4756, 0.0
        %v5097 = vmax.f32 %v4761, 0.0
        %v5098 = vmax.f32 %v4764, 0.0
        %v5099 = vmax.f32 %v4769, 0.0
        %v5100 = vmax.f32 %v4772, 0.0
        %v5101 = vmax.f32 %v4777, 0.0
        %v5102 = vmax.f32 %v4780, 0.0
        %v5103 = vmax.f32 %v4785, 0.0
        %v5104 = vmax.f32 %v4788, 0.0
        %v5105 = vmax.f32 %v4793, 0.0
        %v5106 = vmax.f32 %v4796, 0.0
        %v5107 = vmax.f32 %v4801, 0.0
        %v5108 = vmax.f32 %v4804, 0.0
        %v5109 = vmax.f32 %v4809, 0.0
        %v5110 = vmax.f32 %v4812, 0.0
        %v5111 = vmax.f32 %v4817, 0.0
        %v5112 = vmax.f32 %v4820, 0.0
        %v5113 = vmax.f32 %v4825, 0.0
        %v5114 = vmax.f32 %v4828, 0.0
        %v5115 = vmax.f32 %v4833, 0.0
        %v5116 = vmax.f32 %v4836, 0.0
        %v5117 = vmax.f32 %v4841, 0.0
        %v5118 = vmax.f32 %v4844, 0.0
        %v5119 = vmax.f32 %v4849, 0.0
        %v5120 = vmax.f32 %v4852, 0.0
        %v5121 = vmax.f32 %v4857, 0.0
        %v5122 = vmax.f32 %v4860, 0.0
        %v5123 = vmax.f32 %v4865, 0.0
        %v5124 = vmax.f32 %v4868, 0.0
        %v5125 = vmax.f32 %v4873, 0.0
        %v5126 = vmax.f32 %v4876, 0.0
        %v5127 = vmax.f32 %v4881, 0.0
        %v5128 = vmax.f32 %v4884, 0.0
        %v5129 = vmax.f32 %v4889, 0.0
        %v5130 = vmax.f32 %v4892, 0.0
        %v5131 = vmax.f32 %v4897, 0.0
        %v5132 = vmax.f32 %v4900, 0.0
        %v5133 = vmax.f32 %v4905, 0.0
        %v5134 = vmax.f32 %v4908, 0.0
        %v5135 = vmax.f32 %v4913, 0.0
        %v5136 = vmax.f32 %v4916, 0.0
        %v5137 = vmax.f32 %v4921, 0.0
        %v5138 = vmax.f32 %v4924, 0.0
        %v5139 = vmax.f32 %v4929, 0.0
        %v5140 = vmax.f32 %v4932, 0.0
        %v5141 = vmax.f32 %v4937, 0.0
        %v5142 = vmax.f32 %v4940, 0.0
        %v5143 = vmax.f32 %v4945, 0.0
        %v5144 = vmax.f32 %v4948, 0.0
        %v5145 = vmax.f32 %v4953, 0.0
        %v5146 = vmax.f32 %v4956, 0.0
        %v5147 = vmax.f32 %v4961, 0.0
        %v5148 = vmax.f32 %v4964, 0.0
        %v5149 = vmax.f32 %v4969, 0.0
        %v5150 = vmax.f32 %v4972, 0.0
        %v5151 = vmax.f32 %v4977, 0.0
        %v5152 = vmax.f32 %v4980, 0.0
        %v5153 = vmax.f32 %v4985, 0.0
        %v5154 = vmax.f32 %v4988, 0.0
        %v5155 = vmax.f32 %v4993, 0.0
        %v5156 = vmax.f32 %v4996, 0.0
        %v5157 = vmax.f32 %v5001, 0.0
        %v5158 = vmax.f32 %v5004, 0.0
        %v5159 = vmax.f32 %v5009, 0.0
        %v5160 = vmax.f32 %v5012, 0.0
        %v5161 = vmax.f32 %v5017, 0.0
        %v5162 = vmax.f32 %v5020, 0.0
        %v5163 = vmax.f32 %v5025, 0.0
        %v5164 = vmax.f32 %v5028, 0.0
        %v5165 = vmax.f32 %v5033, 0.0
        %v5166 = vmax.f32 %v5036, 0.0
        %v5167 = vpack.c.bf16 %v5040, %v5039
        %v5168 = vpack.c.bf16 %v5042, %v5041
        %v5169 = vpack.c.bf16 %v5044, %v5043
        %v5170 = vpack.c.bf16 %v5046, %v5045
        %v5171 = vpack.c.bf16 %v5048, %v5047
        %v5172 = vpack.c.bf16 %v5050, %v5049
        %v5173 = vpack.c.bf16 %v5052, %v5051
        %v5174 = vpack.c.bf16 %v5054, %v5053
        %v5175 = vpack.c.bf16 %v5056, %v5055
        %v5176 = vpack.c.bf16 %v5058, %v5057
        %v5177 = vpack.c.bf16 %v5060, %v5059
        %v5178 = vpack.c.bf16 %v5062, %v5061
        %v5179 = vpack.c.bf16 %v5064, %v5063
        %v5180 = vpack.c.bf16 %v5066, %v5065
        %v5181 = vpack.c.bf16 %v5068, %v5067
        %v5182 = vpack.c.bf16 %v5070, %v5069
        %v5183 = vpack.c.bf16 %v5072, %v5071
        %v5184 = vpack.c.bf16 %v5074, %v5073
        %v5185 = vpack.c.bf16 %v5076, %v5075
        %v5186 = vpack.c.bf16 %v5078, %v5077
        %v5187 = vpack.c.bf16 %v5080, %v5079
        %v5188 = vpack.c.bf16 %v5082, %v5081
        %v5189 = vpack.c.bf16 %v5084, %v5083
        %v5190 = vpack.c.bf16 %v5086, %v5085
        %v5191 = vpack.c.bf16 %v5088, %v5087
        %v5192 = vpack.c.bf16 %v5090, %v5089
        %v5193 = vpack.c.bf16 %v5092, %v5091
        %v5194 = vpack.c.bf16 %v5094, %v5093
        %v5195 = vpack.c.bf16 %v5096, %v5095
        %v5196 = vpack.c.bf16 %v5098, %v5097
        %v5197 = vpack.c.bf16 %v5100, %v5099
        %v5198 = vpack.c.bf16 %v5102, %v5101
        %v5199 = vpack.c.bf16 %v5104, %v5103
        %v5200 = vpack.c.bf16 %v5106, %v5105
        %v5201 = vpack.c.bf16 %v5108, %v5107
        %v5202 = vpack.c.bf16 %v5110, %v5109
        %v5203 = vpack.c.bf16 %v5112, %v5111
        %v5204 = vpack.c.bf16 %v5114, %v5113
        %v5205 = vpack.c.bf16 %v5116, %v5115
        %v5206 = vpack.c.bf16 %v5118, %v5117
        %v5207 = vpack.c.bf16 %v5120, %v5119
        %v5208 = vpack.c.bf16 %v5122, %v5121
        %v5209 = vpack.c.bf16 %v5124, %v5123
        %v5210 = vpack.c.bf16 %v5126, %v5125
        %v5211 = vpack.c.bf16 %v5128, %v5127
        %v5212 = vpack.c.bf16 %v5130, %v5129
        %v5213 = vpack.c.bf16 %v5132, %v5131
        %v5214 = vpack.c.bf16 %v5134, %v5133
        %v5215 = vpack.c.bf16 %v5136, %v5135
        %v5216 = vpack.c.bf16 %v5138, %v5137
        %v5217 = vpack.c.bf16 %v5140, %v5139
        %v5218 = vpack.c.bf16 %v5142, %v5141
        %v5219 = vpack.c.bf16 %v5144, %v5143
        %v5220 = vpack.c.bf16 %v5146, %v5145
        %v5221 = vpack.c.bf16 %v5148, %v5147
        %v5222 = vpack.c.bf16 %v5150, %v5149
        %v5223 = vpack.c.bf16 %v5152, %v5151
        %v5224 = vpack.c.bf16 %v5154, %v5153
        %v5225 = vpack.c.bf16 %v5156, %v5155
        %v5226 = vpack.c.bf16 %v5158, %v5157
        %v5227 = vpack.c.bf16 %v5160, %v5159
        %v5228 = vpack.c.bf16 %v5162, %v5161
        %v5229 = vpack.c.bf16 %v5164, %v5163
        %v5230 = vpack.c.bf16 %v5166, %v5165
        %v5231 = vld [vmem:[%s3] sm:$0xf]
        %v5232 = vld [vmem:[%s3 + $0x4] sm:$0xf]
        %v5233 = vld [vmem:[%s3 + $0x8] sm:$0xf]
        %v5234 = vld [vmem:[%s3 + $0xc] sm:$0xf]
        %v5235 = vld [vmem:[%s3 + $0x10] sm:$0xf]
        %v5236 = vld [vmem:[%s3 + $0x14] sm:$0xf]
        %v5237 = vld [vmem:[%s3 + $0x18] sm:$0xf]
        %v5238 = vld [vmem:[%s3 + $0x1c] sm:$0xf]
        %v5239 = vld [vmem:[%s3 + $0x20] sm:$0xf]
        %v5240 = vld [vmem:[%s3 + $0x24] sm:$0xf]
        %v5241 = vld [vmem:[%s3 + $0x28] sm:$0xf]
        %v5242 = vld [vmem:[%s3 + $0x2c] sm:$0xf]
        %v5243 = vld [vmem:[%s3 + $0x30] sm:$0xf]
        %v5244 = vld [vmem:[%s3 + $0x34] sm:$0xf]
        %v5245 = vld [vmem:[%s3 + $0x38] sm:$0xf]
        %v5246 = vld [vmem:[%s3 + $0x3c] sm:$0xf]
        %v5248 = vlaneseq
        %v5249 = vshrl.u32 %v5248, 7
        %v5250 = vsub.s32 0, %v5249
        %v5251 = vrot.slane %v356, %v5250
        %v5269 = vunpack.c.l.b16 %v5231
        %v5270 = vunpack.c.l.b16 %v5232
        %v5271 = vunpack.c.l.b16 %v5233
        %v5272 = vunpack.c.l.b16 %v5234
        %v5273 = vunpack.c.l.b16 %v5235
        %v5274 = vunpack.c.l.b16 %v5236
        %v5275 = vunpack.c.l.b16 %v5237
        %v5276 = vunpack.c.l.b16 %v5238
        %v5277 = vunpack.c.l.b16 %v5239
        %v5278 = vunpack.c.l.b16 %v5240
        %v5279 = vunpack.c.l.b16 %v5241
        %v5280 = vunpack.c.l.b16 %v5242
        %v5281 = vunpack.c.l.b16 %v5243
        %v5282 = vunpack.c.l.b16 %v5244
        %v5283 = vunpack.c.l.b16 %v5245
        %v5284 = vunpack.c.l.b16 %v5246
        %v5285 = vpack.c.b16 %v5270, %v5269
        %v5286 = vpack.c.b16 %v5272, %v5271
        %v5287 = vpack.c.b16 %v5274, %v5273
        %v5288 = vpack.c.b16 %v5276, %v5275
        %v5289 = vpack.c.b16 %v5278, %v5277
        %v5290 = vpack.c.b16 %v5280, %v5279
        %v5291 = vpack.c.b16 %v5282, %v5281
        %v5292 = vpack.c.b16 %v5284, %v5283
        %5301 = vmatprep.subr.bf16.mxu0 0
        %5302 = vmatpush1.bf16.msra.mxu0 %v5292
        %5303 = vmatprep.subr.bf16.mxu0 0
        %5304 = vmatpush1.bf16.msra.mxu0 %v5291
        %5305 = vmatprep.subr.bf16.mxu0 0
        %5306 = vmatpush1.bf16.msra.mxu0 %v5290
        %5307 = vmatprep.subr.bf16.mxu0 0
        %5308 = vmatpush1.bf16.msra.mxu0 %v5289
        %5309 = vmatprep.subr.bf16.mxu0 0
        %5310 = vmatpush1.bf16.msra.mxu0 %v5288
        %5311 = vmatprep.subr.bf16.mxu0 0
        %5312 = vmatpush1.bf16.msra.mxu0 %v5287
        %5313 = vmatprep.subr.bf16.mxu0 0
        %5314 = vmatpush1.bf16.msra.mxu0 %v5286
        %5315 = vmatprep.subr.bf16.mxu0 0
        %5316 = vmatpush1.bf16.msra.mxu0 %v5285
        %5317 = vmatprep.subr.bf16.mxu0 0
        %5318 = vmatpush2.bf16.msra.mxu0 0
        %5319 = vmatprep.subr.bf16.mxu0 0
        %5320 = vmatpush2.bf16.msra.mxu0 0
        %5321 = vmatprep.subr.bf16.mxu0 0
        %5322 = vmatpush2.bf16.msra.mxu0 0
        %5323 = vmatprep.subr.bf16.mxu0 0
        %5324 = vmatpush2.bf16.msra.mxu0 0
        %5325 = vmatprep.subr.bf16.mxu0 0
        %5326 = vmatpush2.bf16.msra.mxu0 0
        %5327 = vmatprep.subr.bf16.mxu0 0
        %5328 = vmatpush2.bf16.msra.mxu0 0
        %5329 = vmatprep.subr.bf16.mxu0 0
        %5330 = vmatpush2.bf16.msra.mxu0 0
        %5331 = vmatprep.subr.bf16.mxu0 0
        %5332 = vmatpush2.bf16.msra.mxu0 0
        %5333 = vmatprep.mubr.bf16.mxu0 0
        %5334 = vmatmul.mubr.bf16.gmra.mxu0 %v5167
        %v5335 = vpop.f32.mrf.mxu0
        %v5336 = vadd.f32 %v5251, %v5335
        %v5337 = vpop.f32.mrf.mxu0
        %v5338 = vpop.f32.mrf.mxu0
        %v5339 = vadd.f32 %v5251, %v5338
        %v5340 = vpop.f32.mrf.mxu0
        %5341 = vmatprep.mubr.bf16.mxu0 0
        %5342 = vmatmul.mubr.bf16.gmra.mxu0 %v5168
        %v5343 = vpop.f32.mrf.mxu0
        %v5344 = vadd.f32 %v5251, %v5343
        %v5345 = vpop.f32.mrf.mxu0
        %v5346 = vpop.f32.mrf.mxu0
        %v5347 = vadd.f32 %v5251, %v5346
        %v5348 = vpop.f32.mrf.mxu0
        %5349 = vmatprep.mubr.bf16.mxu0 0
        %5350 = vmatmul.mubr.bf16.gmra.mxu0 %v5169
        %v5351 = vpop.f32.mrf.mxu0
        %v5352 = vadd.f32 %v5251, %v5351
        %v5353 = vpop.f32.mrf.mxu0
        %v5354 = vpop.f32.mrf.mxu0
        %v5355 = vadd.f32 %v5251, %v5354
        %v5356 = vpop.f32.mrf.mxu0
        %5357 = vmatprep.mubr.bf16.mxu0 0
        %5358 = vmatmul.mubr.bf16.gmra.mxu0 %v5170
        %v5359 = vpop.f32.mrf.mxu0
        %v5360 = vadd.f32 %v5251, %v5359
        %v5361 = vpop.f32.mrf.mxu0
        %v5362 = vpop.f32.mrf.mxu0
        %v5363 = vadd.f32 %v5251, %v5362
        %v5364 = vpop.f32.mrf.mxu0
        %5365 = vmatprep.mubr.bf16.mxu0 0
        %5366 = vmatmul.mubr.bf16.gmra.mxu0 %v5171
        %v5367 = vpop.f32.mrf.mxu0
        %v5368 = vadd.f32 %v5251, %v5367
        %v5369 = vpop.f32.mrf.mxu0
        %v5370 = vpop.f32.mrf.mxu0
        %v5371 = vadd.f32 %v5251, %v5370
        %v5372 = vpop.f32.mrf.mxu0
        %5373 = vmatprep.mubr.bf16.mxu0 0
        %5374 = vmatmul.mubr.bf16.gmra.mxu0 %v5172
        %v5375 = vpop.f32.mrf.mxu0
        %v5376 = vadd.f32 %v5251, %v5375
        %v5377 = vpop.f32.mrf.mxu0
        %v5378 = vpop.f32.mrf.mxu0
        %v5379 = vadd.f32 %v5251, %v5378
        %v5380 = vpop.f32.mrf.mxu0
        %5381 = vmatprep.mubr.bf16.mxu0 0
        %5382 = vmatmul.mubr.bf16.gmra.mxu0 %v5173
        %v5383 = vpop.f32.mrf.mxu0
        %v5384 = vadd.f32 %v5251, %v5383
        %v5385 = vpop.f32.mrf.mxu0
        %v5386 = vpop.f32.mrf.mxu0
        %v5387 = vadd.f32 %v5251, %v5386
        %v5388 = vpop.f32.mrf.mxu0
        %5389 = vmatprep.mubr.bf16.mxu0 0
        %5390 = vmatmul.mubr.bf16.gmra.mxu0 %v5174
        %v5391 = vpop.f32.mrf.mxu0
        %v5392 = vadd.f32 %v5251, %v5391
        %v5393 = vpop.f32.mrf.mxu0
        %v5394 = vpop.f32.mrf.mxu0
        %v5395 = vadd.f32 %v5251, %v5394
        %v5396 = vpop.f32.mrf.mxu0
        %5397 = vmatprep.mubr.bf16.mxu0 0
        %5398 = vmatmul.mubr.bf16.gmra.mxu0 %v5175
        %v5399 = vpop.f32.mrf.mxu0
        %v5400 = vadd.f32 %v5251, %v5399
        %v5401 = vpop.f32.mrf.mxu0
        %v5402 = vpop.f32.mrf.mxu0
        %v5403 = vadd.f32 %v5251, %v5402
        %v5404 = vpop.f32.mrf.mxu0
        %5405 = vmatprep.mubr.bf16.mxu0 0
        %5406 = vmatmul.mubr.bf16.gmra.mxu0 %v5176
        %v5407 = vpop.f32.mrf.mxu0
        %v5408 = vadd.f32 %v5251, %v5407
        %v5409 = vpop.f32.mrf.mxu0
        %v5410 = vpop.f32.mrf.mxu0
        %v5411 = vadd.f32 %v5251, %v5410
        %v5412 = vpop.f32.mrf.mxu0
        %5413 = vmatprep.mubr.bf16.mxu0 0
        %5414 = vmatmul.mubr.bf16.gmra.mxu0 %v5177
        %v5415 = vpop.f32.mrf.mxu0
        %v5416 = vadd.f32 %v5251, %v5415
        %v5417 = vpop.f32.mrf.mxu0
        %v5418 = vpop.f32.mrf.mxu0
        %v5419 = vadd.f32 %v5251, %v5418
        %v5420 = vpop.f32.mrf.mxu0
        %5421 = vmatprep.mubr.bf16.mxu0 0
        %5422 = vmatmul.mubr.bf16.gmra.mxu0 %v5178
        %v5423 = vpop.f32.mrf.mxu0
        %v5424 = vadd.f32 %v5251, %v5423
        %v5425 = vpop.f32.mrf.mxu0
        %v5426 = vpop.f32.mrf.mxu0
        %v5427 = vadd.f32 %v5251, %v5426
        %v5428 = vpop.f32.mrf.mxu0
        %5429 = vmatprep.mubr.bf16.mxu0 0
        %5430 = vmatmul.mubr.bf16.gmra.mxu0 %v5179
        %v5431 = vpop.f32.mrf.mxu0
        %v5432 = vadd.f32 %v5251, %v5431
        %v5433 = vpop.f32.mrf.mxu0
        %v5434 = vpop.f32.mrf.mxu0
        %v5435 = vadd.f32 %v5251, %v5434
        %v5436 = vpop.f32.mrf.mxu0
        %5437 = vmatprep.mubr.bf16.mxu0 0
        %5438 = vmatmul.mubr.bf16.gmra.mxu0 %v5180
        %v5439 = vpop.f32.mrf.mxu0
        %v5440 = vadd.f32 %v5251, %v5439
        %v5441 = vpop.f32.mrf.mxu0
        %v5442 = vpop.f32.mrf.mxu0
        %v5443 = vadd.f32 %v5251, %v5442
        %v5444 = vpop.f32.mrf.mxu0
        %5445 = vmatprep.mubr.bf16.mxu0 0
        %5446 = vmatmul.mubr.bf16.gmra.mxu0 %v5181
        %v5447 = vpop.f32.mrf.mxu0
        %v5448 = vadd.f32 %v5251, %v5447
        %v5449 = vpop.f32.mrf.mxu0
        %v5450 = vpop.f32.mrf.mxu0
        %v5451 = vadd.f32 %v5251, %v5450
        %v5452 = vpop.f32.mrf.mxu0
        %5453 = vmatprep.mubr.bf16.mxu0 0
        %5454 = vmatmul.mubr.bf16.gmra.mxu0 %v5182
        %v5455 = vpop.f32.mrf.mxu0
        %v5456 = vadd.f32 %v5251, %v5455
        %v5457 = vpop.f32.mrf.mxu0
        %v5458 = vpop.f32.mrf.mxu0
        %v5459 = vadd.f32 %v5251, %v5458
        %v5460 = vpop.f32.mrf.mxu0
        %5461 = vmatprep.mubr.bf16.mxu0 0
        %5462 = vmatmul.mubr.bf16.gmra.mxu0 %v5183
        %v5463 = vpop.f32.mrf.mxu0
        %v5464 = vadd.f32 %v5251, %v5463
        %v5465 = vpop.f32.mrf.mxu0
        %v5466 = vpop.f32.mrf.mxu0
        %v5467 = vadd.f32 %v5251, %v5466
        %v5468 = vpop.f32.mrf.mxu0
        %5469 = vmatprep.mubr.bf16.mxu0 0
        %5470 = vmatmul.mubr.bf16.gmra.mxu0 %v5184
        %v5471 = vpop.f32.mrf.mxu0
        %v5472 = vadd.f32 %v5251, %v5471
        %v5473 = vpop.f32.mrf.mxu0
        %v5474 = vpop.f32.mrf.mxu0
        %v5475 = vadd.f32 %v5251, %v5474
        %v5476 = vpop.f32.mrf.mxu0
        %5477 = vmatprep.mubr.bf16.mxu0 0
        %5478 = vmatmul.mubr.bf16.gmra.mxu0 %v5185
        %v5479 = vpop.f32.mrf.mxu0
        %v5480 = vadd.f32 %v5251, %v5479
        %v5481 = vpop.f32.mrf.mxu0
        %v5482 = vpop.f32.mrf.mxu0
        %v5483 = vadd.f32 %v5251, %v5482
        %v5484 = vpop.f32.mrf.mxu0
        %5485 = vmatprep.mubr.bf16.mxu0 0
        %5486 = vmatmul.mubr.bf16.gmra.mxu0 %v5186
        %v5487 = vpop.f32.mrf.mxu0
        %v5488 = vadd.f32 %v5251, %v5487
        %v5489 = vpop.f32.mrf.mxu0
        %v5490 = vpop.f32.mrf.mxu0
        %v5491 = vadd.f32 %v5251, %v5490
        %v5492 = vpop.f32.mrf.mxu0
        %5493 = vmatprep.mubr.bf16.mxu0 0
        %5494 = vmatmul.mubr.bf16.gmra.mxu0 %v5187
        %v5495 = vpop.f32.mrf.mxu0
        %v5496 = vadd.f32 %v5251, %v5495
        %v5497 = vpop.f32.mrf.mxu0
        %v5498 = vpop.f32.mrf.mxu0
        %v5499 = vadd.f32 %v5251, %v5498
        %v5500 = vpop.f32.mrf.mxu0
        %5501 = vmatprep.mubr.bf16.mxu0 0
        %5502 = vmatmul.mubr.bf16.gmra.mxu0 %v5188
        %v5503 = vpop.f32.mrf.mxu0
        %v5504 = vadd.f32 %v5251, %v5503
        %v5505 = vpop.f32.mrf.mxu0
        %v5506 = vpop.f32.mrf.mxu0
        %v5507 = vadd.f32 %v5251, %v5506
        %v5508 = vpop.f32.mrf.mxu0
        %5509 = vmatprep.mubr.bf16.mxu0 0
        %5510 = vmatmul.mubr.bf16.gmra.mxu0 %v5189
        %v5511 = vpop.f32.mrf.mxu0
        %v5512 = vadd.f32 %v5251, %v5511
        %v5513 = vpop.f32.mrf.mxu0
        %v5514 = vpop.f32.mrf.mxu0
        %v5515 = vadd.f32 %v5251, %v5514
        %v5516 = vpop.f32.mrf.mxu0
        %5517 = vmatprep.mubr.bf16.mxu0 0
        %5518 = vmatmul.mubr.bf16.gmra.mxu0 %v5190
        %v5519 = vpop.f32.mrf.mxu0
        %v5520 = vadd.f32 %v5251, %v5519
        %v5521 = vpop.f32.mrf.mxu0
        %v5522 = vpop.f32.mrf.mxu0
        %v5523 = vadd.f32 %v5251, %v5522
        %v5524 = vpop.f32.mrf.mxu0
        %5525 = vmatprep.mubr.bf16.mxu0 0
        %5526 = vmatmul.mubr.bf16.gmra.mxu0 %v5191
        %v5527 = vpop.f32.mrf.mxu0
        %v5528 = vadd.f32 %v5251, %v5527
        %v5529 = vpop.f32.mrf.mxu0
        %v5530 = vpop.f32.mrf.mxu0
        %v5531 = vadd.f32 %v5251, %v5530
        %v5532 = vpop.f32.mrf.mxu0
        %5533 = vmatprep.mubr.bf16.mxu0 0
        %5534 = vmatmul.mubr.bf16.gmra.mxu0 %v5192
        %v5535 = vpop.f32.mrf.mxu0
        %v5536 = vadd.f32 %v5251, %v5535
        %v5537 = vpop.f32.mrf.mxu0
        %v5538 = vpop.f32.mrf.mxu0
        %v5539 = vadd.f32 %v5251, %v5538
        %v5540 = vpop.f32.mrf.mxu0
        %5541 = vmatprep.mubr.bf16.mxu0 0
        %5542 = vmatmul.mubr.bf16.gmra.mxu0 %v5193
        %v5543 = vpop.f32.mrf.mxu0
        %v5544 = vadd.f32 %v5251, %v5543
        %v5545 = vpop.f32.mrf.mxu0
        %v5546 = vpop.f32.mrf.mxu0
        %v5547 = vadd.f32 %v5251, %v5546
        %v5548 = vpop.f32.mrf.mxu0
        %5549 = vmatprep.mubr.bf16.mxu0 0
        %5550 = vmatmul.mubr.bf16.gmra.mxu0 %v5194
        %v5551 = vpop.f32.mrf.mxu0
        %v5552 = vadd.f32 %v5251, %v5551
        %v5553 = vpop.f32.mrf.mxu0
        %v5554 = vpop.f32.mrf.mxu0
        %v5555 = vadd.f32 %v5251, %v5554
        %v5556 = vpop.f32.mrf.mxu0
        %5557 = vmatprep.mubr.bf16.mxu0 0
        %5558 = vmatmul.mubr.bf16.gmra.mxu0 %v5195
        %v5559 = vpop.f32.mrf.mxu0
        %v5560 = vadd.f32 %v5251, %v5559
        %v5561 = vpop.f32.mrf.mxu0
        %v5562 = vpop.f32.mrf.mxu0
        %v5563 = vadd.f32 %v5251, %v5562
        %v5564 = vpop.f32.mrf.mxu0
        %5565 = vmatprep.mubr.bf16.mxu0 0
        %5566 = vmatmul.mubr.bf16.gmra.mxu0 %v5196
        %v5567 = vpop.f32.mrf.mxu0
        %v5568 = vadd.f32 %v5251, %v5567
        %v5569 = vpop.f32.mrf.mxu0
        %v5570 = vpop.f32.mrf.mxu0
        %v5571 = vadd.f32 %v5251, %v5570
        %v5572 = vpop.f32.mrf.mxu0
        %5573 = vmatprep.mubr.bf16.mxu0 0
        %5574 = vmatmul.mubr.bf16.gmra.mxu0 %v5197
        %v5575 = vpop.f32.mrf.mxu0
        %v5576 = vadd.f32 %v5251, %v5575
        %v5577 = vpop.f32.mrf.mxu0
        %v5578 = vpop.f32.mrf.mxu0
        %v5579 = vadd.f32 %v5251, %v5578
        %v5580 = vpop.f32.mrf.mxu0
        %5581 = vmatprep.mubr.bf16.mxu0 0
        %5582 = vmatmul.mubr.bf16.gmra.mxu0 %v5198
        %v5583 = vpop.f32.mrf.mxu0
        %v5584 = vadd.f32 %v5251, %v5583
        %v5585 = vpop.f32.mrf.mxu0
        %v5586 = vpop.f32.mrf.mxu0
        %v5587 = vadd.f32 %v5251, %v5586
        %v5588 = vpop.f32.mrf.mxu0
        %5589 = vmatprep.mubr.bf16.mxu0 0
        %5590 = vmatmul.mubr.bf16.gmra.mxu0 %v5199
        %v5591 = vpop.f32.mrf.mxu0
        %v5592 = vadd.f32 %v5251, %v5591
        %v5593 = vpop.f32.mrf.mxu0
        %v5594 = vpop.f32.mrf.mxu0
        %v5595 = vadd.f32 %v5251, %v5594
        %v5596 = vpop.f32.mrf.mxu0
        %5597 = vmatprep.mubr.bf16.mxu0 0
        %5598 = vmatmul.mubr.bf16.gmra.mxu0 %v5200
        %v5599 = vpop.f32.mrf.mxu0
        %v5600 = vadd.f32 %v5251, %v5599
        %v5601 = vpop.f32.mrf.mxu0
        %v5602 = vpop.f32.mrf.mxu0
        %v5603 = vadd.f32 %v5251, %v5602
        %v5604 = vpop.f32.mrf.mxu0
        %5605 = vmatprep.mubr.bf16.mxu0 0
        %5606 = vmatmul.mubr.bf16.gmra.mxu0 %v5201
        %v5607 = vpop.f32.mrf.mxu0
        %v5608 = vadd.f32 %v5251, %v5607
        %v5609 = vpop.f32.mrf.mxu0
        %v5610 = vpop.f32.mrf.mxu0
        %v5611 = vadd.f32 %v5251, %v5610
        %v5612 = vpop.f32.mrf.mxu0
        %5613 = vmatprep.mubr.bf16.mxu0 0
        %5614 = vmatmul.mubr.bf16.gmra.mxu0 %v5202
        %v5615 = vpop.f32.mrf.mxu0
        %v5616 = vadd.f32 %v5251, %v5615
        %v5617 = vpop.f32.mrf.mxu0
        %v5618 = vpop.f32.mrf.mxu0
        %v5619 = vadd.f32 %v5251, %v5618
        %v5620 = vpop.f32.mrf.mxu0
        %5621 = vmatprep.mubr.bf16.mxu0 0
        %5622 = vmatmul.mubr.bf16.gmra.mxu0 %v5203
        %v5623 = vpop.f32.mrf.mxu0
        %v5624 = vadd.f32 %v5251, %v5623
        %v5625 = vpop.f32.mrf.mxu0
        %v5626 = vpop.f32.mrf.mxu0
        %v5627 = vadd.f32 %v5251, %v5626
        %v5628 = vpop.f32.mrf.mxu0
        %5629 = vmatprep.mubr.bf16.mxu0 0
        %5630 = vmatmul.mubr.bf16.gmra.mxu0 %v5204
        %v5631 = vpop.f32.mrf.mxu0
        %v5632 = vadd.f32 %v5251, %v5631
        %v5633 = vpop.f32.mrf.mxu0
        %v5634 = vpop.f32.mrf.mxu0
        %v5635 = vadd.f32 %v5251, %v5634
        %v5636 = vpop.f32.mrf.mxu0
        %5637 = vmatprep.mubr.bf16.mxu0 0
        %5638 = vmatmul.mubr.bf16.gmra.mxu0 %v5205
        %v5639 = vpop.f32.mrf.mxu0
        %v5640 = vadd.f32 %v5251, %v5639
        %v5641 = vpop.f32.mrf.mxu0
        %v5642 = vpop.f32.mrf.mxu0
        %v5643 = vadd.f32 %v5251, %v5642
        %v5644 = vpop.f32.mrf.mxu0
        %5645 = vmatprep.mubr.bf16.mxu0 0
        %5646 = vmatmul.mubr.bf16.gmra.mxu0 %v5206
        %v5647 = vpop.f32.mrf.mxu0
        %v5648 = vadd.f32 %v5251, %v5647
        %v5649 = vpop.f32.mrf.mxu0
        %v5650 = vpop.f32.mrf.mxu0
        %v5651 = vadd.f32 %v5251, %v5650
        %v5652 = vpop.f32.mrf.mxu0
        %5653 = vmatprep.mubr.bf16.mxu0 0
        %5654 = vmatmul.mubr.bf16.gmra.mxu0 %v5207
        %v5655 = vpop.f32.mrf.mxu0
        %v5656 = vadd.f32 %v5251, %v5655
        %v5657 = vpop.f32.mrf.mxu0
        %v5658 = vpop.f32.mrf.mxu0
        %v5659 = vadd.f32 %v5251, %v5658
        %v5660 = vpop.f32.mrf.mxu0
        %5661 = vmatprep.mubr.bf16.mxu0 0
        %5662 = vmatmul.mubr.bf16.gmra.mxu0 %v5208
        %v5663 = vpop.f32.mrf.mxu0
        %v5664 = vadd.f32 %v5251, %v5663
        %v5665 = vpop.f32.mrf.mxu0
        %v5666 = vpop.f32.mrf.mxu0
        %v5667 = vadd.f32 %v5251, %v5666
        %v5668 = vpop.f32.mrf.mxu0
        %5669 = vmatprep.mubr.bf16.mxu0 0
        %5670 = vmatmul.mubr.bf16.gmra.mxu0 %v5209
        %v5671 = vpop.f32.mrf.mxu0
        %v5672 = vadd.f32 %v5251, %v5671
        %v5673 = vpop.f32.mrf.mxu0
        %v5674 = vpop.f32.mrf.mxu0
        %v5675 = vadd.f32 %v5251, %v5674
        %v5676 = vpop.f32.mrf.mxu0
        %5677 = vmatprep.mubr.bf16.mxu0 0
        %5678 = vmatmul.mubr.bf16.gmra.mxu0 %v5210
        %v5679 = vpop.f32.mrf.mxu0
        %v5680 = vadd.f32 %v5251, %v5679
        %v5681 = vpop.f32.mrf.mxu0
        %v5682 = vpop.f32.mrf.mxu0
        %v5683 = vadd.f32 %v5251, %v5682
        %v5684 = vpop.f32.mrf.mxu0
        %5685 = vmatprep.mubr.bf16.mxu0 0
        %5686 = vmatmul.mubr.bf16.gmra.mxu0 %v5211
        %v5687 = vpop.f32.mrf.mxu0
        %v5688 = vadd.f32 %v5251, %v5687
        %v5689 = vpop.f32.mrf.mxu0
        %v5690 = vpop.f32.mrf.mxu0
        %v5691 = vadd.f32 %v5251, %v5690
        %v5692 = vpop.f32.mrf.mxu0
        %5693 = vmatprep.mubr.bf16.mxu0 0
        %5694 = vmatmul.mubr.bf16.gmra.mxu0 %v5212
        %v5695 = vpop.f32.mrf.mxu0
        %v5696 = vadd.f32 %v5251, %v5695
        %v5697 = vpop.f32.mrf.mxu0
        %v5698 = vpop.f32.mrf.mxu0
        %v5699 = vadd.f32 %v5251, %v5698
        %v5700 = vpop.f32.mrf.mxu0
        %5701 = vmatprep.mubr.bf16.mxu0 0
        %5702 = vmatmul.mubr.bf16.gmra.mxu0 %v5213
        %v5703 = vpop.f32.mrf.mxu0
        %v5704 = vadd.f32 %v5251, %v5703
        %v5705 = vpop.f32.mrf.mxu0
        %v5706 = vpop.f32.mrf.mxu0
        %v5707 = vadd.f32 %v5251, %v5706
        %v5708 = vpop.f32.mrf.mxu0
        %5709 = vmatprep.mubr.bf16.mxu0 0
        %5710 = vmatmul.mubr.bf16.gmra.mxu0 %v5214
        %v5711 = vpop.f32.mrf.mxu0
        %v5712 = vadd.f32 %v5251, %v5711
        %v5713 = vpop.f32.mrf.mxu0
        %v5714 = vpop.f32.mrf.mxu0
        %v5715 = vadd.f32 %v5251, %v5714
        %v5716 = vpop.f32.mrf.mxu0
        %5717 = vmatprep.mubr.bf16.mxu0 0
        %5718 = vmatmul.mubr.bf16.gmra.mxu0 %v5215
        %v5719 = vpop.f32.mrf.mxu0
        %v5720 = vadd.f32 %v5251, %v5719
        %v5721 = vpop.f32.mrf.mxu0
        %v5722 = vpop.f32.mrf.mxu0
        %v5723 = vadd.f32 %v5251, %v5722
        %v5724 = vpop.f32.mrf.mxu0
        %5725 = vmatprep.mubr.bf16.mxu0 0
        %5726 = vmatmul.mubr.bf16.gmra.mxu0 %v5216
        %v5727 = vpop.f32.mrf.mxu0
        %v5728 = vadd.f32 %v5251, %v5727
        %v5729 = vpop.f32.mrf.mxu0
        %v5730 = vpop.f32.mrf.mxu0
        %v5731 = vadd.f32 %v5251, %v5730
        %v5732 = vpop.f32.mrf.mxu0
        %5733 = vmatprep.mubr.bf16.mxu0 0
        %5734 = vmatmul.mubr.bf16.gmra.mxu0 %v5217
        %v5735 = vpop.f32.mrf.mxu0
        %v5736 = vadd.f32 %v5251, %v5735
        %v5737 = vpop.f32.mrf.mxu0
        %v5738 = vpop.f32.mrf.mxu0
        %v5739 = vadd.f32 %v5251, %v5738
        %v5740 = vpop.f32.mrf.mxu0
        %5741 = vmatprep.mubr.bf16.mxu0 0
        %5742 = vmatmul.mubr.bf16.gmra.mxu0 %v5218
        %v5743 = vpop.f32.mrf.mxu0
        %v5744 = vadd.f32 %v5251, %v5743
        %v5745 = vpop.f32.mrf.mxu0
        %v5746 = vpop.f32.mrf.mxu0
        %v5747 = vadd.f32 %v5251, %v5746
        %v5748 = vpop.f32.mrf.mxu0
        %5749 = vmatprep.mubr.bf16.mxu0 0
        %5750 = vmatmul.mubr.bf16.gmra.mxu0 %v5219
        %v5751 = vpop.f32.mrf.mxu0
        %v5752 = vadd.f32 %v5251, %v5751
        %v5753 = vpop.f32.mrf.mxu0
        %v5754 = vpop.f32.mrf.mxu0
        %v5755 = vadd.f32 %v5251, %v5754
        %v5756 = vpop.f32.mrf.mxu0
        %5757 = vmatprep.mubr.bf16.mxu0 0
        %5758 = vmatmul.mubr.bf16.gmra.mxu0 %v5220
        %v5759 = vpop.f32.mrf.mxu0
        %v5760 = vadd.f32 %v5251, %v5759
        %v5761 = vpop.f32.mrf.mxu0
        %v5762 = vpop.f32.mrf.mxu0
        %v5763 = vadd.f32 %v5251, %v5762
        %v5764 = vpop.f32.mrf.mxu0
        %5765 = vmatprep.mubr.bf16.mxu0 0
        %5766 = vmatmul.mubr.bf16.gmra.mxu0 %v5221
        %v5767 = vpop.f32.mrf.mxu0
        %v5768 = vadd.f32 %v5251, %v5767
        %v5769 = vpop.f32.mrf.mxu0
        %v5770 = vpop.f32.mrf.mxu0
        %v5771 = vadd.f32 %v5251, %v5770
        %v5772 = vpop.f32.mrf.mxu0
        %5773 = vmatprep.mubr.bf16.mxu0 0
        %5774 = vmatmul.mubr.bf16.gmra.mxu0 %v5222
        %v5775 = vpop.f32.mrf.mxu0
        %v5776 = vadd.f32 %v5251, %v5775
        %v5777 = vpop.f32.mrf.mxu0
        %v5778 = vpop.f32.mrf.mxu0
        %v5779 = vadd.f32 %v5251, %v5778
        %v5780 = vpop.f32.mrf.mxu0
        %5781 = vmatprep.mubr.bf16.mxu0 0
        %5782 = vmatmul.mubr.bf16.gmra.mxu0 %v5223
        %v5783 = vpop.f32.mrf.mxu0
        %v5784 = vadd.f32 %v5251, %v5783
        %v5785 = vpop.f32.mrf.mxu0
        %v5786 = vpop.f32.mrf.mxu0
        %v5787 = vadd.f32 %v5251, %v5786
        %v5788 = vpop.f32.mrf.mxu0
        %5789 = vmatprep.mubr.bf16.mxu0 0
        %5790 = vmatmul.mubr.bf16.gmra.mxu0 %v5224
        %v5791 = vpop.f32.mrf.mxu0
        %v5792 = vadd.f32 %v5251, %v5791
        %v5793 = vpop.f32.mrf.mxu0
        %v5794 = vpop.f32.mrf.mxu0
        %v5795 = vadd.f32 %v5251, %v5794
        %v5796 = vpop.f32.mrf.mxu0
        %5797 = vmatprep.mubr.bf16.mxu0 0
        %5798 = vmatmul.mubr.bf16.gmra.mxu0 %v5225
        %v5799 = vpop.f32.mrf.mxu0
        %v5800 = vadd.f32 %v5251, %v5799
        %v5801 = vpop.f32.mrf.mxu0
        %v5802 = vpop.f32.mrf.mxu0
        %v5803 = vadd.f32 %v5251, %v5802
        %v5804 = vpop.f32.mrf.mxu0
        %5805 = vmatprep.mubr.bf16.mxu0 0
        %5806 = vmatmul.mubr.bf16.gmra.mxu0 %v5226
        %v5807 = vpop.f32.mrf.mxu0
        %v5808 = vadd.f32 %v5251, %v5807
        %v5809 = vpop.f32.mrf.mxu0
        %v5810 = vpop.f32.mrf.mxu0
        %v5811 = vadd.f32 %v5251, %v5810
        %v5812 = vpop.f32.mrf.mxu0
        %5813 = vmatprep.mubr.bf16.mxu0 0
        %5814 = vmatmul.mubr.bf16.gmra.mxu0 %v5227
        %v5815 = vpop.f32.mrf.mxu0
        %v5816 = vadd.f32 %v5251, %v5815
        %v5817 = vpop.f32.mrf.mxu0
        %v5818 = vpop.f32.mrf.mxu0
        %v5819 = vadd.f32 %v5251, %v5818
        %v5820 = vpop.f32.mrf.mxu0
        %5821 = vmatprep.mubr.bf16.mxu0 0
        %5822 = vmatmul.mubr.bf16.gmra.mxu0 %v5228
        %v5823 = vpop.f32.mrf.mxu0
        %v5824 = vadd.f32 %v5251, %v5823
        %v5825 = vpop.f32.mrf.mxu0
        %v5826 = vpop.f32.mrf.mxu0
        %v5827 = vadd.f32 %v5251, %v5826
        %v5828 = vpop.f32.mrf.mxu0
        %5829 = vmatprep.mubr.bf16.mxu0 0
        %5830 = vmatmul.mubr.bf16.gmra.mxu0 %v5229
        %v5831 = vpop.f32.mrf.mxu0
        %v5832 = vadd.f32 %v5251, %v5831
        %v5833 = vpop.f32.mrf.mxu0
        %v5834 = vpop.f32.mrf.mxu0
        %v5835 = vadd.f32 %v5251, %v5834
        %v5836 = vpop.f32.mrf.mxu0
        %5837 = vmatprep.mubr.bf16.mxu0 0
        %5838 = vmatmul.mubr.bf16.gmra.mxu0 %v5230
        %v5839 = vpop.f32.mrf.mxu0
        %v5840 = vadd.f32 %v5251, %v5839
        %v5841 = vpop.f32.mrf.mxu0
        %v5842 = vpop.f32.mrf.mxu0
        %v5843 = vadd.f32 %v5251, %v5842
        %v5844 = vpop.f32.mrf.mxu0
        %5845 = vdwg.mxu0
        %5846 = vmax.xlane.f32.xlu0 %v5336
        %v5847 = vpop.xlane.xlu0 %5846
        %5848 = vmax.xlane.f32.xlu0 %v5339
        %v5849 = vpop.xlane.xlu0 %5848
        %5850 = vmax.xlane.f32.xlu0 %v5344
        %v5851 = vpop.xlane.xlu0 %5850
        %5852 = vmax.xlane.f32.xlu0 %v5347
        %v5853 = vpop.xlane.xlu0 %5852
        %5854 = vmax.xlane.f32.xlu0 %v5352
        %v5855 = vpop.xlane.xlu0 %5854
        %5856 = vmax.xlane.f32.xlu0 %v5355
        %v5857 = vpop.xlane.xlu0 %5856
        %5858 = vmax.xlane.f32.xlu0 %v5360
        %v5859 = vpop.xlane.xlu0 %5858
        %5860 = vmax.xlane.f32.xlu0 %v5363
        %v5861 = vpop.xlane.xlu0 %5860
        %5862 = vmax.xlane.f32.xlu0 %v5368
        %v5863 = vpop.xlane.xlu0 %5862
        %5864 = vmax.xlane.f32.xlu0 %v5371
        %v5865 = vpop.xlane.xlu0 %5864
        %5866 = vmax.xlane.f32.xlu0 %v5376
        %v5867 = vpop.xlane.xlu0 %5866
        %5868 = vmax.xlane.f32.xlu0 %v5379
        %v5869 = vpop.xlane.xlu0 %5868
        %5870 = vmax.xlane.f32.xlu0 %v5384
        %v5871 = vpop.xlane.xlu0 %5870
        %5872 = vmax.xlane.f32.xlu0 %v5387
        %v5873 = vpop.xlane.xlu0 %5872
        %5874 = vmax.xlane.f32.xlu0 %v5392
        %v5875 = vpop.xlane.xlu0 %5874
        %5876 = vmax.xlane.f32.xlu0 %v5395
        %v5877 = vpop.xlane.xlu0 %5876
        %5878 = vmax.xlane.f32.xlu0 %v5400
        %v5879 = vpop.xlane.xlu0 %5878
        %5880 = vmax.xlane.f32.xlu0 %v5403
        %v5881 = vpop.xlane.xlu0 %5880
        %5882 = vmax.xlane.f32.xlu0 %v5408
        %v5883 = vpop.xlane.xlu0 %5882
        %5884 = vmax.xlane.f32.xlu0 %v5411
        %v5885 = vpop.xlane.xlu0 %5884
        %5886 = vmax.xlane.f32.xlu0 %v5416
        %v5887 = vpop.xlane.xlu0 %5886
        %5888 = vmax.xlane.f32.xlu0 %v5419
        %v5889 = vpop.xlane.xlu0 %5888
        %5890 = vmax.xlane.f32.xlu0 %v5424
        %v5891 = vpop.xlane.xlu0 %5890
        %5892 = vmax.xlane.f32.xlu0 %v5427
        %v5893 = vpop.xlane.xlu0 %5892
        %5894 = vmax.xlane.f32.xlu0 %v5432
        %v5895 = vpop.xlane.xlu0 %5894
        %5896 = vmax.xlane.f32.xlu0 %v5435
        %v5897 = vpop.xlane.xlu0 %5896
        %5898 = vmax.xlane.f32.xlu0 %v5440
        %v5899 = vpop.xlane.xlu0 %5898
        %5900 = vmax.xlane.f32.xlu0 %v5443
        %v5901 = vpop.xlane.xlu0 %5900
        %5902 = vmax.xlane.f32.xlu0 %v5448
        %v5903 = vpop.xlane.xlu0 %5902
        %5904 = vmax.xlane.f32.xlu0 %v5451
        %v5905 = vpop.xlane.xlu0 %5904
        %5906 = vmax.xlane.f32.xlu0 %v5456
        %v5907 = vpop.xlane.xlu0 %5906
        %5908 = vmax.xlane.f32.xlu0 %v5459
        %v5909 = vpop.xlane.xlu0 %5908
        %5910 = vmax.xlane.f32.xlu0 %v5464
        %v5911 = vpop.xlane.xlu0 %5910
        %5912 = vmax.xlane.f32.xlu0 %v5467
        %v5913 = vpop.xlane.xlu0 %5912
        %5914 = vmax.xlane.f32.xlu0 %v5472
        %v5915 = vpop.xlane.xlu0 %5914
        %5916 = vmax.xlane.f32.xlu0 %v5475
        %v5917 = vpop.xlane.xlu0 %5916
        %5918 = vmax.xlane.f32.xlu0 %v5480
        %v5919 = vpop.xlane.xlu0 %5918
        %5920 = vmax.xlane.f32.xlu0 %v5483
        %v5921 = vpop.xlane.xlu0 %5920
        %5922 = vmax.xlane.f32.xlu0 %v5488
        %v5923 = vpop.xlane.xlu0 %5922
        %5924 = vmax.xlane.f32.xlu0 %v5491
        %v5925 = vpop.xlane.xlu0 %5924
        %5926 = vmax.xlane.f32.xlu0 %v5496
        %v5927 = vpop.xlane.xlu0 %5926
        %5928 = vmax.xlane.f32.xlu0 %v5499
        %v5929 = vpop.xlane.xlu0 %5928
        %5930 = vmax.xlane.f32.xlu0 %v5504
        %v5931 = vpop.xlane.xlu0 %5930
        %5932 = vmax.xlane.f32.xlu0 %v5507
        %v5933 = vpop.xlane.xlu0 %5932
        %5934 = vmax.xlane.f32.xlu0 %v5512
        %v5935 = vpop.xlane.xlu0 %5934
        %5936 = vmax.xlane.f32.xlu0 %v5515
        %v5937 = vpop.xlane.xlu0 %5936
        %5938 = vmax.xlane.f32.xlu0 %v5520
        %v5939 = vpop.xlane.xlu0 %5938
        %5940 = vmax.xlane.f32.xlu0 %v5523
        %v5941 = vpop.xlane.xlu0 %5940
        %5942 = vmax.xlane.f32.xlu0 %v5528
        %v5943 = vpop.xlane.xlu0 %5942
        %5944 = vmax.xlane.f32.xlu0 %v5531
        %v5945 = vpop.xlane.xlu0 %5944
        %5946 = vmax.xlane.f32.xlu0 %v5536
        %v5947 = vpop.xlane.xlu0 %5946
        %5948 = vmax.xlane.f32.xlu0 %v5539
        %v5949 = vpop.xlane.xlu0 %5948
        %5950 = vmax.xlane.f32.xlu0 %v5544
        %v5951 = vpop.xlane.xlu0 %5950
        %5952 = vmax.xlane.f32.xlu0 %v5547
        %v5953 = vpop.xlane.xlu0 %5952
        %5954 = vmax.xlane.f32.xlu0 %v5552
        %v5955 = vpop.xlane.xlu0 %5954
        %5956 = vmax.xlane.f32.xlu0 %v5555
        %v5957 = vpop.xlane.xlu0 %5956
        %5958 = vmax.xlane.f32.xlu0 %v5560
        %v5959 = vpop.xlane.xlu0 %5958
        %5960 = vmax.xlane.f32.xlu0 %v5563
        %v5961 = vpop.xlane.xlu0 %5960
        %5962 = vmax.xlane.f32.xlu0 %v5568
        %v5963 = vpop.xlane.xlu0 %5962
        %5964 = vmax.xlane.f32.xlu0 %v5571
        %v5965 = vpop.xlane.xlu0 %5964
        %5966 = vmax.xlane.f32.xlu0 %v5576
        %v5967 = vpop.xlane.xlu0 %5966
        %5968 = vmax.xlane.f32.xlu0 %v5579
        %v5969 = vpop.xlane.xlu0 %5968
        %5970 = vmax.xlane.f32.xlu0 %v5584
        %v5971 = vpop.xlane.xlu0 %5970
        %5972 = vmax.xlane.f32.xlu0 %v5587
        %v5973 = vpop.xlane.xlu0 %5972
        %5974 = vmax.xlane.f32.xlu0 %v5592
        %v5975 = vpop.xlane.xlu0 %5974
        %5976 = vmax.xlane.f32.xlu0 %v5595
        %v5977 = vpop.xlane.xlu0 %5976
        %5978 = vmax.xlane.f32.xlu0 %v5600
        %v5979 = vpop.xlane.xlu0 %5978
        %5980 = vmax.xlane.f32.xlu0 %v5603
        %v5981 = vpop.xlane.xlu0 %5980
        %5982 = vmax.xlane.f32.xlu0 %v5608
        %v5983 = vpop.xlane.xlu0 %5982
        %5984 = vmax.xlane.f32.xlu0 %v5611
        %v5985 = vpop.xlane.xlu0 %5984
        %5986 = vmax.xlane.f32.xlu0 %v5616
        %v5987 = vpop.xlane.xlu0 %5986
        %5988 = vmax.xlane.f32.xlu0 %v5619
        %v5989 = vpop.xlane.xlu0 %5988
        %5990 = vmax.xlane.f32.xlu0 %v5624
        %v5991 = vpop.xlane.xlu0 %5990
        %5992 = vmax.xlane.f32.xlu0 %v5627
        %v5993 = vpop.xlane.xlu0 %5992
        %5994 = vmax.xlane.f32.xlu0 %v5632
        %v5995 = vpop.xlane.xlu0 %5994
        %5996 = vmax.xlane.f32.xlu0 %v5635
        %v5997 = vpop.xlane.xlu0 %5996
        %5998 = vmax.xlane.f32.xlu0 %v5640
        %v5999 = vpop.xlane.xlu0 %5998
        %6000 = vmax.xlane.f32.xlu0 %v5643
        %v6001 = vpop.xlane.xlu0 %6000
        %6002 = vmax.xlane.f32.xlu0 %v5648
        %v6003 = vpop.xlane.xlu0 %6002
        %6004 = vmax.xlane.f32.xlu0 %v5651
        %v6005 = vpop.xlane.xlu0 %6004
        %6006 = vmax.xlane.f32.xlu0 %v5656
        %v6007 = vpop.xlane.xlu0 %6006
        %6008 = vmax.xlane.f32.xlu0 %v5659
        %v6009 = vpop.xlane.xlu0 %6008
        %6010 = vmax.xlane.f32.xlu0 %v5664
        %v6011 = vpop.xlane.xlu0 %6010
        %6012 = vmax.xlane.f32.xlu0 %v5667
        %v6013 = vpop.xlane.xlu0 %6012
        %6014 = vmax.xlane.f32.xlu0 %v5672
        %v6015 = vpop.xlane.xlu0 %6014
        %6016 = vmax.xlane.f32.xlu0 %v5675
        %v6017 = vpop.xlane.xlu0 %6016
        %6018 = vmax.xlane.f32.xlu0 %v5680
        %v6019 = vpop.xlane.xlu0 %6018
        %6020 = vmax.xlane.f32.xlu0 %v5683
        %v6021 = vpop.xlane.xlu0 %6020
        %6022 = vmax.xlane.f32.xlu0 %v5688
        %v6023 = vpop.xlane.xlu0 %6022
        %6024 = vmax.xlane.f32.xlu0 %v5691
        %v6025 = vpop.xlane.xlu0 %6024
        %6026 = vmax.xlane.f32.xlu0 %v5696
        %v6027 = vpop.xlane.xlu0 %6026
        %6028 = vmax.xlane.f32.xlu0 %v5699
        %v6029 = vpop.xlane.xlu0 %6028
        %6030 = vmax.xlane.f32.xlu0 %v5704
        %v6031 = vpop.xlane.xlu0 %6030
        %6032 = vmax.xlane.f32.xlu0 %v5707
        %v6033 = vpop.xlane.xlu0 %6032
        %6034 = vmax.xlane.f32.xlu0 %v5712
        %v6035 = vpop.xlane.xlu0 %6034
        %6036 = vmax.xlane.f32.xlu0 %v5715
        %v6037 = vpop.xlane.xlu0 %6036
        %6038 = vmax.xlane.f32.xlu0 %v5720
        %v6039 = vpop.xlane.xlu0 %6038
        %6040 = vmax.xlane.f32.xlu0 %v5723
        %v6041 = vpop.xlane.xlu0 %6040
        %6042 = vmax.xlane.f32.xlu0 %v5728
        %v6043 = vpop.xlane.xlu0 %6042
        %6044 = vmax.xlane.f32.xlu0 %v5731
        %v6045 = vpop.xlane.xlu0 %6044
        %6046 = vmax.xlane.f32.xlu0 %v5736
        %v6047 = vpop.xlane.xlu0 %6046
        %6048 = vmax.xlane.f32.xlu0 %v5739
        %v6049 = vpop.xlane.xlu0 %6048
        %6050 = vmax.xlane.f32.xlu0 %v5744
        %v6051 = vpop.xlane.xlu0 %6050
        %6052 = vmax.xlane.f32.xlu0 %v5747
        %v6053 = vpop.xlane.xlu0 %6052
        %6054 = vmax.xlane.f32.xlu0 %v5752
        %v6055 = vpop.xlane.xlu0 %6054
        %6056 = vmax.xlane.f32.xlu0 %v5755
        %v6057 = vpop.xlane.xlu0 %6056
        %6058 = vmax.xlane.f32.xlu0 %v5760
        %v6059 = vpop.xlane.xlu0 %6058
        %6060 = vmax.xlane.f32.xlu0 %v5763
        %v6061 = vpop.xlane.xlu0 %6060
        %6062 = vmax.xlane.f32.xlu0 %v5768
        %v6063 = vpop.xlane.xlu0 %6062
        %6064 = vmax.xlane.f32.xlu0 %v5771
        %v6065 = vpop.xlane.xlu0 %6064
        %6066 = vmax.xlane.f32.xlu0 %v5776
        %v6067 = vpop.xlane.xlu0 %6066
        %6068 = vmax.xlane.f32.xlu0 %v5779
        %v6069 = vpop.xlane.xlu0 %6068
        %6070 = vmax.xlane.f32.xlu0 %v5784
        %v6071 = vpop.xlane.xlu0 %6070
        %6072 = vmax.xlane.f32.xlu0 %v5787
        %v6073 = vpop.xlane.xlu0 %6072
        %6074 = vmax.xlane.f32.xlu0 %v5792
        %v6075 = vpop.xlane.xlu0 %6074
        %6076 = vmax.xlane.f32.xlu0 %v5795
        %v6077 = vpop.xlane.xlu0 %6076
        %6078 = vmax.xlane.f32.xlu0 %v5800
        %v6079 = vpop.xlane.xlu0 %6078
        %6080 = vmax.xlane.f32.xlu0 %v5803
        %v6081 = vpop.xlane.xlu0 %6080
        %6082 = vmax.xlane.f32.xlu0 %v5808
        %v6083 = vpop.xlane.xlu0 %6082
        %6084 = vmax.xlane.f32.xlu0 %v5811
        %v6085 = vpop.xlane.xlu0 %6084
        %6086 = vmax.xlane.f32.xlu0 %v5816
        %v6087 = vpop.xlane.xlu0 %6086
        %6088 = vmax.xlane.f32.xlu0 %v5819
        %v6089 = vpop.xlane.xlu0 %6088
        %6090 = vmax.xlane.f32.xlu0 %v5824
        %v6091 = vpop.xlane.xlu0 %6090
        %6092 = vmax.xlane.f32.xlu0 %v5827
        %v6093 = vpop.xlane.xlu0 %6092
        %6094 = vmax.xlane.f32.xlu0 %v5832
        %v6095 = vpop.xlane.xlu0 %6094
        %6096 = vmax.xlane.f32.xlu0 %v5835
        %v6097 = vpop.xlane.xlu0 %6096
        %6098 = vmax.xlane.f32.xlu0 %v5840
        %v6099 = vpop.xlane.xlu0 %6098
        %6100 = vmax.xlane.f32.xlu0 %v5843
        %v6101 = vpop.xlane.xlu0 %6100
        %v6102 = vsub.f32 %v5336, %v5847
        %v6103 = vsub.f32 %v5339, %v5849
        %v6104 = vsub.f32 %v5344, %v5851
        %v6105 = vsub.f32 %v5347, %v5853
        %v6106 = vsub.f32 %v5352, %v5855
        %v6107 = vsub.f32 %v5355, %v5857
        %v6108 = vsub.f32 %v5360, %v5859
        %v6109 = vsub.f32 %v5363, %v5861
        %v6110 = vsub.f32 %v5368, %v5863
        %v6111 = vsub.f32 %v5371, %v5865
        %v6112 = vsub.f32 %v5376, %v5867
        %v6113 = vsub.f32 %v5379, %v5869
        %v6114 = vsub.f32 %v5384, %v5871
        %v6115 = vsub.f32 %v5387, %v5873
        %v6116 = vsub.f32 %v5392, %v5875
        %v6117 = vsub.f32 %v5395, %v5877
        %v6118 = vsub.f32 %v5400, %v5879
        %v6119 = vsub.f32 %v5403, %v5881
        %v6120 = vsub.f32 %v5408, %v5883
        %v6121 = vsub.f32 %v5411, %v5885
        %v6122 = vsub.f32 %v5416, %v5887
        %v6123 = vsub.f32 %v5419, %v5889
        %v6124 = vsub.f32 %v5424, %v5891
        %v6125 = vsub.f32 %v5427, %v5893
        %v6126 = vsub.f32 %v5432, %v5895
        %v6127 = vsub.f32 %v5435, %v5897
        %v6128 = vsub.f32 %v5440, %v5899
        %v6129 = vsub.f32 %v5443, %v5901
        %v6130 = vsub.f32 %v5448, %v5903
        %v6131 = vsub.f32 %v5451, %v5905
        %v6132 = vsub.f32 %v5456, %v5907
        %v6133 = vsub.f32 %v5459, %v5909
        %v6134 = vsub.f32 %v5464, %v5911
        %v6135 = vsub.f32 %v5467, %v5913
        %v6136 = vsub.f32 %v5472, %v5915
        %v6137 = vsub.f32 %v5475, %v5917
        %v6138 = vsub.f32 %v5480, %v5919
        %v6139 = vsub.f32 %v5483, %v5921
        %v6140 = vsub.f32 %v5488, %v5923
        %v6141 = vsub.f32 %v5491, %v5925
        %v6142 = vsub.f32 %v5496, %v5927
        %v6143 = vsub.f32 %v5499, %v5929
        %v6144 = vsub.f32 %v5504, %v5931
        %v6145 = vsub.f32 %v5507, %v5933
        %v6146 = vsub.f32 %v5512, %v5935
        %v6147 = vsub.f32 %v5515, %v5937
        %v6148 = vsub.f32 %v5520, %v5939
        %v6149 = vsub.f32 %v5523, %v5941
        %v6150 = vsub.f32 %v5528, %v5943
        %v6151 = vsub.f32 %v5531, %v5945
        %v6152 = vsub.f32 %v5536, %v5947
        %v6153 = vsub.f32 %v5539, %v5949
        %v6154 = vsub.f32 %v5544, %v5951
        %v6155 = vsub.f32 %v5547, %v5953
        %v6156 = vsub.f32 %v5552, %v5955
        %v6157 = vsub.f32 %v5555, %v5957
        %v6158 = vsub.f32 %v5560, %v5959
        %v6159 = vsub.f32 %v5563, %v5961
        %v6160 = vsub.f32 %v5568, %v5963
        %v6161 = vsub.f32 %v5571, %v5965
        %v6162 = vsub.f32 %v5576, %v5967
        %v6163 = vsub.f32 %v5579, %v5969
        %v6164 = vsub.f32 %v5584, %v5971
        %v6165 = vsub.f32 %v5587, %v5973
        %v6166 = vsub.f32 %v5592, %v5975
        %v6167 = vsub.f32 %v5595, %v5977
        %v6168 = vsub.f32 %v5600, %v5979
        %v6169 = vsub.f32 %v5603, %v5981
        %v6170 = vsub.f32 %v5608, %v5983
        %v6171 = vsub.f32 %v5611, %v5985
        %v6172 = vsub.f32 %v5616, %v5987
        %v6173 = vsub.f32 %v5619, %v5989
        %v6174 = vsub.f32 %v5624, %v5991
        %v6175 = vsub.f32 %v5627, %v5993
        %v6176 = vsub.f32 %v5632, %v5995
        %v6177 = vsub.f32 %v5635, %v5997
        %v6178 = vsub.f32 %v5640, %v5999
        %v6179 = vsub.f32 %v5643, %v6001
        %v6180 = vsub.f32 %v5648, %v6003
        %v6181 = vsub.f32 %v5651, %v6005
        %v6182 = vsub.f32 %v5656, %v6007
        %v6183 = vsub.f32 %v5659, %v6009
        %v6184 = vsub.f32 %v5664, %v6011
        %v6185 = vsub.f32 %v5667, %v6013
        %v6186 = vsub.f32 %v5672, %v6015
        %v6187 = vsub.f32 %v5675, %v6017
        %v6188 = vsub.f32 %v5680, %v6019
        %v6189 = vsub.f32 %v5683, %v6021
        %v6190 = vsub.f32 %v5688, %v6023
        %v6191 = vsub.f32 %v5691, %v6025
        %v6192 = vsub.f32 %v5696, %v6027
        %v6193 = vsub.f32 %v5699, %v6029
        %v6194 = vsub.f32 %v5704, %v6031
        %v6195 = vsub.f32 %v5707, %v6033
        %v6196 = vsub.f32 %v5712, %v6035
        %v6197 = vsub.f32 %v5715, %v6037
        %v6198 = vsub.f32 %v5720, %v6039
        %v6199 = vsub.f32 %v5723, %v6041
        %v6200 = vsub.f32 %v5728, %v6043
        %v6201 = vsub.f32 %v5731, %v6045
        %v6202 = vsub.f32 %v5736, %v6047
        %v6203 = vsub.f32 %v5739, %v6049
        %v6204 = vsub.f32 %v5744, %v6051
        %v6205 = vsub.f32 %v5747, %v6053
        %v6206 = vsub.f32 %v5752, %v6055
        %v6207 = vsub.f32 %v5755, %v6057
        %v6208 = vsub.f32 %v5760, %v6059
        %v6209 = vsub.f32 %v5763, %v6061
        %v6210 = vsub.f32 %v5768, %v6063
        %v6211 = vsub.f32 %v5771, %v6065
        %v6212 = vsub.f32 %v5776, %v6067
        %v6213 = vsub.f32 %v5779, %v6069
        %v6214 = vsub.f32 %v5784, %v6071
        %v6215 = vsub.f32 %v5787, %v6073
        %v6216 = vsub.f32 %v5792, %v6075
        %v6217 = vsub.f32 %v5795, %v6077
        %v6218 = vsub.f32 %v5800, %v6079
        %v6219 = vsub.f32 %v5803, %v6081
        %v6220 = vsub.f32 %v5808, %v6083
        %v6221 = vsub.f32 %v5811, %v6085
        %v6222 = vsub.f32 %v5816, %v6087
        %v6223 = vsub.f32 %v5819, %v6089
        %v6224 = vsub.f32 %v5824, %v6091
        %v6225 = vsub.f32 %v5827, %v6093
        %v6226 = vsub.f32 %v5832, %v6095
        %v6227 = vsub.f32 %v5835, %v6097
        %v6228 = vsub.f32 %v5840, %v6099
        %v6229 = vsub.f32 %v5843, %v6101
        %v6230 = vmul.f32 %v6102, 1.442695
        %v6231 = vpow.pop %v6230
        %v6232 = vmul.f32 %v6103, 1.442695
        %v6233 = vpow.pop %v6232
        %v6234 = vmul.f32 %v6104, 1.442695
        %v6235 = vpow.pop %v6234
        %v6236 = vmul.f32 %v6105, 1.442695
        %v6237 = vpow.pop %v6236
        %v6238 = vmul.f32 %v6106, 1.442695
        %v6239 = vpow.pop %v6238
        %v6240 = vmul.f32 %v6107, 1.442695
        %v6241 = vpow.pop %v6240
        %v6242 = vmul.f32 %v6108, 1.442695
        %v6243 = vpow.pop %v6242
        %v6244 = vmul.f32 %v6109, 1.442695
        %v6245 = vpow.pop %v6244
        %v6246 = vmul.f32 %v6110, 1.442695
        %v6247 = vpow.pop %v6246
        %v6248 = vmul.f32 %v6111, 1.442695
        %v6249 = vpow.pop %v6248
        %v6250 = vmul.f32 %v6112, 1.442695
        %v6251 = vpow.pop %v6250
        %v6252 = vmul.f32 %v6113, 1.442695
        %v6253 = vpow.pop %v6252
        %v6254 = vmul.f32 %v6114, 1.442695
        %v6255 = vpow.pop %v6254
        %v6256 = vmul.f32 %v6115, 1.442695
        %v6257 = vpow.pop %v6256
        %v6258 = vmul.f32 %v6116, 1.442695
        %v6259 = vpow.pop %v6258
        %v6260 = vmul.f32 %v6117, 1.442695
        %v6261 = vpow.pop %v6260
        %v6262 = vmul.f32 %v6118, 1.442695
        %v6263 = vpow.pop %v6262
        %v6264 = vmul.f32 %v6119, 1.442695
        %v6265 = vpow.pop %v6264
        %v6266 = vmul.f32 %v6120, 1.442695
        %v6267 = vpow.pop %v6266
        %v6268 = vmul.f32 %v6121, 1.442695
        %v6269 = vpow.pop %v6268
        %v6270 = vmul.f32 %v6122, 1.442695
        %v6271 = vpow.pop %v6270
        %v6272 = vmul.f32 %v6123, 1.442695
        %v6273 = vpow.pop %v6272
        %v6274 = vmul.f32 %v6124, 1.442695
        %v6275 = vpow.pop %v6274
        %v6276 = vmul.f32 %v6125, 1.442695
        %v6277 = vpow.pop %v6276
        %v6278 = vmul.f32 %v6126, 1.442695
        %v6279 = vpow.pop %v6278
        %v6280 = vmul.f32 %v6127, 1.442695
        %v6281 = vpow.pop %v6280
        %v6282 = vmul.f32 %v6128, 1.442695
        %v6283 = vpow.pop %v6282
        %v6284 = vmul.f32 %v6129, 1.442695
        %v6285 = vpow.pop %v6284
        %v6286 = vmul.f32 %v6130, 1.442695
        %v6287 = vpow.pop %v6286
        %v6288 = vmul.f32 %v6131, 1.442695
        %v6289 = vpow.pop %v6288
        %v6290 = vmul.f32 %v6132, 1.442695
        %v6291 = vpow.pop %v6290
        %v6292 = vmul.f32 %v6133, 1.442695
        %v6293 = vpow.pop %v6292
        %v6294 = vmul.f32 %v6134, 1.442695
        %v6295 = vpow.pop %v6294
        %v6296 = vmul.f32 %v6135, 1.442695
        %v6297 = vpow.pop %v6296
        %v6298 = vmul.f32 %v6136, 1.442695
        %v6299 = vpow.pop %v6298
        %v6300 = vmul.f32 %v6137, 1.442695
        %v6301 = vpow.pop %v6300
        %v6302 = vmul.f32 %v6138, 1.442695
        %v6303 = vpow.pop %v6302
        %v6304 = vmul.f32 %v6139, 1.442695
        %v6305 = vpow.pop %v6304
        %v6306 = vmul.f32 %v6140, 1.442695
        %v6307 = vpow.pop %v6306
        %v6308 = vmul.f32 %v6141, 1.442695
        %v6309 = vpow.pop %v6308
        %v6310 = vmul.f32 %v6142, 1.442695
        %v6311 = vpow.pop %v6310
        %v6312 = vmul.f32 %v6143, 1.442695
        %v6313 = vpow.pop %v6312
        %v6314 = vmul.f32 %v6144, 1.442695
        %v6315 = vpow.pop %v6314
        %v6316 = vmul.f32 %v6145, 1.442695
        %v6317 = vpow.pop %v6316
        %v6318 = vmul.f32 %v6146, 1.442695
        %v6319 = vpow.pop %v6318
        %v6320 = vmul.f32 %v6147, 1.442695
        %v6321 = vpow.pop %v6320
        %v6322 = vmul.f32 %v6148, 1.442695
        %v6323 = vpow.pop %v6322
        %v6324 = vmul.f32 %v6149, 1.442695
        %v6325 = vpow.pop %v6324
        %v6326 = vmul.f32 %v6150, 1.442695
        %v6327 = vpow.pop %v6326
        %v6328 = vmul.f32 %v6151, 1.442695
        %v6329 = vpow.pop %v6328
        %v6330 = vmul.f32 %v6152, 1.442695
        %v6331 = vpow.pop %v6330
        %v6332 = vmul.f32 %v6153, 1.442695
        %v6333 = vpow.pop %v6332
        %v6334 = vmul.f32 %v6154, 1.442695
        %v6335 = vpow.pop %v6334
        %v6336 = vmul.f32 %v6155, 1.442695
        %v6337 = vpow.pop %v6336
        %v6338 = vmul.f32 %v6156, 1.442695
        %v6339 = vpow.pop %v6338
        %v6340 = vmul.f32 %v6157, 1.442695
        %v6341 = vpow.pop %v6340
        %v6342 = vmul.f32 %v6158, 1.442695
        %v6343 = vpow.pop %v6342
        %v6344 = vmul.f32 %v6159, 1.442695
        %v6345 = vpow.pop %v6344
        %v6346 = vmul.f32 %v6160, 1.442695
        %v6347 = vpow.pop %v6346
        %v6348 = vmul.f32 %v6161, 1.442695
        %v6349 = vpow.pop %v6348
        %v6350 = vmul.f32 %v6162, 1.442695
        %v6351 = vpow.pop %v6350
        %v6352 = vmul.f32 %v6163, 1.442695
        %v6353 = vpow.pop %v6352
        %v6354 = vmul.f32 %v6164, 1.442695
        %v6355 = vpow.pop %v6354
        %v6356 = vmul.f32 %v6165, 1.442695
        %v6357 = vpow.pop %v6356
        %v6358 = vmul.f32 %v6166, 1.442695
        %v6359 = vpow.pop %v6358
        %v6360 = vmul.f32 %v6167, 1.442695
        %v6361 = vpow.pop %v6360
        %v6362 = vmul.f32 %v6168, 1.442695
        %v6363 = vpow.pop %v6362
        %v6364 = vmul.f32 %v6169, 1.442695
        %v6365 = vpow.pop %v6364
        %v6366 = vmul.f32 %v6170, 1.442695
        %v6367 = vpow.pop %v6366
        %v6368 = vmul.f32 %v6171, 1.442695
        %v6369 = vpow.pop %v6368
        %v6370 = vmul.f32 %v6172, 1.442695
        %v6371 = vpow.pop %v6370
        %v6372 = vmul.f32 %v6173, 1.442695
        %v6373 = vpow.pop %v6372
        %v6374 = vmul.f32 %v6174, 1.442695
        %v6375 = vpow.pop %v6374
        %v6376 = vmul.f32 %v6175, 1.442695
        %v6377 = vpow.pop %v6376
        %v6378 = vmul.f32 %v6176, 1.442695
        %v6379 = vpow.pop %v6378
        %v6380 = vmul.f32 %v6177, 1.442695
        %v6381 = vpow.pop %v6380
        %v6382 = vmul.f32 %v6178, 1.442695
        %v6383 = vpow.pop %v6382
        %v6384 = vmul.f32 %v6179, 1.442695
        %v6385 = vpow.pop %v6384
        %v6386 = vmul.f32 %v6180, 1.442695
        %v6387 = vpow.pop %v6386
        %v6388 = vmul.f32 %v6181, 1.442695
        %v6389 = vpow.pop %v6388
        %v6390 = vmul.f32 %v6182, 1.442695
        %v6391 = vpow.pop %v6390
        %v6392 = vmul.f32 %v6183, 1.442695
        %v6393 = vpow.pop %v6392
        %v6394 = vmul.f32 %v6184, 1.442695
        %v6395 = vpow.pop %v6394
        %v6396 = vmul.f32 %v6185, 1.442695
        %v6397 = vpow.pop %v6396
        %v6398 = vmul.f32 %v6186, 1.442695
        %v6399 = vpow.pop %v6398
        %v6400 = vmul.f32 %v6187, 1.442695
        %v6401 = vpow.pop %v6400
        %v6402 = vmul.f32 %v6188, 1.442695
        %v6403 = vpow.pop %v6402
        %v6404 = vmul.f32 %v6189, 1.442695
        %v6405 = vpow.pop %v6404
        %v6406 = vmul.f32 %v6190, 1.442695
        %v6407 = vpow.pop %v6406
        %v6408 = vmul.f32 %v6191, 1.442695
        %v6409 = vpow.pop %v6408
        %v6410 = vmul.f32 %v6192, 1.442695
        %v6411 = vpow.pop %v6410
        %v6412 = vmul.f32 %v6193, 1.442695
        %v6413 = vpow.pop %v6412
        %v6414 = vmul.f32 %v6194, 1.442695
        %v6415 = vpow.pop %v6414
        %v6416 = vmul.f32 %v6195, 1.442695
        %v6417 = vpow.pop %v6416
        %v6418 = vmul.f32 %v6196, 1.442695
        %v6419 = vpow.pop %v6418
        %v6420 = vmul.f32 %v6197, 1.442695
        %v6421 = vpow.pop %v6420
        %v6422 = vmul.f32 %v6198, 1.442695
        %v6423 = vpow.pop %v6422
        %v6424 = vmul.f32 %v6199, 1.442695
        %v6425 = vpow.pop %v6424
        %v6426 = vmul.f32 %v6200, 1.442695
        %v6427 = vpow.pop %v6426
        %v6428 = vmul.f32 %v6201, 1.442695
        %v6429 = vpow.pop %v6428
        %v6430 = vmul.f32 %v6202, 1.442695
        %v6431 = vpow.pop %v6430
        %v6432 = vmul.f32 %v6203, 1.442695
        %v6433 = vpow.pop %v6432
        %v6434 = vmul.f32 %v6204, 1.442695
        %v6435 = vpow.pop %v6434
        %v6436 = vmul.f32 %v6205, 1.442695
        %v6437 = vpow.pop %v6436
        %v6438 = vmul.f32 %v6206, 1.442695
        %v6439 = vpow.pop %v6438
        %v6440 = vmul.f32 %v6207, 1.442695
        %v6441 = vpow.pop %v6440
        %v6442 = vmul.f32 %v6208, 1.442695
        %v6443 = vpow.pop %v6442
        %v6444 = vmul.f32 %v6209, 1.442695
        %v6445 = vpow.pop %v6444
        %v6446 = vmul.f32 %v6210, 1.442695
        %v6447 = vpow.pop %v6446
        %v6448 = vmul.f32 %v6211, 1.442695
        %v6449 = vpow.pop %v6448
        %v6450 = vmul.f32 %v6212, 1.442695
        %v6451 = vpow.pop %v6450
        %v6452 = vmul.f32 %v6213, 1.442695
        %v6453 = vpow.pop %v6452
        %v6454 = vmul.f32 %v6214, 1.442695
        %v6455 = vpow.pop %v6454
        %v6456 = vmul.f32 %v6215, 1.442695
        %v6457 = vpow.pop %v6456
        %v6458 = vmul.f32 %v6216, 1.442695
        %v6459 = vpow.pop %v6458
        %v6460 = vmul.f32 %v6217, 1.442695
        %v6461 = vpow.pop %v6460
        %v6462 = vmul.f32 %v6218, 1.442695
        %v6463 = vpow.pop %v6462
        %v6464 = vmul.f32 %v6219, 1.442695
        %v6465 = vpow.pop %v6464
        %v6466 = vmul.f32 %v6220, 1.442695
        %v6467 = vpow.pop %v6466
        %v6468 = vmul.f32 %v6221, 1.442695
        %v6469 = vpow.pop %v6468
        %v6470 = vmul.f32 %v6222, 1.442695
        %v6471 = vpow.pop %v6470
        %v6472 = vmul.f32 %v6223, 1.442695
        %v6473 = vpow.pop %v6472
        %v6474 = vmul.f32 %v6224, 1.442695
        %v6475 = vpow.pop %v6474
        %v6476 = vmul.f32 %v6225, 1.442695
        %v6477 = vpow.pop %v6476
        %v6478 = vmul.f32 %v6226, 1.442695
        %v6479 = vpow.pop %v6478
        %v6480 = vmul.f32 %v6227, 1.442695
        %v6481 = vpow.pop %v6480
        %v6482 = vmul.f32 %v6228, 1.442695
        %v6483 = vpow.pop %v6482
        %v6484 = vmul.f32 %v6229, 1.442695
        %v6485 = vpow.pop %v6484
        %6486 = vadd.xlane.f32.xlu0 %v6231
        %v6487 = vpop.xlane.xlu0 %6486
        %6488 = vadd.xlane.f32.xlu0 %v6233
        %v6489 = vpop.xlane.xlu0 %6488
        %6490 = vadd.xlane.f32.xlu0 %v6235
        %v6491 = vpop.xlane.xlu0 %6490
        %6492 = vadd.xlane.f32.xlu0 %v6237
        %v6493 = vpop.xlane.xlu0 %6492
        %6494 = vadd.xlane.f32.xlu0 %v6239
        %v6495 = vpop.xlane.xlu0 %6494
        %6496 = vadd.xlane.f32.xlu0 %v6241
        %v6497 = vpop.xlane.xlu0 %6496
        %6498 = vadd.xlane.f32.xlu0 %v6243
        %v6499 = vpop.xlane.xlu0 %6498
        %6500 = vadd.xlane.f32.xlu0 %v6245
        %v6501 = vpop.xlane.xlu0 %6500
        %6502 = vadd.xlane.f32.xlu0 %v6247
        %v6503 = vpop.xlane.xlu0 %6502
        %6504 = vadd.xlane.f32.xlu0 %v6249
        %v6505 = vpop.xlane.xlu0 %6504
        %6506 = vadd.xlane.f32.xlu0 %v6251
        %v6507 = vpop.xlane.xlu0 %6506
        %6508 = vadd.xlane.f32.xlu0 %v6253
        %v6509 = vpop.xlane.xlu0 %6508
        %6510 = vadd.xlane.f32.xlu0 %v6255
        %v6511 = vpop.xlane.xlu0 %6510
        %6512 = vadd.xlane.f32.xlu0 %v6257
        %v6513 = vpop.xlane.xlu0 %6512
        %6514 = vadd.xlane.f32.xlu0 %v6259
        %v6515 = vpop.xlane.xlu0 %6514
        %6516 = vadd.xlane.f32.xlu0 %v6261
        %v6517 = vpop.xlane.xlu0 %6516
        %6518 = vadd.xlane.f32.xlu0 %v6263
        %v6519 = vpop.xlane.xlu0 %6518
        %6520 = vadd.xlane.f32.xlu0 %v6265
        %v6521 = vpop.xlane.xlu0 %6520
        %6522 = vadd.xlane.f32.xlu0 %v6267
        %v6523 = vpop.xlane.xlu0 %6522
        %6524 = vadd.xlane.f32.xlu0 %v6269
        %v6525 = vpop.xlane.xlu0 %6524
        %6526 = vadd.xlane.f32.xlu0 %v6271
        %v6527 = vpop.xlane.xlu0 %6526
        %6528 = vadd.xlane.f32.xlu0 %v6273
        %v6529 = vpop.xlane.xlu0 %6528
        %6530 = vadd.xlane.f32.xlu0 %v6275
        %v6531 = vpop.xlane.xlu0 %6530
        %6532 = vadd.xlane.f32.xlu0 %v6277
        %v6533 = vpop.xlane.xlu0 %6532
        %6534 = vadd.xlane.f32.xlu0 %v6279
        %v6535 = vpop.xlane.xlu0 %6534
        %6536 = vadd.xlane.f32.xlu0 %v6281
        %v6537 = vpop.xlane.xlu0 %6536
        %6538 = vadd.xlane.f32.xlu0 %v6283
        %v6539 = vpop.xlane.xlu0 %6538
        %6540 = vadd.xlane.f32.xlu0 %v6285
        %v6541 = vpop.xlane.xlu0 %6540
        %6542 = vadd.xlane.f32.xlu0 %v6287
        %v6543 = vpop.xlane.xlu0 %6542
        %6544 = vadd.xlane.f32.xlu0 %v6289
        %v6545 = vpop.xlane.xlu0 %6544
        %6546 = vadd.xlane.f32.xlu0 %v6291
        %v6547 = vpop.xlane.xlu0 %6546
        %6548 = vadd.xlane.f32.xlu0 %v6293
        %v6549 = vpop.xlane.xlu0 %6548
        %6550 = vadd.xlane.f32.xlu0 %v6295
        %v6551 = vpop.xlane.xlu0 %6550
        %6552 = vadd.xlane.f32.xlu0 %v6297
        %v6553 = vpop.xlane.xlu0 %6552
        %6554 = vadd.xlane.f32.xlu0 %v6299
        %v6555 = vpop.xlane.xlu0 %6554
        %6556 = vadd.xlane.f32.xlu0 %v6301
        %v6557 = vpop.xlane.xlu0 %6556
        %6558 = vadd.xlane.f32.xlu0 %v6303
        %v6559 = vpop.xlane.xlu0 %6558
        %6560 = vadd.xlane.f32.xlu0 %v6305
        %v6561 = vpop.xlane.xlu0 %6560
        %6562 = vadd.xlane.f32.xlu0 %v6307
        %v6563 = vpop.xlane.xlu0 %6562
        %6564 = vadd.xlane.f32.xlu0 %v6309
        %v6565 = vpop.xlane.xlu0 %6564
        %6566 = vadd.xlane.f32.xlu0 %v6311
        %v6567 = vpop.xlane.xlu0 %6566
        %6568 = vadd.xlane.f32.xlu0 %v6313
        %v6569 = vpop.xlane.xlu0 %6568
        %6570 = vadd.xlane.f32.xlu0 %v6315
        %v6571 = vpop.xlane.xlu0 %6570
        %6572 = vadd.xlane.f32.xlu0 %v6317
        %v6573 = vpop.xlane.xlu0 %6572
        %6574 = vadd.xlane.f32.xlu0 %v6319
        %v6575 = vpop.xlane.xlu0 %6574
        %6576 = vadd.xlane.f32.xlu0 %v6321
        %v6577 = vpop.xlane.xlu0 %6576
        %6578 = vadd.xlane.f32.xlu0 %v6323
        %v6579 = vpop.xlane.xlu0 %6578
        %6580 = vadd.xlane.f32.xlu0 %v6325
        %v6581 = vpop.xlane.xlu0 %6580
        %6582 = vadd.xlane.f32.xlu0 %v6327
        %v6583 = vpop.xlane.xlu0 %6582
        %6584 = vadd.xlane.f32.xlu0 %v6329
        %v6585 = vpop.xlane.xlu0 %6584
        %6586 = vadd.xlane.f32.xlu0 %v6331
        %v6587 = vpop.xlane.xlu0 %6586
        %6588 = vadd.xlane.f32.xlu0 %v6333
        %v6589 = vpop.xlane.xlu0 %6588
        %6590 = vadd.xlane.f32.xlu0 %v6335
        %v6591 = vpop.xlane.xlu0 %6590
        %6592 = vadd.xlane.f32.xlu0 %v6337
        %v6593 = vpop.xlane.xlu0 %6592
        %6594 = vadd.xlane.f32.xlu0 %v6339
        %v6595 = vpop.xlane.xlu0 %6594
        %6596 = vadd.xlane.f32.xlu0 %v6341
        %v6597 = vpop.xlane.xlu0 %6596
        %6598 = vadd.xlane.f32.xlu0 %v6343
        %v6599 = vpop.xlane.xlu0 %6598
        %6600 = vadd.xlane.f32.xlu0 %v6345
        %v6601 = vpop.xlane.xlu0 %6600
        %6602 = vadd.xlane.f32.xlu0 %v6347
        %v6603 = vpop.xlane.xlu0 %6602
        %6604 = vadd.xlane.f32.xlu0 %v6349
        %v6605 = vpop.xlane.xlu0 %6604
        %6606 = vadd.xlane.f32.xlu0 %v6351
        %v6607 = vpop.xlane.xlu0 %6606
        %6608 = vadd.xlane.f32.xlu0 %v6353
        %v6609 = vpop.xlane.xlu0 %6608
        %6610 = vadd.xlane.f32.xlu0 %v6355
        %v6611 = vpop.xlane.xlu0 %6610
        %6612 = vadd.xlane.f32.xlu0 %v6357
        %v6613 = vpop.xlane.xlu0 %6612
        %6614 = vadd.xlane.f32.xlu0 %v6359
        %v6615 = vpop.xlane.xlu0 %6614
        %6616 = vadd.xlane.f32.xlu0 %v6361
        %v6617 = vpop.xlane.xlu0 %6616
        %6618 = vadd.xlane.f32.xlu0 %v6363
        %v6619 = vpop.xlane.xlu0 %6618
        %6620 = vadd.xlane.f32.xlu0 %v6365
        %v6621 = vpop.xlane.xlu0 %6620
        %6622 = vadd.xlane.f32.xlu0 %v6367
        %v6623 = vpop.xlane.xlu0 %6622
        %6624 = vadd.xlane.f32.xlu0 %v6369
        %v6625 = vpop.xlane.xlu0 %6624
        %6626 = vadd.xlane.f32.xlu0 %v6371
        %v6627 = vpop.xlane.xlu0 %6626
        %6628 = vadd.xlane.f32.xlu0 %v6373
        %v6629 = vpop.xlane.xlu0 %6628
        %6630 = vadd.xlane.f32.xlu0 %v6375
        %v6631 = vpop.xlane.xlu0 %6630
        %6632 = vadd.xlane.f32.xlu0 %v6377
        %v6633 = vpop.xlane.xlu0 %6632
        %6634 = vadd.xlane.f32.xlu0 %v6379
        %v6635 = vpop.xlane.xlu0 %6634
        %6636 = vadd.xlane.f32.xlu0 %v6381
        %v6637 = vpop.xlane.xlu0 %6636
        %6638 = vadd.xlane.f32.xlu0 %v6383
        %v6639 = vpop.xlane.xlu0 %6638
        %6640 = vadd.xlane.f32.xlu0 %v6385
        %v6641 = vpop.xlane.xlu0 %6640
        %6642 = vadd.xlane.f32.xlu0 %v6387
        %v6643 = vpop.xlane.xlu0 %6642
        %6644 = vadd.xlane.f32.xlu0 %v6389
        %v6645 = vpop.xlane.xlu0 %6644
        %6646 = vadd.xlane.f32.xlu0 %v6391
        %v6647 = vpop.xlane.xlu0 %6646
        %6648 = vadd.xlane.f32.xlu0 %v6393
        %v6649 = vpop.xlane.xlu0 %6648
        %6650 = vadd.xlane.f32.xlu0 %v6395
        %v6651 = vpop.xlane.xlu0 %6650
        %6652 = vadd.xlane.f32.xlu0 %v6397
        %v6653 = vpop.xlane.xlu0 %6652
        %6654 = vadd.xlane.f32.xlu0 %v6399
        %v6655 = vpop.xlane.xlu0 %6654
        %6656 = vadd.xlane.f32.xlu0 %v6401
        %v6657 = vpop.xlane.xlu0 %6656
        %6658 = vadd.xlane.f32.xlu0 %v6403
        %v6659 = vpop.xlane.xlu0 %6658
        %6660 = vadd.xlane.f32.xlu0 %v6405
        %v6661 = vpop.xlane.xlu0 %6660
        %6662 = vadd.xlane.f32.xlu0 %v6407
        %v6663 = vpop.xlane.xlu0 %6662
        %6664 = vadd.xlane.f32.xlu0 %v6409
        %v6665 = vpop.xlane.xlu0 %6664
        %6666 = vadd.xlane.f32.xlu0 %v6411
        %v6667 = vpop.xlane.xlu0 %6666
        %6668 = vadd.xlane.f32.xlu0 %v6413
        %v6669 = vpop.xlane.xlu0 %6668
        %6670 = vadd.xlane.f32.xlu0 %v6415
        %v6671 = vpop.xlane.xlu0 %6670
        %6672 = vadd.xlane.f32.xlu0 %v6417
        %v6673 = vpop.xlane.xlu0 %6672
        %6674 = vadd.xlane.f32.xlu0 %v6419
        %v6675 = vpop.xlane.xlu0 %6674
        %6676 = vadd.xlane.f32.xlu0 %v6421
        %v6677 = vpop.xlane.xlu0 %6676
        %6678 = vadd.xlane.f32.xlu0 %v6423
        %v6679 = vpop.xlane.xlu0 %6678
        %6680 = vadd.xlane.f32.xlu0 %v6425
        %v6681 = vpop.xlane.xlu0 %6680
        %6682 = vadd.xlane.f32.xlu0 %v6427
        %v6683 = vpop.xlane.xlu0 %6682
        %6684 = vadd.xlane.f32.xlu0 %v6429
        %v6685 = vpop.xlane.xlu0 %6684
        %6686 = vadd.xlane.f32.xlu0 %v6431
        %v6687 = vpop.xlane.xlu0 %6686
        %6688 = vadd.xlane.f32.xlu0 %v6433
        %v6689 = vpop.xlane.xlu0 %6688
        %6690 = vadd.xlane.f32.xlu0 %v6435
        %v6691 = vpop.xlane.xlu0 %6690
        %6692 = vadd.xlane.f32.xlu0 %v6437
        %v6693 = vpop.xlane.xlu0 %6692
        %6694 = vadd.xlane.f32.xlu0 %v6439
        %v6695 = vpop.xlane.xlu0 %6694
        %6696 = vadd.xlane.f32.xlu0 %v6441
        %v6697 = vpop.xlane.xlu0 %6696
        %6698 = vadd.xlane.f32.xlu0 %v6443
        %v6699 = vpop.xlane.xlu0 %6698
        %6700 = vadd.xlane.f32.xlu0 %v6445
        %v6701 = vpop.xlane.xlu0 %6700
        %6702 = vadd.xlane.f32.xlu0 %v6447
        %v6703 = vpop.xlane.xlu0 %6702
        %6704 = vadd.xlane.f32.xlu0 %v6449
        %v6705 = vpop.xlane.xlu0 %6704
        %6706 = vadd.xlane.f32.xlu0 %v6451
        %v6707 = vpop.xlane.xlu0 %6706
        %6708 = vadd.xlane.f32.xlu0 %v6453
        %v6709 = vpop.xlane.xlu0 %6708
        %6710 = vadd.xlane.f32.xlu0 %v6455
        %v6711 = vpop.xlane.xlu0 %6710
        %6712 = vadd.xlane.f32.xlu0 %v6457
        %v6713 = vpop.xlane.xlu0 %6712
        %6714 = vadd.xlane.f32.xlu0 %v6459
        %v6715 = vpop.xlane.xlu0 %6714
        %6716 = vadd.xlane.f32.xlu0 %v6461
        %v6717 = vpop.xlane.xlu0 %6716
        %6718 = vadd.xlane.f32.xlu0 %v6463
        %v6719 = vpop.xlane.xlu0 %6718
        %6720 = vadd.xlane.f32.xlu0 %v6465
        %v6721 = vpop.xlane.xlu0 %6720
        %6722 = vadd.xlane.f32.xlu0 %v6467
        %v6723 = vpop.xlane.xlu0 %6722
        %6724 = vadd.xlane.f32.xlu0 %v6469
        %v6725 = vpop.xlane.xlu0 %6724
        %6726 = vadd.xlane.f32.xlu0 %v6471
        %v6727 = vpop.xlane.xlu0 %6726
        %6728 = vadd.xlane.f32.xlu0 %v6473
        %v6729 = vpop.xlane.xlu0 %6728
        %6730 = vadd.xlane.f32.xlu0 %v6475
        %v6731 = vpop.xlane.xlu0 %6730
        %6732 = vadd.xlane.f32.xlu0 %v6477
        %v6733 = vpop.xlane.xlu0 %6732
        %6734 = vadd.xlane.f32.xlu0 %v6479
        %v6735 = vpop.xlane.xlu0 %6734
        %6736 = vadd.xlane.f32.xlu0 %v6481
        %v6737 = vpop.xlane.xlu0 %6736
        %6738 = vadd.xlane.f32.xlu0 %v6483
        %v6739 = vpop.xlane.xlu0 %6738
        %6740 = vadd.xlane.f32.xlu0 %v6485
        %v6741 = vpop.xlane.xlu0 %6740
        %v6742 = vlog2.pop %v6487
        %v6743 = vmul.f32 %v6742, 0.6931472
        %v6744 = vlog2.pop %v6489
        %v6745 = vmul.f32 %v6744, 0.6931472
        %v6746 = vlog2.pop %v6491
        %v6747 = vmul.f32 %v6746, 0.6931472
        %v6748 = vlog2.pop %v6493
        %v6749 = vmul.f32 %v6748, 0.6931472
        %v6750 = vlog2.pop %v6495
        %v6751 = vmul.f32 %v6750, 0.6931472
        %v6752 = vlog2.pop %v6497
        %v6753 = vmul.f32 %v6752, 0.6931472
        %v6754 = vlog2.pop %v6499
        %v6755 = vmul.f32 %v6754, 0.6931472
        %v6756 = vlog2.pop %v6501
        %v6757 = vmul.f32 %v6756, 0.6931472
        %v6758 = vlog2.pop %v6503
        %v6759 = vmul.f32 %v6758, 0.6931472
        %v6760 = vlog2.pop %v6505
        %v6761 = vmul.f32 %v6760, 0.6931472
        %v6762 = vlog2.pop %v6507
        %v6763 = vmul.f32 %v6762, 0.6931472
        %v6764 = vlog2.pop %v6509
        %v6765 = vmul.f32 %v6764, 0.6931472
        %v6766 = vlog2.pop %v6511
        %v6767 = vmul.f32 %v6766, 0.6931472
        %v6768 = vlog2.pop %v6513
        %v6769 = vmul.f32 %v6768, 0.6931472
        %v6770 = vlog2.pop %v6515
        %v6771 = vmul.f32 %v6770, 0.6931472
        %v6772 = vlog2.pop %v6517
        %v6773 = vmul.f32 %v6772, 0.6931472
        %v6774 = vlog2.pop %v6519
        %v6775 = vmul.f32 %v6774, 0.6931472
        %v6776 = vlog2.pop %v6521
        %v6777 = vmul.f32 %v6776, 0.6931472
        %v6778 = vlog2.pop %v6523
        %v6779 = vmul.f32 %v6778, 0.6931472
        %v6780 = vlog2.pop %v6525
        %v6781 = vmul.f32 %v6780, 0.6931472
        %v6782 = vlog2.pop %v6527
        %v6783 = vmul.f32 %v6782, 0.6931472
        %v6784 = vlog2.pop %v6529
        %v6785 = vmul.f32 %v6784, 0.6931472
        %v6786 = vlog2.pop %v6531
        %v6787 = vmul.f32 %v6786, 0.6931472
        %v6788 = vlog2.pop %v6533
        %v6789 = vmul.f32 %v6788, 0.6931472
        %v6790 = vlog2.pop %v6535
        %v6791 = vmul.f32 %v6790, 0.6931472
        %v6792 = vlog2.pop %v6537
        %v6793 = vmul.f32 %v6792, 0.6931472
        %v6794 = vlog2.pop %v6539
        %v6795 = vmul.f32 %v6794, 0.6931472
        %v6796 = vlog2.pop %v6541
        %v6797 = vmul.f32 %v6796, 0.6931472
        %v6798 = vlog2.pop %v6543
        %v6799 = vmul.f32 %v6798, 0.6931472
        %v6800 = vlog2.pop %v6545
        %v6801 = vmul.f32 %v6800, 0.6931472
        %v6802 = vlog2.pop %v6547
        %v6803 = vmul.f32 %v6802, 0.6931472
        %v6804 = vlog2.pop %v6549
        %v6805 = vmul.f32 %v6804, 0.6931472
        %v6806 = vlog2.pop %v6551
        %v6807 = vmul.f32 %v6806, 0.6931472
        %v6808 = vlog2.pop %v6553
        %v6809 = vmul.f32 %v6808, 0.6931472
        %v6810 = vlog2.pop %v6555
        %v6811 = vmul.f32 %v6810, 0.6931472
        %v6812 = vlog2.pop %v6557
        %v6813 = vmul.f32 %v6812, 0.6931472
        %v6814 = vlog2.pop %v6559
        %v6815 = vmul.f32 %v6814, 0.6931472
        %v6816 = vlog2.pop %v6561
        %v6817 = vmul.f32 %v6816, 0.6931472
        %v6818 = vlog2.pop %v6563
        %v6819 = vmul.f32 %v6818, 0.6931472
        %v6820 = vlog2.pop %v6565
        %v6821 = vmul.f32 %v6820, 0.6931472
        %v6822 = vlog2.pop %v6567
        %v6823 = vmul.f32 %v6822, 0.6931472
        %v6824 = vlog2.pop %v6569
        %v6825 = vmul.f32 %v6824, 0.6931472
        %v6826 = vlog2.pop %v6571
        %v6827 = vmul.f32 %v6826, 0.6931472
        %v6828 = vlog2.pop %v6573
        %v6829 = vmul.f32 %v6828, 0.6931472
        %v6830 = vlog2.pop %v6575
        %v6831 = vmul.f32 %v6830, 0.6931472
        %v6832 = vlog2.pop %v6577
        %v6833 = vmul.f32 %v6832, 0.6931472
        %v6834 = vlog2.pop %v6579
        %v6835 = vmul.f32 %v6834, 0.6931472
        %v6836 = vlog2.pop %v6581
        %v6837 = vmul.f32 %v6836, 0.6931472
        %v6838 = vlog2.pop %v6583
        %v6839 = vmul.f32 %v6838, 0.6931472
        %v6840 = vlog2.pop %v6585
        %v6841 = vmul.f32 %v6840, 0.6931472
        %v6842 = vlog2.pop %v6587
        %v6843 = vmul.f32 %v6842, 0.6931472
        %v6844 = vlog2.pop %v6589
        %v6845 = vmul.f32 %v6844, 0.6931472
        %v6846 = vlog2.pop %v6591
        %v6847 = vmul.f32 %v6846, 0.6931472
        %v6848 = vlog2.pop %v6593
        %v6849 = vmul.f32 %v6848, 0.6931472
        %v6850 = vlog2.pop %v6595
        %v6851 = vmul.f32 %v6850, 0.6931472
        %v6852 = vlog2.pop %v6597
        %v6853 = vmul.f32 %v6852, 0.6931472
        %v6854 = vlog2.pop %v6599
        %v6855 = vmul.f32 %v6854, 0.6931472
        %v6856 = vlog2.pop %v6601
        %v6857 = vmul.f32 %v6856, 0.6931472
        %v6858 = vlog2.pop %v6603
        %v6859 = vmul.f32 %v6858, 0.6931472
        %v6860 = vlog2.pop %v6605
        %v6861 = vmul.f32 %v6860, 0.6931472
        %v6862 = vlog2.pop %v6607
        %v6863 = vmul.f32 %v6862, 0.6931472
        %v6864 = vlog2.pop %v6609
        %v6865 = vmul.f32 %v6864, 0.6931472
        %v6866 = vlog2.pop %v6611
        %v6867 = vmul.f32 %v6866, 0.6931472
        %v6868 = vlog2.pop %v6613
        %v6869 = vmul.f32 %v6868, 0.6931472
        %v6870 = vlog2.pop %v6615
        %v6871 = vmul.f32 %v6870, 0.6931472
        %v6872 = vlog2.pop %v6617
        %v6873 = vmul.f32 %v6872, 0.6931472
        %v6874 = vlog2.pop %v6619
        %v6875 = vmul.f32 %v6874, 0.6931472
        %v6876 = vlog2.pop %v6621
        %v6877 = vmul.f32 %v6876, 0.6931472
        %v6878 = vlog2.pop %v6623
        %v6879 = vmul.f32 %v6878, 0.6931472
        %v6880 = vlog2.pop %v6625
        %v6881 = vmul.f32 %v6880, 0.6931472
        %v6882 = vlog2.pop %v6627
        %v6883 = vmul.f32 %v6882, 0.6931472
        %v6884 = vlog2.pop %v6629
        %v6885 = vmul.f32 %v6884, 0.6931472
        %v6886 = vlog2.pop %v6631
        %v6887 = vmul.f32 %v6886, 0.6931472
        %v6888 = vlog2.pop %v6633
        %v6889 = vmul.f32 %v6888, 0.6931472
        %v6890 = vlog2.pop %v6635
        %v6891 = vmul.f32 %v6890, 0.6931472
        %v6892 = vlog2.pop %v6637
        %v6893 = vmul.f32 %v6892, 0.6931472
        %v6894 = vlog2.pop %v6639
        %v6895 = vmul.f32 %v6894, 0.6931472
        %v6896 = vlog2.pop %v6641
        %v6897 = vmul.f32 %v6896, 0.6931472
        %v6898 = vlog2.pop %v6643
        %v6899 = vmul.f32 %v6898, 0.6931472
        %v6900 = vlog2.pop %v6645
        %v6901 = vmul.f32 %v6900, 0.6931472
        %v6902 = vlog2.pop %v6647
        %v6903 = vmul.f32 %v6902, 0.6931472
        %v6904 = vlog2.pop %v6649
        %v6905 = vmul.f32 %v6904, 0.6931472
        %v6906 = vlog2.pop %v6651
        %v6907 = vmul.f32 %v6906, 0.6931472
        %v6908 = vlog2.pop %v6653
        %v6909 = vmul.f32 %v6908, 0.6931472
        %v6910 = vlog2.pop %v6655
        %v6911 = vmul.f32 %v6910, 0.6931472
        %v6912 = vlog2.pop %v6657
        %v6913 = vmul.f32 %v6912, 0.6931472
        %v6914 = vlog2.pop %v6659
        %v6915 = vmul.f32 %v6914, 0.6931472
        %v6916 = vlog2.pop %v6661
        %v6917 = vmul.f32 %v6916, 0.6931472
        %v6918 = vlog2.pop %v6663
        %v6919 = vmul.f32 %v6918, 0.6931472
        %v6920 = vlog2.pop %v6665
        %v6921 = vmul.f32 %v6920, 0.6931472
        %v6922 = vlog2.pop %v6667
        %v6923 = vmul.f32 %v6922, 0.6931472
        %v6924 = vlog2.pop %v6669
        %v6925 = vmul.f32 %v6924, 0.6931472
        %v6926 = vlog2.pop %v6671
        %v6927 = vmul.f32 %v6926, 0.6931472
        %v6928 = vlog2.pop %v6673
        %v6929 = vmul.f32 %v6928, 0.6931472
        %v6930 = vlog2.pop %v6675
        %v6931 = vmul.f32 %v6930, 0.6931472
        %v6932 = vlog2.pop %v6677
        %v6933 = vmul.f32 %v6932, 0.6931472
        %v6934 = vlog2.pop %v6679
        %v6935 = vmul.f32 %v6934, 0.6931472
        %v6936 = vlog2.pop %v6681
        %v6937 = vmul.f32 %v6936, 0.6931472
        %v6938 = vlog2.pop %v6683
        %v6939 = vmul.f32 %v6938, 0.6931472
        %v6940 = vlog2.pop %v6685
        %v6941 = vmul.f32 %v6940, 0.6931472
        %v6942 = vlog2.pop %v6687
        %v6943 = vmul.f32 %v6942, 0.6931472
        %v6944 = vlog2.pop %v6689
        %v6945 = vmul.f32 %v6944, 0.6931472
        %v6946 = vlog2.pop %v6691
        %v6947 = vmul.f32 %v6946, 0.6931472
        %v6948 = vlog2.pop %v6693
        %v6949 = vmul.f32 %v6948, 0.6931472
        %v6950 = vlog2.pop %v6695
        %v6951 = vmul.f32 %v6950, 0.6931472
        %v6952 = vlog2.pop %v6697
        %v6953 = vmul.f32 %v6952, 0.6931472
        %v6954 = vlog2.pop %v6699
        %v6955 = vmul.f32 %v6954, 0.6931472
        %v6956 = vlog2.pop %v6701
        %v6957 = vmul.f32 %v6956, 0.6931472
        %v6958 = vlog2.pop %v6703
        %v6959 = vmul.f32 %v6958, 0.6931472
        %v6960 = vlog2.pop %v6705
        %v6961 = vmul.f32 %v6960, 0.6931472
        %v6962 = vlog2.pop %v6707
        %v6963 = vmul.f32 %v6962, 0.6931472
        %v6964 = vlog2.pop %v6709
        %v6965 = vmul.f32 %v6964, 0.6931472
        %v6966 = vlog2.pop %v6711
        %v6967 = vmul.f32 %v6966, 0.6931472
        %v6968 = vlog2.pop %v6713
        %v6969 = vmul.f32 %v6968, 0.6931472
        %v6970 = vlog2.pop %v6715
        %v6971 = vmul.f32 %v6970, 0.6931472
        %v6972 = vlog2.pop %v6717
        %v6973 = vmul.f32 %v6972, 0.6931472
        %v6974 = vlog2.pop %v6719
        %v6975 = vmul.f32 %v6974, 0.6931472
        %v6976 = vlog2.pop %v6721
        %v6977 = vmul.f32 %v6976, 0.6931472
        %v6978 = vlog2.pop %v6723
        %v6979 = vmul.f32 %v6978, 0.6931472
        %v6980 = vlog2.pop %v6725
        %v6981 = vmul.f32 %v6980, 0.6931472
        %v6982 = vlog2.pop %v6727
        %v6983 = vmul.f32 %v6982, 0.6931472
        %v6984 = vlog2.pop %v6729
        %v6985 = vmul.f32 %v6984, 0.6931472
        %v6986 = vlog2.pop %v6731
        %v6987 = vmul.f32 %v6986, 0.6931472
        %v6988 = vlog2.pop %v6733
        %v6989 = vmul.f32 %v6988, 0.6931472
        %v6990 = vlog2.pop %v6735
        %v6991 = vmul.f32 %v6990, 0.6931472
        %v6992 = vlog2.pop %v6737
        %v6993 = vmul.f32 %v6992, 0.6931472
        %v6994 = vlog2.pop %v6739
        %v6995 = vmul.f32 %v6994, 0.6931472
        %v6996 = vlog2.pop %v6741
        %v6997 = vmul.f32 %v6996, 0.6931472
        %v6998 = vsub.f32 %v6102, %v6743
        %v6999 = vsub.f32 %v6103, %v6745
        %v7000 = vsub.f32 %v6104, %v6747
        %v7001 = vsub.f32 %v6105, %v6749
        %v7002 = vsub.f32 %v6106, %v6751
        %v7003 = vsub.f32 %v6107, %v6753
        %v7004 = vsub.f32 %v6108, %v6755
        %v7005 = vsub.f32 %v6109, %v6757
        %v7006 = vsub.f32 %v6110, %v6759
        %v7007 = vsub.f32 %v6111, %v6761
        %v7008 = vsub.f32 %v6112, %v6763
        %v7009 = vsub.f32 %v6113, %v6765
        %v7010 = vsub.f32 %v6114, %v6767
        %v7011 = vsub.f32 %v6115, %v6769
        %v7012 = vsub.f32 %v6116, %v6771
        %v7013 = vsub.f32 %v6117, %v6773
        %v7014 = vsub.f32 %v6118, %v6775
        %v7015 = vsub.f32 %v6119, %v6777
        %v7016 = vsub.f32 %v6120, %v6779
        %v7017 = vsub.f32 %v6121, %v6781
        %v7018 = vsub.f32 %v6122, %v6783
        %v7019 = vsub.f32 %v6123, %v6785
        %v7020 = vsub.f32 %v6124, %v6787
        %v7021 = vsub.f32 %v6125, %v6789
        %v7022 = vsub.f32 %v6126, %v6791
        %v7023 = vsub.f32 %v6127, %v6793
        %v7024 = vsub.f32 %v6128, %v6795
        %v7025 = vsub.f32 %v6129, %v6797
        %v7026 = vsub.f32 %v6130, %v6799
        %v7027 = vsub.f32 %v6131, %v6801
        %v7028 = vsub.f32 %v6132, %v6803
        %v7029 = vsub.f32 %v6133, %v6805
        %v7030 = vsub.f32 %v6134, %v6807
        %v7031 = vsub.f32 %v6135, %v6809
        %v7032 = vsub.f32 %v6136, %v6811
        %v7033 = vsub.f32 %v6137, %v6813
        %v7034 = vsub.f32 %v6138, %v6815
        %v7035 = vsub.f32 %v6139, %v6817
        %v7036 = vsub.f32 %v6140, %v6819
        %v7037 = vsub.f32 %v6141, %v6821
        %v7038 = vsub.f32 %v6142, %v6823
        %v7039 = vsub.f32 %v6143, %v6825
        %v7040 = vsub.f32 %v6144, %v6827
        %v7041 = vsub.f32 %v6145, %v6829
        %v7042 = vsub.f32 %v6146, %v6831
        %v7043 = vsub.f32 %v6147, %v6833
        %v7044 = vsub.f32 %v6148, %v6835
        %v7045 = vsub.f32 %v6149, %v6837
        %v7046 = vsub.f32 %v6150, %v6839
        %v7047 = vsub.f32 %v6151, %v6841
        %v7048 = vsub.f32 %v6152, %v6843
        %v7049 = vsub.f32 %v6153, %v6845
        %v7050 = vsub.f32 %v6154, %v6847
        %v7051 = vsub.f32 %v6155, %v6849
        %v7052 = vsub.f32 %v6156, %v6851
        %v7053 = vsub.f32 %v6157, %v6853
        %v7054 = vsub.f32 %v6158, %v6855
        %v7055 = vsub.f32 %v6159, %v6857
        %v7056 = vsub.f32 %v6160, %v6859
        %v7057 = vsub.f32 %v6161, %v6861
        %v7058 = vsub.f32 %v6162, %v6863
        %v7059 = vsub.f32 %v6163, %v6865
        %v7060 = vsub.f32 %v6164, %v6867
        %v7061 = vsub.f32 %v6165, %v6869
        %v7062 = vsub.f32 %v6166, %v6871
        %v7063 = vsub.f32 %v6167, %v6873
        %v7064 = vsub.f32 %v6168, %v6875
        %v7065 = vsub.f32 %v6169, %v6877
        %v7066 = vsub.f32 %v6170, %v6879
        %v7067 = vsub.f32 %v6171, %v6881
        %v7068 = vsub.f32 %v6172, %v6883
        %v7069 = vsub.f32 %v6173, %v6885
        %v7070 = vsub.f32 %v6174, %v6887
        %v7071 = vsub.f32 %v6175, %v6889
        %v7072 = vsub.f32 %v6176, %v6891
        %v7073 = vsub.f32 %v6177, %v6893
        %v7074 = vsub.f32 %v6178, %v6895
        %v7075 = vsub.f32 %v6179, %v6897
        %v7076 = vsub.f32 %v6180, %v6899
        %v7077 = vsub.f32 %v6181, %v6901
        %v7078 = vsub.f32 %v6182, %v6903
        %v7079 = vsub.f32 %v6183, %v6905
        %v7080 = vsub.f32 %v6184, %v6907
        %v7081 = vsub.f32 %v6185, %v6909
        %v7082 = vsub.f32 %v6186, %v6911
        %v7083 = vsub.f32 %v6187, %v6913
        %v7084 = vsub.f32 %v6188, %v6915
        %v7085 = vsub.f32 %v6189, %v6917
        %v7086 = vsub.f32 %v6190, %v6919
        %v7087 = vsub.f32 %v6191, %v6921
        %v7088 = vsub.f32 %v6192, %v6923
        %v7089 = vsub.f32 %v6193, %v6925
        %v7090 = vsub.f32 %v6194, %v6927
        %v7091 = vsub.f32 %v6195, %v6929
        %v7092 = vsub.f32 %v6196, %v6931
        %v7093 = vsub.f32 %v6197, %v6933
        %v7094 = vsub.f32 %v6198, %v6935
        %v7095 = vsub.f32 %v6199, %v6937
        %v7096 = vsub.f32 %v6200, %v6939
        %v7097 = vsub.f32 %v6201, %v6941
        %v7098 = vsub.f32 %v6202, %v6943
        %v7099 = vsub.f32 %v6203, %v6945
        %v7100 = vsub.f32 %v6204, %v6947
        %v7101 = vsub.f32 %v6205, %v6949
        %v7102 = vsub.f32 %v6206, %v6951
        %v7103 = vsub.f32 %v6207, %v6953
        %v7104 = vsub.f32 %v6208, %v6955
        %v7105 = vsub.f32 %v6209, %v6957
        %v7106 = vsub.f32 %v6210, %v6959
        %v7107 = vsub.f32 %v6211, %v6961
        %v7108 = vsub.f32 %v6212, %v6963
        %v7109 = vsub.f32 %v6213, %v6965
        %v7110 = vsub.f32 %v6214, %v6967
        %v7111 = vsub.f32 %v6215, %v6969
        %v7112 = vsub.f32 %v6216, %v6971
        %v7113 = vsub.f32 %v6217, %v6973
        %v7114 = vsub.f32 %v6218, %v6975
        %v7115 = vsub.f32 %v6219, %v6977
        %v7116 = vsub.f32 %v6220, %v6979
        %v7117 = vsub.f32 %v6221, %v6981
        %v7118 = vsub.f32 %v6222, %v6983
        %v7119 = vsub.f32 %v6223, %v6985
        %v7120 = vsub.f32 %v6224, %v6987
        %v7121 = vsub.f32 %v6225, %v6989
        %v7122 = vsub.f32 %v6226, %v6991
        %v7123 = vsub.f32 %v6227, %v6993
        %v7124 = vsub.f32 %v6228, %v6995
        %v7125 = vsub.f32 %v6229, %v6997
        %7126 = vst [vmem:[%s218] sm:$0xff] %v6998
        %7127 = vst [vmem:[%s218 + $0x8] sm:$0xff] %v6999
        %7128 = vst [vmem:[%s218 + $0x10] sm:$0xff] %v7000
        %7129 = vst [vmem:[%s218 + $0x18] sm:$0xff] %v7001
        %7130 = vst [vmem:[%s218 + $0x20] sm:$0xff] %v7002
        %7131 = vst [vmem:[%s218 + $0x28] sm:$0xff] %v7003
        %7132 = vst [vmem:[%s218 + $0x30] sm:$0xff] %v7004
        %7133 = vst [vmem:[%s218 + $0x38] sm:$0xff] %v7005
        %7134 = vst [vmem:[%s218 + $0x40] sm:$0xff] %v7006
        %7135 = vst [vmem:[%s218 + $0x48] sm:$0xff] %v7007
        %7136 = vst [vmem:[%s218 + $0x50] sm:$0xff] %v7008
        %7137 = vst [vmem:[%s218 + $0x58] sm:$0xff] %v7009
        %7138 = vst [vmem:[%s218 + $0x60] sm:$0xff] %v7010
        %7139 = vst [vmem:[%s218 + $0x68] sm:$0xff] %v7011
        %7140 = vst [vmem:[%s218 + $0x70] sm:$0xff] %v7012
        %7141 = vst [vmem:[%s218 + $0x78] sm:$0xff] %v7013
        %7142 = vst [vmem:[%s218 + $0x80] sm:$0xff] %v7014
        %7143 = vst [vmem:[%s218 + $0x88] sm:$0xff] %v7015
        %7144 = vst [vmem:[%s218 + $0x90] sm:$0xff] %v7016
        %7145 = vst [vmem:[%s218 + $0x98] sm:$0xff] %v7017
        %7146 = vst [vmem:[%s218 + $0xa0] sm:$0xff] %v7018
        %7147 = vst [vmem:[%s218 + $0xa8] sm:$0xff] %v7019
        %7148 = vst [vmem:[%s218 + $0xb0] sm:$0xff] %v7020
        %7149 = vst [vmem:[%s218 + $0xb8] sm:$0xff] %v7021
        %7150 = vst [vmem:[%s218 + $0xc0] sm:$0xff] %v7022
        %7151 = vst [vmem:[%s218 + $0xc8] sm:$0xff] %v7023
        %7152 = vst [vmem:[%s218 + $0xd0] sm:$0xff] %v7024
        %7153 = vst [vmem:[%s218 + $0xd8] sm:$0xff] %v7025
        %7154 = vst [vmem:[%s218 + $0xe0] sm:$0xff] %v7026
        %7155 = vst [vmem:[%s218 + $0xe8] sm:$0xff] %v7027
        %7156 = vst [vmem:[%s218 + $0xf0] sm:$0xff] %v7028
        %7157 = vst [vmem:[%s218 + $0xf8] sm:$0xff] %v7029
        %7158 = vst [vmem:[%s218 + $0x100] sm:$0xff] %v7030
        %7159 = vst [vmem:[%s218 + $0x108] sm:$0xff] %v7031
        %7160 = vst [vmem:[%s218 + $0x110] sm:$0xff] %v7032
        %7161 = vst [vmem:[%s218 + $0x118] sm:$0xff] %v7033
        %7162 = vst [vmem:[%s218 + $0x120] sm:$0xff] %v7034
        %7163 = vst [vmem:[%s218 + $0x128] sm:$0xff] %v7035
        %7164 = vst [vmem:[%s218 + $0x130] sm:$0xff] %v7036
        %7165 = vst [vmem:[%s218 + $0x138] sm:$0xff] %v7037
        %7166 = vst [vmem:[%s218 + $0x140] sm:$0xff] %v7038
        %7167 = vst [vmem:[%s218 + $0x148] sm:$0xff] %v7039
        %7168 = vst [vmem:[%s218 + $0x150] sm:$0xff] %v7040
        %7169 = vst [vmem:[%s218 + $0x158] sm:$0xff] %v7041
        %7170 = vst [vmem:[%s218 + $0x160] sm:$0xff] %v7042
        %7171 = vst [vmem:[%s218 + $0x168] sm:$0xff] %v7043
        %7172 = vst [vmem:[%s218 + $0x170] sm:$0xff] %v7044
        %7173 = vst [vmem:[%s218 + $0x178] sm:$0xff] %v7045
        %7174 = vst [vmem:[%s218 + $0x180] sm:$0xff] %v7046
        %7175 = vst [vmem:[%s218 + $0x188] sm:$0xff] %v7047
        %7176 = vst [vmem:[%s218 + $0x190] sm:$0xff] %v7048
        %7177 = vst [vmem:[%s218 + $0x198] sm:$0xff] %v7049
        %7178 = vst [vmem:[%s218 + $0x1a0] sm:$0xff] %v7050
        %7179 = vst [vmem:[%s218 + $0x1a8] sm:$0xff] %v7051
        %7180 = vst [vmem:[%s218 + $0x1b0] sm:$0xff] %v7052
        %7181 = vst [vmem:[%s218 + $0x1b8] sm:$0xff] %v7053
        %7182 = vst [vmem:[%s218 + $0x1c0] sm:$0xff] %v7054
        %7183 = vst [vmem:[%s218 + $0x1c8] sm:$0xff] %v7055
        %7184 = vst [vmem:[%s218 + $0x1d0] sm:$0xff] %v7056
        %7185 = vst [vmem:[%s218 + $0x1d8] sm:$0xff] %v7057
        %7186 = vst [vmem:[%s218 + $0x1e0] sm:$0xff] %v7058
        %7187 = vst [vmem:[%s218 + $0x1e8] sm:$0xff] %v7059
        %7188 = vst [vmem:[%s218 + $0x1f0] sm:$0xff] %v7060
        %7189 = vst [vmem:[%s218 + $0x1f8] sm:$0xff] %v7061
        %7190 = vst [vmem:[%s218 + $0x200] sm:$0xff] %v7062
        %7191 = vst [vmem:[%s218 + $0x208] sm:$0xff] %v7063
        %7192 = vst [vmem:[%s218 + $0x210] sm:$0xff] %v7064
        %7193 = vst [vmem:[%s218 + $0x218] sm:$0xff] %v7065
        %7194 = vst [vmem:[%s218 + $0x220] sm:$0xff] %v7066
        %7195 = vst [vmem:[%s218 + $0x228] sm:$0xff] %v7067
        %7196 = vst [vmem:[%s218 + $0x230] sm:$0xff] %v7068
        %7197 = vst [vmem:[%s218 + $0x238] sm:$0xff] %v7069
        %7198 = vst [vmem:[%s218 + $0x240] sm:$0xff] %v7070
        %7199 = vst [vmem:[%s218 + $0x248] sm:$0xff] %v7071
        %7200 = vst [vmem:[%s218 + $0x250] sm:$0xff] %v7072
        %7201 = vst [vmem:[%s218 + $0x258] sm:$0xff] %v7073
        %7202 = vst [vmem:[%s218 + $0x260] sm:$0xff] %v7074
        %7203 = vst [vmem:[%s218 + $0x268] sm:$0xff] %v7075
        %7204 = vst [vmem:[%s218 + $0x270] sm:$0xff] %v7076
        %7205 = vst [vmem:[%s218 + $0x278] sm:$0xff] %v7077
        %7206 = vst [vmem:[%s218 + $0x280] sm:$0xff] %v7078
        %7207 = vst [vmem:[%s218 + $0x288] sm:$0xff] %v7079
        %7208 = vst [vmem:[%s218 + $0x290] sm:$0xff] %v7080
        %7209 = vst [vmem:[%s218 + $0x298] sm:$0xff] %v7081
        %7210 = vst [vmem:[%s218 + $0x2a0] sm:$0xff] %v7082
        %7211 = vst [vmem:[%s218 + $0x2a8] sm:$0xff] %v7083
        %7212 = vst [vmem:[%s218 + $0x2b0] sm:$0xff] %v7084
        %7213 = vst [vmem:[%s218 + $0x2b8] sm:$0xff] %v7085
        %7214 = vst [vmem:[%s218 + $0x2c0] sm:$0xff] %v7086
        %7215 = vst [vmem:[%s218 + $0x2c8] sm:$0xff] %v7087
        %7216 = vst [vmem:[%s218 + $0x2d0] sm:$0xff] %v7088
        %7217 = vst [vmem:[%s218 + $0x2d8] sm:$0xff] %v7089
        %7218 = vst [vmem:[%s218 + $0x2e0] sm:$0xff] %v7090
        %7219 = vst [vmem:[%s218 + $0x2e8] sm:$0xff] %v7091
        %7220 = vst [vmem:[%s218 + $0x2f0] sm:$0xff] %v7092
        %7221 = vst [vmem:[%s218 + $0x2f8] sm:$0xff] %v7093
        %7222 = vst [vmem:[%s218 + $0x300] sm:$0xff] %v7094
        %7223 = vst [vmem:[%s218 + $0x308] sm:$0xff] %v7095
        %7224 = vst [vmem:[%s218 + $0x310] sm:$0xff] %v7096
        %7225 = vst [vmem:[%s218 + $0x318] sm:$0xff] %v7097
        %7226 = vst [vmem:[%s218 + $0x320] sm:$0xff] %v7098
        %7227 = vst [vmem:[%s218 + $0x328] sm:$0xff] %v7099
        %7228 = vst [vmem:[%s218 + $0x330] sm:$0xff] %v7100
        %7229 = vst [vmem:[%s218 + $0x338] sm:$0xff] %v7101
        %7230 = vst [vmem:[%s218 + $0x340] sm:$0xff] %v7102
        %7231 = vst [vmem:[%s218 + $0x348] sm:$0xff] %v7103
        %7232 = vst [vmem:[%s218 + $0x350] sm:$0xff] %v7104
        %7233 = vst [vmem:[%s218 + $0x358] sm:$0xff] %v7105
        %7234 = vst [vmem:[%s218 + $0x360] sm:$0xff] %v7106
        %7235 = vst [vmem:[%s218 + $0x368] sm:$0xff] %v7107
        %7236 = vst [vmem:[%s218 + $0x370] sm:$0xff] %v7108
        %7237 = vst [vmem:[%s218 + $0x378] sm:$0xff] %v7109
        %7238 = vst [vmem:[%s218 + $0x380] sm:$0xff] %v7110
        %7239 = vst [vmem:[%s218 + $0x388] sm:$0xff] %v7111
        %7240 = vst [vmem:[%s218 + $0x390] sm:$0xff] %v7112
        %7241 = vst [vmem:[%s218 + $0x398] sm:$0xff] %v7113
        %7242 = vst [vmem:[%s218 + $0x3a0] sm:$0xff] %v7114
        %7243 = vst [vmem:[%s218 + $0x3a8] sm:$0xff] %v7115
        %7244 = vst [vmem:[%s218 + $0x3b0] sm:$0xff] %v7116
        %7245 = vst [vmem:[%s218 + $0x3b8] sm:$0xff] %v7117
        %7246 = vst [vmem:[%s218 + $0x3c0] sm:$0xff] %v7118
        %7247 = vst [vmem:[%s218 + $0x3c8] sm:$0xff] %v7119
        %7248 = vst [vmem:[%s218 + $0x3d0] sm:$0xff] %v7120
        %7249 = vst [vmem:[%s218 + $0x3d8] sm:$0xff] %v7121
        %7250 = vst [vmem:[%s218 + $0x3e0] sm:$0xff] %v7122
        %7251 = vst [vmem:[%s218 + $0x3e8] sm:$0xff] %v7123
        %7252 = vst [vmem:[%s218 + $0x3f0] sm:$0xff] %v7124
        %7253 = vst [vmem:[%s218 + $0x3f8] sm:$0xff] %v7125
        %s7254 = sand.u32 %s137, 1
        %s7255 = scalar_lea.sflag [#allocation3], %s7254
        %s7256 = sand.u32 %s137, 1
        %s7257 = smul.addr %s7256, 1024
        %s7258 = scalar_lea.vmem [#allocation2], %s7257
        // Predicated region
        $region41: #{tpu_custom_call.1} parent=39 // pred_check
          %p7259 = pneg %p147
        $region42: #{tpu_custom_call.1} parent=39 // pred_check_branch
          %7261 = sbr.rel (%p7259) target = $region44
        $region43: #{tpu_custom_call.1} parent=39 // pred_region
          %s7262 = smul.u32 128, %s19
          %s7264 = ssub.s32 16384, 16384
          %7265 = vsyncadd %s7255, %s7264
          %s7266 = smul.addr %s7262, 128
          %s7267 = scalar_lea.hbm %s5, %s7266
          %s7268 = sshll.u32 %s7258, 4
          %s7269 = int_to_ptr.vmem [resolvable:$true] %s7268
          %7274 = dma.vmem_to_hbm [thread:$0]  %s7269, 16384, %s7267, %s7255, 128, 128, 8
        $region44: #{tpu_custom_call.1} parent=39 // pred_fallthru
          _
      $region40: #{tpu_custom_call.1} parent=5 // pred_fallthru
        _
      %p7275 = scmp.le.s32.totalorder 2, %s14
      // Predicated region
      $region45: #{tpu_custom_call.1} parent=5 // pred_check
        %p7276 = pneg %p7275
      $region46: #{tpu_custom_call.1} parent=5 // pred_check_branch
        %7278 = sbr.rel (%p7276) target = $region48
      $region47: #{tpu_custom_call.1} parent=5 // pred_region
        %s7279 = ssub.s32 %s14, 2
        // Predicated region
        $region49: #{tpu_custom_call.1} parent=47 // pred_check
          %p7280 = pneg %p153
        $region50: #{tpu_custom_call.1} parent=47 // pred_check_branch
          %7282 = sbr.rel (%p7280) target = $region52
        $region51: #{tpu_custom_call.1} parent=47 // pred_region
          %s7283 = sand.u32 %s138, 1
          %s7284 = scalar_lea.sflag [#allocation3], %s7283
          %s7285 = sand.u32 %s138, 1
          %s7286 = smul.addr %s7285, 1024
          %s7287 = scalar_lea.vmem [#allocation2], %s7286
          %7288 = dma.done %s7284, 16384
        $region52: #{tpu_custom_call.1} parent=47 // pred_fallthru
          _
      $region48: #{tpu_custom_call.1} parent=5 // pred_fallthru
        _
    $region6: #{tpu_custom_call.1} parent=1 // loop_footer
      %s18 = sadd.s32 1, %s14
    $region7: #{tpu_custom_call.1} parent=1 // loop_footer_branch
      %13 = sbr.rel target = $region3
    $region8: #{tpu_custom_call.1} parent=1 // loop_exit
      _
    %7289 = vsyncpa [#allocation3], 1
    %s7290 = scalar_lea.sflag [#allocation3], 1
    %7291 = vsyncpa %s7290, 1

</llo_original>
